<compile_context>
chip_gen: v7x
topology: tpu7x:2x2x1
jax: 0.10.0
libtpu: 0.0.40
codegen_flags: <defaults>
</compile_context>

<pallas_src>
import functools

import jax
import jax.numpy as jnp
from jax.experimental import pallas as pl
from jax.experimental.pallas import tpu as pltpu


_WEIGHT_NAMES = (
    "wq_s", "bq_s", "wk_s", "bk_s", "wv_s", "bv_s", "wo_s", "bo_s",
    "wq_c", "bq_c", "wk_c", "bk_c", "wv_c", "bv_c", "wo_c", "bo_c",
    "w1", "b1", "w2", "b2", "ln_g", "ln_b",
)


# --------------------------------------------------------------------------
# Fused decoder-stack Pallas kernel (one grid step per batch element,
# all decoding blocks unrolled inside).
# --------------------------------------------------------------------------
def _decoder_stack_kernel(
        x_ref, enc_ref, seqm_ref, srcm_ref,
        wq_s_ref, bq_s_ref, wk_s_ref, bk_s_ref, wv_s_ref, bv_s_ref,
        wo_s_ref, bo_s_ref,
        wq_c_ref, bq_c_ref, wk_c_ref, bk_c_ref, wv_c_ref, bv_c_ref,
        wo_c_ref, bo_c_ref,
        w1_ref, b1_ref, w2_ref, b2_ref, ln_g_ref, ln_b_ref,
        o_ref, *, n_head, n_block, eps):
    f32 = jnp.float32
    bf16 = jnp.bfloat16
    H = n_head

    x = x_ref[...]                                    # (Lq, E) f32
    enc = enc_ref[...].astype(bf16)                   # (Lk, E) bf16
    # Mask compare hoisted: once per kernel invocation, reused by all blocks.
    seq_keep = seqm_ref[...] > 0.0                    # (Lq, Lq) bool
    src_keep = srcm_ref[...] > 0.0                    # (Lq, Lk) bool
    # Encoder activations broadcast over heads once, reused by every block.
    enc_b = jnp.broadcast_to(enc, (H,) + enc.shape)   # (H, Lk, E) bf16

    def layernorm(y, g, b):
        mu = jnp.mean(y, axis=-1, keepdims=True)
        var = jnp.mean(y * y, axis=-1, keepdims=True) - mu * mu
        return (y - mu) * jax.lax.rsqrt(var + eps) * g + b

    def mha(xq_b, xkv_b, keep, wq, bq, wk, bk, wv, bv, wo, bo):
        # xq_b: (H, Lq, E) bf16; xkv_b: (H, Lkv, E) bf16; keep: (Lq, Lkv) bool
        # wq/wk/wv: (H, E, D) bf16; bq/bk/bv: (H, 1, D) f32 (scale folded in q)
        # wo: (H, D, E) bf16; bo: (1, E) f32
        q = jnp.einsum('hqe,hed->hqd', xq_b, wq,
                       preferred_element_type=f32) + bq          # (H, Lq, D)
        k = jnp.einsum('hke,hed->hkd', xkv_b, wk,
                       preferred_element_type=f32) + bk          # (H, Lkv, D)
        v = jnp.einsum('hke,hed->hkd', xkv_b, wv,
                       preferred_element_type=f32) + bv          # (H, Lkv, D)
        s = jnp.einsum('hqd,hkd->hqk', q.astype(bf16), k.astype(bf16),
                       preferred_element_type=f32)               # (H, Lq, Lkv)
        s = jnp.where(keep[None, :, :], s, jnp.float32(-1e9))
        s = s - jnp.max(s, axis=-1, keepdims=True)
        p = jnp.exp(s)
        p = p * pl.reciprocal(jnp.sum(p, axis=-1, keepdims=True), approx=True)
        o = jnp.einsum('hqk,hkd->hqd', p.astype(bf16), v.astype(bf16),
                       preferred_element_type=f32)               # (H, Lq, D)
        op = jnp.einsum('hqd,hde->hqe', o.astype(bf16), wo,
                        preferred_element_type=f32)              # (H, Lq, E)
        return jnp.sum(op, axis=0) + bo                          # (Lq, E)

    for blk in range(n_block):                 # static unroll over blocks
        lng = ln_g_ref[blk]                    # (3, 1, E)
        lnb = ln_b_ref[blk]

        # ---- masked self-attention + Add & LayerNorm ----
        xb = jnp.broadcast_to(x.astype(bf16), (H,) + x.shape)
        sa = mha(xb, xb, seq_keep,
                 wq_s_ref[blk], bq_s_ref[blk],
                 wk_s_ref[blk], bk_s_ref[blk],
                 wv_s_ref[blk], bv_s_ref[blk],
                 wo_s_ref[blk], bo_s_ref[blk])
        x = layernorm(sa + x, lng[0], lnb[0])

        # ---- encoder-decoder cross attention + Add & LayerNorm ----
        xb = jnp.broadcast_to(x.astype(bf16), (H,) + x.shape)
        ca = mha(xb, enc_b, src_keep,
                 wq_c_ref[blk], bq_c_ref[blk],
                 wk_c_ref[blk], bk_c_ref[blk],
                 wv_c_ref[blk], bv_c_ref[blk],
                 wo_c_ref[blk], bo_c_ref[blk])
        x = layernorm(ca + x, lng[1], lnb[1])

        # ---- position-wise FFN (ReLU) + Add & LayerNorm ----
        h1 = jnp.dot(x.astype(bf16), w1_ref[blk],
                     preferred_element_type=f32) + b1_ref[blk]
        h1 = jnp.maximum(h1, 0.0)
        ff = jnp.dot(h1.astype(bf16), w2_ref[blk],
                     preferred_element_type=f32) + b2_ref[blk]
        x = layernorm(ff + x, lng[2], lnb[2])

    o_ref[...] = x
    # TODO(synk): dropout omitted (module constructed with training=False -> no-op).
    # TODO(synk): E=32 toy config gives lane-sparse (32/128) vregs and masked
    #             stores; real configs should use E >= 128 (lane-dense output).


def decoder_stack(x, enc_output, seq_mask, src_mask, stacked, *,
                  n_head, n_block, eps=1e-5):
    """Runs the whole decoder stack in a single fused pallas_call."""
    B, Lq, E = x.shape
    Lk = enc_output.shape[1]
    weights = [stacked[name] for name in _WEIGHT_NAMES]

    def rep(arr):  # full-array weight block, constant index across the grid
        nd = arr.ndim
        return pl.BlockSpec(tuple(arr.shape), lambda b, _n=nd: (0,) * _n)

    kernel = functools.partial(_decoder_stack_kernel, n_head=n_head,
                               n_block=n_block, eps=eps)

    return pl.pallas_call(
        kernel,
        out_shape=jax.ShapeDtypeStruct((B, Lq, E), jnp.float32),
        grid=(B,),
        in_specs=[
            pl.BlockSpec((None, Lq, E), lambda b: (b, 0, 0)),
            pl.BlockSpec((None, Lk, E), lambda b: (b, 0, 0)),
            pl.BlockSpec((None, Lq, Lq), lambda b: (b, 0, 0)),
            pl.BlockSpec((None, Lq, Lk), lambda b: (b, 0, 0)),
        ] + [rep(w) for w in weights],
        out_specs=pl.BlockSpec((None, Lq, E), lambda b: (b, 0, 0)),
        compiler_params=pltpu.CompilerParams(
            dimension_semantics=("parallel",),
            vmem_limit_bytes=32 * 1024 * 1024,
        ),
    )(x, enc_output, seq_mask, src_mask, *weights)


# --------------------------------------------------------------------------
# Model glue (plain JAX): embeddings, parameter setup
# --------------------------------------------------------------------------
def sinusoid_encoding_table(max_seq_len, emb_dim):
    # Faithful to the PyTorch code: `div` is not in-place, so the base/exponent
    # scaling is dropped; the value before sin/cos is just the position index.
    pos = jnp.tile(jnp.arange(max_seq_len, dtype=jnp.float32)[:, None],
                   (1, emb_dim))
    col = jnp.arange(emb_dim)
    table = jnp.where((col % 2) == 0, jnp.sin(pos), jnp.cos(pos))
    return table[None]  # (1, max_seq_len, emb_dim)


def _init_linear(key, fan_in, fan_out):
    kw, kb = jax.random.split(key)
    bound = 1.0 / (fan_in ** 0.5)
    w = jax.random.uniform(kw, (fan_in, fan_out), jnp.float32, -bound, bound)
    b = jax.random.uniform(kb, (fan_out,), jnp.float32, -bound, bound)
    return w, b


def _init_block(key, emb_dim, attn_dim, n_head, feedforward_dim):
    E, D, H, F = emb_dim, attn_dim, n_head, feedforward_dim
    HD = H * D
    scale = 1.0 / (float(D) ** 0.5)
    ks = jax.random.split(key, 10)
    wq_s, bq_s = _init_linear(ks[0], E, HD)
    wk_s, bk_s = _init_linear(ks[1], E, HD)
    wv_s, bv_s = _init_linear(ks[2], E, HD)
    wo_s, bo_s = _init_linear(ks[3], HD, E)
    wq_c, bq_c = _init_linear(ks[4], E, HD)
    wk_c, bk_c = _init_linear(ks[5], E, HD)
    wv_c, bv_c = _init_linear(ks[6], E, HD)
    wo_c, bo_c = _init_linear(ks[7], HD, E)
    w1, b1 = _init_linear(ks[8], E, F)
    w2, b2 = _init_linear(ks[9], F, E)

    bf16 = jnp.bfloat16
    hw = lambda w: jnp.transpose(w.reshape(E, H, D), (1, 0, 2))  # (H, E, D)
    hb = lambda b: b.reshape(H, 1, D)                            # (H, 1, D)
    ones = jnp.ones((1, E), jnp.float32)
    zeros = jnp.zeros((1, E), jnp.float32)

    return dict(
        # 1/sqrt(attn_dim) folded into the Q projection weight & bias.
        wq_s=(hw(wq_s) * scale).astype(bf16), bq_s=hb(bq_s) * scale,
        wk_s=hw(wk_s).astype(bf16), bk_s=hb(bk_s),
        wv_s=hw(wv_s).astype(bf16), bv_s=hb(bv_s),
        wo_s=wo_s.reshape(H, D, E).astype(bf16), bo_s=bo_s[None, :],
        wq_c=(hw(wq_c) * scale).astype(bf16), bq_c=hb(bq_c) * scale,
        wk_c=hw(wk_c).astype(bf16), bk_c=hb(bk_c),
        wv_c=hw(wv_c).astype(bf16), bv_c=hb(bv_c),
        wo_c=wo_c.reshape(H, D, E).astype(bf16), bo_c=bo_c[None, :],
        w1=w1.astype(bf16), b1=b1[None, :],
        w2=w2.astype(bf16), b2=b2[None, :],
        ln_g=jnp.stack([ones] * 3), ln_b=jnp.stack([zeros] * 3),  # (3, 1, E)
    )


def init_decoder_params(key, n_vocab, emb_dim, pad_idx, max_seq_len, n_block,
                        attn_dim, n_head, feedforward_dim):
    keys = jax.random.split(key, n_block + 1)
    word_emb = jax.random.normal(keys[0], (n_vocab, emb_dim), jnp.float32)
    word_emb = word_emb.at[pad_idx].set(0.0)       # padding_idx row is zero
    blocks = [_init_block(keys[i + 1], emb_dim, attn_dim, n_head,
                          feedforward_dim) for i in range(n_block)]
    stacked = {name: jnp.stack([blk[name] for blk in blocks])
               for name in _WEIGHT_NAMES}
    return dict(
        word_emb=word_emb,
        pos_table=sinusoid_encoding_table(max_seq_len, emb_dim),
        stacked=stacked,
    )


def decoder_forward(params, enc_output, dec_input, src_mask, seq_mask, *,
                    n_head, n_block):
    # Word-embedding gather + position-embedding add in plain JAX: XLA fuses
    # the elementwise add into the gather (no dedicated kernel launch).
    emb = jnp.take(params["word_emb"], dec_input, axis=0)        # (B, Lq, E)
    L, E = emb.shape[1], emb.shape[2]
    x = emb + params["pos_table"][:, :L, :E]
    return decoder_stack(x, enc_output, seq_mask, src_mask, params["stacked"],
                         n_head=n_head, n_block=n_block)


# --------------------------------------------------------------------------
# Main
# --------------------------------------------------------------------------
if __name__ == "__main__":
    n_vocab = 50
    emb_dim = 32
    pad_idx = 0
    max_seq_len = 16
    n_block = 2
    attn_dim = 8          # per-head dim
    n_head = 4
    feedforward_dim = 64
    B, Lq, Lk = 2, 8, 8

    root = jax.random.PRNGKey(0)
    kp, ktok, kenc = jax.random.split(root, 3)

    params = init_decoder_params(kp, n_vocab, emb_dim, pad_idx, max_seq_len,
                                 n_block, attn_dim, n_head, feedforward_dim)

    dec_input = jax.random.randint(ktok, (B, Lq), 0, n_vocab, dtype=jnp.int32)
    enc_output = jax.random.normal(kenc, (B, Lk, emb_dim), jnp.float32)
    causal = jnp.tril(jnp.ones((Lq, Lq), jnp.float32))
    seq_mask = jnp.tile(causal[None], (B, 1, 1))                  # (B, Lq, Lq)
    src_mask = jnp.ones((B, Lq, Lk), jnp.float32)                 # (B, Lq, Lk)

    fwd = jax.jit(functools.partial(decoder_forward, n_head=n_head,
                                    n_block=n_block))
    out = fwd(params, enc_output, dec_input, src_mask, seq_mask)
    out = jax.block_until_ready(out)
    assert out.shape == (B, Lq, emb_dim) and out.dtype == jnp.float32
    assert bool(jnp.all(jnp.isfinite(out)))
    print("KERNEL_OK")
</pallas_src>

<mosaic_0001>
module attributes {stable_mosaic.version = 11 : i64} {
  func.func @_decoder_stack_kernel(%arg0: i32, %arg1: memref<1x8x32xf32, #tpu.memory_space<vmem>>, %arg2: memref<1x8x32xf32, #tpu.memory_space<vmem>>, %arg3: memref<1x8x8xf32, #tpu.memory_space<vmem>>, %arg4: memref<1x8x8xf32, #tpu.memory_space<vmem>>, %arg5: memref<2x4x32x8xbf16, #tpu.memory_space<vmem>>, %arg6: memref<2x4x1x8xf32, #tpu.memory_space<vmem>>, %arg7: memref<2x4x32x8xbf16, #tpu.memory_space<vmem>>, %arg8: memref<2x4x1x8xf32, #tpu.memory_space<vmem>>, %arg9: memref<2x4x32x8xbf16, #tpu.memory_space<vmem>>, %arg10: memref<2x4x1x8xf32, #tpu.memory_space<vmem>>, %arg11: memref<2x4x8x32xbf16, #tpu.memory_space<vmem>>, %arg12: memref<2x1x32xf32, #tpu.memory_space<vmem>>, %arg13: memref<2x4x32x8xbf16, #tpu.memory_space<vmem>>, %arg14: memref<2x4x1x8xf32, #tpu.memory_space<vmem>>, %arg15: memref<2x4x32x8xbf16, #tpu.memory_space<vmem>>, %arg16: memref<2x4x1x8xf32, #tpu.memory_space<vmem>>, %arg17: memref<2x4x32x8xbf16, #tpu.memory_space<vmem>>, %arg18: memref<2x4x1x8xf32, #tpu.memory_space<vmem>>, %arg19: memref<2x4x8x32xbf16, #tpu.memory_space<vmem>>, %arg20: memref<2x1x32xf32, #tpu.memory_space<vmem>>, %arg21: memref<2x32x64xbf16, #tpu.memory_space<vmem>>, %arg22: memref<2x1x64xf32, #tpu.memory_space<vmem>>, %arg23: memref<2x64x32xbf16, #tpu.memory_space<vmem>>, %arg24: memref<2x1x32xf32, #tpu.memory_space<vmem>>, %arg25: memref<2x3x1x32xf32, #tpu.memory_space<vmem>>, %arg26: memref<2x3x1x32xf32, #tpu.memory_space<vmem>>, %arg27: memref<1x8x32xf32, #tpu.memory_space<vmem>>) attributes {dimension_semantics = [#tpu.dimension_semantics<parallel>], iteration_bounds = array<i64: 2>, scalar_prefetch = 0 : i64, scratch_operands = 0 : i64, tpu.core_type = #tpu.core_type<tc>, window_params = [{transform_indices = @transform_0, window_bounds = array<i64: 1, 8, 32>}, {transform_indices = @transform_1, window_bounds = array<i64: 1, 8, 32>}, {transform_indices = @transform_2, window_bounds = array<i64: 1, 8, 8>}, {transform_indices = @transform_3, window_bounds = array<i64: 1, 8, 8>}, {pipeline_mode = #tpu.pipeline_mode<synchronous>, transform_indices = @transform_4, window_bounds = array<i64: 2, 4, 32, 8>}, {pipeline_mode = #tpu.pipeline_mode<synchronous>, transform_indices = @transform_5, window_bounds = array<i64: 2, 4, 1, 8>}, {pipeline_mode = #tpu.pipeline_mode<synchronous>, transform_indices = @transform_6, window_bounds = array<i64: 2, 4, 32, 8>}, {pipeline_mode = #tpu.pipeline_mode<synchronous>, transform_indices = @transform_7, window_bounds = array<i64: 2, 4, 1, 8>}, {pipeline_mode = #tpu.pipeline_mode<synchronous>, transform_indices = @transform_8, window_bounds = array<i64: 2, 4, 32, 8>}, {pipeline_mode = #tpu.pipeline_mode<synchronous>, transform_indices = @transform_9, window_bounds = array<i64: 2, 4, 1, 8>}, {pipeline_mode = #tpu.pipeline_mode<synchronous>, transform_indices = @transform_10, window_bounds = array<i64: 2, 4, 8, 32>}, {pipeline_mode = #tpu.pipeline_mode<synchronous>, transform_indices = @transform_11, window_bounds = array<i64: 2, 1, 32>}, {pipeline_mode = #tpu.pipeline_mode<synchronous>, transform_indices = @transform_12, window_bounds = array<i64: 2, 4, 32, 8>}, {pipeline_mode = #tpu.pipeline_mode<synchronous>, transform_indices = @transform_13, window_bounds = array<i64: 2, 4, 1, 8>}, {pipeline_mode = #tpu.pipeline_mode<synchronous>, transform_indices = @transform_14, window_bounds = array<i64: 2, 4, 32, 8>}, {pipeline_mode = #tpu.pipeline_mode<synchronous>, transform_indices = @transform_15, window_bounds = array<i64: 2, 4, 1, 8>}, {pipeline_mode = #tpu.pipeline_mode<synchronous>, transform_indices = @transform_16, window_bounds = array<i64: 2, 4, 32, 8>}, {pipeline_mode = #tpu.pipeline_mode<synchronous>, transform_indices = @transform_17, window_bounds = array<i64: 2, 4, 1, 8>}, {pipeline_mode = #tpu.pipeline_mode<synchronous>, transform_indices = @transform_18, window_bounds = array<i64: 2, 4, 8, 32>}, {pipeline_mode = #tpu.pipeline_mode<synchronous>, transform_indices = @transform_19, window_bounds = array<i64: 2, 1, 32>}, {pipeline_mode = #tpu.pipeline_mode<synchronous>, transform_indices = @transform_20, window_bounds = array<i64: 2, 32, 64>}, {pipeline_mode = #tpu.pipeline_mode<synchronous>, transform_indices = @transform_21, window_bounds = array<i64: 2, 1, 64>}, {pipeline_mode = #tpu.pipeline_mode<synchronous>, transform_indices = @transform_22, window_bounds = array<i64: 2, 64, 32>}, {pipeline_mode = #tpu.pipeline_mode<synchronous>, transform_indices = @transform_23, window_bounds = array<i64: 2, 1, 32>}, {pipeline_mode = #tpu.pipeline_mode<synchronous>, transform_indices = @transform_24, window_bounds = array<i64: 2, 3, 1, 32>}, {pipeline_mode = #tpu.pipeline_mode<synchronous>, transform_indices = @transform_25, window_bounds = array<i64: 2, 3, 1, 32>}, {transform_indices = @transform_26, window_bounds = array<i64: 1, 8, 32>}]} {
    %c0 = arith.constant 0 : index
    %c0_0 = arith.constant 0 : index
    %c0_1 = arith.constant 0 : index
    %0 = vector.load %arg1[%c0, %c0_0, %c0_1] : memref<1x8x32xf32, #tpu.memory_space<vmem>>, vector<1x8x32xf32>
    %1 = vector.shape_cast %0 : vector<1x8x32xf32> to vector<8x32xf32>
    %c0_2 = arith.constant 0 : index
    %c0_3 = arith.constant 0 : index
    %c0_4 = arith.constant 0 : index
    %2 = vector.load %arg2[%c0_2, %c0_3, %c0_4] : memref<1x8x32xf32, #tpu.memory_space<vmem>>, vector<1x8x32xf32>
    %3 = vector.shape_cast %2 : vector<1x8x32xf32> to vector<8x32xf32>
    %4 = arith.truncf %3 : vector<8x32xf32> to vector<8x32xbf16>
    %c0_5 = arith.constant 0 : index
    %c0_6 = arith.constant 0 : index
    %c0_7 = arith.constant 0 : index
    %5 = vector.load %arg3[%c0_5, %c0_6, %c0_7] : memref<1x8x8xf32, #tpu.memory_space<vmem>>, vector<1x8x8xf32>
    %6 = vector.shape_cast %5 : vector<1x8x8xf32> to vector<8x8xf32>
    %cst = arith.constant 0.000000e+00 : f32
    %7 = vector.broadcast %cst : f32 to vector<8x8xf32>
    %8 = arith.cmpf ogt, %6, %7 : vector<8x8xf32>
    %c0_8 = arith.constant 0 : index
    %c0_9 = arith.constant 0 : index
    %c0_10 = arith.constant 0 : index
    %9 = vector.load %arg4[%c0_8, %c0_9, %c0_10] : memref<1x8x8xf32, #tpu.memory_space<vmem>>, vector<1x8x8xf32>
    %10 = vector.shape_cast %9 : vector<1x8x8xf32> to vector<8x8xf32>
    %cst_11 = arith.constant 0.000000e+00 : f32
    %11 = vector.broadcast %cst_11 : f32 to vector<8x8xf32>
    %12 = arith.cmpf ogt, %10, %11 : vector<8x8xf32>
    %13 = vector.shape_cast %4 : vector<8x32xbf16> to vector<1x8x32xbf16>
    %14 = vector.broadcast %13 : vector<1x8x32xbf16> to vector<4x8x32xbf16>
    %c0_12 = arith.constant 0 : index
    %c0_13 = arith.constant 0 : index
    %c0_14 = arith.constant 0 : index
    %c0_15 = arith.constant 0 : index
    %15 = vector.load %arg25[%c0_12, %c0_13, %c0_14, %c0_15] : memref<2x3x1x32xf32, #tpu.memory_space<vmem>>, vector<1x3x1x32xf32>
    %16 = vector.shape_cast %15 : vector<1x3x1x32xf32> to vector<3x1x32xf32>
    %c0_16 = arith.constant 0 : index
    %c0_17 = arith.constant 0 : index
    %c0_18 = arith.constant 0 : index
    %c0_19 = arith.constant 0 : index
    %17 = vector.load %arg26[%c0_16, %c0_17, %c0_18, %c0_19] : memref<2x3x1x32xf32, #tpu.memory_space<vmem>>, vector<1x3x1x32xf32>
    %18 = vector.shape_cast %17 : vector<1x3x1x32xf32> to vector<3x1x32xf32>
    %19 = arith.truncf %1 : vector<8x32xf32> to vector<8x32xbf16>
    %20 = vector.shape_cast %19 : vector<8x32xbf16> to vector<1x8x32xbf16>
    %21 = vector.broadcast %20 : vector<1x8x32xbf16> to vector<4x8x32xbf16>
    %c0_20 = arith.constant 0 : index
    %c0_21 = arith.constant 0 : index
    %c0_22 = arith.constant 0 : index
    %c0_23 = arith.constant 0 : index
    %22 = vector.load %arg5[%c0_20, %c0_21, %c0_22, %c0_23] : memref<2x4x32x8xbf16, #tpu.memory_space<vmem>>, vector<1x4x32x8xbf16>
    %23 = vector.shape_cast %22 : vector<1x4x32x8xbf16> to vector<4x32x8xbf16>
    %c0_24 = arith.constant 0 : index
    %c0_25 = arith.constant 0 : index
    %c0_26 = arith.constant 0 : index
    %c0_27 = arith.constant 0 : index
    %24 = vector.load %arg6[%c0_24, %c0_25, %c0_26, %c0_27] : memref<2x4x1x8xf32, #tpu.memory_space<vmem>>, vector<1x4x1x8xf32>
    %25 = vector.shape_cast %24 : vector<1x4x1x8xf32> to vector<4x1x8xf32>
    %c0_28 = arith.constant 0 : index
    %c0_29 = arith.constant 0 : index
    %c0_30 = arith.constant 0 : index
    %c0_31 = arith.constant 0 : index
    %26 = vector.load %arg7[%c0_28, %c0_29, %c0_30, %c0_31] : memref<2x4x32x8xbf16, #tpu.memory_space<vmem>>, vector<1x4x32x8xbf16>
    %27 = vector.shape_cast %26 : vector<1x4x32x8xbf16> to vector<4x32x8xbf16>
    %c0_32 = arith.constant 0 : index
    %c0_33 = arith.constant 0 : index
    %c0_34 = arith.constant 0 : index
    %c0_35 = arith.constant 0 : index
    %28 = vector.load %arg8[%c0_32, %c0_33, %c0_34, %c0_35] : memref<2x4x1x8xf32, #tpu.memory_space<vmem>>, vector<1x4x1x8xf32>
    %29 = vector.shape_cast %28 : vector<1x4x1x8xf32> to vector<4x1x8xf32>
    %c0_36 = arith.constant 0 : index
    %c0_37 = arith.constant 0 : index
    %c0_38 = arith.constant 0 : index
    %c0_39 = arith.constant 0 : index
    %30 = vector.load %arg9[%c0_36, %c0_37, %c0_38, %c0_39] : memref<2x4x32x8xbf16, #tpu.memory_space<vmem>>, vector<1x4x32x8xbf16>
    %31 = vector.shape_cast %30 : vector<1x4x32x8xbf16> to vector<4x32x8xbf16>
    %c0_40 = arith.constant 0 : index
    %c0_41 = arith.constant 0 : index
    %c0_42 = arith.constant 0 : index
    %c0_43 = arith.constant 0 : index
    %32 = vector.load %arg10[%c0_40, %c0_41, %c0_42, %c0_43] : memref<2x4x1x8xf32, #tpu.memory_space<vmem>>, vector<1x4x1x8xf32>
    %33 = vector.shape_cast %32 : vector<1x4x1x8xf32> to vector<4x1x8xf32>
    %c0_44 = arith.constant 0 : index
    %c0_45 = arith.constant 0 : index
    %c0_46 = arith.constant 0 : index
    %c0_47 = arith.constant 0 : index
    %34 = vector.load %arg11[%c0_44, %c0_45, %c0_46, %c0_47] : memref<2x4x8x32xbf16, #tpu.memory_space<vmem>>, vector<1x4x8x32xbf16>
    %35 = vector.shape_cast %34 : vector<1x4x8x32xbf16> to vector<4x8x32xbf16>
    %c0_48 = arith.constant 0 : index
    %c0_49 = arith.constant 0 : index
    %c0_50 = arith.constant 0 : index
    %36 = vector.load %arg12[%c0_48, %c0_49, %c0_50] : memref<2x1x32xf32, #tpu.memory_space<vmem>>, vector<1x1x32xf32>
    %37 = vector.shape_cast %36 : vector<1x1x32xf32> to vector<1x32xf32>
    "tpu.trace_start"() <{level = 10 : i32, message = "hqe,hed->hqd"}> : () -> ()
    %cst_51 = arith.constant dense<0.000000e+00> : vector<4x8x8xf32>
    %38 = tpu.matmul %21, %23, %cst_51 {dimension_numbers = #tpu.dot_dimension_numbers<[2], [1], [1], [2], [0, 0, 0, 1, 1, 2], [0], [0]>} : vector<4x8x32xbf16>, vector<4x32x8xbf16>, vector<4x8x8xf32> -> vector<4x8x8xf32>
    "tpu.trace_stop"() : () -> ()
    %39 = vector.broadcast %25 : vector<4x1x8xf32> to vector<4x8x8xf32>
    %40 = arith.addf %38, %39 : vector<4x8x8xf32>
    "tpu.trace_start"() <{level = 10 : i32, message = "hke,hed->hkd"}> : () -> ()
    %cst_52 = arith.constant dense<0.000000e+00> : vector<4x8x8xf32>
    %41 = tpu.matmul %21, %27, %cst_52 {dimension_numbers = #tpu.dot_dimension_numbers<[2], [1], [1], [2], [0, 0, 0, 1, 1, 2], [0], [0]>} : vector<4x8x32xbf16>, vector<4x32x8xbf16>, vector<4x8x8xf32> -> vector<4x8x8xf32>
    "tpu.trace_stop"() : () -> ()
    %42 = vector.broadcast %29 : vector<4x1x8xf32> to vector<4x8x8xf32>
    %43 = arith.addf %41, %42 : vector<4x8x8xf32>
    "tpu.trace_start"() <{level = 10 : i32, message = "hke,hed->hkd"}> : () -> ()
    %cst_53 = arith.constant dense<0.000000e+00> : vector<4x8x8xf32>
    %44 = tpu.matmul %21, %31, %cst_53 {dimension_numbers = #tpu.dot_dimension_numbers<[2], [1], [1], [2], [0, 0, 0, 1, 1, 2], [0], [0]>} : vector<4x8x32xbf16>, vector<4x32x8xbf16>, vector<4x8x8xf32> -> vector<4x8x8xf32>
    "tpu.trace_stop"() : () -> ()
    %45 = vector.broadcast %33 : vector<4x1x8xf32> to vector<4x8x8xf32>
    %46 = arith.addf %44, %45 : vector<4x8x8xf32>
    %47 = arith.truncf %40 : vector<4x8x8xf32> to vector<4x8x8xbf16>
    %48 = arith.truncf %43 : vector<4x8x8xf32> to vector<4x8x8xbf16>
    "tpu.trace_start"() <{level = 10 : i32, message = "hqd,hkd->hqk"}> : () -> ()
    %cst_54 = arith.constant dense<0.000000e+00> : vector<4x8x8xf32>
    %49 = tpu.matmul %47, %48, %cst_54 {dimension_numbers = #tpu.dot_dimension_numbers<[2], [2], [1], [1], [0, 0, 0, 1, 1, 1], [0], [0]>} : vector<4x8x8xbf16>, vector<4x8x8xbf16>, vector<4x8x8xf32> -> vector<4x8x8xf32>
    "tpu.trace_stop"() : () -> ()
    %50 = vector.shape_cast %8 : vector<8x8xi1> to vector<1x8x8xi1>
    %cst_55 = arith.constant -1.000000e+09 : f32
    %51 = vector.shape_cast %50 : vector<1x8x8xi1> to vector<1x8x8xi1>
    %52 = vector.broadcast %51 : vector<1x8x8xi1> to vector<4x8x8xi1>
    %53 = vector.broadcast %cst_55 : f32 to vector<4x8x8xf32>
    %54 = arith.select %52, %49, %53 : vector<4x8x8xi1>, vector<4x8x8xf32>
    %cst_56 = arith.constant dense<0xFF800000> : vector<4x8xf32>
    %55 = vector.multi_reduction <maximumf>, %54, %cst_56 [2] : vector<4x8x8xf32> to vector<4x8xf32>
    %56 = vector.shape_cast %55 : vector<4x8xf32> to vector<4x8x1xf32>
    %57 = vector.broadcast %56 : vector<4x8x1xf32> to vector<4x8x8xf32>
    %58 = arith.subf %54, %57 : vector<4x8x8xf32>
    %59 = math.exp %58 : vector<4x8x8xf32>
    %cst_57 = arith.constant dense<0.000000e+00> : vector<4x8xf32>
    %60 = vector.multi_reduction <add>, %59, %cst_57 [2] : vector<4x8x8xf32> to vector<4x8xf32>
    %61 = vector.shape_cast %60 : vector<4x8xf32> to vector<4x8x1xf32>
    %62 = tpu.reciprocal %61 {approx = true} : vector<4x8x1xf32> -> vector<4x8x1xf32>
    %63 = vector.broadcast %62 : vector<4x8x1xf32> to vector<4x8x8xf32>
    %64 = arith.mulf %59, %63 : vector<4x8x8xf32>
    %65 = arith.truncf %64 : vector<4x8x8xf32> to vector<4x8x8xbf16>
    %66 = arith.truncf %46 : vector<4x8x8xf32> to vector<4x8x8xbf16>
    "tpu.trace_start"() <{level = 10 : i32, message = "hqk,hkd->hqd"}> : () -> ()
    %cst_58 = arith.constant dense<0.000000e+00> : vector<4x8x8xf32>
    %67 = tpu.matmul %65, %66, %cst_58 {dimension_numbers = #tpu.dot_dimension_numbers<[2], [1], [1], [2], [0, 0, 0, 1, 1, 2], [0], [0]>} : vector<4x8x8xbf16>, vector<4x8x8xbf16>, vector<4x8x8xf32> -> vector<4x8x8xf32>
    "tpu.trace_stop"() : () -> ()
    %68 = arith.truncf %67 : vector<4x8x8xf32> to vector<4x8x8xbf16>
    "tpu.trace_start"() <{level = 10 : i32, message = "hqd,hde->hqe"}> : () -> ()
    %cst_59 = arith.constant dense<0.000000e+00> : vector<4x8x32xf32>
    %69 = tpu.matmul %68, %35, %cst_59 {dimension_numbers = #tpu.dot_dimension_numbers<[2], [1], [1], [2], [0, 0, 0, 1, 1, 2], [0], [0]>} : vector<4x8x8xbf16>, vector<4x8x32xbf16>, vector<4x8x32xf32> -> vector<4x8x32xf32>
    "tpu.trace_stop"() : () -> ()
    %cst_60 = arith.constant dense<0.000000e+00> : vector<8x32xf32>
    %70 = vector.multi_reduction <add>, %69, %cst_60 [0] : vector<4x8x32xf32> to vector<8x32xf32>
    %71 = vector.broadcast %37 : vector<1x32xf32> to vector<8x32xf32>
    %72 = arith.addf %70, %71 : vector<8x32xf32>
    %73 = arith.addf %72, %1 : vector<8x32xf32>
    %74 = vector.extract_strided_slice %16 {offsets = [0, 0, 0], sizes = [1, 1, 32], strides = [1, 1, 1]} : vector<3x1x32xf32> to vector<1x1x32xf32>
    %75 = vector.shape_cast %74 : vector<1x1x32xf32> to vector<1x32xf32>
    %76 = vector.extract_strided_slice %18 {offsets = [0, 0, 0], sizes = [1, 1, 32], strides = [1, 1, 1]} : vector<3x1x32xf32> to vector<1x1x32xf32>
    %77 = vector.shape_cast %76 : vector<1x1x32xf32> to vector<1x32xf32>
    %cst_61 = arith.constant dense<0.000000e+00> : vector<8xf32>
    %78 = vector.multi_reduction <add>, %73, %cst_61 [1] : vector<8x32xf32> to vector<8xf32>
    %79 = vector.shape_cast %78 : vector<8xf32> to vector<8x1xf32>
    %cst_62 = arith.constant 3.200000e+01 : f32
    %80 = vector.broadcast %cst_62 : f32 to vector<8x1xf32>
    %81 = arith.divf %79, %80 : vector<8x1xf32>
    %82 = arith.mulf %73, %73 : vector<8x32xf32>
    %cst_63 = arith.constant dense<0.000000e+00> : vector<8xf32>
    %83 = vector.multi_reduction <add>, %82, %cst_63 [1] : vector<8x32xf32> to vector<8xf32>
    %84 = vector.shape_cast %83 : vector<8xf32> to vector<8x1xf32>
    %cst_64 = arith.constant 3.200000e+01 : f32
    %85 = vector.broadcast %cst_64 : f32 to vector<8x1xf32>
    %86 = arith.divf %84, %85 : vector<8x1xf32>
    %87 = arith.mulf %81, %81 : vector<8x1xf32>
    %88 = arith.subf %86, %87 : vector<8x1xf32>
    %89 = vector.broadcast %81 : vector<8x1xf32> to vector<8x32xf32>
    %90 = arith.subf %73, %89 : vector<8x32xf32>
    %cst_65 = arith.constant 9.99999974E-6 : f32
    %91 = vector.broadcast %cst_65 : f32 to vector<8x1xf32>
    %92 = arith.addf %88, %91 : vector<8x1xf32>
    %93 = math.rsqrt %92 : vector<8x1xf32>
    %94 = vector.broadcast %93 : vector<8x1xf32> to vector<8x32xf32>
    %95 = arith.mulf %90, %94 : vector<8x32xf32>
    %96 = vector.broadcast %75 : vector<1x32xf32> to vector<8x32xf32>
    %97 = arith.mulf %95, %96 : vector<8x32xf32>
    %98 = vector.broadcast %77 : vector<1x32xf32> to vector<8x32xf32>
    %99 = arith.addf %97, %98 : vector<8x32xf32>
    %100 = arith.truncf %99 : vector<8x32xf32> to vector<8x32xbf16>
    %101 = vector.shape_cast %100 : vector<8x32xbf16> to vector<1x8x32xbf16>
    %102 = vector.broadcast %101 : vector<1x8x32xbf16> to vector<4x8x32xbf16>
    %c0_66 = arith.constant 0 : index
    %c0_67 = arith.constant 0 : index
    %c0_68 = arith.constant 0 : index
    %c0_69 = arith.constant 0 : index
    %103 = vector.load %arg13[%c0_66, %c0_67, %c0_68, %c0_69] : memref<2x4x32x8xbf16, #tpu.memory_space<vmem>>, vector<1x4x32x8xbf16>
    %104 = vector.shape_cast %103 : vector<1x4x32x8xbf16> to vector<4x32x8xbf16>
    %c0_70 = arith.constant 0 : index
    %c0_71 = arith.constant 0 : index
    %c0_72 = arith.constant 0 : index
    %c0_73 = arith.constant 0 : index
    %105 = vector.load %arg14[%c0_70, %c0_71, %c0_72, %c0_73] : memref<2x4x1x8xf32, #tpu.memory_space<vmem>>, vector<1x4x1x8xf32>
    %106 = vector.shape_cast %105 : vector<1x4x1x8xf32> to vector<4x1x8xf32>
    %c0_74 = arith.constant 0 : index
    %c0_75 = arith.constant 0 : index
    %c0_76 = arith.constant 0 : index
    %c0_77 = arith.constant 0 : index
    %107 = vector.load %arg15[%c0_74, %c0_75, %c0_76, %c0_77] : memref<2x4x32x8xbf16, #tpu.memory_space<vmem>>, vector<1x4x32x8xbf16>
    %108 = vector.shape_cast %107 : vector<1x4x32x8xbf16> to vector<4x32x8xbf16>
    %c0_78 = arith.constant 0 : index
    %c0_79 = arith.constant 0 : index
    %c0_80 = arith.constant 0 : index
    %c0_81 = arith.constant 0 : index
    %109 = vector.load %arg16[%c0_78, %c0_79, %c0_80, %c0_81] : memref<2x4x1x8xf32, #tpu.memory_space<vmem>>, vector<1x4x1x8xf32>
    %110 = vector.shape_cast %109 : vector<1x4x1x8xf32> to vector<4x1x8xf32>
    %c0_82 = arith.constant 0 : index
    %c0_83 = arith.constant 0 : index
    %c0_84 = arith.constant 0 : index
    %c0_85 = arith.constant 0 : index
    %111 = vector.load %arg17[%c0_82, %c0_83, %c0_84, %c0_85] : memref<2x4x32x8xbf16, #tpu.memory_space<vmem>>, vector<1x4x32x8xbf16>
    %112 = vector.shape_cast %111 : vector<1x4x32x8xbf16> to vector<4x32x8xbf16>
    %c0_86 = arith.constant 0 : index
    %c0_87 = arith.constant 0 : index
    %c0_88 = arith.constant 0 : index
    %c0_89 = arith.constant 0 : index
    %113 = vector.load %arg18[%c0_86, %c0_87, %c0_88, %c0_89] : memref<2x4x1x8xf32, #tpu.memory_space<vmem>>, vector<1x4x1x8xf32>
    %114 = vector.shape_cast %113 : vector<1x4x1x8xf32> to vector<4x1x8xf32>
    %c0_90 = arith.constant 0 : index
    %c0_91 = arith.constant 0 : index
    %c0_92 = arith.constant 0 : index
    %c0_93 = arith.constant 0 : index
    %115 = vector.load %arg19[%c0_90, %c0_91, %c0_92, %c0_93] : memref<2x4x8x32xbf16, #tpu.memory_space<vmem>>, vector<1x4x8x32xbf16>
    %116 = vector.shape_cast %115 : vector<1x4x8x32xbf16> to vector<4x8x32xbf16>
    %c0_94 = arith.constant 0 : index
    %c0_95 = arith.constant 0 : index
    %c0_96 = arith.constant 0 : index
    %117 = vector.load %arg20[%c0_94, %c0_95, %c0_96] : memref<2x1x32xf32, #tpu.memory_space<vmem>>, vector<1x1x32xf32>
    %118 = vector.shape_cast %117 : vector<1x1x32xf32> to vector<1x32xf32>
    "tpu.trace_start"() <{level = 10 : i32, message = "hqe,hed->hqd"}> : () -> ()
    %cst_97 = arith.constant dense<0.000000e+00> : vector<4x8x8xf32>
    %119 = tpu.matmul %102, %104, %cst_97 {dimension_numbers = #tpu.dot_dimension_numbers<[2], [1], [1], [2], [0, 0, 0, 1, 1, 2], [0], [0]>} : vector<4x8x32xbf16>, vector<4x32x8xbf16>, vector<4x8x8xf32> -> vector<4x8x8xf32>
    "tpu.trace_stop"() : () -> ()
    %120 = vector.broadcast %106 : vector<4x1x8xf32> to vector<4x8x8xf32>
    %121 = arith.addf %119, %120 : vector<4x8x8xf32>
    "tpu.trace_start"() <{level = 10 : i32, message = "hke,hed->hkd"}> : () -> ()
    %cst_98 = arith.constant dense<0.000000e+00> : vector<4x8x8xf32>
    %122 = tpu.matmul %14, %108, %cst_98 {dimension_numbers = #tpu.dot_dimension_numbers<[2], [1], [1], [2], [0, 0, 0, 1, 1, 2], [0], [0]>} : vector<4x8x32xbf16>, vector<4x32x8xbf16>, vector<4x8x8xf32> -> vector<4x8x8xf32>
    "tpu.trace_stop"() : () -> ()
    %123 = vector.broadcast %110 : vector<4x1x8xf32> to vector<4x8x8xf32>
    %124 = arith.addf %122, %123 : vector<4x8x8xf32>
    "tpu.trace_start"() <{level = 10 : i32, message = "hke,hed->hkd"}> : () -> ()
    %cst_99 = arith.constant dense<0.000000e+00> : vector<4x8x8xf32>
    %125 = tpu.matmul %14, %112, %cst_99 {dimension_numbers = #tpu.dot_dimension_numbers<[2], [1], [1], [2], [0, 0, 0, 1, 1, 2], [0], [0]>} : vector<4x8x32xbf16>, vector<4x32x8xbf16>, vector<4x8x8xf32> -> vector<4x8x8xf32>
    "tpu.trace_stop"() : () -> ()
    %126 = vector.broadcast %114 : vector<4x1x8xf32> to vector<4x8x8xf32>
    %127 = arith.addf %125, %126 : vector<4x8x8xf32>
    %128 = arith.truncf %121 : vector<4x8x8xf32> to vector<4x8x8xbf16>
    %129 = arith.truncf %124 : vector<4x8x8xf32> to vector<4x8x8xbf16>
    "tpu.trace_start"() <{level = 10 : i32, message = "hqd,hkd->hqk"}> : () -> ()
    %cst_100 = arith.constant dense<0.000000e+00> : vector<4x8x8xf32>
    %130 = tpu.matmul %128, %129, %cst_100 {dimension_numbers = #tpu.dot_dimension_numbers<[2], [2], [1], [1], [0, 0, 0, 1, 1, 1], [0], [0]>} : vector<4x8x8xbf16>, vector<4x8x8xbf16>, vector<4x8x8xf32> -> vector<4x8x8xf32>
    "tpu.trace_stop"() : () -> ()
    %131 = vector.shape_cast %12 : vector<8x8xi1> to vector<1x8x8xi1>
    %cst_101 = arith.constant -1.000000e+09 : f32
    %132 = vector.shape_cast %131 : vector<1x8x8xi1> to vector<1x8x8xi1>
    %133 = vector.broadcast %132 : vector<1x8x8xi1> to vector<4x8x8xi1>
    %134 = vector.broadcast %cst_101 : f32 to vector<4x8x8xf32>
    %135 = arith.select %133, %130, %134 : vector<4x8x8xi1>, vector<4x8x8xf32>
    %cst_102 = arith.constant dense<0xFF800000> : vector<4x8xf32>
    %136 = vector.multi_reduction <maximumf>, %135, %cst_102 [2] : vector<4x8x8xf32> to vector<4x8xf32>
    %137 = vector.shape_cast %136 : vector<4x8xf32> to vector<4x8x1xf32>
    %138 = vector.broadcast %137 : vector<4x8x1xf32> to vector<4x8x8xf32>
    %139 = arith.subf %135, %138 : vector<4x8x8xf32>
    %140 = math.exp %139 : vector<4x8x8xf32>
    %cst_103 = arith.constant dense<0.000000e+00> : vector<4x8xf32>
    %141 = vector.multi_reduction <add>, %140, %cst_103 [2] : vector<4x8x8xf32> to vector<4x8xf32>
    %142 = vector.shape_cast %141 : vector<4x8xf32> to vector<4x8x1xf32>
    %143 = tpu.reciprocal %142 {approx = true} : vector<4x8x1xf32> -> vector<4x8x1xf32>
    %144 = vector.broadcast %143 : vector<4x8x1xf32> to vector<4x8x8xf32>
    %145 = arith.mulf %140, %144 : vector<4x8x8xf32>
    %146 = arith.truncf %145 : vector<4x8x8xf32> to vector<4x8x8xbf16>
    %147 = arith.truncf %127 : vector<4x8x8xf32> to vector<4x8x8xbf16>
    "tpu.trace_start"() <{level = 10 : i32, message = "hqk,hkd->hqd"}> : () -> ()
    %cst_104 = arith.constant dense<0.000000e+00> : vector<4x8x8xf32>
    %148 = tpu.matmul %146, %147, %cst_104 {dimension_numbers = #tpu.dot_dimension_numbers<[2], [1], [1], [2], [0, 0, 0, 1, 1, 2], [0], [0]>} : vector<4x8x8xbf16>, vector<4x8x8xbf16>, vector<4x8x8xf32> -> vector<4x8x8xf32>
    "tpu.trace_stop"() : () -> ()
    %149 = arith.truncf %148 : vector<4x8x8xf32> to vector<4x8x8xbf16>
    "tpu.trace_start"() <{level = 10 : i32, message = "hqd,hde->hqe"}> : () -> ()
    %cst_105 = arith.constant dense<0.000000e+00> : vector<4x8x32xf32>
    %150 = tpu.matmul %149, %116, %cst_105 {dimension_numbers = #tpu.dot_dimension_numbers<[2], [1], [1], [2], [0, 0, 0, 1, 1, 2], [0], [0]>} : vector<4x8x8xbf16>, vector<4x8x32xbf16>, vector<4x8x32xf32> -> vector<4x8x32xf32>
    "tpu.trace_stop"() : () -> ()
    %cst_106 = arith.constant dense<0.000000e+00> : vector<8x32xf32>
    %151 = vector.multi_reduction <add>, %150, %cst_106 [0] : vector<4x8x32xf32> to vector<8x32xf32>
    %152 = vector.broadcast %118 : vector<1x32xf32> to vector<8x32xf32>
    %153 = arith.addf %151, %152 : vector<8x32xf32>
    %154 = arith.addf %153, %99 : vector<8x32xf32>
    %155 = vector.extract_strided_slice %16 {offsets = [1, 0, 0], sizes = [1, 1, 32], strides = [1, 1, 1]} : vector<3x1x32xf32> to vector<1x1x32xf32>
    %156 = vector.shape_cast %155 : vector<1x1x32xf32> to vector<1x32xf32>
    %157 = vector.extract_strided_slice %18 {offsets = [1, 0, 0], sizes = [1, 1, 32], strides = [1, 1, 1]} : vector<3x1x32xf32> to vector<1x1x32xf32>
    %158 = vector.shape_cast %157 : vector<1x1x32xf32> to vector<1x32xf32>
    %cst_107 = arith.constant dense<0.000000e+00> : vector<8xf32>
    %159 = vector.multi_reduction <add>, %154, %cst_107 [1] : vector<8x32xf32> to vector<8xf32>
    %160 = vector.shape_cast %159 : vector<8xf32> to vector<8x1xf32>
    %cst_108 = arith.constant 3.200000e+01 : f32
    %161 = vector.broadcast %cst_108 : f32 to vector<8x1xf32>
    %162 = arith.divf %160, %161 : vector<8x1xf32>
    %163 = arith.mulf %154, %154 : vector<8x32xf32>
    %cst_109 = arith.constant dense<0.000000e+00> : vector<8xf32>
    %164 = vector.multi_reduction <add>, %163, %cst_109 [1] : vector<8x32xf32> to vector<8xf32>
    %165 = vector.shape_cast %164 : vector<8xf32> to vector<8x1xf32>
    %cst_110 = arith.constant 3.200000e+01 : f32
    %166 = vector.broadcast %cst_110 : f32 to vector<8x1xf32>
    %167 = arith.divf %165, %166 : vector<8x1xf32>
    %168 = arith.mulf %162, %162 : vector<8x1xf32>
    %169 = arith.subf %167, %168 : vector<8x1xf32>
    %170 = vector.broadcast %162 : vector<8x1xf32> to vector<8x32xf32>
    %171 = arith.subf %154, %170 : vector<8x32xf32>
    %cst_111 = arith.constant 9.99999974E-6 : f32
    %172 = vector.broadcast %cst_111 : f32 to vector<8x1xf32>
    %173 = arith.addf %169, %172 : vector<8x1xf32>
    %174 = math.rsqrt %173 : vector<8x1xf32>
    %175 = vector.broadcast %174 : vector<8x1xf32> to vector<8x32xf32>
    %176 = arith.mulf %171, %175 : vector<8x32xf32>
    %177 = vector.broadcast %156 : vector<1x32xf32> to vector<8x32xf32>
    %178 = arith.mulf %176, %177 : vector<8x32xf32>
    %179 = vector.broadcast %158 : vector<1x32xf32> to vector<8x32xf32>
    %180 = arith.addf %178, %179 : vector<8x32xf32>
    %181 = arith.truncf %180 : vector<8x32xf32> to vector<8x32xbf16>
    %c0_112 = arith.constant 0 : index
    %c0_113 = arith.constant 0 : index
    %c0_114 = arith.constant 0 : index
    %182 = vector.load %arg21[%c0_112, %c0_113, %c0_114] : memref<2x32x64xbf16, #tpu.memory_space<vmem>>, vector<1x32x64xbf16>
    %183 = vector.shape_cast %182 : vector<1x32x64xbf16> to vector<32x64xbf16>
    %cst_115 = arith.constant dense<0.000000e+00> : vector<8x64xf32>
    %184 = tpu.matmul %181, %183, %cst_115 {dimension_numbers = #tpu.dot_dimension_numbers<[1], [0], [0], [1], [0, 0, 1, 1], [], []>} : vector<8x32xbf16>, vector<32x64xbf16>, vector<8x64xf32> -> vector<8x64xf32>
    %c0_116 = arith.constant 0 : index
    %c0_117 = arith.constant 0 : index
    %c0_118 = arith.constant 0 : index
    %185 = vector.load %arg22[%c0_116, %c0_117, %c0_118] : memref<2x1x64xf32, #tpu.memory_space<vmem>>, vector<1x1x64xf32>
    %186 = vector.shape_cast %185 : vector<1x1x64xf32> to vector<1x64xf32>
    %187 = vector.broadcast %186 : vector<1x64xf32> to vector<8x64xf32>
    %188 = arith.addf %184, %187 : vector<8x64xf32>
    %cst_119 = arith.constant 0.000000e+00 : f32
    %189 = vector.broadcast %cst_119 : f32 to vector<8x64xf32>
    %190 = arith.maximumf %188, %189 : vector<8x64xf32>
    %191 = arith.truncf %190 : vector<8x64xf32> to vector<8x64xbf16>
    %c0_120 = arith.constant 0 : index
    %c0_121 = arith.constant 0 : index
    %c0_122 = arith.constant 0 : index
    %192 = vector.load %arg23[%c0_120, %c0_121, %c0_122] : memref<2x64x32xbf16, #tpu.memory_space<vmem>>, vector<1x64x32xbf16>
    %193 = vector.shape_cast %192 : vector<1x64x32xbf16> to vector<64x32xbf16>
    %cst_123 = arith.constant dense<0.000000e+00> : vector<8x32xf32>
    %194 = tpu.matmul %191, %193, %cst_123 {dimension_numbers = #tpu.dot_dimension_numbers<[1], [0], [0], [1], [0, 0, 1, 1], [], []>} : vector<8x64xbf16>, vector<64x32xbf16>, vector<8x32xf32> -> vector<8x32xf32>
    %c0_124 = arith.constant 0 : index
    %c0_125 = arith.constant 0 : index
    %c0_126 = arith.constant 0 : index
    %195 = vector.load %arg24[%c0_124, %c0_125, %c0_126] : memref<2x1x32xf32, #tpu.memory_space<vmem>>, vector<1x1x32xf32>
    %196 = vector.shape_cast %195 : vector<1x1x32xf32> to vector<1x32xf32>
    %197 = vector.broadcast %196 : vector<1x32xf32> to vector<8x32xf32>
    %198 = arith.addf %194, %197 : vector<8x32xf32>
    %199 = arith.addf %198, %180 : vector<8x32xf32>
    %200 = vector.extract_strided_slice %16 {offsets = [2, 0, 0], sizes = [1, 1, 32], strides = [1, 1, 1]} : vector<3x1x32xf32> to vector<1x1x32xf32>
    %201 = vector.shape_cast %200 : vector<1x1x32xf32> to vector<1x32xf32>
    %202 = vector.extract_strided_slice %18 {offsets = [2, 0, 0], sizes = [1, 1, 32], strides = [1, 1, 1]} : vector<3x1x32xf32> to vector<1x1x32xf32>
    %203 = vector.shape_cast %202 : vector<1x1x32xf32> to vector<1x32xf32>
    %cst_127 = arith.constant dense<0.000000e+00> : vector<8xf32>
    %204 = vector.multi_reduction <add>, %199, %cst_127 [1] : vector<8x32xf32> to vector<8xf32>
    %205 = vector.shape_cast %204 : vector<8xf32> to vector<8x1xf32>
    %cst_128 = arith.constant 3.200000e+01 : f32
    %206 = vector.broadcast %cst_128 : f32 to vector<8x1xf32>
    %207 = arith.divf %205, %206 : vector<8x1xf32>
    %208 = arith.mulf %199, %199 : vector<8x32xf32>
    %cst_129 = arith.constant dense<0.000000e+00> : vector<8xf32>
    %209 = vector.multi_reduction <add>, %208, %cst_129 [1] : vector<8x32xf32> to vector<8xf32>
    %210 = vector.shape_cast %209 : vector<8xf32> to vector<8x1xf32>
    %cst_130 = arith.constant 3.200000e+01 : f32
    %211 = vector.broadcast %cst_130 : f32 to vector<8x1xf32>
    %212 = arith.divf %210, %211 : vector<8x1xf32>
    %213 = arith.mulf %207, %207 : vector<8x1xf32>
    %214 = arith.subf %212, %213 : vector<8x1xf32>
    %215 = vector.broadcast %207 : vector<8x1xf32> to vector<8x32xf32>
    %216 = arith.subf %199, %215 : vector<8x32xf32>
    %cst_131 = arith.constant 9.99999974E-6 : f32
    %217 = vector.broadcast %cst_131 : f32 to vector<8x1xf32>
    %218 = arith.addf %214, %217 : vector<8x1xf32>
    %219 = math.rsqrt %218 : vector<8x1xf32>
    %220 = vector.broadcast %219 : vector<8x1xf32> to vector<8x32xf32>
    %221 = arith.mulf %216, %220 : vector<8x32xf32>
    %222 = vector.broadcast %201 : vector<1x32xf32> to vector<8x32xf32>
    %223 = arith.mulf %221, %222 : vector<8x32xf32>
    %224 = vector.broadcast %203 : vector<1x32xf32> to vector<8x32xf32>
    %225 = arith.addf %223, %224 : vector<8x32xf32>
    %c1 = arith.constant 1 : index
    %c0_132 = arith.constant 0 : index
    %c0_133 = arith.constant 0 : index
    %c0_134 = arith.constant 0 : index
    %226 = vector.load %arg25[%c1, %c0_132, %c0_133, %c0_134] : memref<2x3x1x32xf32, #tpu.memory_space<vmem>>, vector<1x3x1x32xf32>
    %227 = vector.shape_cast %226 : vector<1x3x1x32xf32> to vector<3x1x32xf32>
    %c1_135 = arith.constant 1 : index
    %c0_136 = arith.constant 0 : index
    %c0_137 = arith.constant 0 : index
    %c0_138 = arith.constant 0 : index
    %228 = vector.load %arg26[%c1_135, %c0_136, %c0_137, %c0_138] : memref<2x3x1x32xf32, #tpu.memory_space<vmem>>, vector<1x3x1x32xf32>
    %229 = vector.shape_cast %228 : vector<1x3x1x32xf32> to vector<3x1x32xf32>
    %230 = arith.truncf %225 : vector<8x32xf32> to vector<8x32xbf16>
    %231 = vector.shape_cast %230 : vector<8x32xbf16> to vector<1x8x32xbf16>
    %232 = vector.broadcast %231 : vector<1x8x32xbf16> to vector<4x8x32xbf16>
    %c1_139 = arith.constant 1 : index
    %c0_140 = arith.constant 0 : index
    %c0_141 = arith.constant 0 : index
    %c0_142 = arith.constant 0 : index
    %233 = vector.load %arg5[%c1_139, %c0_140, %c0_141, %c0_142] : memref<2x4x32x8xbf16, #tpu.memory_space<vmem>>, vector<1x4x32x8xbf16>
    %234 = vector.shape_cast %233 : vector<1x4x32x8xbf16> to vector<4x32x8xbf16>
    %c1_143 = arith.constant 1 : index
    %c0_144 = arith.constant 0 : index
    %c0_145 = arith.constant 0 : index
    %c0_146 = arith.constant 0 : index
    %235 = vector.load %arg6[%c1_143, %c0_144, %c0_145, %c0_146] : memref<2x4x1x8xf32, #tpu.memory_space<vmem>>, vector<1x4x1x8xf32>
    %236 = vector.shape_cast %235 : vector<1x4x1x8xf32> to vector<4x1x8xf32>
    %c1_147 = arith.constant 1 : index
    %c0_148 = arith.constant 0 : index
    %c0_149 = arith.constant 0 : index
    %c0_150 = arith.constant 0 : index
    %237 = vector.load %arg7[%c1_147, %c0_148, %c0_149, %c0_150] : memref<2x4x32x8xbf16, #tpu.memory_space<vmem>>, vector<1x4x32x8xbf16>
    %238 = vector.shape_cast %237 : vector<1x4x32x8xbf16> to vector<4x32x8xbf16>
    %c1_151 = arith.constant 1 : index
    %c0_152 = arith.constant 0 : index
    %c0_153 = arith.constant 0 : index
    %c0_154 = arith.constant 0 : index
    %239 = vector.load %arg8[%c1_151, %c0_152, %c0_153, %c0_154] : memref<2x4x1x8xf32, #tpu.memory_space<vmem>>, vector<1x4x1x8xf32>
    %240 = vector.shape_cast %239 : vector<1x4x1x8xf32> to vector<4x1x8xf32>
    %c1_155 = arith.constant 1 : index
    %c0_156 = arith.constant 0 : index
    %c0_157 = arith.constant 0 : index
    %c0_158 = arith.constant 0 : index
    %241 = vector.load %arg9[%c1_155, %c0_156, %c0_157, %c0_158] : memref<2x4x32x8xbf16, #tpu.memory_space<vmem>>, vector<1x4x32x8xbf16>
    %242 = vector.shape_cast %241 : vector<1x4x32x8xbf16> to vector<4x32x8xbf16>
    %c1_159 = arith.constant 1 : index
    %c0_160 = arith.constant 0 : index
    %c0_161 = arith.constant 0 : index
    %c0_162 = arith.constant 0 : index
    %243 = vector.load %arg10[%c1_159, %c0_160, %c0_161, %c0_162] : memref<2x4x1x8xf32, #tpu.memory_space<vmem>>, vector<1x4x1x8xf32>
    %244 = vector.shape_cast %243 : vector<1x4x1x8xf32> to vector<4x1x8xf32>
    %c1_163 = arith.constant 1 : index
    %c0_164 = arith.constant 0 : index
    %c0_165 = arith.constant 0 : index
    %c0_166 = arith.constant 0 : index
    %245 = vector.load %arg11[%c1_163, %c0_164, %c0_165, %c0_166] : memref<2x4x8x32xbf16, #tpu.memory_space<vmem>>, vector<1x4x8x32xbf16>
    %246 = vector.shape_cast %245 : vector<1x4x8x32xbf16> to vector<4x8x32xbf16>
    %c1_167 = arith.constant 1 : index
    %c0_168 = arith.constant 0 : index
    %c0_169 = arith.constant 0 : index
    %247 = vector.load %arg12[%c1_167, %c0_168, %c0_169] : memref<2x1x32xf32, #tpu.memory_space<vmem>>, vector<1x1x32xf32>
    %248 = vector.shape_cast %247 : vector<1x1x32xf32> to vector<1x32xf32>
    "tpu.trace_start"() <{level = 10 : i32, message = "hqe,hed->hqd"}> : () -> ()
    %cst_170 = arith.constant dense<0.000000e+00> : vector<4x8x8xf32>
    %249 = tpu.matmul %232, %234, %cst_170 {dimension_numbers = #tpu.dot_dimension_numbers<[2], [1], [1], [2], [0, 0, 0, 1, 1, 2], [0], [0]>} : vector<4x8x32xbf16>, vector<4x32x8xbf16>, vector<4x8x8xf32> -> vector<4x8x8xf32>
    "tpu.trace_stop"() : () -> ()
    %250 = vector.broadcast %236 : vector<4x1x8xf32> to vector<4x8x8xf32>
    %251 = arith.addf %249, %250 : vector<4x8x8xf32>
    "tpu.trace_start"() <{level = 10 : i32, message = "hke,hed->hkd"}> : () -> ()
    %cst_171 = arith.constant dense<0.000000e+00> : vector<4x8x8xf32>
    %252 = tpu.matmul %232, %238, %cst_171 {dimension_numbers = #tpu.dot_dimension_numbers<[2], [1], [1], [2], [0, 0, 0, 1, 1, 2], [0], [0]>} : vector<4x8x32xbf16>, vector<4x32x8xbf16>, vector<4x8x8xf32> -> vector<4x8x8xf32>
    "tpu.trace_stop"() : () -> ()
    %253 = vector.broadcast %240 : vector<4x1x8xf32> to vector<4x8x8xf32>
    %254 = arith.addf %252, %253 : vector<4x8x8xf32>
    "tpu.trace_start"() <{level = 10 : i32, message = "hke,hed->hkd"}> : () -> ()
    %cst_172 = arith.constant dense<0.000000e+00> : vector<4x8x8xf32>
    %255 = tpu.matmul %232, %242, %cst_172 {dimension_numbers = #tpu.dot_dimension_numbers<[2], [1], [1], [2], [0, 0, 0, 1, 1, 2], [0], [0]>} : vector<4x8x32xbf16>, vector<4x32x8xbf16>, vector<4x8x8xf32> -> vector<4x8x8xf32>
    "tpu.trace_stop"() : () -> ()
    %256 = vector.broadcast %244 : vector<4x1x8xf32> to vector<4x8x8xf32>
    %257 = arith.addf %255, %256 : vector<4x8x8xf32>
    %258 = arith.truncf %251 : vector<4x8x8xf32> to vector<4x8x8xbf16>
    %259 = arith.truncf %254 : vector<4x8x8xf32> to vector<4x8x8xbf16>
    "tpu.trace_start"() <{level = 10 : i32, message = "hqd,hkd->hqk"}> : () -> ()
    %cst_173 = arith.constant dense<0.000000e+00> : vector<4x8x8xf32>
    %260 = tpu.matmul %258, %259, %cst_173 {dimension_numbers = #tpu.dot_dimension_numbers<[2], [2], [1], [1], [0, 0, 0, 1, 1, 1], [0], [0]>} : vector<4x8x8xbf16>, vector<4x8x8xbf16>, vector<4x8x8xf32> -> vector<4x8x8xf32>
    "tpu.trace_stop"() : () -> ()
    %261 = vector.shape_cast %8 : vector<8x8xi1> to vector<1x8x8xi1>
    %cst_174 = arith.constant -1.000000e+09 : f32
    %262 = vector.shape_cast %261 : vector<1x8x8xi1> to vector<1x8x8xi1>
    %263 = vector.broadcast %262 : vector<1x8x8xi1> to vector<4x8x8xi1>
    %264 = vector.broadcast %cst_174 : f32 to vector<4x8x8xf32>
    %265 = arith.select %263, %260, %264 : vector<4x8x8xi1>, vector<4x8x8xf32>
    %cst_175 = arith.constant dense<0xFF800000> : vector<4x8xf32>
    %266 = vector.multi_reduction <maximumf>, %265, %cst_175 [2] : vector<4x8x8xf32> to vector<4x8xf32>
    %267 = vector.shape_cast %266 : vector<4x8xf32> to vector<4x8x1xf32>
    %268 = vector.broadcast %267 : vector<4x8x1xf32> to vector<4x8x8xf32>
    %269 = arith.subf %265, %268 : vector<4x8x8xf32>
    %270 = math.exp %269 : vector<4x8x8xf32>
    %cst_176 = arith.constant dense<0.000000e+00> : vector<4x8xf32>
    %271 = vector.multi_reduction <add>, %270, %cst_176 [2] : vector<4x8x8xf32> to vector<4x8xf32>
    %272 = vector.shape_cast %271 : vector<4x8xf32> to vector<4x8x1xf32>
    %273 = tpu.reciprocal %272 {approx = true} : vector<4x8x1xf32> -> vector<4x8x1xf32>
    %274 = vector.broadcast %273 : vector<4x8x1xf32> to vector<4x8x8xf32>
    %275 = arith.mulf %270, %274 : vector<4x8x8xf32>
    %276 = arith.truncf %275 : vector<4x8x8xf32> to vector<4x8x8xbf16>
    %277 = arith.truncf %257 : vector<4x8x8xf32> to vector<4x8x8xbf16>
    "tpu.trace_start"() <{level = 10 : i32, message = "hqk,hkd->hqd"}> : () -> ()
    %cst_177 = arith.constant dense<0.000000e+00> : vector<4x8x8xf32>
    %278 = tpu.matmul %276, %277, %cst_177 {dimension_numbers = #tpu.dot_dimension_numbers<[2], [1], [1], [2], [0, 0, 0, 1, 1, 2], [0], [0]>} : vector<4x8x8xbf16>, vector<4x8x8xbf16>, vector<4x8x8xf32> -> vector<4x8x8xf32>
    "tpu.trace_stop"() : () -> ()
    %279 = arith.truncf %278 : vector<4x8x8xf32> to vector<4x8x8xbf16>
    "tpu.trace_start"() <{level = 10 : i32, message = "hqd,hde->hqe"}> : () -> ()
    %cst_178 = arith.constant dense<0.000000e+00> : vector<4x8x32xf32>
    %280 = tpu.matmul %279, %246, %cst_178 {dimension_numbers = #tpu.dot_dimension_numbers<[2], [1], [1], [2], [0, 0, 0, 1, 1, 2], [0], [0]>} : vector<4x8x8xbf16>, vector<4x8x32xbf16>, vector<4x8x32xf32> -> vector<4x8x32xf32>
    "tpu.trace_stop"() : () -> ()
    %cst_179 = arith.constant dense<0.000000e+00> : vector<8x32xf32>
    %281 = vector.multi_reduction <add>, %280, %cst_179 [0] : vector<4x8x32xf32> to vector<8x32xf32>
    %282 = vector.broadcast %248 : vector<1x32xf32> to vector<8x32xf32>
    %283 = arith.addf %281, %282 : vector<8x32xf32>
    %284 = arith.addf %283, %225 : vector<8x32xf32>
    %285 = vector.extract_strided_slice %227 {offsets = [0, 0, 0], sizes = [1, 1, 32], strides = [1, 1, 1]} : vector<3x1x32xf32> to vector<1x1x32xf32>
    %286 = vector.shape_cast %285 : vector<1x1x32xf32> to vector<1x32xf32>
    %287 = vector.extract_strided_slice %229 {offsets = [0, 0, 0], sizes = [1, 1, 32], strides = [1, 1, 1]} : vector<3x1x32xf32> to vector<1x1x32xf32>
    %288 = vector.shape_cast %287 : vector<1x1x32xf32> to vector<1x32xf32>
    %cst_180 = arith.constant dense<0.000000e+00> : vector<8xf32>
    %289 = vector.multi_reduction <add>, %284, %cst_180 [1] : vector<8x32xf32> to vector<8xf32>
    %290 = vector.shape_cast %289 : vector<8xf32> to vector<8x1xf32>
    %cst_181 = arith.constant 3.200000e+01 : f32
    %291 = vector.broadcast %cst_181 : f32 to vector<8x1xf32>
    %292 = arith.divf %290, %291 : vector<8x1xf32>
    %293 = arith.mulf %284, %284 : vector<8x32xf32>
    %cst_182 = arith.constant dense<0.000000e+00> : vector<8xf32>
    %294 = vector.multi_reduction <add>, %293, %cst_182 [1] : vector<8x32xf32> to vector<8xf32>
    %295 = vector.shape_cast %294 : vector<8xf32> to vector<8x1xf32>
    %cst_183 = arith.constant 3.200000e+01 : f32
    %296 = vector.broadcast %cst_183 : f32 to vector<8x1xf32>
    %297 = arith.divf %295, %296 : vector<8x1xf32>
    %298 = arith.mulf %292, %292 : vector<8x1xf32>
    %299 = arith.subf %297, %298 : vector<8x1xf32>
    %300 = vector.broadcast %292 : vector<8x1xf32> to vector<8x32xf32>
    %301 = arith.subf %284, %300 : vector<8x32xf32>
    %cst_184 = arith.constant 9.99999974E-6 : f32
    %302 = vector.broadcast %cst_184 : f32 to vector<8x1xf32>
    %303 = arith.addf %299, %302 : vector<8x1xf32>
    %304 = math.rsqrt %303 : vector<8x1xf32>
    %305 = vector.broadcast %304 : vector<8x1xf32> to vector<8x32xf32>
    %306 = arith.mulf %301, %305 : vector<8x32xf32>
    %307 = vector.broadcast %286 : vector<1x32xf32> to vector<8x32xf32>
    %308 = arith.mulf %306, %307 : vector<8x32xf32>
    %309 = vector.broadcast %288 : vector<1x32xf32> to vector<8x32xf32>
    %310 = arith.addf %308, %309 : vector<8x32xf32>
    %311 = arith.truncf %310 : vector<8x32xf32> to vector<8x32xbf16>
    %312 = vector.shape_cast %311 : vector<8x32xbf16> to vector<1x8x32xbf16>
    %313 = vector.broadcast %312 : vector<1x8x32xbf16> to vector<4x8x32xbf16>
    %c1_185 = arith.constant 1 : index
    %c0_186 = arith.constant 0 : index
    %c0_187 = arith.constant 0 : index
    %c0_188 = arith.constant 0 : index
    %314 = vector.load %arg13[%c1_185, %c0_186, %c0_187, %c0_188] : memref<2x4x32x8xbf16, #tpu.memory_space<vmem>>, vector<1x4x32x8xbf16>
    %315 = vector.shape_cast %314 : vector<1x4x32x8xbf16> to vector<4x32x8xbf16>
    %c1_189 = arith.constant 1 : index
    %c0_190 = arith.constant 0 : index
    %c0_191 = arith.constant 0 : index
    %c0_192 = arith.constant 0 : index
    %316 = vector.load %arg14[%c1_189, %c0_190, %c0_191, %c0_192] : memref<2x4x1x8xf32, #tpu.memory_space<vmem>>, vector<1x4x1x8xf32>
    %317 = vector.shape_cast %316 : vector<1x4x1x8xf32> to vector<4x1x8xf32>
    %c1_193 = arith.constant 1 : index
    %c0_194 = arith.constant 0 : index
    %c0_195 = arith.constant 0 : index
    %c0_196 = arith.constant 0 : index
    %318 = vector.load %arg15[%c1_193, %c0_194, %c0_195, %c0_196] : memref<2x4x32x8xbf16, #tpu.memory_space<vmem>>, vector<1x4x32x8xbf16>
    %319 = vector.shape_cast %318 : vector<1x4x32x8xbf16> to vector<4x32x8xbf16>
    %c1_197 = arith.constant 1 : index
    %c0_198 = arith.constant 0 : index
    %c0_199 = arith.constant 0 : index
    %c0_200 = arith.constant 0 : index
    %320 = vector.load %arg16[%c1_197, %c0_198, %c0_199, %c0_200] : memref<2x4x1x8xf32, #tpu.memory_space<vmem>>, vector<1x4x1x8xf32>
    %321 = vector.shape_cast %320 : vector<1x4x1x8xf32> to vector<4x1x8xf32>
    %c1_201 = arith.constant 1 : index
    %c0_202 = arith.constant 0 : index
    %c0_203 = arith.constant 0 : index
    %c0_204 = arith.constant 0 : index
    %322 = vector.load %arg17[%c1_201, %c0_202, %c0_203, %c0_204] : memref<2x4x32x8xbf16, #tpu.memory_space<vmem>>, vector<1x4x32x8xbf16>
    %323 = vector.shape_cast %322 : vector<1x4x32x8xbf16> to vector<4x32x8xbf16>
    %c1_205 = arith.constant 1 : index
    %c0_206 = arith.constant 0 : index
    %c0_207 = arith.constant 0 : index
    %c0_208 = arith.constant 0 : index
    %324 = vector.load %arg18[%c1_205, %c0_206, %c0_207, %c0_208] : memref<2x4x1x8xf32, #tpu.memory_space<vmem>>, vector<1x4x1x8xf32>
    %325 = vector.shape_cast %324 : vector<1x4x1x8xf32> to vector<4x1x8xf32>
    %c1_209 = arith.constant 1 : index
    %c0_210 = arith.constant 0 : index
    %c0_211 = arith.constant 0 : index
    %c0_212 = arith.constant 0 : index
    %326 = vector.load %arg19[%c1_209, %c0_210, %c0_211, %c0_212] : memref<2x4x8x32xbf16, #tpu.memory_space<vmem>>, vector<1x4x8x32xbf16>
    %327 = vector.shape_cast %326 : vector<1x4x8x32xbf16> to vector<4x8x32xbf16>
    %c1_213 = arith.constant 1 : index
    %c0_214 = arith.constant 0 : index
    %c0_215 = arith.constant 0 : index
    %328 = vector.load %arg20[%c1_213, %c0_214, %c0_215] : memref<2x1x32xf32, #tpu.memory_space<vmem>>, vector<1x1x32xf32>
    %329 = vector.shape_cast %328 : vector<1x1x32xf32> to vector<1x32xf32>
    "tpu.trace_start"() <{level = 10 : i32, message = "hqe,hed->hqd"}> : () -> ()
    %cst_216 = arith.constant dense<0.000000e+00> : vector<4x8x8xf32>
    %330 = tpu.matmul %313, %315, %cst_216 {dimension_numbers = #tpu.dot_dimension_numbers<[2], [1], [1], [2], [0, 0, 0, 1, 1, 2], [0], [0]>} : vector<4x8x32xbf16>, vector<4x32x8xbf16>, vector<4x8x8xf32> -> vector<4x8x8xf32>
    "tpu.trace_stop"() : () -> ()
    %331 = vector.broadcast %317 : vector<4x1x8xf32> to vector<4x8x8xf32>
    %332 = arith.addf %330, %331 : vector<4x8x8xf32>
    "tpu.trace_start"() <{level = 10 : i32, message = "hke,hed->hkd"}> : () -> ()
    %cst_217 = arith.constant dense<0.000000e+00> : vector<4x8x8xf32>
    %333 = tpu.matmul %14, %319, %cst_217 {dimension_numbers = #tpu.dot_dimension_numbers<[2], [1], [1], [2], [0, 0, 0, 1, 1, 2], [0], [0]>} : vector<4x8x32xbf16>, vector<4x32x8xbf16>, vector<4x8x8xf32> -> vector<4x8x8xf32>
    "tpu.trace_stop"() : () -> ()
    %334 = vector.broadcast %321 : vector<4x1x8xf32> to vector<4x8x8xf32>
    %335 = arith.addf %333, %334 : vector<4x8x8xf32>
    "tpu.trace_start"() <{level = 10 : i32, message = "hke,hed->hkd"}> : () -> ()
    %cst_218 = arith.constant dense<0.000000e+00> : vector<4x8x8xf32>
    %336 = tpu.matmul %14, %323, %cst_218 {dimension_numbers = #tpu.dot_dimension_numbers<[2], [1], [1], [2], [0, 0, 0, 1, 1, 2], [0], [0]>} : vector<4x8x32xbf16>, vector<4x32x8xbf16>, vector<4x8x8xf32> -> vector<4x8x8xf32>
    "tpu.trace_stop"() : () -> ()
    %337 = vector.broadcast %325 : vector<4x1x8xf32> to vector<4x8x8xf32>
    %338 = arith.addf %336, %337 : vector<4x8x8xf32>
    %339 = arith.truncf %332 : vector<4x8x8xf32> to vector<4x8x8xbf16>
    %340 = arith.truncf %335 : vector<4x8x8xf32> to vector<4x8x8xbf16>
    "tpu.trace_start"() <{level = 10 : i32, message = "hqd,hkd->hqk"}> : () -> ()
    %cst_219 = arith.constant dense<0.000000e+00> : vector<4x8x8xf32>
    %341 = tpu.matmul %339, %340, %cst_219 {dimension_numbers = #tpu.dot_dimension_numbers<[2], [2], [1], [1], [0, 0, 0, 1, 1, 1], [0], [0]>} : vector<4x8x8xbf16>, vector<4x8x8xbf16>, vector<4x8x8xf32> -> vector<4x8x8xf32>
    "tpu.trace_stop"() : () -> ()
    %342 = vector.shape_cast %12 : vector<8x8xi1> to vector<1x8x8xi1>
    %cst_220 = arith.constant -1.000000e+09 : f32
    %343 = vector.shape_cast %342 : vector<1x8x8xi1> to vector<1x8x8xi1>
    %344 = vector.broadcast %343 : vector<1x8x8xi1> to vector<4x8x8xi1>
    %345 = vector.broadcast %cst_220 : f32 to vector<4x8x8xf32>
    %346 = arith.select %344, %341, %345 : vector<4x8x8xi1>, vector<4x8x8xf32>
    %cst_221 = arith.constant dense<0xFF800000> : vector<4x8xf32>
    %347 = vector.multi_reduction <maximumf>, %346, %cst_221 [2] : vector<4x8x8xf32> to vector<4x8xf32>
    %348 = vector.shape_cast %347 : vector<4x8xf32> to vector<4x8x1xf32>
    %349 = vector.broadcast %348 : vector<4x8x1xf32> to vector<4x8x8xf32>
    %350 = arith.subf %346, %349 : vector<4x8x8xf32>
    %351 = math.exp %350 : vector<4x8x8xf32>
    %cst_222 = arith.constant dense<0.000000e+00> : vector<4x8xf32>
    %352 = vector.multi_reduction <add>, %351, %cst_222 [2] : vector<4x8x8xf32> to vector<4x8xf32>
    %353 = vector.shape_cast %352 : vector<4x8xf32> to vector<4x8x1xf32>
    %354 = tpu.reciprocal %353 {approx = true} : vector<4x8x1xf32> -> vector<4x8x1xf32>
    %355 = vector.broadcast %354 : vector<4x8x1xf32> to vector<4x8x8xf32>
    %356 = arith.mulf %351, %355 : vector<4x8x8xf32>
    %357 = arith.truncf %356 : vector<4x8x8xf32> to vector<4x8x8xbf16>
    %358 = arith.truncf %338 : vector<4x8x8xf32> to vector<4x8x8xbf16>
    "tpu.trace_start"() <{level = 10 : i32, message = "hqk,hkd->hqd"}> : () -> ()
    %cst_223 = arith.constant dense<0.000000e+00> : vector<4x8x8xf32>
    %359 = tpu.matmul %357, %358, %cst_223 {dimension_numbers = #tpu.dot_dimension_numbers<[2], [1], [1], [2], [0, 0, 0, 1, 1, 2], [0], [0]>} : vector<4x8x8xbf16>, vector<4x8x8xbf16>, vector<4x8x8xf32> -> vector<4x8x8xf32>
    "tpu.trace_stop"() : () -> ()
    %360 = arith.truncf %359 : vector<4x8x8xf32> to vector<4x8x8xbf16>
    "tpu.trace_start"() <{level = 10 : i32, message = "hqd,hde->hqe"}> : () -> ()
    %cst_224 = arith.constant dense<0.000000e+00> : vector<4x8x32xf32>
    %361 = tpu.matmul %360, %327, %cst_224 {dimension_numbers = #tpu.dot_dimension_numbers<[2], [1], [1], [2], [0, 0, 0, 1, 1, 2], [0], [0]>} : vector<4x8x8xbf16>, vector<4x8x32xbf16>, vector<4x8x32xf32> -> vector<4x8x32xf32>
    "tpu.trace_stop"() : () -> ()
    %cst_225 = arith.constant dense<0.000000e+00> : vector<8x32xf32>
    %362 = vector.multi_reduction <add>, %361, %cst_225 [0] : vector<4x8x32xf32> to vector<8x32xf32>
    %363 = vector.broadcast %329 : vector<1x32xf32> to vector<8x32xf32>
    %364 = arith.addf %362, %363 : vector<8x32xf32>
    %365 = arith.addf %364, %310 : vector<8x32xf32>
    %366 = vector.extract_strided_slice %227 {offsets = [1, 0, 0], sizes = [1, 1, 32], strides = [1, 1, 1]} : vector<3x1x32xf32> to vector<1x1x32xf32>
    %367 = vector.shape_cast %366 : vector<1x1x32xf32> to vector<1x32xf32>
    %368 = vector.extract_strided_slice %229 {offsets = [1, 0, 0], sizes = [1, 1, 32], strides = [1, 1, 1]} : vector<3x1x32xf32> to vector<1x1x32xf32>
    %369 = vector.shape_cast %368 : vector<1x1x32xf32> to vector<1x32xf32>
    %cst_226 = arith.constant dense<0.000000e+00> : vector<8xf32>
    %370 = vector.multi_reduction <add>, %365, %cst_226 [1] : vector<8x32xf32> to vector<8xf32>
    %371 = vector.shape_cast %370 : vector<8xf32> to vector<8x1xf32>
    %cst_227 = arith.constant 3.200000e+01 : f32
    %372 = vector.broadcast %cst_227 : f32 to vector<8x1xf32>
    %373 = arith.divf %371, %372 : vector<8x1xf32>
    %374 = arith.mulf %365, %365 : vector<8x32xf32>
    %cst_228 = arith.constant dense<0.000000e+00> : vector<8xf32>
    %375 = vector.multi_reduction <add>, %374, %cst_228 [1] : vector<8x32xf32> to vector<8xf32>
    %376 = vector.shape_cast %375 : vector<8xf32> to vector<8x1xf32>
    %cst_229 = arith.constant 3.200000e+01 : f32
    %377 = vector.broadcast %cst_229 : f32 to vector<8x1xf32>
    %378 = arith.divf %376, %377 : vector<8x1xf32>
    %379 = arith.mulf %373, %373 : vector<8x1xf32>
    %380 = arith.subf %378, %379 : vector<8x1xf32>
    %381 = vector.broadcast %373 : vector<8x1xf32> to vector<8x32xf32>
    %382 = arith.subf %365, %381 : vector<8x32xf32>
    %cst_230 = arith.constant 9.99999974E-6 : f32
    %383 = vector.broadcast %cst_230 : f32 to vector<8x1xf32>
    %384 = arith.addf %380, %383 : vector<8x1xf32>
    %385 = math.rsqrt %384 : vector<8x1xf32>
    %386 = vector.broadcast %385 : vector<8x1xf32> to vector<8x32xf32>
    %387 = arith.mulf %382, %386 : vector<8x32xf32>
    %388 = vector.broadcast %367 : vector<1x32xf32> to vector<8x32xf32>
    %389 = arith.mulf %387, %388 : vector<8x32xf32>
    %390 = vector.broadcast %369 : vector<1x32xf32> to vector<8x32xf32>
    %391 = arith.addf %389, %390 : vector<8x32xf32>
    %392 = arith.truncf %391 : vector<8x32xf32> to vector<8x32xbf16>
    %c1_231 = arith.constant 1 : index
    %c0_232 = arith.constant 0 : index
    %c0_233 = arith.constant 0 : index
    %393 = vector.load %arg21[%c1_231, %c0_232, %c0_233] : memref<2x32x64xbf16, #tpu.memory_space<vmem>>, vector<1x32x64xbf16>
    %394 = vector.shape_cast %393 : vector<1x32x64xbf16> to vector<32x64xbf16>
    %cst_234 = arith.constant dense<0.000000e+00> : vector<8x64xf32>
    %395 = tpu.matmul %392, %394, %cst_234 {dimension_numbers = #tpu.dot_dimension_numbers<[1], [0], [0], [1], [0, 0, 1, 1], [], []>} : vector<8x32xbf16>, vector<32x64xbf16>, vector<8x64xf32> -> vector<8x64xf32>
    %c1_235 = arith.constant 1 : index
    %c0_236 = arith.constant 0 : index
    %c0_237 = arith.constant 0 : index
    %396 = vector.load %arg22[%c1_235, %c0_236, %c0_237] : memref<2x1x64xf32, #tpu.memory_space<vmem>>, vector<1x1x64xf32>
    %397 = vector.shape_cast %396 : vector<1x1x64xf32> to vector<1x64xf32>
    %398 = vector.broadcast %397 : vector<1x64xf32> to vector<8x64xf32>
    %399 = arith.addf %395, %398 : vector<8x64xf32>
    %cst_238 = arith.constant 0.000000e+00 : f32
    %400 = vector.broadcast %cst_238 : f32 to vector<8x64xf32>
    %401 = arith.maximumf %399, %400 : vector<8x64xf32>
    %402 = arith.truncf %401 : vector<8x64xf32> to vector<8x64xbf16>
    %c1_239 = arith.constant 1 : index
    %c0_240 = arith.constant 0 : index
    %c0_241 = arith.constant 0 : index
    %403 = vector.load %arg23[%c1_239, %c0_240, %c0_241] : memref<2x64x32xbf16, #tpu.memory_space<vmem>>, vector<1x64x32xbf16>
    %404 = vector.shape_cast %403 : vector<1x64x32xbf16> to vector<64x32xbf16>
    %cst_242 = arith.constant dense<0.000000e+00> : vector<8x32xf32>
    %405 = tpu.matmul %402, %404, %cst_242 {dimension_numbers = #tpu.dot_dimension_numbers<[1], [0], [0], [1], [0, 0, 1, 1], [], []>} : vector<8x64xbf16>, vector<64x32xbf16>, vector<8x32xf32> -> vector<8x32xf32>
    %c1_243 = arith.constant 1 : index
    %c0_244 = arith.constant 0 : index
    %c0_245 = arith.constant 0 : index
    %406 = vector.load %arg24[%c1_243, %c0_244, %c0_245] : memref<2x1x32xf32, #tpu.memory_space<vmem>>, vector<1x1x32xf32>
    %407 = vector.shape_cast %406 : vector<1x1x32xf32> to vector<1x32xf32>
    %408 = vector.broadcast %407 : vector<1x32xf32> to vector<8x32xf32>
    %409 = arith.addf %405, %408 : vector<8x32xf32>
    %410 = arith.addf %409, %391 : vector<8x32xf32>
    %411 = vector.extract_strided_slice %227 {offsets = [2, 0, 0], sizes = [1, 1, 32], strides = [1, 1, 1]} : vector<3x1x32xf32> to vector<1x1x32xf32>
    %412 = vector.shape_cast %411 : vector<1x1x32xf32> to vector<1x32xf32>
    %413 = vector.extract_strided_slice %229 {offsets = [2, 0, 0], sizes = [1, 1, 32], strides = [1, 1, 1]} : vector<3x1x32xf32> to vector<1x1x32xf32>
    %414 = vector.shape_cast %413 : vector<1x1x32xf32> to vector<1x32xf32>
    %cst_246 = arith.constant dense<0.000000e+00> : vector<8xf32>
    %415 = vector.multi_reduction <add>, %410, %cst_246 [1] : vector<8x32xf32> to vector<8xf32>
    %416 = vector.shape_cast %415 : vector<8xf32> to vector<8x1xf32>
    %cst_247 = arith.constant 3.200000e+01 : f32
    %417 = vector.broadcast %cst_247 : f32 to vector<8x1xf32>
    %418 = arith.divf %416, %417 : vector<8x1xf32>
    %419 = arith.mulf %410, %410 : vector<8x32xf32>
    %cst_248 = arith.constant dense<0.000000e+00> : vector<8xf32>
    %420 = vector.multi_reduction <add>, %419, %cst_248 [1] : vector<8x32xf32> to vector<8xf32>
    %421 = vector.shape_cast %420 : vector<8xf32> to vector<8x1xf32>
    %cst_249 = arith.constant 3.200000e+01 : f32
    %422 = vector.broadcast %cst_249 : f32 to vector<8x1xf32>
    %423 = arith.divf %421, %422 : vector<8x1xf32>
    %424 = arith.mulf %418, %418 : vector<8x1xf32>
    %425 = arith.subf %423, %424 : vector<8x1xf32>
    %426 = vector.broadcast %418 : vector<8x1xf32> to vector<8x32xf32>
    %427 = arith.subf %410, %426 : vector<8x32xf32>
    %cst_250 = arith.constant 9.99999974E-6 : f32
    %428 = vector.broadcast %cst_250 : f32 to vector<8x1xf32>
    %429 = arith.addf %425, %428 : vector<8x1xf32>
    %430 = math.rsqrt %429 : vector<8x1xf32>
    %431 = vector.broadcast %430 : vector<8x1xf32> to vector<8x32xf32>
    %432 = arith.mulf %427, %431 : vector<8x32xf32>
    %433 = vector.broadcast %412 : vector<1x32xf32> to vector<8x32xf32>
    %434 = arith.mulf %432, %433 : vector<8x32xf32>
    %435 = vector.broadcast %414 : vector<1x32xf32> to vector<8x32xf32>
    %436 = arith.addf %434, %435 : vector<8x32xf32>
    %c0_251 = arith.constant 0 : index
    %c0_252 = arith.constant 0 : index
    %c0_253 = arith.constant 0 : index
    %437 = vector.load %arg27[%c0_251, %c0_252, %c0_253] : memref<1x8x32xf32, #tpu.memory_space<vmem>>, vector<1x8x32xf32>
    %438 = vector.shape_cast %437 : vector<1x8x32xf32> to vector<8x32xf32>
    %439 = vector.shape_cast %436 : vector<8x32xf32> to vector<1x8x32xf32>
    tpu.vector_store %arg27[%c0_251, %c0_252, %c0_253], %439 {strides = array<i32>} : memref<1x8x32xf32, #tpu.memory_space<vmem>>, vector<1x8x32xf32>,
    return
  }
  func.func @transform_0(%arg0: i32) -> (i32, i32, i32) {
    %c0_i32 = arith.constant 0 : i32
    %c0_i32_0 = arith.constant 0 : i32
    %c0_i32_1 = arith.constant 0 : i32
    return %arg0, %c0_i32, %c0_i32_0 : i32, i32, i32
  }
  func.func @transform_1(%arg0: i32) -> (i32, i32, i32) {
    %c0_i32 = arith.constant 0 : i32
    %c0_i32_0 = arith.constant 0 : i32
    %c0_i32_1 = arith.constant 0 : i32
    return %arg0, %c0_i32, %c0_i32_0 : i32, i32, i32
  }
  func.func @transform_2(%arg0: i32) -> (i32, i32, i32) {
    %c0_i32 = arith.constant 0 : i32
    %c0_i32_0 = arith.constant 0 : i32
    %c0_i32_1 = arith.constant 0 : i32
    return %arg0, %c0_i32, %c0_i32_0 : i32, i32, i32
  }
  func.func @transform_3(%arg0: i32) -> (i32, i32, i32) {
    %c0_i32 = arith.constant 0 : i32
    %c0_i32_0 = arith.constant 0 : i32
    %c0_i32_1 = arith.constant 0 : i32
    return %arg0, %c0_i32, %c0_i32_0 : i32, i32, i32
  }
  func.func @transform_4(%arg0: i32) -> (i32, i32, i32, i32) {
    %c0_i32 = arith.constant 0 : i32
    %c0_i32_0 = arith.constant 0 : i32
    %c0_i32_1 = arith.constant 0 : i32
    %c0_i32_2 = arith.constant 0 : i32
    %c0_i32_3 = arith.constant 0 : i32
    return %c0_i32, %c0_i32_0, %c0_i32_1, %c0_i32_2 : i32, i32, i32, i32
  }
  func.func @transform_5(%arg0: i32) -> (i32, i32, i32, i32) {
    %c0_i32 = arith.constant 0 : i32
    %c0_i32_0 = arith.constant 0 : i32
    %c0_i32_1 = arith.constant 0 : i32
    %c0_i32_2 = arith.constant 0 : i32
    %c0_i32_3 = arith.constant 0 : i32
    return %c0_i32, %c0_i32_0, %c0_i32_1, %c0_i32_2 : i32, i32, i32, i32
  }
  func.func @transform_6(%arg0: i32) -> (i32, i32, i32, i32) {
    %c0_i32 = arith.constant 0 : i32
    %c0_i32_0 = arith.constant 0 : i32
    %c0_i32_1 = arith.constant 0 : i32
    %c0_i32_2 = arith.constant 0 : i32
    %c0_i32_3 = arith.constant 0 : i32
    return %c0_i32, %c0_i32_0, %c0_i32_1, %c0_i32_2 : i32, i32, i32, i32
  }
  func.func @transform_7(%arg0: i32) -> (i32, i32, i32, i32) {
    %c0_i32 = arith.constant 0 : i32
    %c0_i32_0 = arith.constant 0 : i32
    %c0_i32_1 = arith.constant 0 : i32
    %c0_i32_2 = arith.constant 0 : i32
    %c0_i32_3 = arith.constant 0 : i32
    return %c0_i32, %c0_i32_0, %c0_i32_1, %c0_i32_2 : i32, i32, i32, i32
  }
  func.func @transform_8(%arg0: i32) -> (i32, i32, i32, i32) {
    %c0_i32 = arith.constant 0 : i32
    %c0_i32_0 = arith.constant 0 : i32
    %c0_i32_1 = arith.constant 0 : i32
    %c0_i32_2 = arith.constant 0 : i32
    %c0_i32_3 = arith.constant 0 : i32
    return %c0_i32, %c0_i32_0, %c0_i32_1, %c0_i32_2 : i32, i32, i32, i32
  }
  func.func @transform_9(%arg0: i32) -> (i32, i32, i32, i32) {
    %c0_i32 = arith.constant 0 : i32
    %c0_i32_0 = arith.constant 0 : i32
    %c0_i32_1 = arith.constant 0 : i32
    %c0_i32_2 = arith.constant 0 : i32
    %c0_i32_3 = arith.constant 0 : i32
    return %c0_i32, %c0_i32_0, %c0_i32_1, %c0_i32_2 : i32, i32, i32, i32
  }
  func.func @transform_10(%arg0: i32) -> (i32, i32, i32, i32) {
    %c0_i32 = arith.constant 0 : i32
    %c0_i32_0 = arith.constant 0 : i32
    %c0_i32_1 = arith.constant 0 : i32
    %c0_i32_2 = arith.constant 0 : i32
    %c0_i32_3 = arith.constant 0 : i32
    return %c0_i32, %c0_i32_0, %c0_i32_1, %c0_i32_2 : i32, i32, i32, i32
  }
  func.func @transform_11(%arg0: i32) -> (i32, i32, i32) {
    %c0_i32 = arith.constant 0 : i32
    %c0_i32_0 = arith.constant 0 : i32
    %c0_i32_1 = arith.constant 0 : i32
    %c0_i32_2 = arith.constant 0 : i32
    return %c0_i32, %c0_i32_0, %c0_i32_1 : i32, i32, i32
  }
  func.func @transform_12(%arg0: i32) -> (i32, i32, i32, i32) {
    %c0_i32 = arith.constant 0 : i32
    %c0_i32_0 = arith.constant 0 : i32
    %c0_i32_1 = arith.constant 0 : i32
    %c0_i32_2 = arith.constant 0 : i32
    %c0_i32_3 = arith.constant 0 : i32
    return %c0_i32, %c0_i32_0, %c0_i32_1, %c0_i32_2 : i32, i32, i32, i32
  }
  func.func @transform_13(%arg0: i32) -> (i32, i32, i32, i32) {
    %c0_i32 = arith.constant 0 : i32
    %c0_i32_0 = arith.constant 0 : i32
    %c0_i32_1 = arith.constant 0 : i32
    %c0_i32_2 = arith.constant 0 : i32
    %c0_i32_3 = arith.constant 0 : i32
    return %c0_i32, %c0_i32_0, %c0_i32_1, %c0_i32_2 : i32, i32, i32, i32
  }
  func.func @transform_14(%arg0: i32) -> (i32, i32, i32, i32) {
    %c0_i32 = arith.constant 0 : i32
    %c0_i32_0 = arith.constant 0 : i32
    %c0_i32_1 = arith.constant 0 : i32
    %c0_i32_2 = arith.constant 0 : i32
    %c0_i32_3 = arith.constant 0 : i32
    return %c0_i32, %c0_i32_0, %c0_i32_1, %c0_i32_2 : i32, i32, i32, i32
  }
  func.func @transform_15(%arg0: i32) -> (i32, i32, i32, i32) {
    %c0_i32 = arith.constant 0 : i32
    %c0_i32_0 = arith.constant 0 : i32
    %c0_i32_1 = arith.constant 0 : i32
    %c0_i32_2 = arith.constant 0 : i32
    %c0_i32_3 = arith.constant 0 : i32
    return %c0_i32, %c0_i32_0, %c0_i32_1, %c0_i32_2 : i32, i32, i32, i32
  }
  func.func @transform_16(%arg0: i32) -> (i32, i32, i32, i32) {
    %c0_i32 = arith.constant 0 : i32
    %c0_i32_0 = arith.constant 0 : i32
    %c0_i32_1 = arith.constant 0 : i32
    %c0_i32_2 = arith.constant 0 : i32
    %c0_i32_3 = arith.constant 0 : i32
    return %c0_i32, %c0_i32_0, %c0_i32_1, %c0_i32_2 : i32, i32, i32, i32
  }
  func.func @transform_17(%arg0: i32) -> (i32, i32, i32, i32) {
    %c0_i32 = arith.constant 0 : i32
    %c0_i32_0 = arith.constant 0 : i32
    %c0_i32_1 = arith.constant 0 : i32
    %c0_i32_2 = arith.constant 0 : i32
    %c0_i32_3 = arith.constant 0 : i32
    return %c0_i32, %c0_i32_0, %c0_i32_1, %c0_i32_2 : i32, i32, i32, i32
  }
  func.func @transform_18(%arg0: i32) -> (i32, i32, i32, i32) {
    %c0_i32 = arith.constant 0 : i32
    %c0_i32_0 = arith.constant 0 : i32
    %c0_i32_1 = arith.constant 0 : i32
    %c0_i32_2 = arith.constant 0 : i32
    %c0_i32_3 = arith.constant 0 : i32
    return %c0_i32, %c0_i32_0, %c0_i32_1, %c0_i32_2 : i32, i32, i32, i32
  }
  func.func @transform_19(%arg0: i32) -> (i32, i32, i32) {
    %c0_i32 = arith.constant 0 : i32
    %c0_i32_0 = arith.constant 0 : i32
    %c0_i32_1 = arith.constant 0 : i32
    %c0_i32_2 = arith.constant 0 : i32
    return %c0_i32, %c0_i32_0, %c0_i32_1 : i32, i32, i32
  }
  func.func @transform_20(%arg0: i32) -> (i32, i32, i32) {
    %c0_i32 = arith.constant 0 : i32
    %c0_i32_0 = arith.constant 0 : i32
    %c0_i32_1 = arith.constant 0 : i32
    %c0_i32_2 = arith.constant 0 : i32
    return %c0_i32, %c0_i32_0, %c0_i32_1 : i32, i32, i32
  }
  func.func @transform_21(%arg0: i32) -> (i32, i32, i32) {
    %c0_i32 = arith.constant 0 : i32
    %c0_i32_0 = arith.constant 0 : i32
    %c0_i32_1 = arith.constant 0 : i32
    %c0_i32_2 = arith.constant 0 : i32
    return %c0_i32, %c0_i32_0, %c0_i32_1 : i32, i32, i32
  }
  func.func @transform_22(%arg0: i32) -> (i32, i32, i32) {
    %c0_i32 = arith.constant 0 : i32
    %c0_i32_0 = arith.constant 0 : i32
    %c0_i32_1 = arith.constant 0 : i32
    %c0_i32_2 = arith.constant 0 : i32
    return %c0_i32, %c0_i32_0, %c0_i32_1 : i32, i32, i32
  }
  func.func @transform_23(%arg0: i32) -> (i32, i32, i32) {
    %c0_i32 = arith.constant 0 : i32
    %c0_i32_0 = arith.constant 0 : i32
    %c0_i32_1 = arith.constant 0 : i32
    %c0_i32_2 = arith.constant 0 : i32
    return %c0_i32, %c0_i32_0, %c0_i32_1 : i32, i32, i32
  }
  func.func @transform_24(%arg0: i32) -> (i32, i32, i32, i32) {
    %c0_i32 = arith.constant 0 : i32
    %c0_i32_0 = arith.constant 0 : i32
    %c0_i32_1 = arith.constant 0 : i32
    %c0_i32_2 = arith.constant 0 : i32
    %c0_i32_3 = arith.constant 0 : i32
    return %c0_i32, %c0_i32_0, %c0_i32_1, %c0_i32_2 : i32, i32, i32, i32
  }
  func.func @transform_25(%arg0: i32) -> (i32, i32, i32, i32) {
    %c0_i32 = arith.constant 0 : i32
    %c0_i32_0 = arith.constant 0 : i32
    %c0_i32_1 = arith.constant 0 : i32
    %c0_i32_2 = arith.constant 0 : i32
    %c0_i32_3 = arith.constant 0 : i32
    return %c0_i32, %c0_i32_0, %c0_i32_1, %c0_i32_2 : i32, i32, i32, i32
  }
  func.func @transform_26(%arg0: i32) -> (i32, i32, i32) {
    %c0_i32 = arith.constant 0 : i32
    %c0_i32_0 = arith.constant 0 : i32
    %c0_i32_1 = arith.constant 0 : i32
    return %arg0, %c0_i32, %c0_i32_0 : i32, i32, i32
  }
}

</mosaic_0001>

<llo_original>
// kernel: decoder_forward.1
$region0: #{decoder_forward.1}
  #allocation0 [shape = 'u32[]', space=smem, size = 0x4, offset = 0x4, fixed_abs, tag = 'smem constant byte address 0x4 - core index']
  #allocation1 [shape = 'u32[144,128]{1,0:T(1,128)}', space=vmem, size = 0x12000, scoped, tag = 'internal scratch']
  %s0 = inlined_call_operand.vmem [shape: f32[2,8,32], index: 0, kind: input, shape index: {}]
  %s1 = inlined_call_operand.vmem [shape: f32[2,8,32], index: 1, kind: input, shape index: {}]
  %s2 = inlined_call_operand.vmem [shape: f32[2,8,8], index: 2, kind: input, shape index: {}]
  %s3 = inlined_call_operand.vmem [shape: f32[2,8,8], index: 3, kind: input, shape index: {}]
  %s4 = inlined_call_operand.vmem [shape: bf16[2,4,32,8], index: 4, kind: input, shape index: {}]
  %s5 = inlined_call_operand.vmem [shape: f32[2,4,1,8], index: 5, kind: input, shape index: {}]
  %s6 = inlined_call_operand.vmem [shape: bf16[2,4,32,8], index: 6, kind: input, shape index: {}]
  %s7 = inlined_call_operand.vmem [shape: f32[2,4,1,8], index: 7, kind: input, shape index: {}]
  %s8 = inlined_call_operand.vmem [shape: bf16[2,4,32,8], index: 8, kind: input, shape index: {}]
  %s9 = inlined_call_operand.vmem [shape: f32[2,4,1,8], index: 9, kind: input, shape index: {}]
  %s10 = inlined_call_operand.vmem [shape: bf16[2,4,8,32], index: 10, kind: input, shape index: {}]
  %s11 = inlined_call_operand.vmem [shape: f32[2,1,32], index: 11, kind: input, shape index: {}]
  %s12 = inlined_call_operand.vmem [shape: bf16[2,4,32,8], index: 12, kind: input, shape index: {}]
  %s13 = inlined_call_operand.vmem [shape: f32[2,4,1,8], index: 13, kind: input, shape index: {}]
  %s14 = inlined_call_operand.vmem [shape: bf16[2,4,32,8], index: 14, kind: input, shape index: {}]
  %s15 = inlined_call_operand.vmem [shape: f32[2,4,1,8], index: 15, kind: input, shape index: {}]
  %s16 = inlined_call_operand.vmem [shape: bf16[2,4,32,8], index: 16, kind: input, shape index: {}]
  %s17 = inlined_call_operand.vmem [shape: f32[2,4,1,8], index: 17, kind: input, shape index: {}]
  %s18 = inlined_call_operand.vmem [shape: bf16[2,4,8,32], index: 18, kind: input, shape index: {}]
  %s19 = inlined_call_operand.vmem [shape: f32[2,1,32], index: 19, kind: input, shape index: {}]
  %s20 = inlined_call_operand.vmem [shape: bf16[2,32,64], index: 20, kind: input, shape index: {}]
  %s21 = inlined_call_operand.vmem [shape: f32[2,1,64], index: 21, kind: input, shape index: {}]
  %s22 = inlined_call_operand.vmem [shape: bf16[2,64,32], index: 22, kind: input, shape index: {}]
  %s23 = inlined_call_operand.vmem [shape: f32[2,1,32], index: 23, kind: input, shape index: {}]
  %s24 = inlined_call_operand.vmem [shape: f32[2,3,1,32], index: 24, kind: input, shape index: {}]
  %s25 = inlined_call_operand.vmem [shape: f32[2,3,1,32], index: 25, kind: input, shape index: {}]
  %s26 = inlined_call_operand.hbm [shape: f32[2,8,32], index: 26, kind: output, shape index: {}]
  %s27 = sld [smem:[#allocation0]]
  $region137: #{decoder_forward.1} parent=0
    _
  %s29 = ssub.s32 1, %s27
  %s30 = scalar_select 0, %s29, %s27
  $region1: #{decoder_forward.1} parent=0
    #allocation2 [shape = 'u8[8192]{0}', space=vmem, size = 0x2000, scoped, tag = 'output window, operand 0']
    #allocation3 [shape = 's32[2]{0}', space=sflag, size = 0x8, scoped, tag = 'scoped memory for decoder_forward.1']
    %31 = vsyncpa [#allocation3], 0
    %s32 = scalar_lea.sflag [#allocation3], 1
    %33 = vsyncpa %s32, 0
    loop: start=0, step=1, limit=4
    $region2: #{decoder_forward.1} parent=1 // loop_pre_header
      _
    $region3: #{decoder_forward.1} parent=1 // loop_header
      %s35 = sphi 0, %s39
      %p36 = scmp.ge.s32.totalorder %s35, 4
      %s45 = sphi 0, %s47
      %s48 = sphi 0, %s45
      %s49 = sphi 0, %s48
      %s65 = sphi 0, %s49
      %s71 = sphi 0, %s73
      %s74 = sphi 0, %s71
      %s75 = sphi 0, %s74
      %s91 = sphi 0, %s75
      %s97 = sphi 0, %s99
      %s100 = sphi 0, %s97
      %s101 = sphi 0, %s100
      %s117 = sphi 0, %s101
      %s123 = sphi 0, %s125
      %s126 = sphi 0, %s123
      %s127 = sphi 0, %s126
      %s143 = sphi 0, %s127
      %s147 = sphi 0, %s147
      %s149 = sphi 0, %s147
      %s150 = sphi 0, %s149
      %s164 = sphi 0, %s150
      %s168 = sphi 0, %s168
      %s170 = sphi 0, %s168
      %s171 = sphi 0, %s170
      %s185 = sphi 0, %s171
      %s189 = sphi 0, %s189
      %s191 = sphi 0, %s189
      %s192 = sphi 0, %s191
      %s206 = sphi 0, %s192
      %s210 = sphi 0, %s210
      %s212 = sphi 0, %s210
      %s213 = sphi 0, %s212
      %s227 = sphi 0, %s213
      %s231 = sphi 0, %s231
      %s233 = sphi 0, %s231
      %s234 = sphi 0, %s233
      %s248 = sphi 0, %s234
      %s252 = sphi 0, %s252
      %s254 = sphi 0, %s252
      %s255 = sphi 0, %s254
      %s269 = sphi 0, %s255
      %s273 = sphi 0, %s273
      %s275 = sphi 0, %s273
      %s276 = sphi 0, %s275
      %s290 = sphi 0, %s276
      %s294 = sphi 0, %s294
      %s296 = sphi 0, %s294
      %s297 = sphi 0, %s296
      %s311 = sphi 0, %s297
      %s315 = sphi 0, %s315
      %s317 = sphi 0, %s315
      %s318 = sphi 0, %s317
      %s332 = sphi 0, %s318
      %s336 = sphi 0, %s336
      %s338 = sphi 0, %s336
      %s339 = sphi 0, %s338
      %s353 = sphi 0, %s339
      %s357 = sphi 0, %s357
      %s359 = sphi 0, %s357
      %s360 = sphi 0, %s359
      %s374 = sphi 0, %s360
      %s378 = sphi 0, %s378
      %s380 = sphi 0, %s378
      %s381 = sphi 0, %s380
      %s395 = sphi 0, %s381
      %s399 = sphi 0, %s399
      %s401 = sphi 0, %s399
      %s402 = sphi 0, %s401
      %s416 = sphi 0, %s402
      %s420 = sphi 0, %s420
      %s422 = sphi 0, %s420
      %s423 = sphi 0, %s422
      %s437 = sphi 0, %s423
      %s441 = sphi 0, %s441
      %s443 = sphi 0, %s441
      %s444 = sphi 0, %s443
      %s458 = sphi 0, %s444
      %s462 = sphi 0, %s462
      %s464 = sphi 0, %s462
      %s465 = sphi 0, %s464
      %s479 = sphi 0, %s465
      %s483 = sphi 0, %s483
      %s485 = sphi 0, %s483
      %s486 = sphi 0, %s485
      %s500 = sphi 0, %s486
      %s504 = sphi 0, %s504
      %s506 = sphi 0, %s504
      %s507 = sphi 0, %s506
      %s521 = sphi 0, %s507
      %s525 = sphi 0, %s525
      %s527 = sphi 0, %s525
      %s528 = sphi 0, %s527
      %s542 = sphi 0, %s528
      %s546 = sphi 0, %s546
      %s548 = sphi 0, %s546
      %s549 = sphi 0, %s548
      %s563 = sphi 0, %s549
      %s567 = sphi 0, %s567
      %s569 = sphi 0, %s567
      %s570 = sphi 0, %s569
      %s584 = sphi 0, %s570
      %s588 = sphi 0, %s588
      %s590 = sphi 0, %s588
      %s591 = sphi 0, %s590
      %s605 = sphi 0, %s591
      %s611 = sphi 0, %s613
      %s614 = sphi 0, %s611
      %s615 = sphi 0, %s614
      %s631 = sphi 0, %s615
    $region4: #{decoder_forward.1} parent=1 // loop_header_branch
      %38 = sbr.rel (%p36) target = $region8
    $region5: #{decoder_forward.1} parent=1 // loop_body
      %s40 = ssub.s32 %s35, 1
      %s41 = ssub.s32 %s35, 2
      %s42 = sadd.s32 %s35, 1
      %s43 = ssub.s32 %s35, %s42
      %p44 = scmp.eq.s32.totalorder %s43, 0
      %s46 = sadd.s32 %s45, 1
      %s47 = scalar_select %p44, %s45, %s46
      %p50 = pneg %p44
      %p51 = scmp.eq.s32.totalorder %s35, 1
      %p52 = por %p50, %p51
      %p53 = scmp.ne.s32.totalorder %s45, %s48
      %p54 = scmp.eq.s32.totalorder %s35, 0
      %p55 = por %p53, %p54
      %p56 = scmp.ne.s32.totalorder %s45, %s48
      %p57 = scmp.eq.s32.totalorder %s40, 1
      %p58 = por %p56, %p57
      %p59 = scmp.ne.s32.totalorder %s48, %s49
      %p60 = scmp.eq.s32.totalorder %s40, 0
      %p61 = por %p59, %p60
      %p62 = scmp.ne.s32.totalorder %s48, %s49
      %p63 = scmp.eq.s32.totalorder %s41, 1
      %p64 = por %p62, %p63
      %p66 = scmp.ne.s32.totalorder %s49, %s65
      %p67 = scmp.eq.s32.totalorder %s41, 0
      %p68 = por %p66, %p67
      %s69 = ssub.s32 %s35, %s42
      %p70 = scmp.eq.s32.totalorder %s69, 0
      %s72 = sadd.s32 %s71, 1
      %s73 = scalar_select %p70, %s71, %s72
      %p76 = pneg %p70
      %p77 = scmp.eq.s32.totalorder %s35, 1
      %p78 = por %p76, %p77
      %p79 = scmp.ne.s32.totalorder %s71, %s74
      %p80 = scmp.eq.s32.totalorder %s35, 0
      %p81 = por %p79, %p80
      %p82 = scmp.ne.s32.totalorder %s71, %s74
      %p83 = scmp.eq.s32.totalorder %s40, 1
      %p84 = por %p82, %p83
      %p85 = scmp.ne.s32.totalorder %s74, %s75
      %p86 = scmp.eq.s32.totalorder %s40, 0
      %p87 = por %p85, %p86
      %p88 = scmp.ne.s32.totalorder %s74, %s75
      %p89 = scmp.eq.s32.totalorder %s41, 1
      %p90 = por %p88, %p89
      %p92 = scmp.ne.s32.totalorder %s75, %s91
      %p93 = scmp.eq.s32.totalorder %s41, 0
      %p94 = por %p92, %p93
      %s95 = ssub.s32 %s35, %s42
      %p96 = scmp.eq.s32.totalorder %s95, 0
      %s98 = sadd.s32 %s97, 1
      %s99 = scalar_select %p96, %s97, %s98
      %p102 = pneg %p96
      %p103 = scmp.eq.s32.totalorder %s35, 1
      %p104 = por %p102, %p103
      %p105 = scmp.ne.s32.totalorder %s97, %s100
      %p106 = scmp.eq.s32.totalorder %s35, 0
      %p107 = por %p105, %p106
      %p108 = scmp.ne.s32.totalorder %s97, %s100
      %p109 = scmp.eq.s32.totalorder %s40, 1
      %p110 = por %p108, %p109
      %p111 = scmp.ne.s32.totalorder %s100, %s101
      %p112 = scmp.eq.s32.totalorder %s40, 0
      %p113 = por %p111, %p112
      %p114 = scmp.ne.s32.totalorder %s100, %s101
      %p115 = scmp.eq.s32.totalorder %s41, 1
      %p116 = por %p114, %p115
      %p118 = scmp.ne.s32.totalorder %s101, %s117
      %p119 = scmp.eq.s32.totalorder %s41, 0
      %p120 = por %p118, %p119
      %s121 = ssub.s32 %s35, %s42
      %p122 = scmp.eq.s32.totalorder %s121, 0
      %s124 = sadd.s32 %s123, 1
      %s125 = scalar_select %p122, %s123, %s124
      %p128 = pneg %p122
      %p129 = scmp.eq.s32.totalorder %s35, 1
      %p130 = por %p128, %p129
      %p131 = scmp.ne.s32.totalorder %s123, %s126
      %p132 = scmp.eq.s32.totalorder %s35, 0
      %p133 = por %p131, %p132
      %p134 = scmp.ne.s32.totalorder %s123, %s126
      %p135 = scmp.eq.s32.totalorder %s40, 1
      %p136 = por %p134, %p135
      %p137 = scmp.ne.s32.totalorder %s126, %s127
      %p138 = scmp.eq.s32.totalorder %s40, 0
      %p139 = por %p137, %p138
      %p140 = scmp.ne.s32.totalorder %s126, %s127
      %p141 = scmp.eq.s32.totalorder %s41, 1
      %p142 = por %p140, %p141
      %p144 = scmp.ne.s32.totalorder %s127, %s143
      %p145 = scmp.eq.s32.totalorder %s41, 0
      %p146 = por %p144, %p145
      %s148 = sadd.s32 %s147, 1
      %p151 = scmp.eq.s32.totalorder %s35, 1
      %p152 = scmp.ne.s32.totalorder %s147, %s149
      %p153 = scmp.eq.s32.totalorder %s35, 0
      %p154 = por %p152, %p153
      %p155 = scmp.ne.s32.totalorder %s147, %s149
      %p156 = scmp.eq.s32.totalorder %s40, 1
      %p157 = por %p155, %p156
      %p158 = scmp.ne.s32.totalorder %s149, %s150
      %p159 = scmp.eq.s32.totalorder %s40, 0
      %p160 = por %p158, %p159
      %p161 = scmp.ne.s32.totalorder %s149, %s150
      %p162 = scmp.eq.s32.totalorder %s41, 1
      %p163 = por %p161, %p162
      %p165 = scmp.ne.s32.totalorder %s150, %s164
      %p166 = scmp.eq.s32.totalorder %s41, 0
      %p167 = por %p165, %p166
      %s169 = sadd.s32 %s168, 1
      %p172 = scmp.eq.s32.totalorder %s35, 1
      %p173 = scmp.ne.s32.totalorder %s168, %s170
      %p174 = scmp.eq.s32.totalorder %s35, 0
      %p175 = por %p173, %p174
      %p176 = scmp.ne.s32.totalorder %s168, %s170
      %p177 = scmp.eq.s32.totalorder %s40, 1
      %p178 = por %p176, %p177
      %p179 = scmp.ne.s32.totalorder %s170, %s171
      %p180 = scmp.eq.s32.totalorder %s40, 0
      %p181 = por %p179, %p180
      %p182 = scmp.ne.s32.totalorder %s170, %s171
      %p183 = scmp.eq.s32.totalorder %s41, 1
      %p184 = por %p182, %p183
      %p186 = scmp.ne.s32.totalorder %s171, %s185
      %p187 = scmp.eq.s32.totalorder %s41, 0
      %p188 = por %p186, %p187
      %s190 = sadd.s32 %s189, 1
      %p193 = scmp.eq.s32.totalorder %s35, 1
      %p194 = scmp.ne.s32.totalorder %s189, %s191
      %p195 = scmp.eq.s32.totalorder %s35, 0
      %p196 = por %p194, %p195
      %p197 = scmp.ne.s32.totalorder %s189, %s191
      %p198 = scmp.eq.s32.totalorder %s40, 1
      %p199 = por %p197, %p198
      %p200 = scmp.ne.s32.totalorder %s191, %s192
      %p201 = scmp.eq.s32.totalorder %s40, 0
      %p202 = por %p200, %p201
      %p203 = scmp.ne.s32.totalorder %s191, %s192
      %p204 = scmp.eq.s32.totalorder %s41, 1
      %p205 = por %p203, %p204
      %p207 = scmp.ne.s32.totalorder %s192, %s206
      %p208 = scmp.eq.s32.totalorder %s41, 0
      %p209 = por %p207, %p208
      %s211 = sadd.s32 %s210, 1
      %p214 = scmp.eq.s32.totalorder %s35, 1
      %p215 = scmp.ne.s32.totalorder %s210, %s212
      %p216 = scmp.eq.s32.totalorder %s35, 0
      %p217 = por %p215, %p216
      %p218 = scmp.ne.s32.totalorder %s210, %s212
      %p219 = scmp.eq.s32.totalorder %s40, 1
      %p220 = por %p218, %p219
      %p221 = scmp.ne.s32.totalorder %s212, %s213
      %p222 = scmp.eq.s32.totalorder %s40, 0
      %p223 = por %p221, %p222
      %p224 = scmp.ne.s32.totalorder %s212, %s213
      %p225 = scmp.eq.s32.totalorder %s41, 1
      %p226 = por %p224, %p225
      %p228 = scmp.ne.s32.totalorder %s213, %s227
      %p229 = scmp.eq.s32.totalorder %s41, 0
      %p230 = por %p228, %p229
      %s232 = sadd.s32 %s231, 1
      %p235 = scmp.eq.s32.totalorder %s35, 1
      %p236 = scmp.ne.s32.totalorder %s231, %s233
      %p237 = scmp.eq.s32.totalorder %s35, 0
      %p238 = por %p236, %p237
      %p239 = scmp.ne.s32.totalorder %s231, %s233
      %p240 = scmp.eq.s32.totalorder %s40, 1
      %p241 = por %p239, %p240
      %p242 = scmp.ne.s32.totalorder %s233, %s234
      %p243 = scmp.eq.s32.totalorder %s40, 0
      %p244 = por %p242, %p243
      %p245 = scmp.ne.s32.totalorder %s233, %s234
      %p246 = scmp.eq.s32.totalorder %s41, 1
      %p247 = por %p245, %p246
      %p249 = scmp.ne.s32.totalorder %s234, %s248
      %p250 = scmp.eq.s32.totalorder %s41, 0
      %p251 = por %p249, %p250
      %s253 = sadd.s32 %s252, 1
      %p256 = scmp.eq.s32.totalorder %s35, 1
      %p257 = scmp.ne.s32.totalorder %s252, %s254
      %p258 = scmp.eq.s32.totalorder %s35, 0
      %p259 = por %p257, %p258
      %p260 = scmp.ne.s32.totalorder %s252, %s254
      %p261 = scmp.eq.s32.totalorder %s40, 1
      %p262 = por %p260, %p261
      %p263 = scmp.ne.s32.totalorder %s254, %s255
      %p264 = scmp.eq.s32.totalorder %s40, 0
      %p265 = por %p263, %p264
      %p266 = scmp.ne.s32.totalorder %s254, %s255
      %p267 = scmp.eq.s32.totalorder %s41, 1
      %p268 = por %p266, %p267
      %p270 = scmp.ne.s32.totalorder %s255, %s269
      %p271 = scmp.eq.s32.totalorder %s41, 0
      %p272 = por %p270, %p271
      %s274 = sadd.s32 %s273, 1
      %p277 = scmp.eq.s32.totalorder %s35, 1
      %p278 = scmp.ne.s32.totalorder %s273, %s275
      %p279 = scmp.eq.s32.totalorder %s35, 0
      %p280 = por %p278, %p279
      %p281 = scmp.ne.s32.totalorder %s273, %s275
      %p282 = scmp.eq.s32.totalorder %s40, 1
      %p283 = por %p281, %p282
      %p284 = scmp.ne.s32.totalorder %s275, %s276
      %p285 = scmp.eq.s32.totalorder %s40, 0
      %p286 = por %p284, %p285
      %p287 = scmp.ne.s32.totalorder %s275, %s276
      %p288 = scmp.eq.s32.totalorder %s41, 1
      %p289 = por %p287, %p288
      %p291 = scmp.ne.s32.totalorder %s276, %s290
      %p292 = scmp.eq.s32.totalorder %s41, 0
      %p293 = por %p291, %p292
      %s295 = sadd.s32 %s294, 1
      %p298 = scmp.eq.s32.totalorder %s35, 1
      %p299 = scmp.ne.s32.totalorder %s294, %s296
      %p300 = scmp.eq.s32.totalorder %s35, 0
      %p301 = por %p299, %p300
      %p302 = scmp.ne.s32.totalorder %s294, %s296
      %p303 = scmp.eq.s32.totalorder %s40, 1
      %p304 = por %p302, %p303
      %p305 = scmp.ne.s32.totalorder %s296, %s297
      %p306 = scmp.eq.s32.totalorder %s40, 0
      %p307 = por %p305, %p306
      %p308 = scmp.ne.s32.totalorder %s296, %s297
      %p309 = scmp.eq.s32.totalorder %s41, 1
      %p310 = por %p308, %p309
      %p312 = scmp.ne.s32.totalorder %s297, %s311
      %p313 = scmp.eq.s32.totalorder %s41, 0
      %p314 = por %p312, %p313
      %s316 = sadd.s32 %s315, 1
      %p319 = scmp.eq.s32.totalorder %s35, 1
      %p320 = scmp.ne.s32.totalorder %s315, %s317
      %p321 = scmp.eq.s32.totalorder %s35, 0
      %p322 = por %p320, %p321
      %p323 = scmp.ne.s32.totalorder %s315, %s317
      %p324 = scmp.eq.s32.totalorder %s40, 1
      %p325 = por %p323, %p324
      %p326 = scmp.ne.s32.totalorder %s317, %s318
      %p327 = scmp.eq.s32.totalorder %s40, 0
      %p328 = por %p326, %p327
      %p329 = scmp.ne.s32.totalorder %s317, %s318
      %p330 = scmp.eq.s32.totalorder %s41, 1
      %p331 = por %p329, %p330
      %p333 = scmp.ne.s32.totalorder %s318, %s332
      %p334 = scmp.eq.s32.totalorder %s41, 0
      %p335 = por %p333, %p334
      %s337 = sadd.s32 %s336, 1
      %p340 = scmp.eq.s32.totalorder %s35, 1
      %p341 = scmp.ne.s32.totalorder %s336, %s338
      %p342 = scmp.eq.s32.totalorder %s35, 0
      %p343 = por %p341, %p342
      %p344 = scmp.ne.s32.totalorder %s336, %s338
      %p345 = scmp.eq.s32.totalorder %s40, 1
      %p346 = por %p344, %p345
      %p347 = scmp.ne.s32.totalorder %s338, %s339
      %p348 = scmp.eq.s32.totalorder %s40, 0
      %p349 = por %p347, %p348
      %p350 = scmp.ne.s32.totalorder %s338, %s339
      %p351 = scmp.eq.s32.totalorder %s41, 1
      %p352 = por %p350, %p351
      %p354 = scmp.ne.s32.totalorder %s339, %s353
      %p355 = scmp.eq.s32.totalorder %s41, 0
      %p356 = por %p354, %p355
      %s358 = sadd.s32 %s357, 1
      %p361 = scmp.eq.s32.totalorder %s35, 1
      %p362 = scmp.ne.s32.totalorder %s357, %s359
      %p363 = scmp.eq.s32.totalorder %s35, 0
      %p364 = por %p362, %p363
      %p365 = scmp.ne.s32.totalorder %s357, %s359
      %p366 = scmp.eq.s32.totalorder %s40, 1
      %p367 = por %p365, %p366
      %p368 = scmp.ne.s32.totalorder %s359, %s360
      %p369 = scmp.eq.s32.totalorder %s40, 0
      %p370 = por %p368, %p369
      %p371 = scmp.ne.s32.totalorder %s359, %s360
      %p372 = scmp.eq.s32.totalorder %s41, 1
      %p373 = por %p371, %p372
      %p375 = scmp.ne.s32.totalorder %s360, %s374
      %p376 = scmp.eq.s32.totalorder %s41, 0
      %p377 = por %p375, %p376
      %s379 = sadd.s32 %s378, 1
      %p382 = scmp.eq.s32.totalorder %s35, 1
      %p383 = scmp.ne.s32.totalorder %s378, %s380
      %p384 = scmp.eq.s32.totalorder %s35, 0
      %p385 = por %p383, %p384
      %p386 = scmp.ne.s32.totalorder %s378, %s380
      %p387 = scmp.eq.s32.totalorder %s40, 1
      %p388 = por %p386, %p387
      %p389 = scmp.ne.s32.totalorder %s380, %s381
      %p390 = scmp.eq.s32.totalorder %s40, 0
      %p391 = por %p389, %p390
      %p392 = scmp.ne.s32.totalorder %s380, %s381
      %p393 = scmp.eq.s32.totalorder %s41, 1
      %p394 = por %p392, %p393
      %p396 = scmp.ne.s32.totalorder %s381, %s395
      %p397 = scmp.eq.s32.totalorder %s41, 0
      %p398 = por %p396, %p397
      %s400 = sadd.s32 %s399, 1
      %p403 = scmp.eq.s32.totalorder %s35, 1
      %p404 = scmp.ne.s32.totalorder %s399, %s401
      %p405 = scmp.eq.s32.totalorder %s35, 0
      %p406 = por %p404, %p405
      %p407 = scmp.ne.s32.totalorder %s399, %s401
      %p408 = scmp.eq.s32.totalorder %s40, 1
      %p409 = por %p407, %p408
      %p410 = scmp.ne.s32.totalorder %s401, %s402
      %p411 = scmp.eq.s32.totalorder %s40, 0
      %p412 = por %p410, %p411
      %p413 = scmp.ne.s32.totalorder %s401, %s402
      %p414 = scmp.eq.s32.totalorder %s41, 1
      %p415 = por %p413, %p414
      %p417 = scmp.ne.s32.totalorder %s402, %s416
      %p418 = scmp.eq.s32.totalorder %s41, 0
      %p419 = por %p417, %p418
      %s421 = sadd.s32 %s420, 1
      %p424 = scmp.eq.s32.totalorder %s35, 1
      %p425 = scmp.ne.s32.totalorder %s420, %s422
      %p426 = scmp.eq.s32.totalorder %s35, 0
      %p427 = por %p425, %p426
      %p428 = scmp.ne.s32.totalorder %s420, %s422
      %p429 = scmp.eq.s32.totalorder %s40, 1
      %p430 = por %p428, %p429
      %p431 = scmp.ne.s32.totalorder %s422, %s423
      %p432 = scmp.eq.s32.totalorder %s40, 0
      %p433 = por %p431, %p432
      %p434 = scmp.ne.s32.totalorder %s422, %s423
      %p435 = scmp.eq.s32.totalorder %s41, 1
      %p436 = por %p434, %p435
      %p438 = scmp.ne.s32.totalorder %s423, %s437
      %p439 = scmp.eq.s32.totalorder %s41, 0
      %p440 = por %p438, %p439
      %s442 = sadd.s32 %s441, 1
      %p445 = scmp.eq.s32.totalorder %s35, 1
      %p446 = scmp.ne.s32.totalorder %s441, %s443
      %p447 = scmp.eq.s32.totalorder %s35, 0
      %p448 = por %p446, %p447
      %p449 = scmp.ne.s32.totalorder %s441, %s443
      %p450 = scmp.eq.s32.totalorder %s40, 1
      %p451 = por %p449, %p450
      %p452 = scmp.ne.s32.totalorder %s443, %s444
      %p453 = scmp.eq.s32.totalorder %s40, 0
      %p454 = por %p452, %p453
      %p455 = scmp.ne.s32.totalorder %s443, %s444
      %p456 = scmp.eq.s32.totalorder %s41, 1
      %p457 = por %p455, %p456
      %p459 = scmp.ne.s32.totalorder %s444, %s458
      %p460 = scmp.eq.s32.totalorder %s41, 0
      %p461 = por %p459, %p460
      %s463 = sadd.s32 %s462, 1
      %p466 = scmp.eq.s32.totalorder %s35, 1
      %p467 = scmp.ne.s32.totalorder %s462, %s464
      %p468 = scmp.eq.s32.totalorder %s35, 0
      %p469 = por %p467, %p468
      %p470 = scmp.ne.s32.totalorder %s462, %s464
      %p471 = scmp.eq.s32.totalorder %s40, 1
      %p472 = por %p470, %p471
      %p473 = scmp.ne.s32.totalorder %s464, %s465
      %p474 = scmp.eq.s32.totalorder %s40, 0
      %p475 = por %p473, %p474
      %p476 = scmp.ne.s32.totalorder %s464, %s465
      %p477 = scmp.eq.s32.totalorder %s41, 1
      %p478 = por %p476, %p477
      %p480 = scmp.ne.s32.totalorder %s465, %s479
      %p481 = scmp.eq.s32.totalorder %s41, 0
      %p482 = por %p480, %p481
      %s484 = sadd.s32 %s483, 1
      %p487 = scmp.eq.s32.totalorder %s35, 1
      %p488 = scmp.ne.s32.totalorder %s483, %s485
      %p489 = scmp.eq.s32.totalorder %s35, 0
      %p490 = por %p488, %p489
      %p491 = scmp.ne.s32.totalorder %s483, %s485
      %p492 = scmp.eq.s32.totalorder %s40, 1
      %p493 = por %p491, %p492
      %p494 = scmp.ne.s32.totalorder %s485, %s486
      %p495 = scmp.eq.s32.totalorder %s40, 0
      %p496 = por %p494, %p495
      %p497 = scmp.ne.s32.totalorder %s485, %s486
      %p498 = scmp.eq.s32.totalorder %s41, 1
      %p499 = por %p497, %p498
      %p501 = scmp.ne.s32.totalorder %s486, %s500
      %p502 = scmp.eq.s32.totalorder %s41, 0
      %p503 = por %p501, %p502
      %s505 = sadd.s32 %s504, 1
      %p508 = scmp.eq.s32.totalorder %s35, 1
      %p509 = scmp.ne.s32.totalorder %s504, %s506
      %p510 = scmp.eq.s32.totalorder %s35, 0
      %p511 = por %p509, %p510
      %p512 = scmp.ne.s32.totalorder %s504, %s506
      %p513 = scmp.eq.s32.totalorder %s40, 1
      %p514 = por %p512, %p513
      %p515 = scmp.ne.s32.totalorder %s506, %s507
      %p516 = scmp.eq.s32.totalorder %s40, 0
      %p517 = por %p515, %p516
      %p518 = scmp.ne.s32.totalorder %s506, %s507
      %p519 = scmp.eq.s32.totalorder %s41, 1
      %p520 = por %p518, %p519
      %p522 = scmp.ne.s32.totalorder %s507, %s521
      %p523 = scmp.eq.s32.totalorder %s41, 0
      %p524 = por %p522, %p523
      %s526 = sadd.s32 %s525, 1
      %p529 = scmp.eq.s32.totalorder %s35, 1
      %p530 = scmp.ne.s32.totalorder %s525, %s527
      %p531 = scmp.eq.s32.totalorder %s35, 0
      %p532 = por %p530, %p531
      %p533 = scmp.ne.s32.totalorder %s525, %s527
      %p534 = scmp.eq.s32.totalorder %s40, 1
      %p535 = por %p533, %p534
      %p536 = scmp.ne.s32.totalorder %s527, %s528
      %p537 = scmp.eq.s32.totalorder %s40, 0
      %p538 = por %p536, %p537
      %p539 = scmp.ne.s32.totalorder %s527, %s528
      %p540 = scmp.eq.s32.totalorder %s41, 1
      %p541 = por %p539, %p540
      %p543 = scmp.ne.s32.totalorder %s528, %s542
      %p544 = scmp.eq.s32.totalorder %s41, 0
      %p545 = por %p543, %p544
      %s547 = sadd.s32 %s546, 1
      %p550 = scmp.eq.s32.totalorder %s35, 1
      %p551 = scmp.ne.s32.totalorder %s546, %s548
      %p552 = scmp.eq.s32.totalorder %s35, 0
      %p553 = por %p551, %p552
      %p554 = scmp.ne.s32.totalorder %s546, %s548
      %p555 = scmp.eq.s32.totalorder %s40, 1
      %p556 = por %p554, %p555
      %p557 = scmp.ne.s32.totalorder %s548, %s549
      %p558 = scmp.eq.s32.totalorder %s40, 0
      %p559 = por %p557, %p558
      %p560 = scmp.ne.s32.totalorder %s548, %s549
      %p561 = scmp.eq.s32.totalorder %s41, 1
      %p562 = por %p560, %p561
      %p564 = scmp.ne.s32.totalorder %s549, %s563
      %p565 = scmp.eq.s32.totalorder %s41, 0
      %p566 = por %p564, %p565
      %s568 = sadd.s32 %s567, 1
      %p571 = scmp.eq.s32.totalorder %s35, 1
      %p572 = scmp.ne.s32.totalorder %s567, %s569
      %p573 = scmp.eq.s32.totalorder %s35, 0
      %p574 = por %p572, %p573
      %p575 = scmp.ne.s32.totalorder %s567, %s569
      %p576 = scmp.eq.s32.totalorder %s40, 1
      %p577 = por %p575, %p576
      %p578 = scmp.ne.s32.totalorder %s569, %s570
      %p579 = scmp.eq.s32.totalorder %s40, 0
      %p580 = por %p578, %p579
      %p581 = scmp.ne.s32.totalorder %s569, %s570
      %p582 = scmp.eq.s32.totalorder %s41, 1
      %p583 = por %p581, %p582
      %p585 = scmp.ne.s32.totalorder %s570, %s584
      %p586 = scmp.eq.s32.totalorder %s41, 0
      %p587 = por %p585, %p586
      %s589 = sadd.s32 %s588, 1
      %p592 = scmp.eq.s32.totalorder %s35, 1
      %p593 = scmp.ne.s32.totalorder %s588, %s590
      %p594 = scmp.eq.s32.totalorder %s35, 0
      %p595 = por %p593, %p594
      %p596 = scmp.ne.s32.totalorder %s588, %s590
      %p597 = scmp.eq.s32.totalorder %s40, 1
      %p598 = por %p596, %p597
      %p599 = scmp.ne.s32.totalorder %s590, %s591
      %p600 = scmp.eq.s32.totalorder %s40, 0
      %p601 = por %p599, %p600
      %p602 = scmp.ne.s32.totalorder %s590, %s591
      %p603 = scmp.eq.s32.totalorder %s41, 1
      %p604 = por %p602, %p603
      %p606 = scmp.ne.s32.totalorder %s591, %s605
      %p607 = scmp.eq.s32.totalorder %s41, 0
      %p608 = por %p606, %p607
      %s609 = ssub.s32 %s35, %s42
      %p610 = scmp.eq.s32.totalorder %s609, 0
      %s612 = sadd.s32 %s611, 1
      %s613 = scalar_select %p610, %s611, %s612
      %p616 = pneg %p610
      %p617 = scmp.eq.s32.totalorder %s35, 1
      %p618 = por %p616, %p617
      %p619 = scmp.ne.s32.totalorder %s611, %s614
      %p620 = scmp.eq.s32.totalorder %s35, 0
      %p621 = por %p619, %p620
      %p622 = scmp.ne.s32.totalorder %s611, %s614
      %p623 = scmp.eq.s32.totalorder %s40, 1
      %p624 = por %p622, %p623
      %p625 = scmp.ne.s32.totalorder %s614, %s615
      %p626 = scmp.eq.s32.totalorder %s40, 0
      %p627 = por %p625, %p626
      %p628 = scmp.ne.s32.totalorder %s614, %s615
      %p629 = scmp.eq.s32.totalorder %s41, 1
      %p630 = por %p628, %p629
      %p632 = scmp.ne.s32.totalorder %s615, %s631
      %p633 = scmp.eq.s32.totalorder %s41, 0
      %p634 = por %p632, %p633
      %p635 = scmp.le.s32.totalorder 1, %s35
      %p636 = scmp.lt.s32.totalorder %s35, 3
      %p637 = pnand %p635, %p636
      %p638 = pneg %p637
      // Predicated region
      $region9: #{decoder_forward.1} parent=5 // pred_check
        _
      $region10: #{decoder_forward.1} parent=5 // pred_check_branch
        %640 = sbr.rel (%p637) target = $region12
      $region11: #{decoder_forward.1} parent=5 // pred_region
        %s641 = ssub.s32 %s35, 1
        // Predicated region
        $region13: #{decoder_forward.1} parent=11 // pred_check
          %p642 = pneg %p160
        $region14: #{decoder_forward.1} parent=11 // pred_check_branch
          %644 = sbr.rel (%p642) target = $region16
        $region15: #{decoder_forward.1} parent=11 // pred_region
          _
        $region16: #{decoder_forward.1} parent=11 // pred_fallthru
          _
        // Predicated region
        $region17: #{decoder_forward.1} parent=11 // pred_check
          %p645 = pneg %p181
        $region18: #{decoder_forward.1} parent=11 // pred_check_branch
          %647 = sbr.rel (%p645) target = $region20
        $region19: #{decoder_forward.1} parent=11 // pred_region
          _
        $region20: #{decoder_forward.1} parent=11 // pred_fallthru
          _
        // Predicated region
        $region21: #{decoder_forward.1} parent=11 // pred_check
          %p648 = pneg %p202
        $region22: #{decoder_forward.1} parent=11 // pred_check_branch
          %650 = sbr.rel (%p648) target = $region24
        $region23: #{decoder_forward.1} parent=11 // pred_region
          _
        $region24: #{decoder_forward.1} parent=11 // pred_fallthru
          _
        // Predicated region
        $region25: #{decoder_forward.1} parent=11 // pred_check
          %p651 = pneg %p223
        $region26: #{decoder_forward.1} parent=11 // pred_check_branch
          %653 = sbr.rel (%p651) target = $region28
        $region27: #{decoder_forward.1} parent=11 // pred_region
          _
        $region28: #{decoder_forward.1} parent=11 // pred_fallthru
          _
        // Predicated region
        $region29: #{decoder_forward.1} parent=11 // pred_check
          %p654 = pneg %p244
        $region30: #{decoder_forward.1} parent=11 // pred_check_branch
          %656 = sbr.rel (%p654) target = $region32
        $region31: #{decoder_forward.1} parent=11 // pred_region
          _
        $region32: #{decoder_forward.1} parent=11 // pred_fallthru
          _
        // Predicated region
        $region33: #{decoder_forward.1} parent=11 // pred_check
          %p657 = pneg %p265
        $region34: #{decoder_forward.1} parent=11 // pred_check_branch
          %659 = sbr.rel (%p657) target = $region36
        $region35: #{decoder_forward.1} parent=11 // pred_region
          _
        $region36: #{decoder_forward.1} parent=11 // pred_fallthru
          _
        // Predicated region
        $region37: #{decoder_forward.1} parent=11 // pred_check
          %p660 = pneg %p286
        $region38: #{decoder_forward.1} parent=11 // pred_check_branch
          %662 = sbr.rel (%p660) target = $region40
        $region39: #{decoder_forward.1} parent=11 // pred_region
          _
        $region40: #{decoder_forward.1} parent=11 // pred_fallthru
          _
        // Predicated region
        $region41: #{decoder_forward.1} parent=11 // pred_check
          %p663 = pneg %p307
        $region42: #{decoder_forward.1} parent=11 // pred_check_branch
          %665 = sbr.rel (%p663) target = $region44
        $region43: #{decoder_forward.1} parent=11 // pred_region
          _
        $region44: #{decoder_forward.1} parent=11 // pred_fallthru
          _
        // Predicated region
        $region45: #{decoder_forward.1} parent=11 // pred_check
          %p666 = pneg %p328
        $region46: #{decoder_forward.1} parent=11 // pred_check_branch
          %668 = sbr.rel (%p666) target = $region48
        $region47: #{decoder_forward.1} parent=11 // pred_region
          _
        $region48: #{decoder_forward.1} parent=11 // pred_fallthru
          _
        // Predicated region
        $region49: #{decoder_forward.1} parent=11 // pred_check
          %p669 = pneg %p349
        $region50: #{decoder_forward.1} parent=11 // pred_check_branch
          %671 = sbr.rel (%p669) target = $region52
        $region51: #{decoder_forward.1} parent=11 // pred_region
          _
        $region52: #{decoder_forward.1} parent=11 // pred_fallthru
          _
        // Predicated region
        $region53: #{decoder_forward.1} parent=11 // pred_check
          %p672 = pneg %p370
        $region54: #{decoder_forward.1} parent=11 // pred_check_branch
          %674 = sbr.rel (%p672) target = $region56
        $region55: #{decoder_forward.1} parent=11 // pred_region
          _
        $region56: #{decoder_forward.1} parent=11 // pred_fallthru
          _
        // Predicated region
        $region57: #{decoder_forward.1} parent=11 // pred_check
          %p675 = pneg %p391
        $region58: #{decoder_forward.1} parent=11 // pred_check_branch
          %677 = sbr.rel (%p675) target = $region60
        $region59: #{decoder_forward.1} parent=11 // pred_region
          _
        $region60: #{decoder_forward.1} parent=11 // pred_fallthru
          _
        // Predicated region
        $region61: #{decoder_forward.1} parent=11 // pred_check
          %p678 = pneg %p412
        $region62: #{decoder_forward.1} parent=11 // pred_check_branch
          %680 = sbr.rel (%p678) target = $region64
        $region63: #{decoder_forward.1} parent=11 // pred_region
          _
        $region64: #{decoder_forward.1} parent=11 // pred_fallthru
          _
        // Predicated region
        $region65: #{decoder_forward.1} parent=11 // pred_check
          %p681 = pneg %p433
        $region66: #{decoder_forward.1} parent=11 // pred_check_branch
          %683 = sbr.rel (%p681) target = $region68
        $region67: #{decoder_forward.1} parent=11 // pred_region
          _
        $region68: #{decoder_forward.1} parent=11 // pred_fallthru
          _
        // Predicated region
        $region69: #{decoder_forward.1} parent=11 // pred_check
          %p684 = pneg %p454
        $region70: #{decoder_forward.1} parent=11 // pred_check_branch
          %686 = sbr.rel (%p684) target = $region72
        $region71: #{decoder_forward.1} parent=11 // pred_region
          _
        $region72: #{decoder_forward.1} parent=11 // pred_fallthru
          _
        // Predicated region
        $region73: #{decoder_forward.1} parent=11 // pred_check
          %p687 = pneg %p475
        $region74: #{decoder_forward.1} parent=11 // pred_check_branch
          %689 = sbr.rel (%p687) target = $region76
        $region75: #{decoder_forward.1} parent=11 // pred_region
          _
        $region76: #{decoder_forward.1} parent=11 // pred_fallthru
          _
        // Predicated region
        $region77: #{decoder_forward.1} parent=11 // pred_check
          %p690 = pneg %p496
        $region78: #{decoder_forward.1} parent=11 // pred_check_branch
          %692 = sbr.rel (%p690) target = $region80
        $region79: #{decoder_forward.1} parent=11 // pred_region
          _
        $region80: #{decoder_forward.1} parent=11 // pred_fallthru
          _
        // Predicated region
        $region81: #{decoder_forward.1} parent=11 // pred_check
          %p693 = pneg %p517
        $region82: #{decoder_forward.1} parent=11 // pred_check_branch
          %695 = sbr.rel (%p693) target = $region84
        $region83: #{decoder_forward.1} parent=11 // pred_region
          _
        $region84: #{decoder_forward.1} parent=11 // pred_fallthru
          _
        // Predicated region
        $region85: #{decoder_forward.1} parent=11 // pred_check
          %p696 = pneg %p538
        $region86: #{decoder_forward.1} parent=11 // pred_check_branch
          %698 = sbr.rel (%p696) target = $region88
        $region87: #{decoder_forward.1} parent=11 // pred_region
          _
        $region88: #{decoder_forward.1} parent=11 // pred_fallthru
          _
        // Predicated region
        $region89: #{decoder_forward.1} parent=11 // pred_check
          %p699 = pneg %p559
        $region90: #{decoder_forward.1} parent=11 // pred_check_branch
          %701 = sbr.rel (%p699) target = $region92
        $region91: #{decoder_forward.1} parent=11 // pred_region
          _
        $region92: #{decoder_forward.1} parent=11 // pred_fallthru
          _
        // Predicated region
        $region93: #{decoder_forward.1} parent=11 // pred_check
          %p702 = pneg %p580
        $region94: #{decoder_forward.1} parent=11 // pred_check_branch
          %704 = sbr.rel (%p702) target = $region96
        $region95: #{decoder_forward.1} parent=11 // pred_region
          _
        $region96: #{decoder_forward.1} parent=11 // pred_fallthru
          _
        // Predicated region
        $region97: #{decoder_forward.1} parent=11 // pred_check
          %p705 = pneg %p601
        $region98: #{decoder_forward.1} parent=11 // pred_check_branch
          %707 = sbr.rel (%p705) target = $region100
        $region99: #{decoder_forward.1} parent=11 // pred_region
          _
        $region100: #{decoder_forward.1} parent=11 // pred_fallthru
          _
      $region12: #{decoder_forward.1} parent=5 // pred_fallthru
        _
      %p708 = scmp.lt.s32.totalorder %s35, 2
      // Predicated region
      $region101: #{decoder_forward.1} parent=5 // pred_check
        %p709 = pneg %p708
      $region102: #{decoder_forward.1} parent=5 // pred_check_branch
        %711 = sbr.rel (%p709) target = $region104
      $region103: #{decoder_forward.1} parent=5 // pred_region
        // Predicated region
        $region105: #{decoder_forward.1} parent=103 // pred_check
          %p712 = pneg %p55
        $region106: #{decoder_forward.1} parent=103 // pred_check_branch
          %714 = sbr.rel (%p712) target = $region108
        $region107: #{decoder_forward.1} parent=103 // pred_region
          %p715 = scmp.lt.s32.totalorder %s35, 1
          %s716 = scalar_select %p715, %s35, 1
          %s717 = smul.addr %s716, 8
          %s718 = scalar_lea.vmem %s0, %s717
        $region108: #{decoder_forward.1} parent=103 // pred_fallthru
          _
        // Predicated region
        $region109: #{decoder_forward.1} parent=103 // pred_check
          %p719 = pneg %p81
        $region110: #{decoder_forward.1} parent=103 // pred_check_branch
          %721 = sbr.rel (%p719) target = $region112
        $region111: #{decoder_forward.1} parent=103 // pred_region
          %p722 = scmp.lt.s32.totalorder %s35, 1
          %s723 = scalar_select %p722, %s35, 1
          %s724 = smul.addr %s723, 8
          %s725 = scalar_lea.vmem %s1, %s724
        $region112: #{decoder_forward.1} parent=103 // pred_fallthru
          _
        // Predicated region
        $region113: #{decoder_forward.1} parent=103 // pred_check
          %p726 = pneg %p107
        $region114: #{decoder_forward.1} parent=103 // pred_check_branch
          %728 = sbr.rel (%p726) target = $region116
        $region115: #{decoder_forward.1} parent=103 // pred_region
          %p729 = scmp.lt.s32.totalorder %s35, 1
          %s730 = scalar_select %p729, %s35, 1
          %s731 = smul.addr %s730, 8
          %s732 = scalar_lea.vmem %s2, %s731
        $region116: #{decoder_forward.1} parent=103 // pred_fallthru
          _
        // Predicated region
        $region117: #{decoder_forward.1} parent=103 // pred_check
          %p733 = pneg %p133
        $region118: #{decoder_forward.1} parent=103 // pred_check_branch
          %735 = sbr.rel (%p733) target = $region120
        $region119: #{decoder_forward.1} parent=103 // pred_region
          %p736 = scmp.lt.s32.totalorder %s35, 1
          %s737 = scalar_select %p736, %s35, 1
          %s738 = smul.addr %s737, 8
          %s739 = scalar_lea.vmem %s3, %s738
        $region120: #{decoder_forward.1} parent=103 // pred_fallthru
          _
      $region104: #{decoder_forward.1} parent=5 // pred_fallthru
        _
      %p740 = scmp.le.s32.totalorder 1, %s35
      %p741 = scmp.lt.s32.totalorder %s35, 3
      %p742 = pnand %p740, %p741
      %p743 = pneg %p742
      // Predicated region
      $region121: #{decoder_forward.1} parent=5 // pred_check
        _
      $region122: #{decoder_forward.1} parent=5 // pred_check_branch
        %745 = sbr.rel (%p742) target = $region124
      $region123: #{decoder_forward.1} parent=5 // pred_region
        %s746 = ssub.s32 %s35, 1
        %p747 = scmp.lt.s32.totalorder %s40, 1
        %s748 = scalar_select %p747, %s40, 1
        %s749 = smul.addr %s748, 8
        %s750 = scalar_lea.vmem %s0, %s749
        %p751 = pneg %p61
        %p752 = pneg %p58
        %p753 = scmp.lt.s32.totalorder %s40, 1
        %s754 = scalar_select %p753, %s40, 1
        %s755 = smul.addr %s754, 8
        %s756 = scalar_lea.vmem %s1, %s755
        %p757 = pneg %p87
        %p758 = pneg %p84
        %p759 = scmp.lt.s32.totalorder %s40, 1
        %s760 = scalar_select %p759, %s40, 1
        %s761 = smul.addr %s760, 8
        %s762 = scalar_lea.vmem %s2, %s761
        %p763 = pneg %p113
        %p764 = pneg %p110
        %p765 = scmp.lt.s32.totalorder %s40, 1
        %s766 = scalar_select %p765, %s40, 1
        %s767 = smul.addr %s766, 8
        %s768 = scalar_lea.vmem %s3, %s767
        %p769 = pneg %p139
        %p770 = pneg %p136
        %p771 = pneg %p160
        %p772 = pneg %p157
        %p773 = pneg %p181
        %p774 = pneg %p178
        %p775 = pneg %p202
        %p776 = pneg %p199
        %p777 = pneg %p223
        %p778 = pneg %p220
        %p779 = pneg %p244
        %p780 = pneg %p241
        %p781 = pneg %p265
        %p782 = pneg %p262
        %p783 = pneg %p286
        %p784 = pneg %p283
        %p785 = pneg %p307
        %p786 = pneg %p304
        %p787 = pneg %p328
        %p788 = pneg %p325
        %p789 = pneg %p349
        %p790 = pneg %p346
        %p791 = pneg %p370
        %p792 = pneg %p367
        %p793 = pneg %p391
        %p794 = pneg %p388
        %p795 = pneg %p412
        %p796 = pneg %p409
        %p797 = pneg %p433
        %p798 = pneg %p430
        %p799 = pneg %p454
        %p800 = pneg %p451
        %p801 = pneg %p475
        %p802 = pneg %p472
        %p803 = pneg %p496
        %p804 = pneg %p493
        %p805 = pneg %p517
        %p806 = pneg %p514
        %p807 = pneg %p538
        %p808 = pneg %p535
        %p809 = pneg %p559
        %p810 = pneg %p556
        %p811 = pneg %p580
        %p812 = pneg %p577
        %p813 = pneg %p601
        %p814 = pneg %p598
        %p815 = pneg %p627
        %p816 = pneg %p624
        %s817 = sand.u32 %s614, 1
        %s818 = scalar_lea.sflag [#allocation3], %s817
        %s819 = sand.u32 %s614, 1
        %s820 = smul.addr %s819, 8
        %s821 = scalar_lea.vmem [#allocation2], %s820
        %p822 = scmp.lt.s32.totalorder %s40, 1
        %s823 = scalar_select %p822, %s40, 1
        %s824 = smul.addr %s823, 8
        %s825 = scalar_lea.vmem %s0, %s824
        %p826 = scmp.lt.s32.totalorder %s40, 1
        %s827 = scalar_select %p826, %s40, 1
        %s828 = smul.addr %s827, 8
        %s829 = scalar_lea.vmem %s1, %s828
        %p830 = scmp.lt.s32.totalorder %s40, 1
        %s831 = scalar_select %p830, %s40, 1
        %s832 = smul.addr %s831, 8
        %s833 = scalar_lea.vmem %s2, %s832
        %p834 = scmp.lt.s32.totalorder %s40, 1
        %s835 = scalar_select %p834, %s40, 1
        %s836 = smul.addr %s835, 8
        %s837 = scalar_lea.vmem %s3, %s836
        %v839 = vld [vmem:[%s825] sm:$0xff]
        %v840 = vld [vmem:[%s829] sm:$0xff]
        %v841 = vpack.c.bf16 %v840, %v840
        %v842 = vld [vmem:[%s833] sm:$0xff]
        %vm843 = vcmp.gt.f32.partialorder %v842, 0.0
        %v844 = vld [vmem:[%s837] sm:$0xff]
        %vm845 = vcmp.gt.f32.partialorder %v844, 0.0
        %v846 = vld [vmem:[%s24] sm:$0x1]
        %v847 = vld [vmem:[%s24 + $0x1] sm:$0x1]
        %v848 = vld [vmem:[%s24 + $0x2] sm:$0x1]
        %v849 = vld [vmem:[%s25] sm:$0x1]
        %v850 = vld [vmem:[%s25 + $0x1] sm:$0x1]
        %v851 = vld [vmem:[%s25 + $0x2] sm:$0x1]
        %v852 = vpack.c.bf16 %v839, %v839
        %v853 = vld [vmem:[%s4] sm:$0xf]
        %v854 = vld [vmem:[%s4 + $0x4] sm:$0xf]
        %v855 = vld [vmem:[%s4 + $0x8] sm:$0xf]
        %v856 = vld [vmem:[%s4 + $0xc] sm:$0xf]
        %v857 = vld [vmem:[%s4 + $0x10] sm:$0xf]
        %v858 = vld [vmem:[%s4 + $0x14] sm:$0xf]
        %v859 = vld [vmem:[%s4 + $0x18] sm:$0xf]
        %v860 = vld [vmem:[%s4 + $0x1c] sm:$0xf]
        %v861 = vld [vmem:[%s4 + $0x20] sm:$0xf]
        %v862 = vld [vmem:[%s4 + $0x24] sm:$0xf]
        %v863 = vld [vmem:[%s4 + $0x28] sm:$0xf]
        %v864 = vld [vmem:[%s4 + $0x2c] sm:$0xf]
        %v865 = vld [vmem:[%s4 + $0x30] sm:$0xf]
        %v866 = vld [vmem:[%s4 + $0x34] sm:$0xf]
        %v867 = vld [vmem:[%s4 + $0x38] sm:$0xf]
        %v868 = vld [vmem:[%s4 + $0x3c] sm:$0xf]
        %v869 = vld [vmem:[%s5] sm:$0x1]
        %v870 = vld [vmem:[%s5 + $0x1] sm:$0x1]
        %v871 = vld [vmem:[%s5 + $0x2] sm:$0x1]
        %v872 = vld [vmem:[%s5 + $0x3] sm:$0x1]
        %v873 = vld [vmem:[%s6] sm:$0xf]
        %v874 = vld [vmem:[%s6 + $0x4] sm:$0xf]
        %v875 = vld [vmem:[%s6 + $0x8] sm:$0xf]
        %v876 = vld [vmem:[%s6 + $0xc] sm:$0xf]
        %v877 = vld [vmem:[%s6 + $0x10] sm:$0xf]
        %v878 = vld [vmem:[%s6 + $0x14] sm:$0xf]
        %v879 = vld [vmem:[%s6 + $0x18] sm:$0xf]
        %v880 = vld [vmem:[%s6 + $0x1c] sm:$0xf]
        %v881 = vld [vmem:[%s6 + $0x20] sm:$0xf]
        %v882 = vld [vmem:[%s6 + $0x24] sm:$0xf]
        %v883 = vld [vmem:[%s6 + $0x28] sm:$0xf]
        %v884 = vld [vmem:[%s6 + $0x2c] sm:$0xf]
        %v885 = vld [vmem:[%s6 + $0x30] sm:$0xf]
        %v886 = vld [vmem:[%s6 + $0x34] sm:$0xf]
        %v887 = vld [vmem:[%s6 + $0x38] sm:$0xf]
        %v888 = vld [vmem:[%s6 + $0x3c] sm:$0xf]
        %v889 = vld [vmem:[%s7] sm:$0x1]
        %v890 = vld [vmem:[%s7 + $0x1] sm:$0x1]
        %v891 = vld [vmem:[%s7 + $0x2] sm:$0x1]
        %v892 = vld [vmem:[%s7 + $0x3] sm:$0x1]
        %v893 = vld [vmem:[%s8] sm:$0xf]
        %v894 = vld [vmem:[%s8 + $0x4] sm:$0xf]
        %v895 = vld [vmem:[%s8 + $0x8] sm:$0xf]
        %v896 = vld [vmem:[%s8 + $0xc] sm:$0xf]
        %v897 = vld [vmem:[%s8 + $0x10] sm:$0xf]
        %v898 = vld [vmem:[%s8 + $0x14] sm:$0xf]
        %v899 = vld [vmem:[%s8 + $0x18] sm:$0xf]
        %v900 = vld [vmem:[%s8 + $0x1c] sm:$0xf]
        %v901 = vld [vmem:[%s8 + $0x20] sm:$0xf]
        %v902 = vld [vmem:[%s8 + $0x24] sm:$0xf]
        %v903 = vld [vmem:[%s8 + $0x28] sm:$0xf]
        %v904 = vld [vmem:[%s8 + $0x2c] sm:$0xf]
        %v905 = vld [vmem:[%s8 + $0x30] sm:$0xf]
        %v906 = vld [vmem:[%s8 + $0x34] sm:$0xf]
        %v907 = vld [vmem:[%s8 + $0x38] sm:$0xf]
        %v908 = vld [vmem:[%s8 + $0x3c] sm:$0xf]
        %v909 = vld [vmem:[%s9] sm:$0x1]
        %v910 = vld [vmem:[%s9 + $0x1] sm:$0x1]
        %v911 = vld [vmem:[%s9 + $0x2] sm:$0x1]
        %v912 = vld [vmem:[%s9 + $0x3] sm:$0x1]
        %v913 = vld [vmem:[%s10] sm:$0xf]
        %v914 = vld [vmem:[%s10 + $0x4] sm:$0xf]
        %v915 = vld [vmem:[%s10 + $0x8] sm:$0xf]
        %v916 = vld [vmem:[%s10 + $0xc] sm:$0xf]
        %v917 = vld [vmem:[%s11] sm:$0x1]
        %v922 = vlaneseq
        %v923 = vshrl.u32 %v922, 7
        %v924 = vsub.s32 0, %v923
        %v925 = vrot.slane %v869, %v924
        %v926 = vlaneseq
        %v927 = vshrl.u32 %v926, 7
        %v928 = vsub.s32 0, %v927
        %v929 = vrot.slane %v870, %v928
        %v930 = vlaneseq
        %v931 = vshrl.u32 %v930, 7
        %v932 = vsub.s32 0, %v931
        %v933 = vrot.slane %v871, %v932
        %v934 = vlaneseq
        %v935 = vshrl.u32 %v934, 7
        %v936 = vsub.s32 0, %v935
        %v937 = vrot.slane %v872, %v936
        %v946 = vunpack.c.l.b16 %v853
        %v947 = vunpack.c.l.b16 %v854
        %v948 = vunpack.c.l.b16 %v855
        %v949 = vunpack.c.l.b16 %v856
        %v950 = vpack.c.b16 %v947, %v946
        %v951 = vpack.c.b16 %v949, %v948
        %vm954 = vcmask 261120
        %v956 = vsel %vm954, %v852, 0
        %958 = vmatprep.subr.bf16.mxu0 0
        %959 = vmatpush1.bf16.msra.mxu0 %v950
        %960 = vmatprep.subr.bf16.mxu0 0
        %961 = vmatpush1.bf16.msra.mxu0 %v951
        %962 = vmatprep.subr.bf16.mxu0 0
        %963 = vmatpush1.bf16.msra.mxu0 0
        %964 = vmatprep.subr.bf16.mxu0 0
        %965 = vmatpush1.bf16.msra.mxu0 0
        %966 = vmatprep.subr.bf16.mxu0 0
        %967 = vmatpush1.bf16.msra.mxu0 0
        %968 = vmatprep.subr.bf16.mxu0 0
        %969 = vmatpush1.bf16.msra.mxu0 0
        %970 = vmatprep.subr.bf16.mxu0 0
        %971 = vmatpush1.bf16.msra.mxu0 0
        %972 = vmatprep.subr.bf16.mxu0 0
        %973 = vmatpush1.bf16.msra.mxu0 0
        %974 = vmatprep.subr.bf16.mxu0 0
        %975 = vmatpush1.bf16.msra.mxu0 0
        %976 = vmatprep.subr.bf16.mxu0 0
        %977 = vmatpush1.bf16.msra.mxu0 0
        %978 = vmatprep.subr.bf16.mxu0 0
        %979 = vmatpush1.bf16.msra.mxu0 0
        %980 = vmatprep.subr.bf16.mxu0 0
        %981 = vmatpush1.bf16.msra.mxu0 0
        %982 = vmatprep.subr.bf16.mxu0 0
        %983 = vmatpush1.bf16.msra.mxu0 0
        %984 = vmatprep.subr.bf16.mxu0 0
        %985 = vmatpush1.bf16.msra.mxu0 0
        %986 = vmatprep.subr.bf16.mxu0 0
        %987 = vmatpush1.bf16.msra.mxu0 0
        %988 = vmatprep.subr.bf16.mxu0 0
        %989 = vmatpush1.bf16.msra.mxu0 0
        %990 = vmatprep.mubr.bf16.mxu0 0
        %991 = vmatmul.mubr.bf16.gmra.mrb[0].mxu0 %v956
        %v992 = vpop.f32.mrb[0].mxu0
        %v993 = vadd.f32 %v925, %v992
        %v994 = vpop.f32.mrb[0].mxu0
        %v995 = vpop.f32.mrb[0].mxu0
        %v996 = vpop.f32.mrb[0].mxu0
        %997 = vdwg.mxu0
        %v1002 = vunpack.c.l.b16 %v857
        %v1003 = vunpack.c.l.b16 %v858
        %v1004 = vunpack.c.l.b16 %v859
        %v1005 = vunpack.c.l.b16 %v860
        %v1006 = vpack.c.b16 %v1003, %v1002
        %v1007 = vpack.c.b16 %v1005, %v1004
        %1010 = vmatprep.subr.bf16.mxu0 0
        %1011 = vmatpush1.bf16.msra.mxu0 %v1006
        %1012 = vmatprep.subr.bf16.mxu0 0
        %1013 = vmatpush1.bf16.msra.mxu0 %v1007
        %1014 = vmatprep.subr.bf16.mxu0 0
        %1015 = vmatpush1.bf16.msra.mxu0 0
        %1016 = vmatprep.subr.bf16.mxu0 0
        %1017 = vmatpush1.bf16.msra.mxu0 0
        %1018 = vmatprep.subr.bf16.mxu0 0
        %1019 = vmatpush1.bf16.msra.mxu0 0
        %1020 = vmatprep.subr.bf16.mxu0 0
        %1021 = vmatpush1.bf16.msra.mxu0 0
        %1022 = vmatprep.subr.bf16.mxu0 0
        %1023 = vmatpush1.bf16.msra.mxu0 0
        %1024 = vmatprep.subr.bf16.mxu0 0
        %1025 = vmatpush1.bf16.msra.mxu0 0
        %1026 = vmatprep.subr.bf16.mxu0 0
        %1027 = vmatpush1.bf16.msra.mxu0 0
        %1028 = vmatprep.subr.bf16.mxu0 0
        %1029 = vmatpush1.bf16.msra.mxu0 0
        %1030 = vmatprep.subr.bf16.mxu0 0
        %1031 = vmatpush1.bf16.msra.mxu0 0
        %1032 = vmatprep.subr.bf16.mxu0 0
        %1033 = vmatpush1.bf16.msra.mxu0 0
        %1034 = vmatprep.subr.bf16.mxu0 0
        %1035 = vmatpush1.bf16.msra.mxu0 0
        %1036 = vmatprep.subr.bf16.mxu0 0
        %1037 = vmatpush1.bf16.msra.mxu0 0
        %1038 = vmatprep.subr.bf16.mxu0 0
        %1039 = vmatpush1.bf16.msra.mxu0 0
        %1040 = vmatprep.subr.bf16.mxu0 0
        %1041 = vmatpush1.bf16.msra.mxu0 0
        %1042 = vmatprep.mubr.bf16.mxu0 0
        %1043 = vmatmul.mubr.bf16.gmra.mrb[0].mxu0 %v956
        %v1044 = vpop.f32.mrb[0].mxu0
        %v1045 = vadd.f32 %v929, %v1044
        %v1046 = vpop.f32.mrb[0].mxu0
        %v1047 = vpop.f32.mrb[0].mxu0
        %v1048 = vpop.f32.mrb[0].mxu0
        %1049 = vdwg.mxu0
        %v1054 = vunpack.c.l.b16 %v861
        %v1055 = vunpack.c.l.b16 %v862
        %v1056 = vunpack.c.l.b16 %v863
        %v1057 = vunpack.c.l.b16 %v864
        %v1058 = vpack.c.b16 %v1055, %v1054
        %v1059 = vpack.c.b16 %v1057, %v1056
        %1062 = vmatprep.subr.bf16.mxu0 0
        %1063 = vmatpush1.bf16.msra.mxu0 %v1058
        %1064 = vmatprep.subr.bf16.mxu0 0
        %1065 = vmatpush1.bf16.msra.mxu0 %v1059
        %1066 = vmatprep.subr.bf16.mxu0 0
        %1067 = vmatpush1.bf16.msra.mxu0 0
        %1068 = vmatprep.subr.bf16.mxu0 0
        %1069 = vmatpush1.bf16.msra.mxu0 0
        %1070 = vmatprep.subr.bf16.mxu0 0
        %1071 = vmatpush1.bf16.msra.mxu0 0
        %1072 = vmatprep.subr.bf16.mxu0 0
        %1073 = vmatpush1.bf16.msra.mxu0 0
        %1074 = vmatprep.subr.bf16.mxu0 0
        %1075 = vmatpush1.bf16.msra.mxu0 0
        %1076 = vmatprep.subr.bf16.mxu0 0
        %1077 = vmatpush1.bf16.msra.mxu0 0
        %1078 = vmatprep.subr.bf16.mxu0 0
        %1079 = vmatpush1.bf16.msra.mxu0 0
        %1080 = vmatprep.subr.bf16.mxu0 0
        %1081 = vmatpush1.bf16.msra.mxu0 0
        %1082 = vmatprep.subr.bf16.mxu0 0
        %1083 = vmatpush1.bf16.msra.mxu0 0
        %1084 = vmatprep.subr.bf16.mxu0 0
        %1085 = vmatpush1.bf16.msra.mxu0 0
        %1086 = vmatprep.subr.bf16.mxu0 0
        %1087 = vmatpush1.bf16.msra.mxu0 0
        %1088 = vmatprep.subr.bf16.mxu0 0
        %1089 = vmatpush1.bf16.msra.mxu0 0
        %1090 = vmatprep.subr.bf16.mxu0 0
        %1091 = vmatpush1.bf16.msra.mxu0 0
        %1092 = vmatprep.subr.bf16.mxu0 0
        %1093 = vmatpush1.bf16.msra.mxu0 0
        %1094 = vmatprep.mubr.bf16.mxu0 0
        %1095 = vmatmul.mubr.bf16.gmra.mrb[0].mxu0 %v956
        %v1096 = vpop.f32.mrb[0].mxu0
        %v1097 = vadd.f32 %v933, %v1096
        %v1098 = vpop.f32.mrb[0].mxu0
        %v1099 = vpop.f32.mrb[0].mxu0
        %v1100 = vpop.f32.mrb[0].mxu0
        %1101 = vdwg.mxu0
        %v1106 = vunpack.c.l.b16 %v865
        %v1107 = vunpack.c.l.b16 %v866
        %v1108 = vunpack.c.l.b16 %v867
        %v1109 = vunpack.c.l.b16 %v868
        %v1110 = vpack.c.b16 %v1107, %v1106
        %v1111 = vpack.c.b16 %v1109, %v1108
        %1114 = vmatprep.subr.bf16.mxu0 0
        %1115 = vmatpush1.bf16.msra.mxu0 %v1110
        %1116 = vmatprep.subr.bf16.mxu0 0
        %1117 = vmatpush1.bf16.msra.mxu0 %v1111
        %1118 = vmatprep.subr.bf16.mxu0 0
        %1119 = vmatpush1.bf16.msra.mxu0 0
        %1120 = vmatprep.subr.bf16.mxu0 0
        %1121 = vmatpush1.bf16.msra.mxu0 0
        %1122 = vmatprep.subr.bf16.mxu0 0
        %1123 = vmatpush1.bf16.msra.mxu0 0
        %1124 = vmatprep.subr.bf16.mxu0 0
        %1125 = vmatpush1.bf16.msra.mxu0 0
        %1126 = vmatprep.subr.bf16.mxu0 0
        %1127 = vmatpush1.bf16.msra.mxu0 0
        %1128 = vmatprep.subr.bf16.mxu0 0
        %1129 = vmatpush1.bf16.msra.mxu0 0
        %1130 = vmatprep.subr.bf16.mxu0 0
        %1131 = vmatpush1.bf16.msra.mxu0 0
        %1132 = vmatprep.subr.bf16.mxu0 0
        %1133 = vmatpush1.bf16.msra.mxu0 0
        %1134 = vmatprep.subr.bf16.mxu0 0
        %1135 = vmatpush1.bf16.msra.mxu0 0
        %1136 = vmatprep.subr.bf16.mxu0 0
        %1137 = vmatpush1.bf16.msra.mxu0 0
        %1138 = vmatprep.subr.bf16.mxu0 0
        %1139 = vmatpush1.bf16.msra.mxu0 0
        %1140 = vmatprep.subr.bf16.mxu0 0
        %1141 = vmatpush1.bf16.msra.mxu0 0
        %1142 = vmatprep.subr.bf16.mxu0 0
        %1143 = vmatpush1.bf16.msra.mxu0 0
        %1144 = vmatprep.subr.bf16.mxu0 0
        %1145 = vmatpush1.bf16.msra.mxu0 0
        %1146 = vmatprep.mubr.bf16.mxu0 0
        %1147 = vmatmul.mubr.bf16.gmra.mrb[0].mxu0 %v956
        %v1148 = vpop.f32.mrb[0].mxu0
        %v1149 = vadd.f32 %v937, %v1148
        %v1150 = vpop.f32.mrb[0].mxu0
        %v1151 = vpop.f32.mrb[0].mxu0
        %v1152 = vpop.f32.mrb[0].mxu0
        %1153 = vdwg.mxu0
        %v1158 = vlaneseq
        %v1159 = vshrl.u32 %v1158, 7
        %v1160 = vsub.s32 0, %v1159
        %v1161 = vrot.slane %v889, %v1160
        %v1162 = vlaneseq
        %v1163 = vshrl.u32 %v1162, 7
        %v1164 = vsub.s32 0, %v1163
        %v1165 = vrot.slane %v890, %v1164
        %v1166 = vlaneseq
        %v1167 = vshrl.u32 %v1166, 7
        %v1168 = vsub.s32 0, %v1167
        %v1169 = vrot.slane %v891, %v1168
        %v1170 = vlaneseq
        %v1171 = vshrl.u32 %v1170, 7
        %v1172 = vsub.s32 0, %v1171
        %v1173 = vrot.slane %v892, %v1172
        %v1182 = vunpack.c.l.b16 %v873
        %v1183 = vunpack.c.l.b16 %v874
        %v1184 = vunpack.c.l.b16 %v875
        %v1185 = vunpack.c.l.b16 %v876
        %v1186 = vpack.c.b16 %v1183, %v1182
        %v1187 = vpack.c.b16 %v1185, %v1184
        %1190 = vmatprep.subr.bf16.mxu0 0
        %1191 = vmatpush1.bf16.msra.mxu0 %v1186
        %1192 = vmatprep.subr.bf16.mxu0 0
        %1193 = vmatpush1.bf16.msra.mxu0 %v1187
        %1194 = vmatprep.subr.bf16.mxu0 0
        %1195 = vmatpush1.bf16.msra.mxu0 0
        %1196 = vmatprep.subr.bf16.mxu0 0
        %1197 = vmatpush1.bf16.msra.mxu0 0
        %1198 = vmatprep.subr.bf16.mxu0 0
        %1199 = vmatpush1.bf16.msra.mxu0 0
        %1200 = vmatprep.subr.bf16.mxu0 0
        %1201 = vmatpush1.bf16.msra.mxu0 0
        %1202 = vmatprep.subr.bf16.mxu0 0
        %1203 = vmatpush1.bf16.msra.mxu0 0
        %1204 = vmatprep.subr.bf16.mxu0 0
        %1205 = vmatpush1.bf16.msra.mxu0 0
        %1206 = vmatprep.subr.bf16.mxu0 0
        %1207 = vmatpush1.bf16.msra.mxu0 0
        %1208 = vmatprep.subr.bf16.mxu0 0
        %1209 = vmatpush1.bf16.msra.mxu0 0
        %1210 = vmatprep.subr.bf16.mxu0 0
        %1211 = vmatpush1.bf16.msra.mxu0 0
        %1212 = vmatprep.subr.bf16.mxu0 0
        %1213 = vmatpush1.bf16.msra.mxu0 0
        %1214 = vmatprep.subr.bf16.mxu0 0
        %1215 = vmatpush1.bf16.msra.mxu0 0
        %1216 = vmatprep.subr.bf16.mxu0 0
        %1217 = vmatpush1.bf16.msra.mxu0 0
        %1218 = vmatprep.subr.bf16.mxu0 0
        %1219 = vmatpush1.bf16.msra.mxu0 0
        %1220 = vmatprep.subr.bf16.mxu0 0
        %1221 = vmatpush1.bf16.msra.mxu0 0
        %1222 = vmatprep.mubr.bf16.mxu0 0
        %1223 = vmatmul.mubr.bf16.gmra.mrb[0].mxu0 %v956
        %v1224 = vpop.f32.mrb[0].mxu0
        %v1225 = vadd.f32 %v1161, %v1224
        %v1226 = vpop.f32.mrb[0].mxu0
        %v1227 = vpop.f32.mrb[0].mxu0
        %v1228 = vpop.f32.mrb[0].mxu0
        %1229 = vdwg.mxu0
        %v1234 = vunpack.c.l.b16 %v877
        %v1235 = vunpack.c.l.b16 %v878
        %v1236 = vunpack.c.l.b16 %v879
        %v1237 = vunpack.c.l.b16 %v880
        %v1238 = vpack.c.b16 %v1235, %v1234
        %v1239 = vpack.c.b16 %v1237, %v1236
        %1242 = vmatprep.subr.bf16.mxu0 0
        %1243 = vmatpush1.bf16.msra.mxu0 %v1238
        %1244 = vmatprep.subr.bf16.mxu0 0
        %1245 = vmatpush1.bf16.msra.mxu0 %v1239
        %1246 = vmatprep.subr.bf16.mxu0 0
        %1247 = vmatpush1.bf16.msra.mxu0 0
        %1248 = vmatprep.subr.bf16.mxu0 0
        %1249 = vmatpush1.bf16.msra.mxu0 0
        %1250 = vmatprep.subr.bf16.mxu0 0
        %1251 = vmatpush1.bf16.msra.mxu0 0
        %1252 = vmatprep.subr.bf16.mxu0 0
        %1253 = vmatpush1.bf16.msra.mxu0 0
        %1254 = vmatprep.subr.bf16.mxu0 0
        %1255 = vmatpush1.bf16.msra.mxu0 0
        %1256 = vmatprep.subr.bf16.mxu0 0
        %1257 = vmatpush1.bf16.msra.mxu0 0
        %1258 = vmatprep.subr.bf16.mxu0 0
        %1259 = vmatpush1.bf16.msra.mxu0 0
        %1260 = vmatprep.subr.bf16.mxu0 0
        %1261 = vmatpush1.bf16.msra.mxu0 0
        %1262 = vmatprep.subr.bf16.mxu0 0
        %1263 = vmatpush1.bf16.msra.mxu0 0
        %1264 = vmatprep.subr.bf16.mxu0 0
        %1265 = vmatpush1.bf16.msra.mxu0 0
        %1266 = vmatprep.subr.bf16.mxu0 0
        %1267 = vmatpush1.bf16.msra.mxu0 0
        %1268 = vmatprep.subr.bf16.mxu0 0
        %1269 = vmatpush1.bf16.msra.mxu0 0
        %1270 = vmatprep.subr.bf16.mxu0 0
        %1271 = vmatpush1.bf16.msra.mxu0 0
        %1272 = vmatprep.subr.bf16.mxu0 0
        %1273 = vmatpush1.bf16.msra.mxu0 0
        %1274 = vmatprep.mubr.bf16.mxu0 0
        %1275 = vmatmul.mubr.bf16.gmra.mrb[0].mxu0 %v956
        %v1276 = vpop.f32.mrb[0].mxu0
        %v1277 = vadd.f32 %v1165, %v1276
        %v1278 = vpop.f32.mrb[0].mxu0
        %v1279 = vpop.f32.mrb[0].mxu0
        %v1280 = vpop.f32.mrb[0].mxu0
        %1281 = vdwg.mxu0
        %v1286 = vunpack.c.l.b16 %v881
        %v1287 = vunpack.c.l.b16 %v882
        %v1288 = vunpack.c.l.b16 %v883
        %v1289 = vunpack.c.l.b16 %v884
        %v1290 = vpack.c.b16 %v1287, %v1286
        %v1291 = vpack.c.b16 %v1289, %v1288
        %1294 = vmatprep.subr.bf16.mxu0 0
        %1295 = vmatpush1.bf16.msra.mxu0 %v1290
        %1296 = vmatprep.subr.bf16.mxu0 0
        %1297 = vmatpush1.bf16.msra.mxu0 %v1291
        %1298 = vmatprep.subr.bf16.mxu0 0
        %1299 = vmatpush1.bf16.msra.mxu0 0
        %1300 = vmatprep.subr.bf16.mxu0 0
        %1301 = vmatpush1.bf16.msra.mxu0 0
        %1302 = vmatprep.subr.bf16.mxu0 0
        %1303 = vmatpush1.bf16.msra.mxu0 0
        %1304 = vmatprep.subr.bf16.mxu0 0
        %1305 = vmatpush1.bf16.msra.mxu0 0
        %1306 = vmatprep.subr.bf16.mxu0 0
        %1307 = vmatpush1.bf16.msra.mxu0 0
        %1308 = vmatprep.subr.bf16.mxu0 0
        %1309 = vmatpush1.bf16.msra.mxu0 0
        %1310 = vmatprep.subr.bf16.mxu0 0
        %1311 = vmatpush1.bf16.msra.mxu0 0
        %1312 = vmatprep.subr.bf16.mxu0 0
        %1313 = vmatpush1.bf16.msra.mxu0 0
        %1314 = vmatprep.subr.bf16.mxu0 0
        %1315 = vmatpush1.bf16.msra.mxu0 0
        %1316 = vmatprep.subr.bf16.mxu0 0
        %1317 = vmatpush1.bf16.msra.mxu0 0
        %1318 = vmatprep.subr.bf16.mxu0 0
        %1319 = vmatpush1.bf16.msra.mxu0 0
        %1320 = vmatprep.subr.bf16.mxu0 0
        %1321 = vmatpush1.bf16.msra.mxu0 0
        %1322 = vmatprep.subr.bf16.mxu0 0
        %1323 = vmatpush1.bf16.msra.mxu0 0
        %1324 = vmatprep.subr.bf16.mxu0 0
        %1325 = vmatpush1.bf16.msra.mxu0 0
        %1326 = vmatprep.mubr.bf16.mxu0 0
        %1327 = vmatmul.mubr.bf16.gmra.mrb[0].mxu0 %v956
        %v1328 = vpop.f32.mrb[0].mxu0
        %v1329 = vadd.f32 %v1169, %v1328
        %v1330 = vpop.f32.mrb[0].mxu0
        %v1331 = vpop.f32.mrb[0].mxu0
        %v1332 = vpop.f32.mrb[0].mxu0
        %1333 = vdwg.mxu0
        %v1338 = vunpack.c.l.b16 %v885
        %v1339 = vunpack.c.l.b16 %v886
        %v1340 = vunpack.c.l.b16 %v887
        %v1341 = vunpack.c.l.b16 %v888
        %v1342 = vpack.c.b16 %v1339, %v1338
        %v1343 = vpack.c.b16 %v1341, %v1340
        %1346 = vmatprep.subr.bf16.mxu0 0
        %1347 = vmatpush1.bf16.msra.mxu0 %v1342
        %1348 = vmatprep.subr.bf16.mxu0 0
        %1349 = vmatpush1.bf16.msra.mxu0 %v1343
        %1350 = vmatprep.subr.bf16.mxu0 0
        %1351 = vmatpush1.bf16.msra.mxu0 0
        %1352 = vmatprep.subr.bf16.mxu0 0
        %1353 = vmatpush1.bf16.msra.mxu0 0
        %1354 = vmatprep.subr.bf16.mxu0 0
        %1355 = vmatpush1.bf16.msra.mxu0 0
        %1356 = vmatprep.subr.bf16.mxu0 0
        %1357 = vmatpush1.bf16.msra.mxu0 0
        %1358 = vmatprep.subr.bf16.mxu0 0
        %1359 = vmatpush1.bf16.msra.mxu0 0
        %1360 = vmatprep.subr.bf16.mxu0 0
        %1361 = vmatpush1.bf16.msra.mxu0 0
        %1362 = vmatprep.subr.bf16.mxu0 0
        %1363 = vmatpush1.bf16.msra.mxu0 0
        %1364 = vmatprep.subr.bf16.mxu0 0
        %1365 = vmatpush1.bf16.msra.mxu0 0
        %1366 = vmatprep.subr.bf16.mxu0 0
        %1367 = vmatpush1.bf16.msra.mxu0 0
        %1368 = vmatprep.subr.bf16.mxu0 0
        %1369 = vmatpush1.bf16.msra.mxu0 0
        %1370 = vmatprep.subr.bf16.mxu0 0
        %1371 = vmatpush1.bf16.msra.mxu0 0
        %1372 = vmatprep.subr.bf16.mxu0 0
        %1373 = vmatpush1.bf16.msra.mxu0 0
        %1374 = vmatprep.subr.bf16.mxu0 0
        %1375 = vmatpush1.bf16.msra.mxu0 0
        %1376 = vmatprep.subr.bf16.mxu0 0
        %1377 = vmatpush1.bf16.msra.mxu0 0
        %1378 = vmatprep.mubr.bf16.mxu0 0
        %1379 = vmatmul.mubr.bf16.gmra.mrb[0].mxu0 %v956
        %v1380 = vpop.f32.mrb[0].mxu0
        %v1381 = vadd.f32 %v1173, %v1380
        %v1382 = vpop.f32.mrb[0].mxu0
        %v1383 = vpop.f32.mrb[0].mxu0
        %v1384 = vpop.f32.mrb[0].mxu0
        %1385 = vdwg.mxu0
        %v1390 = vlaneseq
        %v1391 = vshrl.u32 %v1390, 7
        %v1392 = vsub.s32 0, %v1391
        %v1393 = vrot.slane %v909, %v1392
        %v1394 = vlaneseq
        %v1395 = vshrl.u32 %v1394, 7
        %v1396 = vsub.s32 0, %v1395
        %v1397 = vrot.slane %v910, %v1396
        %v1398 = vlaneseq
        %v1399 = vshrl.u32 %v1398, 7
        %v1400 = vsub.s32 0, %v1399
        %v1401 = vrot.slane %v911, %v1400
        %v1402 = vlaneseq
        %v1403 = vshrl.u32 %v1402, 7
        %v1404 = vsub.s32 0, %v1403
        %v1405 = vrot.slane %v912, %v1404
        %v1414 = vunpack.c.l.b16 %v893
        %v1415 = vunpack.c.l.b16 %v894
        %v1416 = vunpack.c.l.b16 %v895
        %v1417 = vunpack.c.l.b16 %v896
        %v1418 = vpack.c.b16 %v1415, %v1414
        %v1419 = vpack.c.b16 %v1417, %v1416
        %1422 = vmatprep.subr.bf16.mxu0 0
        %1423 = vmatpush1.bf16.msra.mxu0 %v1418
        %1424 = vmatprep.subr.bf16.mxu0 0
        %1425 = vmatpush1.bf16.msra.mxu0 %v1419
        %1426 = vmatprep.subr.bf16.mxu0 0
        %1427 = vmatpush1.bf16.msra.mxu0 0
        %1428 = vmatprep.subr.bf16.mxu0 0
        %1429 = vmatpush1.bf16.msra.mxu0 0
        %1430 = vmatprep.subr.bf16.mxu0 0
        %1431 = vmatpush1.bf16.msra.mxu0 0
        %1432 = vmatprep.subr.bf16.mxu0 0
        %1433 = vmatpush1.bf16.msra.mxu0 0
        %1434 = vmatprep.subr.bf16.mxu0 0
        %1435 = vmatpush1.bf16.msra.mxu0 0
        %1436 = vmatprep.subr.bf16.mxu0 0
        %1437 = vmatpush1.bf16.msra.mxu0 0
        %1438 = vmatprep.subr.bf16.mxu0 0
        %1439 = vmatpush1.bf16.msra.mxu0 0
        %1440 = vmatprep.subr.bf16.mxu0 0
        %1441 = vmatpush1.bf16.msra.mxu0 0
        %1442 = vmatprep.subr.bf16.mxu0 0
        %1443 = vmatpush1.bf16.msra.mxu0 0
        %1444 = vmatprep.subr.bf16.mxu0 0
        %1445 = vmatpush1.bf16.msra.mxu0 0
        %1446 = vmatprep.subr.bf16.mxu0 0
        %1447 = vmatpush1.bf16.msra.mxu0 0
        %1448 = vmatprep.subr.bf16.mxu0 0
        %1449 = vmatpush1.bf16.msra.mxu0 0
        %1450 = vmatprep.subr.bf16.mxu0 0
        %1451 = vmatpush1.bf16.msra.mxu0 0
        %1452 = vmatprep.subr.bf16.mxu0 0
        %1453 = vmatpush1.bf16.msra.mxu0 0
        %1454 = vmatprep.mubr.bf16.mxu0 0
        %1455 = vmatmul.mubr.bf16.gmra.mrb[0].mxu0 %v956
        %v1456 = vpop.f32.mrb[0].mxu0
        %v1457 = vadd.f32 %v1393, %v1456
        %v1458 = vpop.f32.mrb[0].mxu0
        %v1459 = vpop.f32.mrb[0].mxu0
        %v1460 = vpop.f32.mrb[0].mxu0
        %1461 = vdwg.mxu0
        %v1466 = vunpack.c.l.b16 %v897
        %v1467 = vunpack.c.l.b16 %v898
        %v1468 = vunpack.c.l.b16 %v899
        %v1469 = vunpack.c.l.b16 %v900
        %v1470 = vpack.c.b16 %v1467, %v1466
        %v1471 = vpack.c.b16 %v1469, %v1468
        %1474 = vmatprep.subr.bf16.mxu0 0
        %1475 = vmatpush1.bf16.msra.mxu0 %v1470
        %1476 = vmatprep.subr.bf16.mxu0 0
        %1477 = vmatpush1.bf16.msra.mxu0 %v1471
        %1478 = vmatprep.subr.bf16.mxu0 0
        %1479 = vmatpush1.bf16.msra.mxu0 0
        %1480 = vmatprep.subr.bf16.mxu0 0
        %1481 = vmatpush1.bf16.msra.mxu0 0
        %1482 = vmatprep.subr.bf16.mxu0 0
        %1483 = vmatpush1.bf16.msra.mxu0 0
        %1484 = vmatprep.subr.bf16.mxu0 0
        %1485 = vmatpush1.bf16.msra.mxu0 0
        %1486 = vmatprep.subr.bf16.mxu0 0
        %1487 = vmatpush1.bf16.msra.mxu0 0
        %1488 = vmatprep.subr.bf16.mxu0 0
        %1489 = vmatpush1.bf16.msra.mxu0 0
        %1490 = vmatprep.subr.bf16.mxu0 0
        %1491 = vmatpush1.bf16.msra.mxu0 0
        %1492 = vmatprep.subr.bf16.mxu0 0
        %1493 = vmatpush1.bf16.msra.mxu0 0
        %1494 = vmatprep.subr.bf16.mxu0 0
        %1495 = vmatpush1.bf16.msra.mxu0 0
        %1496 = vmatprep.subr.bf16.mxu0 0
        %1497 = vmatpush1.bf16.msra.mxu0 0
        %1498 = vmatprep.subr.bf16.mxu0 0
        %1499 = vmatpush1.bf16.msra.mxu0 0
        %1500 = vmatprep.subr.bf16.mxu0 0
        %1501 = vmatpush1.bf16.msra.mxu0 0
        %1502 = vmatprep.subr.bf16.mxu0 0
        %1503 = vmatpush1.bf16.msra.mxu0 0
        %1504 = vmatprep.subr.bf16.mxu0 0
        %1505 = vmatpush1.bf16.msra.mxu0 0
        %1506 = vmatprep.mubr.bf16.mxu0 0
        %1507 = vmatmul.mubr.bf16.gmra.mrb[0].mxu0 %v956
        %v1508 = vpop.f32.mrb[0].mxu0
        %v1509 = vadd.f32 %v1397, %v1508
        %v1510 = vpop.f32.mrb[0].mxu0
        %v1511 = vpop.f32.mrb[0].mxu0
        %v1512 = vpop.f32.mrb[0].mxu0
        %1513 = vdwg.mxu0
        %v1518 = vunpack.c.l.b16 %v901
        %v1519 = vunpack.c.l.b16 %v902
        %v1520 = vunpack.c.l.b16 %v903
        %v1521 = vunpack.c.l.b16 %v904
        %v1522 = vpack.c.b16 %v1519, %v1518
        %v1523 = vpack.c.b16 %v1521, %v1520
        %1526 = vmatprep.subr.bf16.mxu0 0
        %1527 = vmatpush1.bf16.msra.mxu0 %v1522
        %1528 = vmatprep.subr.bf16.mxu0 0
        %1529 = vmatpush1.bf16.msra.mxu0 %v1523
        %1530 = vmatprep.subr.bf16.mxu0 0
        %1531 = vmatpush1.bf16.msra.mxu0 0
        %1532 = vmatprep.subr.bf16.mxu0 0
        %1533 = vmatpush1.bf16.msra.mxu0 0
        %1534 = vmatprep.subr.bf16.mxu0 0
        %1535 = vmatpush1.bf16.msra.mxu0 0
        %1536 = vmatprep.subr.bf16.mxu0 0
        %1537 = vmatpush1.bf16.msra.mxu0 0
        %1538 = vmatprep.subr.bf16.mxu0 0
        %1539 = vmatpush1.bf16.msra.mxu0 0
        %1540 = vmatprep.subr.bf16.mxu0 0
        %1541 = vmatpush1.bf16.msra.mxu0 0
        %1542 = vmatprep.subr.bf16.mxu0 0
        %1543 = vmatpush1.bf16.msra.mxu0 0
        %1544 = vmatprep.subr.bf16.mxu0 0
        %1545 = vmatpush1.bf16.msra.mxu0 0
        %1546 = vmatprep.subr.bf16.mxu0 0
        %1547 = vmatpush1.bf16.msra.mxu0 0
        %1548 = vmatprep.subr.bf16.mxu0 0
        %1549 = vmatpush1.bf16.msra.mxu0 0
        %1550 = vmatprep.subr.bf16.mxu0 0
        %1551 = vmatpush1.bf16.msra.mxu0 0
        %1552 = vmatprep.subr.bf16.mxu0 0
        %1553 = vmatpush1.bf16.msra.mxu0 0
        %1554 = vmatprep.subr.bf16.mxu0 0
        %1555 = vmatpush1.bf16.msra.mxu0 0
        %1556 = vmatprep.subr.bf16.mxu0 0
        %1557 = vmatpush1.bf16.msra.mxu0 0
        %1558 = vmatprep.mubr.bf16.mxu0 0
        %1559 = vmatmul.mubr.bf16.gmra.mrb[0].mxu0 %v956
        %v1560 = vpop.f32.mrb[0].mxu0
        %v1561 = vadd.f32 %v1401, %v1560
        %v1562 = vpop.f32.mrb[0].mxu0
        %v1563 = vpop.f32.mrb[0].mxu0
        %v1564 = vpop.f32.mrb[0].mxu0
        %1565 = vdwg.mxu0
        %v1570 = vunpack.c.l.b16 %v905
        %v1571 = vunpack.c.l.b16 %v906
        %v1572 = vunpack.c.l.b16 %v907
        %v1573 = vunpack.c.l.b16 %v908
        %v1574 = vpack.c.b16 %v1571, %v1570
        %v1575 = vpack.c.b16 %v1573, %v1572
        %1578 = vmatprep.subr.bf16.mxu0 0
        %1579 = vmatpush1.bf16.msra.mxu0 %v1574
        %1580 = vmatprep.subr.bf16.mxu0 0
        %1581 = vmatpush1.bf16.msra.mxu0 %v1575
        %1582 = vmatprep.subr.bf16.mxu0 0
        %1583 = vmatpush1.bf16.msra.mxu0 0
        %1584 = vmatprep.subr.bf16.mxu0 0
        %1585 = vmatpush1.bf16.msra.mxu0 0
        %1586 = vmatprep.subr.bf16.mxu0 0
        %1587 = vmatpush1.bf16.msra.mxu0 0
        %1588 = vmatprep.subr.bf16.mxu0 0
        %1589 = vmatpush1.bf16.msra.mxu0 0
        %1590 = vmatprep.subr.bf16.mxu0 0
        %1591 = vmatpush1.bf16.msra.mxu0 0
        %1592 = vmatprep.subr.bf16.mxu0 0
        %1593 = vmatpush1.bf16.msra.mxu0 0
        %1594 = vmatprep.subr.bf16.mxu0 0
        %1595 = vmatpush1.bf16.msra.mxu0 0
        %1596 = vmatprep.subr.bf16.mxu0 0
        %1597 = vmatpush1.bf16.msra.mxu0 0
        %1598 = vmatprep.subr.bf16.mxu0 0
        %1599 = vmatpush1.bf16.msra.mxu0 0
        %1600 = vmatprep.subr.bf16.mxu0 0
        %1601 = vmatpush1.bf16.msra.mxu0 0
        %1602 = vmatprep.subr.bf16.mxu0 0
        %1603 = vmatpush1.bf16.msra.mxu0 0
        %1604 = vmatprep.subr.bf16.mxu0 0
        %1605 = vmatpush1.bf16.msra.mxu0 0
        %1606 = vmatprep.subr.bf16.mxu0 0
        %1607 = vmatpush1.bf16.msra.mxu0 0
        %1608 = vmatprep.subr.bf16.mxu0 0
        %1609 = vmatpush1.bf16.msra.mxu0 0
        %1610 = vmatprep.mubr.bf16.mxu0 0
        %1611 = vmatmul.mubr.bf16.gmra.mrb[0].mxu0 %v956
        %v1612 = vpop.f32.mrb[0].mxu0
        %v1613 = vadd.f32 %v1405, %v1612
        %v1614 = vpop.f32.mrb[0].mxu0
        %v1615 = vpop.f32.mrb[0].mxu0
        %v1616 = vpop.f32.mrb[0].mxu0
        %1617 = vdwg.mxu0
        %v1618 = vpack.c.bf16 %v993, %v993
        %v1619 = vpack.c.bf16 %v1045, %v1045
        %v1620 = vpack.c.bf16 %v1097, %v1097
        %v1621 = vpack.c.bf16 %v1149, %v1149
        %v1622 = vpack.c.bf16 %v1225, %v1225
        %v1623 = vpack.c.bf16 %v1277, %v1277
        %v1624 = vpack.c.bf16 %v1329, %v1329
        %v1625 = vpack.c.bf16 %v1381, %v1381
        %vm1626 = vcmask 64512
        %v1628 = vsel %vm1626, %v1618, 0
        %v1631 = vsel %vm1626, %v1622, 0
        %1633 = vmatprep.subr.bf16.mxu0 0
        %1634 = vmatpush1.bf16.xpose.msra.mxu0 %v1631
        %1635 = vmatprep.subr.bf16.mxu0 0
        %1636 = vmatpush1.bf16.xpose.msra.mxu0 0
        %1637 = vmatprep.subr.bf16.mxu0 0
        %1638 = vmatpush1.bf16.xpose.msra.mxu0 0
        %1639 = vmatprep.subr.bf16.mxu0 0
        %1640 = vmatpush1.bf16.xpose.msra.mxu0 0
        %1641 = vmatprep.subr.bf16.mxu0 0
        %1642 = vmatpush1.bf16.xpose.msra.mxu0 0
        %1643 = vmatprep.subr.bf16.mxu0 0
        %1644 = vmatpush1.bf16.xpose.msra.mxu0 0
        %1645 = vmatprep.subr.bf16.mxu0 0
        %1646 = vmatpush1.bf16.xpose.msra.mxu0 0
        %1647 = vmatprep.subr.bf16.mxu0 0
        %1648 = vmatpush1.bf16.xpose.msra.mxu0 0
        %1649 = vmatprep.subr.bf16.mxu0 0
        %1650 = vmatpush1.bf16.xpose.msra.mxu0 0
        %1651 = vmatprep.subr.bf16.mxu0 0
        %1652 = vmatpush1.bf16.xpose.msra.mxu0 0
        %1653 = vmatprep.subr.bf16.mxu0 0
        %1654 = vmatpush1.bf16.xpose.msra.mxu0 0
        %1655 = vmatprep.subr.bf16.mxu0 0
        %1656 = vmatpush1.bf16.xpose.msra.mxu0 0
        %1657 = vmatprep.subr.bf16.mxu0 0
        %1658 = vmatpush1.bf16.xpose.msra.mxu0 0
        %1659 = vmatprep.subr.bf16.mxu0 0
        %1660 = vmatpush1.bf16.xpose.msra.mxu0 0
        %1661 = vmatprep.subr.bf16.mxu0 0
        %1662 = vmatpush1.bf16.xpose.msra.mxu0 0
        %1663 = vmatprep.subr.bf16.mxu0 0
        %1664 = vmatpush1.bf16.xpose.msra.mxu0 0
        %1665 = vmatprep.mubr.bf16.mxu0 0
        %1666 = vmatmul.mubr.bf16.gmra.mrb[0].mxu0 %v1628
        %v1667 = vpop.f32.mrb[0].mxu0
        %v1668 = vadd.f32 0.0, %v1667
        %v1669 = vpop.f32.mrb[0].mxu0
        %v1670 = vpop.f32.mrb[0].mxu0
        %v1671 = vpop.f32.mrb[0].mxu0
        %1672 = vdwg.mxu0
        %v1674 = vsel %vm1626, %v1619, 0
        %v1677 = vsel %vm1626, %v1623, 0
        %1679 = vmatprep.subr.bf16.mxu0 0
        %1680 = vmatpush1.bf16.xpose.msra.mxu0 %v1677
        %1681 = vmatprep.subr.bf16.mxu0 0
        %1682 = vmatpush1.bf16.xpose.msra.mxu0 0
        %1683 = vmatprep.subr.bf16.mxu0 0
        %1684 = vmatpush1.bf16.xpose.msra.mxu0 0
        %1685 = vmatprep.subr.bf16.mxu0 0
        %1686 = vmatpush1.bf16.xpose.msra.mxu0 0
        %1687 = vmatprep.subr.bf16.mxu0 0
        %1688 = vmatpush1.bf16.xpose.msra.mxu0 0
        %1689 = vmatprep.subr.bf16.mxu0 0
        %1690 = vmatpush1.bf16.xpose.msra.mxu0 0
        %1691 = vmatprep.subr.bf16.mxu0 0
        %1692 = vmatpush1.bf16.xpose.msra.mxu0 0
        %1693 = vmatprep.subr.bf16.mxu0 0
        %1694 = vmatpush1.bf16.xpose.msra.mxu0 0
        %1695 = vmatprep.subr.bf16.mxu0 0
        %1696 = vmatpush1.bf16.xpose.msra.mxu0 0
        %1697 = vmatprep.subr.bf16.mxu0 0
        %1698 = vmatpush1.bf16.xpose.msra.mxu0 0
        %1699 = vmatprep.subr.bf16.mxu0 0
        %1700 = vmatpush1.bf16.xpose.msra.mxu0 0
        %1701 = vmatprep.subr.bf16.mxu0 0
        %1702 = vmatpush1.bf16.xpose.msra.mxu0 0
        %1703 = vmatprep.subr.bf16.mxu0 0
        %1704 = vmatpush1.bf16.xpose.msra.mxu0 0
        %1705 = vmatprep.subr.bf16.mxu0 0
        %1706 = vmatpush1.bf16.xpose.msra.mxu0 0
        %1707 = vmatprep.subr.bf16.mxu0 0
        %1708 = vmatpush1.bf16.xpose.msra.mxu0 0
        %1709 = vmatprep.subr.bf16.mxu0 0
        %1710 = vmatpush1.bf16.xpose.msra.mxu0 0
        %1711 = vmatprep.mubr.bf16.mxu0 0
        %1712 = vmatmul.mubr.bf16.gmra.mrb[0].mxu0 %v1674
        %v1713 = vpop.f32.mrb[0].mxu0
        %v1714 = vadd.f32 0.0, %v1713
        %v1715 = vpop.f32.mrb[0].mxu0
        %v1716 = vpop.f32.mrb[0].mxu0
        %v1717 = vpop.f32.mrb[0].mxu0
        %1718 = vdwg.mxu0
        %v1720 = vsel %vm1626, %v1620, 0
        %v1723 = vsel %vm1626, %v1624, 0
        %1725 = vmatprep.subr.bf16.mxu0 0
        %1726 = vmatpush1.bf16.xpose.msra.mxu0 %v1723
        %1727 = vmatprep.subr.bf16.mxu0 0
        %1728 = vmatpush1.bf16.xpose.msra.mxu0 0
        %1729 = vmatprep.subr.bf16.mxu0 0
        %1730 = vmatpush1.bf16.xpose.msra.mxu0 0
        %1731 = vmatprep.subr.bf16.mxu0 0
        %1732 = vmatpush1.bf16.xpose.msra.mxu0 0
        %1733 = vmatprep.subr.bf16.mxu0 0
        %1734 = vmatpush1.bf16.xpose.msra.mxu0 0
        %1735 = vmatprep.subr.bf16.mxu0 0
        %1736 = vmatpush1.bf16.xpose.msra.mxu0 0
        %1737 = vmatprep.subr.bf16.mxu0 0
        %1738 = vmatpush1.bf16.xpose.msra.mxu0 0
        %1739 = vmatprep.subr.bf16.mxu0 0
        %1740 = vmatpush1.bf16.xpose.msra.mxu0 0
        %1741 = vmatprep.subr.bf16.mxu0 0
        %1742 = vmatpush1.bf16.xpose.msra.mxu0 0
        %1743 = vmatprep.subr.bf16.mxu0 0
        %1744 = vmatpush1.bf16.xpose.msra.mxu0 0
        %1745 = vmatprep.subr.bf16.mxu0 0
        %1746 = vmatpush1.bf16.xpose.msra.mxu0 0
        %1747 = vmatprep.subr.bf16.mxu0 0
        %1748 = vmatpush1.bf16.xpose.msra.mxu0 0
        %1749 = vmatprep.subr.bf16.mxu0 0
        %1750 = vmatpush1.bf16.xpose.msra.mxu0 0
        %1751 = vmatprep.subr.bf16.mxu0 0
        %1752 = vmatpush1.bf16.xpose.msra.mxu0 0
        %1753 = vmatprep.subr.bf16.mxu0 0
        %1754 = vmatpush1.bf16.xpose.msra.mxu0 0
        %1755 = vmatprep.subr.bf16.mxu0 0
        %1756 = vmatpush1.bf16.xpose.msra.mxu0 0
        %1757 = vmatprep.mubr.bf16.mxu0 0
        %1758 = vmatmul.mubr.bf16.gmra.mrb[0].mxu0 %v1720
        %v1759 = vpop.f32.mrb[0].mxu0
        %v1760 = vadd.f32 0.0, %v1759
        %v1761 = vpop.f32.mrb[0].mxu0
        %v1762 = vpop.f32.mrb[0].mxu0
        %v1763 = vpop.f32.mrb[0].mxu0
        %1764 = vdwg.mxu0
        %v1766 = vsel %vm1626, %v1621, 0
        %v1769 = vsel %vm1626, %v1625, 0
        %1771 = vmatprep.subr.bf16.mxu0 0
        %1772 = vmatpush1.bf16.xpose.msra.mxu0 %v1769
        %1773 = vmatprep.subr.bf16.mxu0 0
        %1774 = vmatpush1.bf16.xpose.msra.mxu0 0
        %1775 = vmatprep.subr.bf16.mxu0 0
        %1776 = vmatpush1.bf16.xpose.msra.mxu0 0
        %1777 = vmatprep.subr.bf16.mxu0 0
        %1778 = vmatpush1.bf16.xpose.msra.mxu0 0
        %1779 = vmatprep.subr.bf16.mxu0 0
        %1780 = vmatpush1.bf16.xpose.msra.mxu0 0
        %1781 = vmatprep.subr.bf16.mxu0 0
        %1782 = vmatpush1.bf16.xpose.msra.mxu0 0
        %1783 = vmatprep.subr.bf16.mxu0 0
        %1784 = vmatpush1.bf16.xpose.msra.mxu0 0
        %1785 = vmatprep.subr.bf16.mxu0 0
        %1786 = vmatpush1.bf16.xpose.msra.mxu0 0
        %1787 = vmatprep.subr.bf16.mxu0 0
        %1788 = vmatpush1.bf16.xpose.msra.mxu0 0
        %1789 = vmatprep.subr.bf16.mxu0 0
        %1790 = vmatpush1.bf16.xpose.msra.mxu0 0
        %1791 = vmatprep.subr.bf16.mxu0 0
        %1792 = vmatpush1.bf16.xpose.msra.mxu0 0
        %1793 = vmatprep.subr.bf16.mxu0 0
        %1794 = vmatpush1.bf16.xpose.msra.mxu0 0
        %1795 = vmatprep.subr.bf16.mxu0 0
        %1796 = vmatpush1.bf16.xpose.msra.mxu0 0
        %1797 = vmatprep.subr.bf16.mxu0 0
        %1798 = vmatpush1.bf16.xpose.msra.mxu0 0
        %1799 = vmatprep.subr.bf16.mxu0 0
        %1800 = vmatpush1.bf16.xpose.msra.mxu0 0
        %1801 = vmatprep.subr.bf16.mxu0 0
        %1802 = vmatpush1.bf16.xpose.msra.mxu0 0
        %1803 = vmatprep.mubr.bf16.mxu0 0
        %1804 = vmatmul.mubr.bf16.gmra.mrb[0].mxu0 %v1766
        %v1805 = vpop.f32.mrb[0].mxu0
        %v1806 = vadd.f32 0.0, %v1805
        %v1807 = vpop.f32.mrb[0].mxu0
        %v1808 = vpop.f32.mrb[0].mxu0
        %v1809 = vpop.f32.mrb[0].mxu0
        %1810 = vdwg.mxu0
        %v1811 = vsel %vm843, 1, 0
        %vm1812 = vcmp.eq.s32.totalorder %v1811, 1
        %v1813 = vsel %vm1812, %v1668, -1e+09
        %v1814 = vsel %vm1812, %v1714, -1e+09
        %v1815 = vsel %vm1812, %v1760, -1e+09
        %v1816 = vsel %vm1812, %v1806, -1e+09
        %v1817 = vsel %vm1626, %v1813, -inf
        %1818 = vmax.xlane.f32.xlu0 %v1817
        %v1819 = vpop.xlane.xlu0 %1818
        %v1820 = vsel %vm1626, %v1814, -inf
        %1821 = vmax.xlane.f32.xlu0 %v1820
        %v1822 = vpop.xlane.xlu0 %1821
        %v1823 = vsel %vm1626, %v1815, -inf
        %1824 = vmax.xlane.f32.xlu0 %v1823
        %v1825 = vpop.xlane.xlu0 %1824
        %v1826 = vsel %vm1626, %v1816, -inf
        %1827 = vmax.xlane.f32.xlu0 %v1826
        %v1828 = vpop.xlane.xlu0 %1827
        %v1829 = vsub.f32 %v1813, %v1819
        %v1830 = vsub.f32 %v1814, %v1822
        %v1831 = vsub.f32 %v1815, %v1825
        %v1832 = vsub.f32 %v1816, %v1828
        %v1833 = vmul.f32 %v1829, 1.442695
        %v1834 = vpow.pop %v1833
        %v1835 = vmul.f32 %v1830, 1.442695
        %v1836 = vpow.pop %v1835
        %v1837 = vmul.f32 %v1831, 1.442695
        %v1838 = vpow.pop %v1837
        %v1839 = vmul.f32 %v1832, 1.442695
        %v1840 = vpow.pop %v1839
        %v1841 = vsel %vm1626, %v1834, 0.0
        %1842 = vadd.xlane.f32.xlu0 %v1841
        %v1843 = vpop.xlane.xlu0 %1842
        %v1844 = vsel %vm1626, %v1836, 0.0
        %1845 = vadd.xlane.f32.xlu0 %v1844
        %v1846 = vpop.xlane.xlu0 %1845
        %v1847 = vsel %vm1626, %v1838, 0.0
        %1848 = vadd.xlane.f32.xlu0 %v1847
        %v1849 = vpop.xlane.xlu0 %1848
        %v1850 = vsel %vm1626, %v1840, 0.0
        %1851 = vadd.xlane.f32.xlu0 %v1850
        %v1852 = vpop.xlane.xlu0 %1851
        %v1853 = vrcp.pop %v1843
        %v1854 = vrcp.pop %v1846
        %v1855 = vrcp.pop %v1849
        %v1856 = vrcp.pop %v1852
        %v1857 = vmul.f32 %v1834, %v1853
        %v1858 = vmul.f32 %v1836, %v1854
        %v1859 = vmul.f32 %v1838, %v1855
        %v1860 = vmul.f32 %v1840, %v1856
        %v1861 = vpack.c.bf16 %v1857, %v1857
        %v1862 = vpack.c.bf16 %v1858, %v1858
        %v1863 = vpack.c.bf16 %v1859, %v1859
        %v1864 = vpack.c.bf16 %v1860, %v1860
        %v1865 = vpack.c.bf16 %v1457, %v1457
        %v1866 = vpack.c.bf16 %v1509, %v1509
        %v1867 = vpack.c.bf16 %v1561, %v1561
        %v1868 = vpack.c.bf16 %v1613, %v1613
        %v1870 = vsel %vm1626, %v1861, 0
        %vm1872 = vcmask 1043456
        %v1874 = vsel %vm1872, %v1865, 0
        %1876 = vmatprep.subr.bf16.mxu0 0
        %1877 = vmatpush1.bf16.msra.mxu0 %v1874
        %1878 = vmatprep.subr.bf16.mxu0 0
        %1879 = vmatpush1.bf16.msra.mxu0 0
        %1880 = vmatprep.subr.bf16.mxu0 0
        %1881 = vmatpush1.bf16.msra.mxu0 0
        %1882 = vmatprep.subr.bf16.mxu0 0
        %1883 = vmatpush1.bf16.msra.mxu0 0
        %1884 = vmatprep.subr.bf16.mxu0 0
        %1885 = vmatpush1.bf16.msra.mxu0 0
        %1886 = vmatprep.subr.bf16.mxu0 0
        %1887 = vmatpush1.bf16.msra.mxu0 0
        %1888 = vmatprep.subr.bf16.mxu0 0
        %1889 = vmatpush1.bf16.msra.mxu0 0
        %1890 = vmatprep.subr.bf16.mxu0 0
        %1891 = vmatpush1.bf16.msra.mxu0 0
        %1892 = vmatprep.subr.bf16.mxu0 0
        %1893 = vmatpush1.bf16.msra.mxu0 0
        %1894 = vmatprep.subr.bf16.mxu0 0
        %1895 = vmatpush1.bf16.msra.mxu0 0
        %1896 = vmatprep.subr.bf16.mxu0 0
        %1897 = vmatpush1.bf16.msra.mxu0 0
        %1898 = vmatprep.subr.bf16.mxu0 0
        %1899 = vmatpush1.bf16.msra.mxu0 0
        %1900 = vmatprep.subr.bf16.mxu0 0
        %1901 = vmatpush1.bf16.msra.mxu0 0
        %1902 = vmatprep.subr.bf16.mxu0 0
        %1903 = vmatpush1.bf16.msra.mxu0 0
        %1904 = vmatprep.subr.bf16.mxu0 0
        %1905 = vmatpush1.bf16.msra.mxu0 0
        %1906 = vmatprep.subr.bf16.mxu0 0
        %1907 = vmatpush1.bf16.msra.mxu0 0
        %1908 = vmatprep.mubr.bf16.mxu0 0
        %1909 = vmatmul.mubr.bf16.gmra.mrb[0].mxu0 %v1870
        %v1910 = vpop.f32.mrb[0].mxu0
        %v1911 = vadd.f32 0.0, %v1910
        %v1912 = vpop.f32.mrb[0].mxu0
        %v1913 = vpop.f32.mrb[0].mxu0
        %v1914 = vpop.f32.mrb[0].mxu0
        %1915 = vdwg.mxu0
        %v1917 = vsel %vm1626, %v1862, 0
        %v1920 = vsel %vm1872, %v1866, 0
        %1922 = vmatprep.subr.bf16.mxu0 0
        %1923 = vmatpush1.bf16.msra.mxu0 %v1920
        %1924 = vmatprep.subr.bf16.mxu0 0
        %1925 = vmatpush1.bf16.msra.mxu0 0
        %1926 = vmatprep.subr.bf16.mxu0 0
        %1927 = vmatpush1.bf16.msra.mxu0 0
        %1928 = vmatprep.subr.bf16.mxu0 0
        %1929 = vmatpush1.bf16.msra.mxu0 0
        %1930 = vmatprep.subr.bf16.mxu0 0
        %1931 = vmatpush1.bf16.msra.mxu0 0
        %1932 = vmatprep.subr.bf16.mxu0 0
        %1933 = vmatpush1.bf16.msra.mxu0 0
        %1934 = vmatprep.subr.bf16.mxu0 0
        %1935 = vmatpush1.bf16.msra.mxu0 0
        %1936 = vmatprep.subr.bf16.mxu0 0
        %1937 = vmatpush1.bf16.msra.mxu0 0
        %1938 = vmatprep.subr.bf16.mxu0 0
        %1939 = vmatpush1.bf16.msra.mxu0 0
        %1940 = vmatprep.subr.bf16.mxu0 0
        %1941 = vmatpush1.bf16.msra.mxu0 0
        %1942 = vmatprep.subr.bf16.mxu0 0
        %1943 = vmatpush1.bf16.msra.mxu0 0
        %1944 = vmatprep.subr.bf16.mxu0 0
        %1945 = vmatpush1.bf16.msra.mxu0 0
        %1946 = vmatprep.subr.bf16.mxu0 0
        %1947 = vmatpush1.bf16.msra.mxu0 0
        %1948 = vmatprep.subr.bf16.mxu0 0
        %1949 = vmatpush1.bf16.msra.mxu0 0
        %1950 = vmatprep.subr.bf16.mxu0 0
        %1951 = vmatpush1.bf16.msra.mxu0 0
        %1952 = vmatprep.subr.bf16.mxu0 0
        %1953 = vmatpush1.bf16.msra.mxu0 0
        %1954 = vmatprep.mubr.bf16.mxu0 0
        %1955 = vmatmul.mubr.bf16.gmra.mrb[0].mxu0 %v1917
        %v1956 = vpop.f32.mrb[0].mxu0
        %v1957 = vadd.f32 0.0, %v1956
        %v1958 = vpop.f32.mrb[0].mxu0
        %v1959 = vpop.f32.mrb[0].mxu0
        %v1960 = vpop.f32.mrb[0].mxu0
        %1961 = vdwg.mxu0
        %v1963 = vsel %vm1626, %v1863, 0
        %v1966 = vsel %vm1872, %v1867, 0
        %1968 = vmatprep.subr.bf16.mxu0 0
        %1969 = vmatpush1.bf16.msra.mxu0 %v1966
        %1970 = vmatprep.subr.bf16.mxu0 0
        %1971 = vmatpush1.bf16.msra.mxu0 0
        %1972 = vmatprep.subr.bf16.mxu0 0
        %1973 = vmatpush1.bf16.msra.mxu0 0
        %1974 = vmatprep.subr.bf16.mxu0 0
        %1975 = vmatpush1.bf16.msra.mxu0 0
        %1976 = vmatprep.subr.bf16.mxu0 0
        %1977 = vmatpush1.bf16.msra.mxu0 0
        %1978 = vmatprep.subr.bf16.mxu0 0
        %1979 = vmatpush1.bf16.msra.mxu0 0
        %1980 = vmatprep.subr.bf16.mxu0 0
        %1981 = vmatpush1.bf16.msra.mxu0 0
        %1982 = vmatprep.subr.bf16.mxu0 0
        %1983 = vmatpush1.bf16.msra.mxu0 0
        %1984 = vmatprep.subr.bf16.mxu0 0
        %1985 = vmatpush1.bf16.msra.mxu0 0
        %1986 = vmatprep.subr.bf16.mxu0 0
        %1987 = vmatpush1.bf16.msra.mxu0 0
        %1988 = vmatprep.subr.bf16.mxu0 0
        %1989 = vmatpush1.bf16.msra.mxu0 0
        %1990 = vmatprep.subr.bf16.mxu0 0
        %1991 = vmatpush1.bf16.msra.mxu0 0
        %1992 = vmatprep.subr.bf16.mxu0 0
        %1993 = vmatpush1.bf16.msra.mxu0 0
        %1994 = vmatprep.subr.bf16.mxu0 0
        %1995 = vmatpush1.bf16.msra.mxu0 0
        %1996 = vmatprep.subr.bf16.mxu0 0
        %1997 = vmatpush1.bf16.msra.mxu0 0
        %1998 = vmatprep.subr.bf16.mxu0 0
        %1999 = vmatpush1.bf16.msra.mxu0 0
        %2000 = vmatprep.mubr.bf16.mxu0 0
        %2001 = vmatmul.mubr.bf16.gmra.mrb[0].mxu0 %v1963
        %v2002 = vpop.f32.mrb[0].mxu0
        %v2003 = vadd.f32 0.0, %v2002
        %v2004 = vpop.f32.mrb[0].mxu0
        %v2005 = vpop.f32.mrb[0].mxu0
        %v2006 = vpop.f32.mrb[0].mxu0
        %2007 = vdwg.mxu0
        %v2009 = vsel %vm1626, %v1864, 0
        %v2012 = vsel %vm1872, %v1868, 0
        %2014 = vmatprep.subr.bf16.mxu0 0
        %2015 = vmatpush1.bf16.msra.mxu0 %v2012
        %2016 = vmatprep.subr.bf16.mxu0 0
        %2017 = vmatpush1.bf16.msra.mxu0 0
        %2018 = vmatprep.subr.bf16.mxu0 0
        %2019 = vmatpush1.bf16.msra.mxu0 0
        %2020 = vmatprep.subr.bf16.mxu0 0
        %2021 = vmatpush1.bf16.msra.mxu0 0
        %2022 = vmatprep.subr.bf16.mxu0 0
        %2023 = vmatpush1.bf16.msra.mxu0 0
        %2024 = vmatprep.subr.bf16.mxu0 0
        %2025 = vmatpush1.bf16.msra.mxu0 0
        %2026 = vmatprep.subr.bf16.mxu0 0
        %2027 = vmatpush1.bf16.msra.mxu0 0
        %2028 = vmatprep.subr.bf16.mxu0 0
        %2029 = vmatpush1.bf16.msra.mxu0 0
        %2030 = vmatprep.subr.bf16.mxu0 0
        %2031 = vmatpush1.bf16.msra.mxu0 0
        %2032 = vmatprep.subr.bf16.mxu0 0
        %2033 = vmatpush1.bf16.msra.mxu0 0
        %2034 = vmatprep.subr.bf16.mxu0 0
        %2035 = vmatpush1.bf16.msra.mxu0 0
        %2036 = vmatprep.subr.bf16.mxu0 0
        %2037 = vmatpush1.bf16.msra.mxu0 0
        %2038 = vmatprep.subr.bf16.mxu0 0
        %2039 = vmatpush1.bf16.msra.mxu0 0
        %2040 = vmatprep.subr.bf16.mxu0 0
        %2041 = vmatpush1.bf16.msra.mxu0 0
        %2042 = vmatprep.subr.bf16.mxu0 0
        %2043 = vmatpush1.bf16.msra.mxu0 0
        %2044 = vmatprep.subr.bf16.mxu0 0
        %2045 = vmatpush1.bf16.msra.mxu0 0
        %2046 = vmatprep.mubr.bf16.mxu0 0
        %2047 = vmatmul.mubr.bf16.gmra.mrb[0].mxu0 %v2009
        %v2048 = vpop.f32.mrb[0].mxu0
        %v2049 = vadd.f32 0.0, %v2048
        %v2050 = vpop.f32.mrb[0].mxu0
        %v2051 = vpop.f32.mrb[0].mxu0
        %v2052 = vpop.f32.mrb[0].mxu0
        %2053 = vdwg.mxu0
        %v2054 = vpack.c.bf16 %v1911, %v1911
        %v2055 = vpack.c.bf16 %v1957, %v1957
        %v2056 = vpack.c.bf16 %v2003, %v2003
        %v2057 = vpack.c.bf16 %v2049, %v2049
        %v2059 = vsel %vm1626, %v2054, 0
        %v2062 = vsel %vm1872, %v913, 0
        %2064 = vmatprep.subr.bf16.mxu0 0
        %2065 = vmatpush1.bf16.msra.mxu0 %v2062
        %2066 = vmatprep.subr.bf16.mxu0 0
        %2067 = vmatpush1.bf16.msra.mxu0 0
        %2068 = vmatprep.subr.bf16.mxu0 0
        %2069 = vmatpush1.bf16.msra.mxu0 0
        %2070 = vmatprep.subr.bf16.mxu0 0
        %2071 = vmatpush1.bf16.msra.mxu0 0
        %2072 = vmatprep.subr.bf16.mxu0 0
        %2073 = vmatpush1.bf16.msra.mxu0 0
        %2074 = vmatprep.subr.bf16.mxu0 0
        %2075 = vmatpush1.bf16.msra.mxu0 0
        %2076 = vmatprep.subr.bf16.mxu0 0
        %2077 = vmatpush1.bf16.msra.mxu0 0
        %2078 = vmatprep.subr.bf16.mxu0 0
        %2079 = vmatpush1.bf16.msra.mxu0 0
        %2080 = vmatprep.subr.bf16.mxu0 0
        %2081 = vmatpush1.bf16.msra.mxu0 0
        %2082 = vmatprep.subr.bf16.mxu0 0
        %2083 = vmatpush1.bf16.msra.mxu0 0
        %2084 = vmatprep.subr.bf16.mxu0 0
        %2085 = vmatpush1.bf16.msra.mxu0 0
        %2086 = vmatprep.subr.bf16.mxu0 0
        %2087 = vmatpush1.bf16.msra.mxu0 0
        %2088 = vmatprep.subr.bf16.mxu0 0
        %2089 = vmatpush1.bf16.msra.mxu0 0
        %2090 = vmatprep.subr.bf16.mxu0 0
        %2091 = vmatpush1.bf16.msra.mxu0 0
        %2092 = vmatprep.subr.bf16.mxu0 0
        %2093 = vmatpush1.bf16.msra.mxu0 0
        %2094 = vmatprep.subr.bf16.mxu0 0
        %2095 = vmatpush1.bf16.msra.mxu0 0
        %2096 = vmatprep.mubr.bf16.mxu0 0
        %2097 = vmatmul.mubr.bf16.gmra.mrb[0].mxu0 %v2059
        %v2098 = vpop.f32.mrb[0].mxu0
        %v2099 = vadd.f32 0.0, %v2098
        %v2100 = vpop.f32.mrb[0].mxu0
        %v2101 = vpop.f32.mrb[0].mxu0
        %v2102 = vpop.f32.mrb[0].mxu0
        %2103 = vdwg.mxu0
        %v2105 = vsel %vm1626, %v2055, 0
        %v2108 = vsel %vm1872, %v914, 0
        %2110 = vmatprep.subr.bf16.mxu0 0
        %2111 = vmatpush1.bf16.msra.mxu0 %v2108
        %2112 = vmatprep.subr.bf16.mxu0 0
        %2113 = vmatpush1.bf16.msra.mxu0 0
        %2114 = vmatprep.subr.bf16.mxu0 0
        %2115 = vmatpush1.bf16.msra.mxu0 0
        %2116 = vmatprep.subr.bf16.mxu0 0
        %2117 = vmatpush1.bf16.msra.mxu0 0
        %2118 = vmatprep.subr.bf16.mxu0 0
        %2119 = vmatpush1.bf16.msra.mxu0 0
        %2120 = vmatprep.subr.bf16.mxu0 0
        %2121 = vmatpush1.bf16.msra.mxu0 0
        %2122 = vmatprep.subr.bf16.mxu0 0
        %2123 = vmatpush1.bf16.msra.mxu0 0
        %2124 = vmatprep.subr.bf16.mxu0 0
        %2125 = vmatpush1.bf16.msra.mxu0 0
        %2126 = vmatprep.subr.bf16.mxu0 0
        %2127 = vmatpush1.bf16.msra.mxu0 0
        %2128 = vmatprep.subr.bf16.mxu0 0
        %2129 = vmatpush1.bf16.msra.mxu0 0
        %2130 = vmatprep.subr.bf16.mxu0 0
        %2131 = vmatpush1.bf16.msra.mxu0 0
        %2132 = vmatprep.subr.bf16.mxu0 0
        %2133 = vmatpush1.bf16.msra.mxu0 0
        %2134 = vmatprep.subr.bf16.mxu0 0
        %2135 = vmatpush1.bf16.msra.mxu0 0
        %2136 = vmatprep.subr.bf16.mxu0 0
        %2137 = vmatpush1.bf16.msra.mxu0 0
        %2138 = vmatprep.subr.bf16.mxu0 0
        %2139 = vmatpush1.bf16.msra.mxu0 0
        %2140 = vmatprep.subr.bf16.mxu0 0
        %2141 = vmatpush1.bf16.msra.mxu0 0
        %2142 = vmatprep.mubr.bf16.mxu0 0
        %2143 = vmatmul.mubr.bf16.gmra.mrb[0].mxu0 %v2105
        %v2144 = vpop.f32.mrb[0].mxu0
        %v2145 = vadd.f32 0.0, %v2144
        %v2146 = vpop.f32.mrb[0].mxu0
        %v2147 = vpop.f32.mrb[0].mxu0
        %v2148 = vpop.f32.mrb[0].mxu0
        %2149 = vdwg.mxu0
        %v2151 = vsel %vm1626, %v2056, 0
        %v2154 = vsel %vm1872, %v915, 0
        %2156 = vmatprep.subr.bf16.mxu0 0
        %2157 = vmatpush1.bf16.msra.mxu0 %v2154
        %2158 = vmatprep.subr.bf16.mxu0 0
        %2159 = vmatpush1.bf16.msra.mxu0 0
        %2160 = vmatprep.subr.bf16.mxu0 0
        %2161 = vmatpush1.bf16.msra.mxu0 0
        %2162 = vmatprep.subr.bf16.mxu0 0
        %2163 = vmatpush1.bf16.msra.mxu0 0
        %2164 = vmatprep.subr.bf16.mxu0 0
        %2165 = vmatpush1.bf16.msra.mxu0 0
        %2166 = vmatprep.subr.bf16.mxu0 0
        %2167 = vmatpush1.bf16.msra.mxu0 0
        %2168 = vmatprep.subr.bf16.mxu0 0
        %2169 = vmatpush1.bf16.msra.mxu0 0
        %2170 = vmatprep.subr.bf16.mxu0 0
        %2171 = vmatpush1.bf16.msra.mxu0 0
        %2172 = vmatprep.subr.bf16.mxu0 0
        %2173 = vmatpush1.bf16.msra.mxu0 0
        %2174 = vmatprep.subr.bf16.mxu0 0
        %2175 = vmatpush1.bf16.msra.mxu0 0
        %2176 = vmatprep.subr.bf16.mxu0 0
        %2177 = vmatpush1.bf16.msra.mxu0 0
        %2178 = vmatprep.subr.bf16.mxu0 0
        %2179 = vmatpush1.bf16.msra.mxu0 0
        %2180 = vmatprep.subr.bf16.mxu0 0
        %2181 = vmatpush1.bf16.msra.mxu0 0
        %2182 = vmatprep.subr.bf16.mxu0 0
        %2183 = vmatpush1.bf16.msra.mxu0 0
        %2184 = vmatprep.subr.bf16.mxu0 0
        %2185 = vmatpush1.bf16.msra.mxu0 0
        %2186 = vmatprep.subr.bf16.mxu0 0
        %2187 = vmatpush1.bf16.msra.mxu0 0
        %2188 = vmatprep.mubr.bf16.mxu0 0
        %2189 = vmatmul.mubr.bf16.gmra.mrb[0].mxu0 %v2151
        %v2190 = vpop.f32.mrb[0].mxu0
        %v2191 = vadd.f32 0.0, %v2190
        %v2192 = vpop.f32.mrb[0].mxu0
        %v2193 = vpop.f32.mrb[0].mxu0
        %v2194 = vpop.f32.mrb[0].mxu0
        %2195 = vdwg.mxu0
        %v2197 = vsel %vm1626, %v2057, 0
        %v2200 = vsel %vm1872, %v916, 0
        %2202 = vmatprep.subr.bf16.mxu0 0
        %2203 = vmatpush1.bf16.msra.mxu0 %v2200
        %2204 = vmatprep.subr.bf16.mxu0 0
        %2205 = vmatpush1.bf16.msra.mxu0 0
        %2206 = vmatprep.subr.bf16.mxu0 0
        %2207 = vmatpush1.bf16.msra.mxu0 0
        %2208 = vmatprep.subr.bf16.mxu0 0
        %2209 = vmatpush1.bf16.msra.mxu0 0
        %2210 = vmatprep.subr.bf16.mxu0 0
        %2211 = vmatpush1.bf16.msra.mxu0 0
        %2212 = vmatprep.subr.bf16.mxu0 0
        %2213 = vmatpush1.bf16.msra.mxu0 0
        %2214 = vmatprep.subr.bf16.mxu0 0
        %2215 = vmatpush1.bf16.msra.mxu0 0
        %2216 = vmatprep.subr.bf16.mxu0 0
        %2217 = vmatpush1.bf16.msra.mxu0 0
        %2218 = vmatprep.subr.bf16.mxu0 0
        %2219 = vmatpush1.bf16.msra.mxu0 0
        %2220 = vmatprep.subr.bf16.mxu0 0
        %2221 = vmatpush1.bf16.msra.mxu0 0
        %2222 = vmatprep.subr.bf16.mxu0 0
        %2223 = vmatpush1.bf16.msra.mxu0 0
        %2224 = vmatprep.subr.bf16.mxu0 0
        %2225 = vmatpush1.bf16.msra.mxu0 0
        %2226 = vmatprep.subr.bf16.mxu0 0
        %2227 = vmatpush1.bf16.msra.mxu0 0
        %2228 = vmatprep.subr.bf16.mxu0 0
        %2229 = vmatpush1.bf16.msra.mxu0 0
        %2230 = vmatprep.subr.bf16.mxu0 0
        %2231 = vmatpush1.bf16.msra.mxu0 0
        %2232 = vmatprep.subr.bf16.mxu0 0
        %2233 = vmatpush1.bf16.msra.mxu0 0
        %2234 = vmatprep.mubr.bf16.mxu0 0
        %2235 = vmatmul.mubr.bf16.gmra.mrb[0].mxu0 %v2197
        %v2236 = vpop.f32.mrb[0].mxu0
        %v2237 = vadd.f32 0.0, %v2236
        %v2238 = vpop.f32.mrb[0].mxu0
        %v2239 = vpop.f32.mrb[0].mxu0
        %v2240 = vpop.f32.mrb[0].mxu0
        %2241 = vdwg.mxu0
        %v2242 = vsel %vm954, %v2099, 0.0
        %v2243 = vsel %vm954, %v2145, 0.0
        %v2244 = vadd.f32 %v2242, %v2243
        %v2245 = vsel %vm954, %v2191, 0.0
        %v2246 = vadd.f32 %v2244, %v2245
        %v2247 = vsel %vm954, %v2237, 0.0
        %v2248 = vadd.f32 %v2246, %v2247
        %v2250 = vlaneseq
        %v2251 = vshrl.u32 %v2250, 7
        %v2252 = vsub.s32 0, %v2251
        %v2253 = vrot.slane %v917, %v2252
        %v2255 = vadd.f32 %v2248, %v2253
        %v2256 = vadd.f32 %v2255, %v839
        %v2257 = vsel %vm954, %v2256, 0.0
        %2258 = vadd.xlane.f32.xlu0 %v2257
        %v2259 = vpop.xlane.xlu0 %2258
        %v2260 = vrcp.pop 32.0
        %v2261 = vmul.f32 %v2259, %v2260
        %v2262 = vmul.f32 %v2256, %v2256
        %v2263 = vsel %vm954, %v2262, 0.0
        %2264 = vadd.xlane.f32.xlu0 %v2263
        %v2265 = vpop.xlane.xlu0 %2264
        %v2266 = vmul.f32 %v2265, %v2260
        %v2267 = vmul.f32 %v2261, %v2261
        %v2268 = vsub.f32 %v2266, %v2267
        %v2269 = vsub.f32 %v2256, %v2261
        %v2270 = vadd.f32 %v2268, 1e-05
        %v2271 = vrsqrt.pop %v2270
        %v2272 = vmul.f32 %v2269, %v2271
        %v2274 = vlaneseq
        %v2275 = vshrl.u32 %v2274, 7
        %v2276 = vsub.s32 0, %v2275
        %v2277 = vrot.slane %v846, %v2276
        %v2279 = vmul.f32 %v2272, %v2277
        %v2281 = vlaneseq
        %v2282 = vshrl.u32 %v2281, 7
        %v2283 = vsub.s32 0, %v2282
        %v2284 = vrot.slane %v849, %v2283
        %v2286 = vadd.f32 %v2279, %v2284
        %v2287 = vpack.c.bf16 %v2286, %v2286
        %v2288 = vld [vmem:[%s12] sm:$0xf]
        %v2289 = vld [vmem:[%s12 + $0x4] sm:$0xf]
        %v2290 = vld [vmem:[%s12 + $0x8] sm:$0xf]
        %v2291 = vld [vmem:[%s12 + $0xc] sm:$0xf]
        %v2292 = vld [vmem:[%s12 + $0x10] sm:$0xf]
        %v2293 = vld [vmem:[%s12 + $0x14] sm:$0xf]
        %v2294 = vld [vmem:[%s12 + $0x18] sm:$0xf]
        %v2295 = vld [vmem:[%s12 + $0x1c] sm:$0xf]
        %v2296 = vld [vmem:[%s12 + $0x20] sm:$0xf]
        %v2297 = vld [vmem:[%s12 + $0x24] sm:$0xf]
        %v2298 = vld [vmem:[%s12 + $0x28] sm:$0xf]
        %v2299 = vld [vmem:[%s12 + $0x2c] sm:$0xf]
        %v2300 = vld [vmem:[%s12 + $0x30] sm:$0xf]
        %v2301 = vld [vmem:[%s12 + $0x34] sm:$0xf]
        %v2302 = vld [vmem:[%s12 + $0x38] sm:$0xf]
        %v2303 = vld [vmem:[%s12 + $0x3c] sm:$0xf]
        %v2304 = vld [vmem:[%s13] sm:$0x1]
        %v2305 = vld [vmem:[%s13 + $0x1] sm:$0x1]
        %v2306 = vld [vmem:[%s13 + $0x2] sm:$0x1]
        %v2307 = vld [vmem:[%s13 + $0x3] sm:$0x1]
        %v2308 = vld [vmem:[%s14] sm:$0xf]
        %v2309 = vld [vmem:[%s14 + $0x4] sm:$0xf]
        %v2310 = vld [vmem:[%s14 + $0x8] sm:$0xf]
        %v2311 = vld [vmem:[%s14 + $0xc] sm:$0xf]
        %v2312 = vld [vmem:[%s14 + $0x10] sm:$0xf]
        %v2313 = vld [vmem:[%s14 + $0x14] sm:$0xf]
        %v2314 = vld [vmem:[%s14 + $0x18] sm:$0xf]
        %v2315 = vld [vmem:[%s14 + $0x1c] sm:$0xf]
        %v2316 = vld [vmem:[%s14 + $0x20] sm:$0xf]
        %v2317 = vld [vmem:[%s14 + $0x24] sm:$0xf]
        %v2318 = vld [vmem:[%s14 + $0x28] sm:$0xf]
        %v2319 = vld [vmem:[%s14 + $0x2c] sm:$0xf]
        %v2320 = vld [vmem:[%s14 + $0x30] sm:$0xf]
        %v2321 = vld [vmem:[%s14 + $0x34] sm:$0xf]
        %v2322 = vld [vmem:[%s14 + $0x38] sm:$0xf]
        %v2323 = vld [vmem:[%s14 + $0x3c] sm:$0xf]
        %v2324 = vld [vmem:[%s15] sm:$0x1]
        %v2325 = vld [vmem:[%s15 + $0x1] sm:$0x1]
        %v2326 = vld [vmem:[%s15 + $0x2] sm:$0x1]
        %v2327 = vld [vmem:[%s15 + $0x3] sm:$0x1]
        %v2328 = vld [vmem:[%s16] sm:$0xf]
        %v2329 = vld [vmem:[%s16 + $0x4] sm:$0xf]
        %v2330 = vld [vmem:[%s16 + $0x8] sm:$0xf]
        %v2331 = vld [vmem:[%s16 + $0xc] sm:$0xf]
        %v2332 = vld [vmem:[%s16 + $0x10] sm:$0xf]
        %v2333 = vld [vmem:[%s16 + $0x14] sm:$0xf]
        %v2334 = vld [vmem:[%s16 + $0x18] sm:$0xf]
        %v2335 = vld [vmem:[%s16 + $0x1c] sm:$0xf]
        %v2336 = vld [vmem:[%s16 + $0x20] sm:$0xf]
        %v2337 = vld [vmem:[%s16 + $0x24] sm:$0xf]
        %v2338 = vld [vmem:[%s16 + $0x28] sm:$0xf]
        %v2339 = vld [vmem:[%s16 + $0x2c] sm:$0xf]
        %v2340 = vld [vmem:[%s16 + $0x30] sm:$0xf]
        %v2341 = vld [vmem:[%s16 + $0x34] sm:$0xf]
        %v2342 = vld [vmem:[%s16 + $0x38] sm:$0xf]
        %v2343 = vld [vmem:[%s16 + $0x3c] sm:$0xf]
        %v2344 = vld [vmem:[%s17] sm:$0x1]
        %v2345 = vld [vmem:[%s17 + $0x1] sm:$0x1]
        %v2346 = vld [vmem:[%s17 + $0x2] sm:$0x1]
        %v2347 = vld [vmem:[%s17 + $0x3] sm:$0x1]
        %v2348 = vld [vmem:[%s18] sm:$0xf]
        %v2349 = vld [vmem:[%s18 + $0x4] sm:$0xf]
        %v2350 = vld [vmem:[%s18 + $0x8] sm:$0xf]
        %v2351 = vld [vmem:[%s18 + $0xc] sm:$0xf]
        %v2352 = vld [vmem:[%s19] sm:$0x1]
        %v2357 = vlaneseq
        %v2358 = vshrl.u32 %v2357, 7
        %v2359 = vsub.s32 0, %v2358
        %v2360 = vrot.slane %v2304, %v2359
        %v2361 = vlaneseq
        %v2362 = vshrl.u32 %v2361, 7
        %v2363 = vsub.s32 0, %v2362
        %v2364 = vrot.slane %v2305, %v2363
        %v2365 = vlaneseq
        %v2366 = vshrl.u32 %v2365, 7
        %v2367 = vsub.s32 0, %v2366
        %v2368 = vrot.slane %v2306, %v2367
        %v2369 = vlaneseq
        %v2370 = vshrl.u32 %v2369, 7
        %v2371 = vsub.s32 0, %v2370
        %v2372 = vrot.slane %v2307, %v2371
        %v2381 = vunpack.c.l.b16 %v2288
        %v2382 = vunpack.c.l.b16 %v2289
        %v2383 = vunpack.c.l.b16 %v2290
        %v2384 = vunpack.c.l.b16 %v2291
        %v2385 = vpack.c.b16 %v2382, %v2381
        %v2386 = vpack.c.b16 %v2384, %v2383
        %v2390 = vsel %vm954, %v2287, 0
        %2392 = vmatprep.subr.bf16.mxu0 0
        %2393 = vmatpush1.bf16.msra.mxu0 %v2385
        %2394 = vmatprep.subr.bf16.mxu0 0
        %2395 = vmatpush1.bf16.msra.mxu0 %v2386
        %2396 = vmatprep.subr.bf16.mxu0 0
        %2397 = vmatpush1.bf16.msra.mxu0 0
        %2398 = vmatprep.subr.bf16.mxu0 0
        %2399 = vmatpush1.bf16.msra.mxu0 0
        %2400 = vmatprep.subr.bf16.mxu0 0
        %2401 = vmatpush1.bf16.msra.mxu0 0
        %2402 = vmatprep.subr.bf16.mxu0 0
        %2403 = vmatpush1.bf16.msra.mxu0 0
        %2404 = vmatprep.subr.bf16.mxu0 0
        %2405 = vmatpush1.bf16.msra.mxu0 0
        %2406 = vmatprep.subr.bf16.mxu0 0
        %2407 = vmatpush1.bf16.msra.mxu0 0
        %2408 = vmatprep.subr.bf16.mxu0 0
        %2409 = vmatpush1.bf16.msra.mxu0 0
        %2410 = vmatprep.subr.bf16.mxu0 0
        %2411 = vmatpush1.bf16.msra.mxu0 0
        %2412 = vmatprep.subr.bf16.mxu0 0
        %2413 = vmatpush1.bf16.msra.mxu0 0
        %2414 = vmatprep.subr.bf16.mxu0 0
        %2415 = vmatpush1.bf16.msra.mxu0 0
        %2416 = vmatprep.subr.bf16.mxu0 0
        %2417 = vmatpush1.bf16.msra.mxu0 0
        %2418 = vmatprep.subr.bf16.mxu0 0
        %2419 = vmatpush1.bf16.msra.mxu0 0
        %2420 = vmatprep.subr.bf16.mxu0 0
        %2421 = vmatpush1.bf16.msra.mxu0 0
        %2422 = vmatprep.subr.bf16.mxu0 0
        %2423 = vmatpush1.bf16.msra.mxu0 0
        %2424 = vmatprep.mubr.bf16.mxu0 0
        %2425 = vmatmul.mubr.bf16.gmra.mrb[0].mxu0 %v2390
        %v2426 = vpop.f32.mrb[0].mxu0
        %v2427 = vadd.f32 %v2360, %v2426
        %v2428 = vpop.f32.mrb[0].mxu0
        %v2429 = vpop.f32.mrb[0].mxu0
        %v2430 = vpop.f32.mrb[0].mxu0
        %2431 = vdwg.mxu0
        %v2436 = vunpack.c.l.b16 %v2292
        %v2437 = vunpack.c.l.b16 %v2293
        %v2438 = vunpack.c.l.b16 %v2294
        %v2439 = vunpack.c.l.b16 %v2295
        %v2440 = vpack.c.b16 %v2437, %v2436
        %v2441 = vpack.c.b16 %v2439, %v2438
        %2444 = vmatprep.subr.bf16.mxu0 0
        %2445 = vmatpush1.bf16.msra.mxu0 %v2440
        %2446 = vmatprep.subr.bf16.mxu0 0
        %2447 = vmatpush1.bf16.msra.mxu0 %v2441
        %2448 = vmatprep.subr.bf16.mxu0 0
        %2449 = vmatpush1.bf16.msra.mxu0 0
        %2450 = vmatprep.subr.bf16.mxu0 0
        %2451 = vmatpush1.bf16.msra.mxu0 0
        %2452 = vmatprep.subr.bf16.mxu0 0
        %2453 = vmatpush1.bf16.msra.mxu0 0
        %2454 = vmatprep.subr.bf16.mxu0 0
        %2455 = vmatpush1.bf16.msra.mxu0 0
        %2456 = vmatprep.subr.bf16.mxu0 0
        %2457 = vmatpush1.bf16.msra.mxu0 0
        %2458 = vmatprep.subr.bf16.mxu0 0
        %2459 = vmatpush1.bf16.msra.mxu0 0
        %2460 = vmatprep.subr.bf16.mxu0 0
        %2461 = vmatpush1.bf16.msra.mxu0 0
        %2462 = vmatprep.subr.bf16.mxu0 0
        %2463 = vmatpush1.bf16.msra.mxu0 0
        %2464 = vmatprep.subr.bf16.mxu0 0
        %2465 = vmatpush1.bf16.msra.mxu0 0
        %2466 = vmatprep.subr.bf16.mxu0 0
        %2467 = vmatpush1.bf16.msra.mxu0 0
        %2468 = vmatprep.subr.bf16.mxu0 0
        %2469 = vmatpush1.bf16.msra.mxu0 0
        %2470 = vmatprep.subr.bf16.mxu0 0
        %2471 = vmatpush1.bf16.msra.mxu0 0
        %2472 = vmatprep.subr.bf16.mxu0 0
        %2473 = vmatpush1.bf16.msra.mxu0 0
        %2474 = vmatprep.subr.bf16.mxu0 0
        %2475 = vmatpush1.bf16.msra.mxu0 0
        %2476 = vmatprep.mubr.bf16.mxu0 0
        %2477 = vmatmul.mubr.bf16.gmra.mrb[0].mxu0 %v2390
        %v2478 = vpop.f32.mrb[0].mxu0
        %v2479 = vadd.f32 %v2364, %v2478
        %v2480 = vpop.f32.mrb[0].mxu0
        %v2481 = vpop.f32.mrb[0].mxu0
        %v2482 = vpop.f32.mrb[0].mxu0
        %2483 = vdwg.mxu0
        %v2488 = vunpack.c.l.b16 %v2296
        %v2489 = vunpack.c.l.b16 %v2297
        %v2490 = vunpack.c.l.b16 %v2298
        %v2491 = vunpack.c.l.b16 %v2299
        %v2492 = vpack.c.b16 %v2489, %v2488
        %v2493 = vpack.c.b16 %v2491, %v2490
        %2496 = vmatprep.subr.bf16.mxu0 0
        %2497 = vmatpush1.bf16.msra.mxu0 %v2492
        %2498 = vmatprep.subr.bf16.mxu0 0
        %2499 = vmatpush1.bf16.msra.mxu0 %v2493
        %2500 = vmatprep.subr.bf16.mxu0 0
        %2501 = vmatpush1.bf16.msra.mxu0 0
        %2502 = vmatprep.subr.bf16.mxu0 0
        %2503 = vmatpush1.bf16.msra.mxu0 0
        %2504 = vmatprep.subr.bf16.mxu0 0
        %2505 = vmatpush1.bf16.msra.mxu0 0
        %2506 = vmatprep.subr.bf16.mxu0 0
        %2507 = vmatpush1.bf16.msra.mxu0 0
        %2508 = vmatprep.subr.bf16.mxu0 0
        %2509 = vmatpush1.bf16.msra.mxu0 0
        %2510 = vmatprep.subr.bf16.mxu0 0
        %2511 = vmatpush1.bf16.msra.mxu0 0
        %2512 = vmatprep.subr.bf16.mxu0 0
        %2513 = vmatpush1.bf16.msra.mxu0 0
        %2514 = vmatprep.subr.bf16.mxu0 0
        %2515 = vmatpush1.bf16.msra.mxu0 0
        %2516 = vmatprep.subr.bf16.mxu0 0
        %2517 = vmatpush1.bf16.msra.mxu0 0
        %2518 = vmatprep.subr.bf16.mxu0 0
        %2519 = vmatpush1.bf16.msra.mxu0 0
        %2520 = vmatprep.subr.bf16.mxu0 0
        %2521 = vmatpush1.bf16.msra.mxu0 0
        %2522 = vmatprep.subr.bf16.mxu0 0
        %2523 = vmatpush1.bf16.msra.mxu0 0
        %2524 = vmatprep.subr.bf16.mxu0 0
        %2525 = vmatpush1.bf16.msra.mxu0 0
        %2526 = vmatprep.subr.bf16.mxu0 0
        %2527 = vmatpush1.bf16.msra.mxu0 0
        %2528 = vmatprep.mubr.bf16.mxu0 0
        %2529 = vmatmul.mubr.bf16.gmra.mrb[0].mxu0 %v2390
        %v2530 = vpop.f32.mrb[0].mxu0
        %v2531 = vadd.f32 %v2368, %v2530
        %v2532 = vpop.f32.mrb[0].mxu0
        %v2533 = vpop.f32.mrb[0].mxu0
        %v2534 = vpop.f32.mrb[0].mxu0
        %2535 = vdwg.mxu0
        %v2540 = vunpack.c.l.b16 %v2300
        %v2541 = vunpack.c.l.b16 %v2301
        %v2542 = vunpack.c.l.b16 %v2302
        %v2543 = vunpack.c.l.b16 %v2303
        %v2544 = vpack.c.b16 %v2541, %v2540
        %v2545 = vpack.c.b16 %v2543, %v2542
        %2548 = vmatprep.subr.bf16.mxu0 0
        %2549 = vmatpush1.bf16.msra.mxu0 %v2544
        %2550 = vmatprep.subr.bf16.mxu0 0
        %2551 = vmatpush1.bf16.msra.mxu0 %v2545
        %2552 = vmatprep.subr.bf16.mxu0 0
        %2553 = vmatpush1.bf16.msra.mxu0 0
        %2554 = vmatprep.subr.bf16.mxu0 0
        %2555 = vmatpush1.bf16.msra.mxu0 0
        %2556 = vmatprep.subr.bf16.mxu0 0
        %2557 = vmatpush1.bf16.msra.mxu0 0
        %2558 = vmatprep.subr.bf16.mxu0 0
        %2559 = vmatpush1.bf16.msra.mxu0 0
        %2560 = vmatprep.subr.bf16.mxu0 0
        %2561 = vmatpush1.bf16.msra.mxu0 0
        %2562 = vmatprep.subr.bf16.mxu0 0
        %2563 = vmatpush1.bf16.msra.mxu0 0
        %2564 = vmatprep.subr.bf16.mxu0 0
        %2565 = vmatpush1.bf16.msra.mxu0 0
        %2566 = vmatprep.subr.bf16.mxu0 0
        %2567 = vmatpush1.bf16.msra.mxu0 0
        %2568 = vmatprep.subr.bf16.mxu0 0
        %2569 = vmatpush1.bf16.msra.mxu0 0
        %2570 = vmatprep.subr.bf16.mxu0 0
        %2571 = vmatpush1.bf16.msra.mxu0 0
        %2572 = vmatprep.subr.bf16.mxu0 0
        %2573 = vmatpush1.bf16.msra.mxu0 0
        %2574 = vmatprep.subr.bf16.mxu0 0
        %2575 = vmatpush1.bf16.msra.mxu0 0
        %2576 = vmatprep.subr.bf16.mxu0 0
        %2577 = vmatpush1.bf16.msra.mxu0 0
        %2578 = vmatprep.subr.bf16.mxu0 0
        %2579 = vmatpush1.bf16.msra.mxu0 0
        %2580 = vmatprep.mubr.bf16.mxu0 0
        %2581 = vmatmul.mubr.bf16.gmra.mrb[0].mxu0 %v2390
        %v2582 = vpop.f32.mrb[0].mxu0
        %v2583 = vadd.f32 %v2372, %v2582
        %v2584 = vpop.f32.mrb[0].mxu0
        %v2585 = vpop.f32.mrb[0].mxu0
        %v2586 = vpop.f32.mrb[0].mxu0
        %2587 = vdwg.mxu0
        %v2592 = vlaneseq
        %v2593 = vshrl.u32 %v2592, 7
        %v2594 = vsub.s32 0, %v2593
        %v2595 = vrot.slane %v2324, %v2594
        %v2596 = vlaneseq
        %v2597 = vshrl.u32 %v2596, 7
        %v2598 = vsub.s32 0, %v2597
        %v2599 = vrot.slane %v2325, %v2598
        %v2600 = vlaneseq
        %v2601 = vshrl.u32 %v2600, 7
        %v2602 = vsub.s32 0, %v2601
        %v2603 = vrot.slane %v2326, %v2602
        %v2604 = vlaneseq
        %v2605 = vshrl.u32 %v2604, 7
        %v2606 = vsub.s32 0, %v2605
        %v2607 = vrot.slane %v2327, %v2606
        %v2616 = vunpack.c.l.b16 %v2308
        %v2617 = vunpack.c.l.b16 %v2309
        %v2618 = vunpack.c.l.b16 %v2310
        %v2619 = vunpack.c.l.b16 %v2311
        %v2620 = vpack.c.b16 %v2617, %v2616
        %v2621 = vpack.c.b16 %v2619, %v2618
        %v2625 = vsel %vm954, %v841, 0
        %2627 = vmatprep.subr.bf16.mxu0 0
        %2628 = vmatpush1.bf16.msra.mxu0 %v2620
        %2629 = vmatprep.subr.bf16.mxu0 0
        %2630 = vmatpush1.bf16.msra.mxu0 %v2621
        %2631 = vmatprep.subr.bf16.mxu0 0
        %2632 = vmatpush1.bf16.msra.mxu0 0
        %2633 = vmatprep.subr.bf16.mxu0 0
        %2634 = vmatpush1.bf16.msra.mxu0 0
        %2635 = vmatprep.subr.bf16.mxu0 0
        %2636 = vmatpush1.bf16.msra.mxu0 0
        %2637 = vmatprep.subr.bf16.mxu0 0
        %2638 = vmatpush1.bf16.msra.mxu0 0
        %2639 = vmatprep.subr.bf16.mxu0 0
        %2640 = vmatpush1.bf16.msra.mxu0 0
        %2641 = vmatprep.subr.bf16.mxu0 0
        %2642 = vmatpush1.bf16.msra.mxu0 0
        %2643 = vmatprep.subr.bf16.mxu0 0
        %2644 = vmatpush1.bf16.msra.mxu0 0
        %2645 = vmatprep.subr.bf16.mxu0 0
        %2646 = vmatpush1.bf16.msra.mxu0 0
        %2647 = vmatprep.subr.bf16.mxu0 0
        %2648 = vmatpush1.bf16.msra.mxu0 0
        %2649 = vmatprep.subr.bf16.mxu0 0
        %2650 = vmatpush1.bf16.msra.mxu0 0
        %2651 = vmatprep.subr.bf16.mxu0 0
        %2652 = vmatpush1.bf16.msra.mxu0 0
        %2653 = vmatprep.subr.bf16.mxu0 0
        %2654 = vmatpush1.bf16.msra.mxu0 0
        %2655 = vmatprep.subr.bf16.mxu0 0
        %2656 = vmatpush1.bf16.msra.mxu0 0
        %2657 = vmatprep.subr.bf16.mxu0 0
        %2658 = vmatpush1.bf16.msra.mxu0 0
        %2659 = vmatprep.mubr.bf16.mxu0 0
        %2660 = vmatmul.mubr.bf16.gmra.mrb[0].mxu0 %v2625
        %v2661 = vpop.f32.mrb[0].mxu0
        %v2662 = vadd.f32 %v2595, %v2661
        %v2663 = vpop.f32.mrb[0].mxu0
        %v2664 = vpop.f32.mrb[0].mxu0
        %v2665 = vpop.f32.mrb[0].mxu0
        %2666 = vdwg.mxu0
        %v2671 = vunpack.c.l.b16 %v2312
        %v2672 = vunpack.c.l.b16 %v2313
        %v2673 = vunpack.c.l.b16 %v2314
        %v2674 = vunpack.c.l.b16 %v2315
        %v2675 = vpack.c.b16 %v2672, %v2671
        %v2676 = vpack.c.b16 %v2674, %v2673
        %2679 = vmatprep.subr.bf16.mxu0 0
        %2680 = vmatpush1.bf16.msra.mxu0 %v2675
        %2681 = vmatprep.subr.bf16.mxu0 0
        %2682 = vmatpush1.bf16.msra.mxu0 %v2676
        %2683 = vmatprep.subr.bf16.mxu0 0
        %2684 = vmatpush1.bf16.msra.mxu0 0
        %2685 = vmatprep.subr.bf16.mxu0 0
        %2686 = vmatpush1.bf16.msra.mxu0 0
        %2687 = vmatprep.subr.bf16.mxu0 0
        %2688 = vmatpush1.bf16.msra.mxu0 0
        %2689 = vmatprep.subr.bf16.mxu0 0
        %2690 = vmatpush1.bf16.msra.mxu0 0
        %2691 = vmatprep.subr.bf16.mxu0 0
        %2692 = vmatpush1.bf16.msra.mxu0 0
        %2693 = vmatprep.subr.bf16.mxu0 0
        %2694 = vmatpush1.bf16.msra.mxu0 0
        %2695 = vmatprep.subr.bf16.mxu0 0
        %2696 = vmatpush1.bf16.msra.mxu0 0
        %2697 = vmatprep.subr.bf16.mxu0 0
        %2698 = vmatpush1.bf16.msra.mxu0 0
        %2699 = vmatprep.subr.bf16.mxu0 0
        %2700 = vmatpush1.bf16.msra.mxu0 0
        %2701 = vmatprep.subr.bf16.mxu0 0
        %2702 = vmatpush1.bf16.msra.mxu0 0
        %2703 = vmatprep.subr.bf16.mxu0 0
        %2704 = vmatpush1.bf16.msra.mxu0 0
        %2705 = vmatprep.subr.bf16.mxu0 0
        %2706 = vmatpush1.bf16.msra.mxu0 0
        %2707 = vmatprep.subr.bf16.mxu0 0
        %2708 = vmatpush1.bf16.msra.mxu0 0
        %2709 = vmatprep.subr.bf16.mxu0 0
        %2710 = vmatpush1.bf16.msra.mxu0 0
        %2711 = vmatprep.mubr.bf16.mxu0 0
        %2712 = vmatmul.mubr.bf16.gmra.mrb[0].mxu0 %v2625
        %v2713 = vpop.f32.mrb[0].mxu0
        %v2714 = vadd.f32 %v2599, %v2713
        %v2715 = vpop.f32.mrb[0].mxu0
        %v2716 = vpop.f32.mrb[0].mxu0
        %v2717 = vpop.f32.mrb[0].mxu0
        %2718 = vdwg.mxu0
        %v2723 = vunpack.c.l.b16 %v2316
        %v2724 = vunpack.c.l.b16 %v2317
        %v2725 = vunpack.c.l.b16 %v2318
        %v2726 = vunpack.c.l.b16 %v2319
        %v2727 = vpack.c.b16 %v2724, %v2723
        %v2728 = vpack.c.b16 %v2726, %v2725
        %2731 = vmatprep.subr.bf16.mxu0 0
        %2732 = vmatpush1.bf16.msra.mxu0 %v2727
        %2733 = vmatprep.subr.bf16.mxu0 0
        %2734 = vmatpush1.bf16.msra.mxu0 %v2728
        %2735 = vmatprep.subr.bf16.mxu0 0
        %2736 = vmatpush1.bf16.msra.mxu0 0
        %2737 = vmatprep.subr.bf16.mxu0 0
        %2738 = vmatpush1.bf16.msra.mxu0 0
        %2739 = vmatprep.subr.bf16.mxu0 0
        %2740 = vmatpush1.bf16.msra.mxu0 0
        %2741 = vmatprep.subr.bf16.mxu0 0
        %2742 = vmatpush1.bf16.msra.mxu0 0
        %2743 = vmatprep.subr.bf16.mxu0 0
        %2744 = vmatpush1.bf16.msra.mxu0 0
        %2745 = vmatprep.subr.bf16.mxu0 0
        %2746 = vmatpush1.bf16.msra.mxu0 0
        %2747 = vmatprep.subr.bf16.mxu0 0
        %2748 = vmatpush1.bf16.msra.mxu0 0
        %2749 = vmatprep.subr.bf16.mxu0 0
        %2750 = vmatpush1.bf16.msra.mxu0 0
        %2751 = vmatprep.subr.bf16.mxu0 0
        %2752 = vmatpush1.bf16.msra.mxu0 0
        %2753 = vmatprep.subr.bf16.mxu0 0
        %2754 = vmatpush1.bf16.msra.mxu0 0
        %2755 = vmatprep.subr.bf16.mxu0 0
        %2756 = vmatpush1.bf16.msra.mxu0 0
        %2757 = vmatprep.subr.bf16.mxu0 0
        %2758 = vmatpush1.bf16.msra.mxu0 0
        %2759 = vmatprep.subr.bf16.mxu0 0
        %2760 = vmatpush1.bf16.msra.mxu0 0
        %2761 = vmatprep.subr.bf16.mxu0 0
        %2762 = vmatpush1.bf16.msra.mxu0 0
        %2763 = vmatprep.mubr.bf16.mxu0 0
        %2764 = vmatmul.mubr.bf16.gmra.mrb[0].mxu0 %v2625
        %v2765 = vpop.f32.mrb[0].mxu0
        %v2766 = vadd.f32 %v2603, %v2765
        %v2767 = vpop.f32.mrb[0].mxu0
        %v2768 = vpop.f32.mrb[0].mxu0
        %v2769 = vpop.f32.mrb[0].mxu0
        %2770 = vdwg.mxu0
        %v2775 = vunpack.c.l.b16 %v2320
        %v2776 = vunpack.c.l.b16 %v2321
        %v2777 = vunpack.c.l.b16 %v2322
        %v2778 = vunpack.c.l.b16 %v2323
        %v2779 = vpack.c.b16 %v2776, %v2775
        %v2780 = vpack.c.b16 %v2778, %v2777
        %2783 = vmatprep.subr.bf16.mxu0 0
        %2784 = vmatpush1.bf16.msra.mxu0 %v2779
        %2785 = vmatprep.subr.bf16.mxu0 0
        %2786 = vmatpush1.bf16.msra.mxu0 %v2780
        %2787 = vmatprep.subr.bf16.mxu0 0
        %2788 = vmatpush1.bf16.msra.mxu0 0
        %2789 = vmatprep.subr.bf16.mxu0 0
        %2790 = vmatpush1.bf16.msra.mxu0 0
        %2791 = vmatprep.subr.bf16.mxu0 0
        %2792 = vmatpush1.bf16.msra.mxu0 0
        %2793 = vmatprep.subr.bf16.mxu0 0
        %2794 = vmatpush1.bf16.msra.mxu0 0
        %2795 = vmatprep.subr.bf16.mxu0 0
        %2796 = vmatpush1.bf16.msra.mxu0 0
        %2797 = vmatprep.subr.bf16.mxu0 0
        %2798 = vmatpush1.bf16.msra.mxu0 0
        %2799 = vmatprep.subr.bf16.mxu0 0
        %2800 = vmatpush1.bf16.msra.mxu0 0
        %2801 = vmatprep.subr.bf16.mxu0 0
        %2802 = vmatpush1.bf16.msra.mxu0 0
        %2803 = vmatprep.subr.bf16.mxu0 0
        %2804 = vmatpush1.bf16.msra.mxu0 0
        %2805 = vmatprep.subr.bf16.mxu0 0
        %2806 = vmatpush1.bf16.msra.mxu0 0
        %2807 = vmatprep.subr.bf16.mxu0 0
        %2808 = vmatpush1.bf16.msra.mxu0 0
        %2809 = vmatprep.subr.bf16.mxu0 0
        %2810 = vmatpush1.bf16.msra.mxu0 0
        %2811 = vmatprep.subr.bf16.mxu0 0
        %2812 = vmatpush1.bf16.msra.mxu0 0
        %2813 = vmatprep.subr.bf16.mxu0 0
        %2814 = vmatpush1.bf16.msra.mxu0 0
        %2815 = vmatprep.mubr.bf16.mxu0 0
        %2816 = vmatmul.mubr.bf16.gmra.mrb[0].mxu0 %v2625
        %v2817 = vpop.f32.mrb[0].mxu0
        %v2818 = vadd.f32 %v2607, %v2817
        %v2819 = vpop.f32.mrb[0].mxu0
        %v2820 = vpop.f32.mrb[0].mxu0
        %v2821 = vpop.f32.mrb[0].mxu0
        %2822 = vdwg.mxu0
        %v2827 = vlaneseq
        %v2828 = vshrl.u32 %v2827, 7
        %v2829 = vsub.s32 0, %v2828
        %v2830 = vrot.slane %v2344, %v2829
        %v2831 = vlaneseq
        %v2832 = vshrl.u32 %v2831, 7
        %v2833 = vsub.s32 0, %v2832
        %v2834 = vrot.slane %v2345, %v2833
        %v2835 = vlaneseq
        %v2836 = vshrl.u32 %v2835, 7
        %v2837 = vsub.s32 0, %v2836
        %v2838 = vrot.slane %v2346, %v2837
        %v2839 = vlaneseq
        %v2840 = vshrl.u32 %v2839, 7
        %v2841 = vsub.s32 0, %v2840
        %v2842 = vrot.slane %v2347, %v2841
        %v2851 = vunpack.c.l.b16 %v2328
        %v2852 = vunpack.c.l.b16 %v2329
        %v2853 = vunpack.c.l.b16 %v2330
        %v2854 = vunpack.c.l.b16 %v2331
        %v2855 = vpack.c.b16 %v2852, %v2851
        %v2856 = vpack.c.b16 %v2854, %v2853
        %2859 = vmatprep.subr.bf16.mxu0 0
        %2860 = vmatpush1.bf16.msra.mxu0 %v2855
        %2861 = vmatprep.subr.bf16.mxu0 0
        %2862 = vmatpush1.bf16.msra.mxu0 %v2856
        %2863 = vmatprep.subr.bf16.mxu0 0
        %2864 = vmatpush1.bf16.msra.mxu0 0
        %2865 = vmatprep.subr.bf16.mxu0 0
        %2866 = vmatpush1.bf16.msra.mxu0 0
        %2867 = vmatprep.subr.bf16.mxu0 0
        %2868 = vmatpush1.bf16.msra.mxu0 0
        %2869 = vmatprep.subr.bf16.mxu0 0
        %2870 = vmatpush1.bf16.msra.mxu0 0
        %2871 = vmatprep.subr.bf16.mxu0 0
        %2872 = vmatpush1.bf16.msra.mxu0 0
        %2873 = vmatprep.subr.bf16.mxu0 0
        %2874 = vmatpush1.bf16.msra.mxu0 0
        %2875 = vmatprep.subr.bf16.mxu0 0
        %2876 = vmatpush1.bf16.msra.mxu0 0
        %2877 = vmatprep.subr.bf16.mxu0 0
        %2878 = vmatpush1.bf16.msra.mxu0 0
        %2879 = vmatprep.subr.bf16.mxu0 0
        %2880 = vmatpush1.bf16.msra.mxu0 0
        %2881 = vmatprep.subr.bf16.mxu0 0
        %2882 = vmatpush1.bf16.msra.mxu0 0
        %2883 = vmatprep.subr.bf16.mxu0 0
        %2884 = vmatpush1.bf16.msra.mxu0 0
        %2885 = vmatprep.subr.bf16.mxu0 0
        %2886 = vmatpush1.bf16.msra.mxu0 0
        %2887 = vmatprep.subr.bf16.mxu0 0
        %2888 = vmatpush1.bf16.msra.mxu0 0
        %2889 = vmatprep.subr.bf16.mxu0 0
        %2890 = vmatpush1.bf16.msra.mxu0 0
        %2891 = vmatprep.mubr.bf16.mxu0 0
        %2892 = vmatmul.mubr.bf16.gmra.mrb[0].mxu0 %v2625
        %v2893 = vpop.f32.mrb[0].mxu0
        %v2894 = vadd.f32 %v2830, %v2893
        %v2895 = vpop.f32.mrb[0].mxu0
        %v2896 = vpop.f32.mrb[0].mxu0
        %v2897 = vpop.f32.mrb[0].mxu0
        %2898 = vdwg.mxu0
        %v2903 = vunpack.c.l.b16 %v2332
        %v2904 = vunpack.c.l.b16 %v2333
        %v2905 = vunpack.c.l.b16 %v2334
        %v2906 = vunpack.c.l.b16 %v2335
        %v2907 = vpack.c.b16 %v2904, %v2903
        %v2908 = vpack.c.b16 %v2906, %v2905
        %2911 = vmatprep.subr.bf16.mxu0 0
        %2912 = vmatpush1.bf16.msra.mxu0 %v2907
        %2913 = vmatprep.subr.bf16.mxu0 0
        %2914 = vmatpush1.bf16.msra.mxu0 %v2908
        %2915 = vmatprep.subr.bf16.mxu0 0
        %2916 = vmatpush1.bf16.msra.mxu0 0
        %2917 = vmatprep.subr.bf16.mxu0 0
        %2918 = vmatpush1.bf16.msra.mxu0 0
        %2919 = vmatprep.subr.bf16.mxu0 0
        %2920 = vmatpush1.bf16.msra.mxu0 0
        %2921 = vmatprep.subr.bf16.mxu0 0
        %2922 = vmatpush1.bf16.msra.mxu0 0
        %2923 = vmatprep.subr.bf16.mxu0 0
        %2924 = vmatpush1.bf16.msra.mxu0 0
        %2925 = vmatprep.subr.bf16.mxu0 0
        %2926 = vmatpush1.bf16.msra.mxu0 0
        %2927 = vmatprep.subr.bf16.mxu0 0
        %2928 = vmatpush1.bf16.msra.mxu0 0
        %2929 = vmatprep.subr.bf16.mxu0 0
        %2930 = vmatpush1.bf16.msra.mxu0 0
        %2931 = vmatprep.subr.bf16.mxu0 0
        %2932 = vmatpush1.bf16.msra.mxu0 0
        %2933 = vmatprep.subr.bf16.mxu0 0
        %2934 = vmatpush1.bf16.msra.mxu0 0
        %2935 = vmatprep.subr.bf16.mxu0 0
        %2936 = vmatpush1.bf16.msra.mxu0 0
        %2937 = vmatprep.subr.bf16.mxu0 0
        %2938 = vmatpush1.bf16.msra.mxu0 0
        %2939 = vmatprep.subr.bf16.mxu0 0
        %2940 = vmatpush1.bf16.msra.mxu0 0
        %2941 = vmatprep.subr.bf16.mxu0 0
        %2942 = vmatpush1.bf16.msra.mxu0 0
        %2943 = vmatprep.mubr.bf16.mxu0 0
        %2944 = vmatmul.mubr.bf16.gmra.mrb[0].mxu0 %v2625
        %v2945 = vpop.f32.mrb[0].mxu0
        %v2946 = vadd.f32 %v2834, %v2945
        %v2947 = vpop.f32.mrb[0].mxu0
        %v2948 = vpop.f32.mrb[0].mxu0
        %v2949 = vpop.f32.mrb[0].mxu0
        %2950 = vdwg.mxu0
        %v2955 = vunpack.c.l.b16 %v2336
        %v2956 = vunpack.c.l.b16 %v2337
        %v2957 = vunpack.c.l.b16 %v2338
        %v2958 = vunpack.c.l.b16 %v2339
        %v2959 = vpack.c.b16 %v2956, %v2955
        %v2960 = vpack.c.b16 %v2958, %v2957
        %2963 = vmatprep.subr.bf16.mxu0 0
        %2964 = vmatpush1.bf16.msra.mxu0 %v2959
        %2965 = vmatprep.subr.bf16.mxu0 0
        %2966 = vmatpush1.bf16.msra.mxu0 %v2960
        %2967 = vmatprep.subr.bf16.mxu0 0
        %2968 = vmatpush1.bf16.msra.mxu0 0
        %2969 = vmatprep.subr.bf16.mxu0 0
        %2970 = vmatpush1.bf16.msra.mxu0 0
        %2971 = vmatprep.subr.bf16.mxu0 0
        %2972 = vmatpush1.bf16.msra.mxu0 0
        %2973 = vmatprep.subr.bf16.mxu0 0
        %2974 = vmatpush1.bf16.msra.mxu0 0
        %2975 = vmatprep.subr.bf16.mxu0 0
        %2976 = vmatpush1.bf16.msra.mxu0 0
        %2977 = vmatprep.subr.bf16.mxu0 0
        %2978 = vmatpush1.bf16.msra.mxu0 0
        %2979 = vmatprep.subr.bf16.mxu0 0
        %2980 = vmatpush1.bf16.msra.mxu0 0
        %2981 = vmatprep.subr.bf16.mxu0 0
        %2982 = vmatpush1.bf16.msra.mxu0 0
        %2983 = vmatprep.subr.bf16.mxu0 0
        %2984 = vmatpush1.bf16.msra.mxu0 0
        %2985 = vmatprep.subr.bf16.mxu0 0
        %2986 = vmatpush1.bf16.msra.mxu0 0
        %2987 = vmatprep.subr.bf16.mxu0 0
        %2988 = vmatpush1.bf16.msra.mxu0 0
        %2989 = vmatprep.subr.bf16.mxu0 0
        %2990 = vmatpush1.bf16.msra.mxu0 0
        %2991 = vmatprep.subr.bf16.mxu0 0
        %2992 = vmatpush1.bf16.msra.mxu0 0
        %2993 = vmatprep.subr.bf16.mxu0 0
        %2994 = vmatpush1.bf16.msra.mxu0 0
        %2995 = vmatprep.mubr.bf16.mxu0 0
        %2996 = vmatmul.mubr.bf16.gmra.mrb[0].mxu0 %v2625
        %v2997 = vpop.f32.mrb[0].mxu0
        %v2998 = vadd.f32 %v2838, %v2997
        %v2999 = vpop.f32.mrb[0].mxu0
        %v3000 = vpop.f32.mrb[0].mxu0
        %v3001 = vpop.f32.mrb[0].mxu0
        %3002 = vdwg.mxu0
        %v3007 = vunpack.c.l.b16 %v2340
        %v3008 = vunpack.c.l.b16 %v2341
        %v3009 = vunpack.c.l.b16 %v2342
        %v3010 = vunpack.c.l.b16 %v2343
        %v3011 = vpack.c.b16 %v3008, %v3007
        %v3012 = vpack.c.b16 %v3010, %v3009
        %3015 = vmatprep.subr.bf16.mxu0 0
        %3016 = vmatpush1.bf16.msra.mxu0 %v3011
        %3017 = vmatprep.subr.bf16.mxu0 0
        %3018 = vmatpush1.bf16.msra.mxu0 %v3012
        %3019 = vmatprep.subr.bf16.mxu0 0
        %3020 = vmatpush1.bf16.msra.mxu0 0
        %3021 = vmatprep.subr.bf16.mxu0 0
        %3022 = vmatpush1.bf16.msra.mxu0 0
        %3023 = vmatprep.subr.bf16.mxu0 0
        %3024 = vmatpush1.bf16.msra.mxu0 0
        %3025 = vmatprep.subr.bf16.mxu0 0
        %3026 = vmatpush1.bf16.msra.mxu0 0
        %3027 = vmatprep.subr.bf16.mxu0 0
        %3028 = vmatpush1.bf16.msra.mxu0 0
        %3029 = vmatprep.subr.bf16.mxu0 0
        %3030 = vmatpush1.bf16.msra.mxu0 0
        %3031 = vmatprep.subr.bf16.mxu0 0
        %3032 = vmatpush1.bf16.msra.mxu0 0
        %3033 = vmatprep.subr.bf16.mxu0 0
        %3034 = vmatpush1.bf16.msra.mxu0 0
        %3035 = vmatprep.subr.bf16.mxu0 0
        %3036 = vmatpush1.bf16.msra.mxu0 0
        %3037 = vmatprep.subr.bf16.mxu0 0
        %3038 = vmatpush1.bf16.msra.mxu0 0
        %3039 = vmatprep.subr.bf16.mxu0 0
        %3040 = vmatpush1.bf16.msra.mxu0 0
        %3041 = vmatprep.subr.bf16.mxu0 0
        %3042 = vmatpush1.bf16.msra.mxu0 0
        %3043 = vmatprep.subr.bf16.mxu0 0
        %3044 = vmatpush1.bf16.msra.mxu0 0
        %3045 = vmatprep.subr.bf16.mxu0 0
        %3046 = vmatpush1.bf16.msra.mxu0 0
        %3047 = vmatprep.mubr.bf16.mxu0 0
        %3048 = vmatmul.mubr.bf16.gmra.mrb[0].mxu0 %v2625
        %v3049 = vpop.f32.mrb[0].mxu0
        %v3050 = vadd.f32 %v2842, %v3049
        %v3051 = vpop.f32.mrb[0].mxu0
        %v3052 = vpop.f32.mrb[0].mxu0
        %v3053 = vpop.f32.mrb[0].mxu0
        %3054 = vdwg.mxu0
        %v3055 = vpack.c.bf16 %v2427, %v2427
        %v3056 = vpack.c.bf16 %v2479, %v2479
        %v3057 = vpack.c.bf16 %v2531, %v2531
        %v3058 = vpack.c.bf16 %v2583, %v2583
        %v3059 = vpack.c.bf16 %v2662, %v2662
        %v3060 = vpack.c.bf16 %v2714, %v2714
        %v3061 = vpack.c.bf16 %v2766, %v2766
        %v3062 = vpack.c.bf16 %v2818, %v2818
        %v3064 = vsel %vm1626, %v3055, 0
        %v3067 = vsel %vm1626, %v3059, 0
        %3069 = vmatprep.subr.bf16.mxu0 0
        %3070 = vmatpush1.bf16.xpose.msra.mxu0 %v3067
        %3071 = vmatprep.subr.bf16.mxu0 0
        %3072 = vmatpush1.bf16.xpose.msra.mxu0 0
        %3073 = vmatprep.subr.bf16.mxu0 0
        %3074 = vmatpush1.bf16.xpose.msra.mxu0 0
        %3075 = vmatprep.subr.bf16.mxu0 0
        %3076 = vmatpush1.bf16.xpose.msra.mxu0 0
        %3077 = vmatprep.subr.bf16.mxu0 0
        %3078 = vmatpush1.bf16.xpose.msra.mxu0 0
        %3079 = vmatprep.subr.bf16.mxu0 0
        %3080 = vmatpush1.bf16.xpose.msra.mxu0 0
        %3081 = vmatprep.subr.bf16.mxu0 0
        %3082 = vmatpush1.bf16.xpose.msra.mxu0 0
        %3083 = vmatprep.subr.bf16.mxu0 0
        %3084 = vmatpush1.bf16.xpose.msra.mxu0 0
        %3085 = vmatprep.subr.bf16.mxu0 0
        %3086 = vmatpush1.bf16.xpose.msra.mxu0 0
        %3087 = vmatprep.subr.bf16.mxu0 0
        %3088 = vmatpush1.bf16.xpose.msra.mxu0 0
        %3089 = vmatprep.subr.bf16.mxu0 0
        %3090 = vmatpush1.bf16.xpose.msra.mxu0 0
        %3091 = vmatprep.subr.bf16.mxu0 0
        %3092 = vmatpush1.bf16.xpose.msra.mxu0 0
        %3093 = vmatprep.subr.bf16.mxu0 0
        %3094 = vmatpush1.bf16.xpose.msra.mxu0 0
        %3095 = vmatprep.subr.bf16.mxu0 0
        %3096 = vmatpush1.bf16.xpose.msra.mxu0 0
        %3097 = vmatprep.subr.bf16.mxu0 0
        %3098 = vmatpush1.bf16.xpose.msra.mxu0 0
        %3099 = vmatprep.subr.bf16.mxu0 0
        %3100 = vmatpush1.bf16.xpose.msra.mxu0 0
        %3101 = vmatprep.mubr.bf16.mxu0 0
        %3102 = vmatmul.mubr.bf16.gmra.mrb[0].mxu0 %v3064
        %v3103 = vpop.f32.mrb[0].mxu0
        %v3104 = vadd.f32 0.0, %v3103
        %v3105 = vpop.f32.mrb[0].mxu0
        %v3106 = vpop.f32.mrb[0].mxu0
        %v3107 = vpop.f32.mrb[0].mxu0
        %3108 = vdwg.mxu0
        %v3110 = vsel %vm1626, %v3056, 0
        %v3113 = vsel %vm1626, %v3060, 0
        %3115 = vmatprep.subr.bf16.mxu0 0
        %3116 = vmatpush1.bf16.xpose.msra.mxu0 %v3113
        %3117 = vmatprep.subr.bf16.mxu0 0
        %3118 = vmatpush1.bf16.xpose.msra.mxu0 0
        %3119 = vmatprep.subr.bf16.mxu0 0
        %3120 = vmatpush1.bf16.xpose.msra.mxu0 0
        %3121 = vmatprep.subr.bf16.mxu0 0
        %3122 = vmatpush1.bf16.xpose.msra.mxu0 0
        %3123 = vmatprep.subr.bf16.mxu0 0
        %3124 = vmatpush1.bf16.xpose.msra.mxu0 0
        %3125 = vmatprep.subr.bf16.mxu0 0
        %3126 = vmatpush1.bf16.xpose.msra.mxu0 0
        %3127 = vmatprep.subr.bf16.mxu0 0
        %3128 = vmatpush1.bf16.xpose.msra.mxu0 0
        %3129 = vmatprep.subr.bf16.mxu0 0
        %3130 = vmatpush1.bf16.xpose.msra.mxu0 0
        %3131 = vmatprep.subr.bf16.mxu0 0
        %3132 = vmatpush1.bf16.xpose.msra.mxu0 0
        %3133 = vmatprep.subr.bf16.mxu0 0
        %3134 = vmatpush1.bf16.xpose.msra.mxu0 0
        %3135 = vmatprep.subr.bf16.mxu0 0
        %3136 = vmatpush1.bf16.xpose.msra.mxu0 0
        %3137 = vmatprep.subr.bf16.mxu0 0
        %3138 = vmatpush1.bf16.xpose.msra.mxu0 0
        %3139 = vmatprep.subr.bf16.mxu0 0
        %3140 = vmatpush1.bf16.xpose.msra.mxu0 0
        %3141 = vmatprep.subr.bf16.mxu0 0
        %3142 = vmatpush1.bf16.xpose.msra.mxu0 0
        %3143 = vmatprep.subr.bf16.mxu0 0
        %3144 = vmatpush1.bf16.xpose.msra.mxu0 0
        %3145 = vmatprep.subr.bf16.mxu0 0
        %3146 = vmatpush1.bf16.xpose.msra.mxu0 0
        %3147 = vmatprep.mubr.bf16.mxu0 0
        %3148 = vmatmul.mubr.bf16.gmra.mrb[0].mxu0 %v3110
        %v3149 = vpop.f32.mrb[0].mxu0
        %v3150 = vadd.f32 0.0, %v3149
        %v3151 = vpop.f32.mrb[0].mxu0
        %v3152 = vpop.f32.mrb[0].mxu0
        %v3153 = vpop.f32.mrb[0].mxu0
        %3154 = vdwg.mxu0
        %v3156 = vsel %vm1626, %v3057, 0
        %v3159 = vsel %vm1626, %v3061, 0
        %3161 = vmatprep.subr.bf16.mxu0 0
        %3162 = vmatpush1.bf16.xpose.msra.mxu0 %v3159
        %3163 = vmatprep.subr.bf16.mxu0 0
        %3164 = vmatpush1.bf16.xpose.msra.mxu0 0
        %3165 = vmatprep.subr.bf16.mxu0 0
        %3166 = vmatpush1.bf16.xpose.msra.mxu0 0
        %3167 = vmatprep.subr.bf16.mxu0 0
        %3168 = vmatpush1.bf16.xpose.msra.mxu0 0
        %3169 = vmatprep.subr.bf16.mxu0 0
        %3170 = vmatpush1.bf16.xpose.msra.mxu0 0
        %3171 = vmatprep.subr.bf16.mxu0 0
        %3172 = vmatpush1.bf16.xpose.msra.mxu0 0
        %3173 = vmatprep.subr.bf16.mxu0 0
        %3174 = vmatpush1.bf16.xpose.msra.mxu0 0
        %3175 = vmatprep.subr.bf16.mxu0 0
        %3176 = vmatpush1.bf16.xpose.msra.mxu0 0
        %3177 = vmatprep.subr.bf16.mxu0 0
        %3178 = vmatpush1.bf16.xpose.msra.mxu0 0
        %3179 = vmatprep.subr.bf16.mxu0 0
        %3180 = vmatpush1.bf16.xpose.msra.mxu0 0
        %3181 = vmatprep.subr.bf16.mxu0 0
        %3182 = vmatpush1.bf16.xpose.msra.mxu0 0
        %3183 = vmatprep.subr.bf16.mxu0 0
        %3184 = vmatpush1.bf16.xpose.msra.mxu0 0
        %3185 = vmatprep.subr.bf16.mxu0 0
        %3186 = vmatpush1.bf16.xpose.msra.mxu0 0
        %3187 = vmatprep.subr.bf16.mxu0 0
        %3188 = vmatpush1.bf16.xpose.msra.mxu0 0
        %3189 = vmatprep.subr.bf16.mxu0 0
        %3190 = vmatpush1.bf16.xpose.msra.mxu0 0
        %3191 = vmatprep.subr.bf16.mxu0 0
        %3192 = vmatpush1.bf16.xpose.msra.mxu0 0
        %3193 = vmatprep.mubr.bf16.mxu0 0
        %3194 = vmatmul.mubr.bf16.gmra.mrb[0].mxu0 %v3156
        %v3195 = vpop.f32.mrb[0].mxu0
        %v3196 = vadd.f32 0.0, %v3195
        %v3197 = vpop.f32.mrb[0].mxu0
        %v3198 = vpop.f32.mrb[0].mxu0
        %v3199 = vpop.f32.mrb[0].mxu0
        %3200 = vdwg.mxu0
        %v3202 = vsel %vm1626, %v3058, 0
        %v3205 = vsel %vm1626, %v3062, 0
        %3207 = vmatprep.subr.bf16.mxu0 0
        %3208 = vmatpush1.bf16.xpose.msra.mxu0 %v3205
        %3209 = vmatprep.subr.bf16.mxu0 0
        %3210 = vmatpush1.bf16.xpose.msra.mxu0 0
        %3211 = vmatprep.subr.bf16.mxu0 0
        %3212 = vmatpush1.bf16.xpose.msra.mxu0 0
        %3213 = vmatprep.subr.bf16.mxu0 0
        %3214 = vmatpush1.bf16.xpose.msra.mxu0 0
        %3215 = vmatprep.subr.bf16.mxu0 0
        %3216 = vmatpush1.bf16.xpose.msra.mxu0 0
        %3217 = vmatprep.subr.bf16.mxu0 0
        %3218 = vmatpush1.bf16.xpose.msra.mxu0 0
        %3219 = vmatprep.subr.bf16.mxu0 0
        %3220 = vmatpush1.bf16.xpose.msra.mxu0 0
        %3221 = vmatprep.subr.bf16.mxu0 0
        %3222 = vmatpush1.bf16.xpose.msra.mxu0 0
        %3223 = vmatprep.subr.bf16.mxu0 0
        %3224 = vmatpush1.bf16.xpose.msra.mxu0 0
        %3225 = vmatprep.subr.bf16.mxu0 0
        %3226 = vmatpush1.bf16.xpose.msra.mxu0 0
        %3227 = vmatprep.subr.bf16.mxu0 0
        %3228 = vmatpush1.bf16.xpose.msra.mxu0 0
        %3229 = vmatprep.subr.bf16.mxu0 0
        %3230 = vmatpush1.bf16.xpose.msra.mxu0 0
        %3231 = vmatprep.subr.bf16.mxu0 0
        %3232 = vmatpush1.bf16.xpose.msra.mxu0 0
        %3233 = vmatprep.subr.bf16.mxu0 0
        %3234 = vmatpush1.bf16.xpose.msra.mxu0 0
        %3235 = vmatprep.subr.bf16.mxu0 0
        %3236 = vmatpush1.bf16.xpose.msra.mxu0 0
        %3237 = vmatprep.subr.bf16.mxu0 0
        %3238 = vmatpush1.bf16.xpose.msra.mxu0 0
        %3239 = vmatprep.mubr.bf16.mxu0 0
        %3240 = vmatmul.mubr.bf16.gmra.mrb[0].mxu0 %v3202
        %v3241 = vpop.f32.mrb[0].mxu0
        %v3242 = vadd.f32 0.0, %v3241
        %v3243 = vpop.f32.mrb[0].mxu0
        %v3244 = vpop.f32.mrb[0].mxu0
        %v3245 = vpop.f32.mrb[0].mxu0
        %3246 = vdwg.mxu0
        %v3247 = vsel %vm845, 1, 0
        %vm3248 = vcmp.eq.s32.totalorder %v3247, 1
        %v3249 = vsel %vm3248, %v3104, -1e+09
        %v3250 = vsel %vm3248, %v3150, -1e+09
        %v3251 = vsel %vm3248, %v3196, -1e+09
        %v3252 = vsel %vm3248, %v3242, -1e+09
        %v3253 = vsel %vm1626, %v3249, -inf
        %3254 = vmax.xlane.f32.xlu0 %v3253
        %v3255 = vpop.xlane.xlu0 %3254
        %v3256 = vsel %vm1626, %v3250, -inf
        %3257 = vmax.xlane.f32.xlu0 %v3256
        %v3258 = vpop.xlane.xlu0 %3257
        %v3259 = vsel %vm1626, %v3251, -inf
        %3260 = vmax.xlane.f32.xlu0 %v3259
        %v3261 = vpop.xlane.xlu0 %3260
        %v3262 = vsel %vm1626, %v3252, -inf
        %3263 = vmax.xlane.f32.xlu0 %v3262
        %v3264 = vpop.xlane.xlu0 %3263
        %v3265 = vsub.f32 %v3249, %v3255
        %v3266 = vsub.f32 %v3250, %v3258
        %v3267 = vsub.f32 %v3251, %v3261
        %v3268 = vsub.f32 %v3252, %v3264
        %v3269 = vmul.f32 %v3265, 1.442695
        %v3270 = vpow.pop %v3269
        %v3271 = vmul.f32 %v3266, 1.442695
        %v3272 = vpow.pop %v3271
        %v3273 = vmul.f32 %v3267, 1.442695
        %v3274 = vpow.pop %v3273
        %v3275 = vmul.f32 %v3268, 1.442695
        %v3276 = vpow.pop %v3275
        %v3277 = vsel %vm1626, %v3270, 0.0
        %3278 = vadd.xlane.f32.xlu0 %v3277
        %v3279 = vpop.xlane.xlu0 %3278
        %v3280 = vsel %vm1626, %v3272, 0.0
        %3281 = vadd.xlane.f32.xlu0 %v3280
        %v3282 = vpop.xlane.xlu0 %3281
        %v3283 = vsel %vm1626, %v3274, 0.0
        %3284 = vadd.xlane.f32.xlu0 %v3283
        %v3285 = vpop.xlane.xlu0 %3284
        %v3286 = vsel %vm1626, %v3276, 0.0
        %3287 = vadd.xlane.f32.xlu0 %v3286
        %v3288 = vpop.xlane.xlu0 %3287
        %v3289 = vrcp.pop %v3279
        %v3290 = vrcp.pop %v3282
        %v3291 = vrcp.pop %v3285
        %v3292 = vrcp.pop %v3288
        %v3293 = vmul.f32 %v3270, %v3289
        %v3294 = vmul.f32 %v3272, %v3290
        %v3295 = vmul.f32 %v3274, %v3291
        %v3296 = vmul.f32 %v3276, %v3292
        %v3297 = vpack.c.bf16 %v3293, %v3293
        %v3298 = vpack.c.bf16 %v3294, %v3294
        %v3299 = vpack.c.bf16 %v3295, %v3295
        %v3300 = vpack.c.bf16 %v3296, %v3296
        %v3301 = vpack.c.bf16 %v2894, %v2894
        %v3302 = vpack.c.bf16 %v2946, %v2946
        %v3303 = vpack.c.bf16 %v2998, %v2998
        %v3304 = vpack.c.bf16 %v3050, %v3050
        %v3306 = vsel %vm1626, %v3297, 0
        %v3309 = vsel %vm1872, %v3301, 0
        %3311 = vmatprep.subr.bf16.mxu0 0
        %3312 = vmatpush1.bf16.msra.mxu0 %v3309
        %3313 = vmatprep.subr.bf16.mxu0 0
        %3314 = vmatpush1.bf16.msra.mxu0 0
        %3315 = vmatprep.subr.bf16.mxu0 0
        %3316 = vmatpush1.bf16.msra.mxu0 0
        %3317 = vmatprep.subr.bf16.mxu0 0
        %3318 = vmatpush1.bf16.msra.mxu0 0
        %3319 = vmatprep.subr.bf16.mxu0 0
        %3320 = vmatpush1.bf16.msra.mxu0 0
        %3321 = vmatprep.subr.bf16.mxu0 0
        %3322 = vmatpush1.bf16.msra.mxu0 0
        %3323 = vmatprep.subr.bf16.mxu0 0
        %3324 = vmatpush1.bf16.msra.mxu0 0
        %3325 = vmatprep.subr.bf16.mxu0 0
        %3326 = vmatpush1.bf16.msra.mxu0 0
        %3327 = vmatprep.subr.bf16.mxu0 0
        %3328 = vmatpush1.bf16.msra.mxu0 0
        %3329 = vmatprep.subr.bf16.mxu0 0
        %3330 = vmatpush1.bf16.msra.mxu0 0
        %3331 = vmatprep.subr.bf16.mxu0 0
        %3332 = vmatpush1.bf16.msra.mxu0 0
        %3333 = vmatprep.subr.bf16.mxu0 0
        %3334 = vmatpush1.bf16.msra.mxu0 0
        %3335 = vmatprep.subr.bf16.mxu0 0
        %3336 = vmatpush1.bf16.msra.mxu0 0
        %3337 = vmatprep.subr.bf16.mxu0 0
        %3338 = vmatpush1.bf16.msra.mxu0 0
        %3339 = vmatprep.subr.bf16.mxu0 0
        %3340 = vmatpush1.bf16.msra.mxu0 0
        %3341 = vmatprep.subr.bf16.mxu0 0
        %3342 = vmatpush1.bf16.msra.mxu0 0
        %3343 = vmatprep.mubr.bf16.mxu0 0
        %3344 = vmatmul.mubr.bf16.gmra.mrb[0].mxu0 %v3306
        %v3345 = vpop.f32.mrb[0].mxu0
        %v3346 = vadd.f32 0.0, %v3345
        %v3347 = vpop.f32.mrb[0].mxu0
        %v3348 = vpop.f32.mrb[0].mxu0
        %v3349 = vpop.f32.mrb[0].mxu0
        %3350 = vdwg.mxu0
        %v3352 = vsel %vm1626, %v3298, 0
        %v3355 = vsel %vm1872, %v3302, 0
        %3357 = vmatprep.subr.bf16.mxu0 0
        %3358 = vmatpush1.bf16.msra.mxu0 %v3355
        %3359 = vmatprep.subr.bf16.mxu0 0
        %3360 = vmatpush1.bf16.msra.mxu0 0
        %3361 = vmatprep.subr.bf16.mxu0 0
        %3362 = vmatpush1.bf16.msra.mxu0 0
        %3363 = vmatprep.subr.bf16.mxu0 0
        %3364 = vmatpush1.bf16.msra.mxu0 0
        %3365 = vmatprep.subr.bf16.mxu0 0
        %3366 = vmatpush1.bf16.msra.mxu0 0
        %3367 = vmatprep.subr.bf16.mxu0 0
        %3368 = vmatpush1.bf16.msra.mxu0 0
        %3369 = vmatprep.subr.bf16.mxu0 0
        %3370 = vmatpush1.bf16.msra.mxu0 0
        %3371 = vmatprep.subr.bf16.mxu0 0
        %3372 = vmatpush1.bf16.msra.mxu0 0
        %3373 = vmatprep.subr.bf16.mxu0 0
        %3374 = vmatpush1.bf16.msra.mxu0 0
        %3375 = vmatprep.subr.bf16.mxu0 0
        %3376 = vmatpush1.bf16.msra.mxu0 0
        %3377 = vmatprep.subr.bf16.mxu0 0
        %3378 = vmatpush1.bf16.msra.mxu0 0
        %3379 = vmatprep.subr.bf16.mxu0 0
        %3380 = vmatpush1.bf16.msra.mxu0 0
        %3381 = vmatprep.subr.bf16.mxu0 0
        %3382 = vmatpush1.bf16.msra.mxu0 0
        %3383 = vmatprep.subr.bf16.mxu0 0
        %3384 = vmatpush1.bf16.msra.mxu0 0
        %3385 = vmatprep.subr.bf16.mxu0 0
        %3386 = vmatpush1.bf16.msra.mxu0 0
        %3387 = vmatprep.subr.bf16.mxu0 0
        %3388 = vmatpush1.bf16.msra.mxu0 0
        %3389 = vmatprep.mubr.bf16.mxu0 0
        %3390 = vmatmul.mubr.bf16.gmra.mrb[0].mxu0 %v3352
        %v3391 = vpop.f32.mrb[0].mxu0
        %v3392 = vadd.f32 0.0, %v3391
        %v3393 = vpop.f32.mrb[0].mxu0
        %v3394 = vpop.f32.mrb[0].mxu0
        %v3395 = vpop.f32.mrb[0].mxu0
        %3396 = vdwg.mxu0
        %v3398 = vsel %vm1626, %v3299, 0
        %v3401 = vsel %vm1872, %v3303, 0
        %3403 = vmatprep.subr.bf16.mxu0 0
        %3404 = vmatpush1.bf16.msra.mxu0 %v3401
        %3405 = vmatprep.subr.bf16.mxu0 0
        %3406 = vmatpush1.bf16.msra.mxu0 0
        %3407 = vmatprep.subr.bf16.mxu0 0
        %3408 = vmatpush1.bf16.msra.mxu0 0
        %3409 = vmatprep.subr.bf16.mxu0 0
        %3410 = vmatpush1.bf16.msra.mxu0 0
        %3411 = vmatprep.subr.bf16.mxu0 0
        %3412 = vmatpush1.bf16.msra.mxu0 0
        %3413 = vmatprep.subr.bf16.mxu0 0
        %3414 = vmatpush1.bf16.msra.mxu0 0
        %3415 = vmatprep.subr.bf16.mxu0 0
        %3416 = vmatpush1.bf16.msra.mxu0 0
        %3417 = vmatprep.subr.bf16.mxu0 0
        %3418 = vmatpush1.bf16.msra.mxu0 0
        %3419 = vmatprep.subr.bf16.mxu0 0
        %3420 = vmatpush1.bf16.msra.mxu0 0
        %3421 = vmatprep.subr.bf16.mxu0 0
        %3422 = vmatpush1.bf16.msra.mxu0 0
        %3423 = vmatprep.subr.bf16.mxu0 0
        %3424 = vmatpush1.bf16.msra.mxu0 0
        %3425 = vmatprep.subr.bf16.mxu0 0
        %3426 = vmatpush1.bf16.msra.mxu0 0
        %3427 = vmatprep.subr.bf16.mxu0 0
        %3428 = vmatpush1.bf16.msra.mxu0 0
        %3429 = vmatprep.subr.bf16.mxu0 0
        %3430 = vmatpush1.bf16.msra.mxu0 0
        %3431 = vmatprep.subr.bf16.mxu0 0
        %3432 = vmatpush1.bf16.msra.mxu0 0
        %3433 = vmatprep.subr.bf16.mxu0 0
        %3434 = vmatpush1.bf16.msra.mxu0 0
        %3435 = vmatprep.mubr.bf16.mxu0 0
        %3436 = vmatmul.mubr.bf16.gmra.mrb[0].mxu0 %v3398
        %v3437 = vpop.f32.mrb[0].mxu0
        %v3438 = vadd.f32 0.0, %v3437
        %v3439 = vpop.f32.mrb[0].mxu0
        %v3440 = vpop.f32.mrb[0].mxu0
        %v3441 = vpop.f32.mrb[0].mxu0
        %3442 = vdwg.mxu0
        %v3444 = vsel %vm1626, %v3300, 0
        %v3447 = vsel %vm1872, %v3304, 0
        %3449 = vmatprep.subr.bf16.mxu0 0
        %3450 = vmatpush1.bf16.msra.mxu0 %v3447
        %3451 = vmatprep.subr.bf16.mxu0 0
        %3452 = vmatpush1.bf16.msra.mxu0 0
        %3453 = vmatprep.subr.bf16.mxu0 0
        %3454 = vmatpush1.bf16.msra.mxu0 0
        %3455 = vmatprep.subr.bf16.mxu0 0
        %3456 = vmatpush1.bf16.msra.mxu0 0
        %3457 = vmatprep.subr.bf16.mxu0 0
        %3458 = vmatpush1.bf16.msra.mxu0 0
        %3459 = vmatprep.subr.bf16.mxu0 0
        %3460 = vmatpush1.bf16.msra.mxu0 0
        %3461 = vmatprep.subr.bf16.mxu0 0
        %3462 = vmatpush1.bf16.msra.mxu0 0
        %3463 = vmatprep.subr.bf16.mxu0 0
        %3464 = vmatpush1.bf16.msra.mxu0 0
        %3465 = vmatprep.subr.bf16.mxu0 0
        %3466 = vmatpush1.bf16.msra.mxu0 0
        %3467 = vmatprep.subr.bf16.mxu0 0
        %3468 = vmatpush1.bf16.msra.mxu0 0
        %3469 = vmatprep.subr.bf16.mxu0 0
        %3470 = vmatpush1.bf16.msra.mxu0 0
        %3471 = vmatprep.subr.bf16.mxu0 0
        %3472 = vmatpush1.bf16.msra.mxu0 0
        %3473 = vmatprep.subr.bf16.mxu0 0
        %3474 = vmatpush1.bf16.msra.mxu0 0
        %3475 = vmatprep.subr.bf16.mxu0 0
        %3476 = vmatpush1.bf16.msra.mxu0 0
        %3477 = vmatprep.subr.bf16.mxu0 0
        %3478 = vmatpush1.bf16.msra.mxu0 0
        %3479 = vmatprep.subr.bf16.mxu0 0
        %3480 = vmatpush1.bf16.msra.mxu0 0
        %3481 = vmatprep.mubr.bf16.mxu0 0
        %3482 = vmatmul.mubr.bf16.gmra.mrb[0].mxu0 %v3444
        %v3483 = vpop.f32.mrb[0].mxu0
        %v3484 = vadd.f32 0.0, %v3483
        %v3485 = vpop.f32.mrb[0].mxu0
        %v3486 = vpop.f32.mrb[0].mxu0
        %v3487 = vpop.f32.mrb[0].mxu0
        %3488 = vdwg.mxu0
        %v3489 = vpack.c.bf16 %v3346, %v3346
        %v3490 = vpack.c.bf16 %v3392, %v3392
        %v3491 = vpack.c.bf16 %v3438, %v3438
        %v3492 = vpack.c.bf16 %v3484, %v3484
        %v3494 = vsel %vm1626, %v3489, 0
        %v3497 = vsel %vm1872, %v2348, 0
        %3499 = vmatprep.subr.bf16.mxu0 0
        %3500 = vmatpush1.bf16.msra.mxu0 %v3497
        %3501 = vmatprep.subr.bf16.mxu0 0
        %3502 = vmatpush1.bf16.msra.mxu0 0
        %3503 = vmatprep.subr.bf16.mxu0 0
        %3504 = vmatpush1.bf16.msra.mxu0 0
        %3505 = vmatprep.subr.bf16.mxu0 0
        %3506 = vmatpush1.bf16.msra.mxu0 0
        %3507 = vmatprep.subr.bf16.mxu0 0
        %3508 = vmatpush1.bf16.msra.mxu0 0
        %3509 = vmatprep.subr.bf16.mxu0 0
        %3510 = vmatpush1.bf16.msra.mxu0 0
        %3511 = vmatprep.subr.bf16.mxu0 0
        %3512 = vmatpush1.bf16.msra.mxu0 0
        %3513 = vmatprep.subr.bf16.mxu0 0
        %3514 = vmatpush1.bf16.msra.mxu0 0
        %3515 = vmatprep.subr.bf16.mxu0 0
        %3516 = vmatpush1.bf16.msra.mxu0 0
        %3517 = vmatprep.subr.bf16.mxu0 0
        %3518 = vmatpush1.bf16.msra.mxu0 0
        %3519 = vmatprep.subr.bf16.mxu0 0
        %3520 = vmatpush1.bf16.msra.mxu0 0
        %3521 = vmatprep.subr.bf16.mxu0 0
        %3522 = vmatpush1.bf16.msra.mxu0 0
        %3523 = vmatprep.subr.bf16.mxu0 0
        %3524 = vmatpush1.bf16.msra.mxu0 0
        %3525 = vmatprep.subr.bf16.mxu0 0
        %3526 = vmatpush1.bf16.msra.mxu0 0
        %3527 = vmatprep.subr.bf16.mxu0 0
        %3528 = vmatpush1.bf16.msra.mxu0 0
        %3529 = vmatprep.subr.bf16.mxu0 0
        %3530 = vmatpush1.bf16.msra.mxu0 0
        %3531 = vmatprep.mubr.bf16.mxu0 0
        %3532 = vmatmul.mubr.bf16.gmra.mrb[0].mxu0 %v3494
        %v3533 = vpop.f32.mrb[0].mxu0
        %v3534 = vadd.f32 0.0, %v3533
        %v3535 = vpop.f32.mrb[0].mxu0
        %v3536 = vpop.f32.mrb[0].mxu0
        %v3537 = vpop.f32.mrb[0].mxu0
        %3538 = vdwg.mxu0
        %v3540 = vsel %vm1626, %v3490, 0
        %v3543 = vsel %vm1872, %v2349, 0
        %3545 = vmatprep.subr.bf16.mxu0 0
        %3546 = vmatpush1.bf16.msra.mxu0 %v3543
        %3547 = vmatprep.subr.bf16.mxu0 0
        %3548 = vmatpush1.bf16.msra.mxu0 0
        %3549 = vmatprep.subr.bf16.mxu0 0
        %3550 = vmatpush1.bf16.msra.mxu0 0
        %3551 = vmatprep.subr.bf16.mxu0 0
        %3552 = vmatpush1.bf16.msra.mxu0 0
        %3553 = vmatprep.subr.bf16.mxu0 0
        %3554 = vmatpush1.bf16.msra.mxu0 0
        %3555 = vmatprep.subr.bf16.mxu0 0
        %3556 = vmatpush1.bf16.msra.mxu0 0
        %3557 = vmatprep.subr.bf16.mxu0 0
        %3558 = vmatpush1.bf16.msra.mxu0 0
        %3559 = vmatprep.subr.bf16.mxu0 0
        %3560 = vmatpush1.bf16.msra.mxu0 0
        %3561 = vmatprep.subr.bf16.mxu0 0
        %3562 = vmatpush1.bf16.msra.mxu0 0
        %3563 = vmatprep.subr.bf16.mxu0 0
        %3564 = vmatpush1.bf16.msra.mxu0 0
        %3565 = vmatprep.subr.bf16.mxu0 0
        %3566 = vmatpush1.bf16.msra.mxu0 0
        %3567 = vmatprep.subr.bf16.mxu0 0
        %3568 = vmatpush1.bf16.msra.mxu0 0
        %3569 = vmatprep.subr.bf16.mxu0 0
        %3570 = vmatpush1.bf16.msra.mxu0 0
        %3571 = vmatprep.subr.bf16.mxu0 0
        %3572 = vmatpush1.bf16.msra.mxu0 0
        %3573 = vmatprep.subr.bf16.mxu0 0
        %3574 = vmatpush1.bf16.msra.mxu0 0
        %3575 = vmatprep.subr.bf16.mxu0 0
        %3576 = vmatpush1.bf16.msra.mxu0 0
        %3577 = vmatprep.mubr.bf16.mxu0 0
        %3578 = vmatmul.mubr.bf16.gmra.mrb[0].mxu0 %v3540
        %v3579 = vpop.f32.mrb[0].mxu0
        %v3580 = vadd.f32 0.0, %v3579
        %v3581 = vpop.f32.mrb[0].mxu0
        %v3582 = vpop.f32.mrb[0].mxu0
        %v3583 = vpop.f32.mrb[0].mxu0
        %3584 = vdwg.mxu0
        %v3586 = vsel %vm1626, %v3491, 0
        %v3589 = vsel %vm1872, %v2350, 0
        %3591 = vmatprep.subr.bf16.mxu0 0
        %3592 = vmatpush1.bf16.msra.mxu0 %v3589
        %3593 = vmatprep.subr.bf16.mxu0 0
        %3594 = vmatpush1.bf16.msra.mxu0 0
        %3595 = vmatprep.subr.bf16.mxu0 0
        %3596 = vmatpush1.bf16.msra.mxu0 0
        %3597 = vmatprep.subr.bf16.mxu0 0
        %3598 = vmatpush1.bf16.msra.mxu0 0
        %3599 = vmatprep.subr.bf16.mxu0 0
        %3600 = vmatpush1.bf16.msra.mxu0 0
        %3601 = vmatprep.subr.bf16.mxu0 0
        %3602 = vmatpush1.bf16.msra.mxu0 0
        %3603 = vmatprep.subr.bf16.mxu0 0
        %3604 = vmatpush1.bf16.msra.mxu0 0
        %3605 = vmatprep.subr.bf16.mxu0 0
        %3606 = vmatpush1.bf16.msra.mxu0 0
        %3607 = vmatprep.subr.bf16.mxu0 0
        %3608 = vmatpush1.bf16.msra.mxu0 0
        %3609 = vmatprep.subr.bf16.mxu0 0
        %3610 = vmatpush1.bf16.msra.mxu0 0
        %3611 = vmatprep.subr.bf16.mxu0 0
        %3612 = vmatpush1.bf16.msra.mxu0 0
        %3613 = vmatprep.subr.bf16.mxu0 0
        %3614 = vmatpush1.bf16.msra.mxu0 0
        %3615 = vmatprep.subr.bf16.mxu0 0
        %3616 = vmatpush1.bf16.msra.mxu0 0
        %3617 = vmatprep.subr.bf16.mxu0 0
        %3618 = vmatpush1.bf16.msra.mxu0 0
        %3619 = vmatprep.subr.bf16.mxu0 0
        %3620 = vmatpush1.bf16.msra.mxu0 0
        %3621 = vmatprep.subr.bf16.mxu0 0
        %3622 = vmatpush1.bf16.msra.mxu0 0
        %3623 = vmatprep.mubr.bf16.mxu0 0
        %3624 = vmatmul.mubr.bf16.gmra.mrb[0].mxu0 %v3586
        %v3625 = vpop.f32.mrb[0].mxu0
        %v3626 = vadd.f32 0.0, %v3625
        %v3627 = vpop.f32.mrb[0].mxu0
        %v3628 = vpop.f32.mrb[0].mxu0
        %v3629 = vpop.f32.mrb[0].mxu0
        %3630 = vdwg.mxu0
        %v3632 = vsel %vm1626, %v3492, 0
        %v3635 = vsel %vm1872, %v2351, 0
        %3637 = vmatprep.subr.bf16.mxu0 0
        %3638 = vmatpush1.bf16.msra.mxu0 %v3635
        %3639 = vmatprep.subr.bf16.mxu0 0
        %3640 = vmatpush1.bf16.msra.mxu0 0
        %3641 = vmatprep.subr.bf16.mxu0 0
        %3642 = vmatpush1.bf16.msra.mxu0 0
        %3643 = vmatprep.subr.bf16.mxu0 0
        %3644 = vmatpush1.bf16.msra.mxu0 0
        %3645 = vmatprep.subr.bf16.mxu0 0
        %3646 = vmatpush1.bf16.msra.mxu0 0
        %3647 = vmatprep.subr.bf16.mxu0 0
        %3648 = vmatpush1.bf16.msra.mxu0 0
        %3649 = vmatprep.subr.bf16.mxu0 0
        %3650 = vmatpush1.bf16.msra.mxu0 0
        %3651 = vmatprep.subr.bf16.mxu0 0
        %3652 = vmatpush1.bf16.msra.mxu0 0
        %3653 = vmatprep.subr.bf16.mxu0 0
        %3654 = vmatpush1.bf16.msra.mxu0 0
        %3655 = vmatprep.subr.bf16.mxu0 0
        %3656 = vmatpush1.bf16.msra.mxu0 0
        %3657 = vmatprep.subr.bf16.mxu0 0
        %3658 = vmatpush1.bf16.msra.mxu0 0
        %3659 = vmatprep.subr.bf16.mxu0 0
        %3660 = vmatpush1.bf16.msra.mxu0 0
        %3661 = vmatprep.subr.bf16.mxu0 0
        %3662 = vmatpush1.bf16.msra.mxu0 0
        %3663 = vmatprep.subr.bf16.mxu0 0
        %3664 = vmatpush1.bf16.msra.mxu0 0
        %3665 = vmatprep.subr.bf16.mxu0 0
        %3666 = vmatpush1.bf16.msra.mxu0 0
        %3667 = vmatprep.subr.bf16.mxu0 0
        %3668 = vmatpush1.bf16.msra.mxu0 0
        %3669 = vmatprep.mubr.bf16.mxu0 0
        %3670 = vmatmul.mubr.bf16.gmra.mrb[0].mxu0 %v3632
        %v3671 = vpop.f32.mrb[0].mxu0
        %v3672 = vadd.f32 0.0, %v3671
        %v3673 = vpop.f32.mrb[0].mxu0
        %v3674 = vpop.f32.mrb[0].mxu0
        %v3675 = vpop.f32.mrb[0].mxu0
        %3676 = vdwg.mxu0
        %v3677 = vsel %vm954, %v3534, 0.0
        %v3678 = vsel %vm954, %v3580, 0.0
        %v3679 = vadd.f32 %v3677, %v3678
        %v3680 = vsel %vm954, %v3626, 0.0
        %v3681 = vadd.f32 %v3679, %v3680
        %v3682 = vsel %vm954, %v3672, 0.0
        %v3683 = vadd.f32 %v3681, %v3682
        %v3685 = vlaneseq
        %v3686 = vshrl.u32 %v3685, 7
        %v3687 = vsub.s32 0, %v3686
        %v3688 = vrot.slane %v2352, %v3687
        %v3690 = vadd.f32 %v3683, %v3688
        %v3691 = vadd.f32 %v3690, %v2286
        %v3692 = vsel %vm954, %v3691, 0.0
        %3693 = vadd.xlane.f32.xlu0 %v3692
        %v3694 = vpop.xlane.xlu0 %3693
        %v3695 = vmul.f32 %v3694, %v2260
        %v3696 = vmul.f32 %v3691, %v3691
        %v3697 = vsel %vm954, %v3696, 0.0
        %3698 = vadd.xlane.f32.xlu0 %v3697
        %v3699 = vpop.xlane.xlu0 %3698
        %v3700 = vmul.f32 %v3699, %v2260
        %v3701 = vmul.f32 %v3695, %v3695
        %v3702 = vsub.f32 %v3700, %v3701
        %v3703 = vsub.f32 %v3691, %v3695
        %v3704 = vadd.f32 %v3702, 1e-05
        %v3705 = vrsqrt.pop %v3704
        %v3706 = vmul.f32 %v3703, %v3705
        %v3708 = vlaneseq
        %v3709 = vshrl.u32 %v3708, 7
        %v3710 = vsub.s32 0, %v3709
        %v3711 = vrot.slane %v847, %v3710
        %v3713 = vmul.f32 %v3706, %v3711
        %v3715 = vlaneseq
        %v3716 = vshrl.u32 %v3715, 7
        %v3717 = vsub.s32 0, %v3716
        %v3718 = vrot.slane %v850, %v3717
        %v3720 = vadd.f32 %v3713, %v3718
        %v3721 = vpack.c.bf16 %v3720, %v3720
        %v3722 = vld [vmem:[%s20] sm:$0xf]
        %v3723 = vld [vmem:[%s20 + $0x4] sm:$0xf]
        %v3724 = vld [vmem:[%s20 + $0x8] sm:$0xf]
        %v3725 = vld [vmem:[%s20 + $0xc] sm:$0xf]
        %v3726 = vld [vmem:[%s21] sm:$0x1]
        %v3728 = vlaneseq
        %v3729 = vshrl.u32 %v3728, 7
        %v3730 = vsub.s32 0, %v3729
        %v3731 = vrot.slane %v3726, %v3730
        %v3737 = vunpack.c.l.b16 %v3722
        %v3738 = vunpack.c.l.b16 %v3723
        %v3739 = vunpack.c.l.b16 %v3724
        %v3740 = vunpack.c.l.b16 %v3725
        %v3741 = vpack.c.b16 %v3738, %v3737
        %v3742 = vpack.c.b16 %v3740, %v3739
        %v3746 = vsel %vm954, %v3721, 0
        %3748 = vmatprep.subr.bf16.mxu0 0
        %3749 = vmatpush1.bf16.msra.mxu0 %v3741
        %3750 = vmatprep.subr.bf16.mxu0 0
        %3751 = vmatpush1.bf16.msra.mxu0 %v3742
        %3752 = vmatprep.subr.bf16.mxu0 0
        %3753 = vmatpush1.bf16.msra.mxu0 0
        %3754 = vmatprep.subr.bf16.mxu0 0
        %3755 = vmatpush1.bf16.msra.mxu0 0
        %3756 = vmatprep.subr.bf16.mxu0 0
        %3757 = vmatpush1.bf16.msra.mxu0 0
        %3758 = vmatprep.subr.bf16.mxu0 0
        %3759 = vmatpush1.bf16.msra.mxu0 0
        %3760 = vmatprep.subr.bf16.mxu0 0
        %3761 = vmatpush1.bf16.msra.mxu0 0
        %3762 = vmatprep.subr.bf16.mxu0 0
        %3763 = vmatpush1.bf16.msra.mxu0 0
        %3764 = vmatprep.subr.bf16.mxu0 0
        %3765 = vmatpush1.bf16.msra.mxu0 0
        %3766 = vmatprep.subr.bf16.mxu0 0
        %3767 = vmatpush1.bf16.msra.mxu0 0
        %3768 = vmatprep.subr.bf16.mxu0 0
        %3769 = vmatpush1.bf16.msra.mxu0 0
        %3770 = vmatprep.subr.bf16.mxu0 0
        %3771 = vmatpush1.bf16.msra.mxu0 0
        %3772 = vmatprep.subr.bf16.mxu0 0
        %3773 = vmatpush1.bf16.msra.mxu0 0
        %3774 = vmatprep.subr.bf16.mxu0 0
        %3775 = vmatpush1.bf16.msra.mxu0 0
        %3776 = vmatprep.subr.bf16.mxu0 0
        %3777 = vmatpush1.bf16.msra.mxu0 0
        %3778 = vmatprep.subr.bf16.mxu0 0
        %3779 = vmatpush1.bf16.msra.mxu0 0
        %3780 = vmatprep.mubr.bf16.mxu0 0
        %3781 = vmatmul.mubr.bf16.gmra.mrb[0].mxu0 %v3746
        %v3782 = vpop.f32.mrb[0].mxu0
        %v3783 = vadd.f32 %v3731, %v3782
        %v3784 = vpop.f32.mrb[0].mxu0
        %v3785 = vpop.f32.mrb[0].mxu0
        %v3786 = vpop.f32.mrb[0].mxu0
        %3787 = vdwg.mxu0
        %v3788 = vmax.f32 %v3783, 0.0
        %v3789 = vpack.c.bf16 %v3788, %v3788
        %v3790 = vld [vmem:[%s22] sm:$0xf]
        %v3791 = vld [vmem:[%s22 + $0x4] sm:$0xf]
        %v3792 = vld [vmem:[%s22 + $0x8] sm:$0xf]
        %v3793 = vld [vmem:[%s22 + $0xc] sm:$0xf]
        %v3794 = vld [vmem:[%s22 + $0x10] sm:$0xf]
        %v3795 = vld [vmem:[%s22 + $0x14] sm:$0xf]
        %v3796 = vld [vmem:[%s22 + $0x18] sm:$0xf]
        %v3797 = vld [vmem:[%s22 + $0x1c] sm:$0xf]
        %v3798 = vld [vmem:[%s23] sm:$0x1]
        %v3800 = vlaneseq
        %v3801 = vshrl.u32 %v3800, 7
        %v3802 = vsub.s32 0, %v3801
        %v3803 = vrot.slane %v3798, %v3802
        %v3813 = vunpack.c.l.b16 %v3790
        %v3814 = vunpack.c.l.b16 %v3791
        %v3815 = vunpack.c.l.b16 %v3792
        %v3816 = vunpack.c.l.b16 %v3793
        %v3817 = vunpack.c.l.b16 %v3794
        %v3818 = vunpack.c.l.b16 %v3795
        %v3819 = vunpack.c.l.b16 %v3796
        %v3820 = vunpack.c.l.b16 %v3797
        %v3821 = vpack.c.b16 %v3814, %v3813
        %v3822 = vpack.c.b16 %v3816, %v3815
        %v3823 = vpack.c.b16 %v3818, %v3817
        %v3824 = vpack.c.b16 %v3820, %v3819
        %vm3829 = vcmask 523264
        %v3831 = vsel %vm3829, %v3789, 0
        %3833 = vmatprep.subr.bf16.mxu0 0
        %3834 = vmatpush1.bf16.msra.mxu0 %v3821
        %3835 = vmatprep.subr.bf16.mxu0 0
        %3836 = vmatpush1.bf16.msra.mxu0 %v3822
        %3837 = vmatprep.subr.bf16.mxu0 0
        %3838 = vmatpush1.bf16.msra.mxu0 %v3823
        %3839 = vmatprep.subr.bf16.mxu0 0
        %3840 = vmatpush1.bf16.msra.mxu0 %v3824
        %3841 = vmatprep.subr.bf16.mxu0 0
        %3842 = vmatpush1.bf16.msra.mxu0 0
        %3843 = vmatprep.subr.bf16.mxu0 0
        %3844 = vmatpush1.bf16.msra.mxu0 0
        %3845 = vmatprep.subr.bf16.mxu0 0
        %3846 = vmatpush1.bf16.msra.mxu0 0
        %3847 = vmatprep.subr.bf16.mxu0 0
        %3848 = vmatpush1.bf16.msra.mxu0 0
        %3849 = vmatprep.subr.bf16.mxu0 0
        %3850 = vmatpush1.bf16.msra.mxu0 0
        %3851 = vmatprep.subr.bf16.mxu0 0
        %3852 = vmatpush1.bf16.msra.mxu0 0
        %3853 = vmatprep.subr.bf16.mxu0 0
        %3854 = vmatpush1.bf16.msra.mxu0 0
        %3855 = vmatprep.subr.bf16.mxu0 0
        %3856 = vmatpush1.bf16.msra.mxu0 0
        %3857 = vmatprep.subr.bf16.mxu0 0
        %3858 = vmatpush1.bf16.msra.mxu0 0
        %3859 = vmatprep.subr.bf16.mxu0 0
        %3860 = vmatpush1.bf16.msra.mxu0 0
        %3861 = vmatprep.subr.bf16.mxu0 0
        %3862 = vmatpush1.bf16.msra.mxu0 0
        %3863 = vmatprep.subr.bf16.mxu0 0
        %3864 = vmatpush1.bf16.msra.mxu0 0
        %3865 = vmatprep.mubr.bf16.mxu0 0
        %3866 = vmatmul.mubr.bf16.gmra.mrb[0].mxu0 %v3831
        %v3867 = vpop.f32.mrb[0].mxu0
        %v3868 = vadd.f32 %v3803, %v3867
        %v3869 = vpop.f32.mrb[0].mxu0
        %v3870 = vpop.f32.mrb[0].mxu0
        %v3871 = vpop.f32.mrb[0].mxu0
        %3872 = vdwg.mxu0
        %v3873 = vadd.f32 %v3868, %v3720
        %v3874 = vsel %vm954, %v3873, 0.0
        %3875 = vadd.xlane.f32.xlu0 %v3874
        %v3876 = vpop.xlane.xlu0 %3875
        %v3877 = vmul.f32 %v3876, %v2260
        %v3878 = vmul.f32 %v3873, %v3873
        %v3879 = vsel %vm954, %v3878, 0.0
        %3880 = vadd.xlane.f32.xlu0 %v3879
        %v3881 = vpop.xlane.xlu0 %3880
        %v3882 = vmul.f32 %v3881, %v2260
        %v3883 = vmul.f32 %v3877, %v3877
        %v3884 = vsub.f32 %v3882, %v3883
        %v3885 = vsub.f32 %v3873, %v3877
        %v3886 = vadd.f32 %v3884, 1e-05
        %v3887 = vrsqrt.pop %v3886
        %v3888 = vmul.f32 %v3885, %v3887
        %v3890 = vlaneseq
        %v3891 = vshrl.u32 %v3890, 7
        %v3892 = vsub.s32 0, %v3891
        %v3893 = vrot.slane %v848, %v3892
        %v3895 = vmul.f32 %v3888, %v3893
        %v3897 = vlaneseq
        %v3898 = vshrl.u32 %v3897, 7
        %v3899 = vsub.s32 0, %v3898
        %v3900 = vrot.slane %v851, %v3899
        %v3902 = vadd.f32 %v3895, %v3900
        %s3903 = scalar_lea.vmem %s24, 3
        %v3904 = vld [vmem:[%s3903] sm:$0x1]
        %v3905 = vld [vmem:[%s3903 + $0x1] sm:$0x1]
        %v3906 = vld [vmem:[%s3903 + $0x2] sm:$0x1]
        %s3907 = scalar_lea.vmem %s25, 3
        %v3908 = vld [vmem:[%s3907] sm:$0x1]
        %v3909 = vld [vmem:[%s3907 + $0x1] sm:$0x1]
        %v3910 = vld [vmem:[%s3907 + $0x2] sm:$0x1]
        %v3911 = vpack.c.bf16 %v3902, %v3902
        %s3912 = scalar_lea.vmem %s4, 64
        %v3913 = vld [vmem:[%s3912] sm:$0xf]
        %v3914 = vld [vmem:[%s3912 + $0x4] sm:$0xf]
        %v3915 = vld [vmem:[%s3912 + $0x8] sm:$0xf]
        %v3916 = vld [vmem:[%s3912 + $0xc] sm:$0xf]
        %v3917 = vld [vmem:[%s3912 + $0x10] sm:$0xf]
        %v3918 = vld [vmem:[%s3912 + $0x14] sm:$0xf]
        %v3919 = vld [vmem:[%s3912 + $0x18] sm:$0xf]
        %v3920 = vld [vmem:[%s3912 + $0x1c] sm:$0xf]
        %v3921 = vld [vmem:[%s3912 + $0x20] sm:$0xf]
        %v3922 = vld [vmem:[%s3912 + $0x24] sm:$0xf]
        %v3923 = vld [vmem:[%s3912 + $0x28] sm:$0xf]
        %v3924 = vld [vmem:[%s3912 + $0x2c] sm:$0xf]
        %v3925 = vld [vmem:[%s3912 + $0x30] sm:$0xf]
        %v3926 = vld [vmem:[%s3912 + $0x34] sm:$0xf]
        %v3927 = vld [vmem:[%s3912 + $0x38] sm:$0xf]
        %v3928 = vld [vmem:[%s3912 + $0x3c] sm:$0xf]
        %s3929 = scalar_lea.vmem %s5, 4
        %v3930 = vld [vmem:[%s3929] sm:$0x1]
        %v3931 = vld [vmem:[%s3929 + $0x1] sm:$0x1]
        %v3932 = vld [vmem:[%s3929 + $0x2] sm:$0x1]
        %v3933 = vld [vmem:[%s3929 + $0x3] sm:$0x1]
        %s3934 = scalar_lea.vmem %s6, 64
        %v3935 = vld [vmem:[%s3934] sm:$0xf]
        %v3936 = vld [vmem:[%s3934 + $0x4] sm:$0xf]
        %v3937 = vld [vmem:[%s3934 + $0x8] sm:$0xf]
        %v3938 = vld [vmem:[%s3934 + $0xc] sm:$0xf]
        %v3939 = vld [vmem:[%s3934 + $0x10] sm:$0xf]
        %v3940 = vld [vmem:[%s3934 + $0x14] sm:$0xf]
        %v3941 = vld [vmem:[%s3934 + $0x18] sm:$0xf]
        %v3942 = vld [vmem:[%s3934 + $0x1c] sm:$0xf]
        %v3943 = vld [vmem:[%s3934 + $0x20] sm:$0xf]
        %v3944 = vld [vmem:[%s3934 + $0x24] sm:$0xf]
        %v3945 = vld [vmem:[%s3934 + $0x28] sm:$0xf]
        %v3946 = vld [vmem:[%s3934 + $0x2c] sm:$0xf]
        %v3947 = vld [vmem:[%s3934 + $0x30] sm:$0xf]
        %v3948 = vld [vmem:[%s3934 + $0x34] sm:$0xf]
        %v3949 = vld [vmem:[%s3934 + $0x38] sm:$0xf]
        %v3950 = vld [vmem:[%s3934 + $0x3c] sm:$0xf]
        %s3951 = scalar_lea.vmem %s7, 4
        %v3952 = vld [vmem:[%s3951] sm:$0x1]
        %v3953 = vld [vmem:[%s3951 + $0x1] sm:$0x1]
        %v3954 = vld [vmem:[%s3951 + $0x2] sm:$0x1]
        %v3955 = vld [vmem:[%s3951 + $0x3] sm:$0x1]
        %s3956 = scalar_lea.vmem %s8, 64
        %v3957 = vld [vmem:[%s3956] sm:$0xf]
        %v3958 = vld [vmem:[%s3956 + $0x4] sm:$0xf]
        %v3959 = vld [vmem:[%s3956 + $0x8] sm:$0xf]
        %v3960 = vld [vmem:[%s3956 + $0xc] sm:$0xf]
        %v3961 = vld [vmem:[%s3956 + $0x10] sm:$0xf]
        %v3962 = vld [vmem:[%s3956 + $0x14] sm:$0xf]
        %v3963 = vld [vmem:[%s3956 + $0x18] sm:$0xf]
        %v3964 = vld [vmem:[%s3956 + $0x1c] sm:$0xf]
        %v3965 = vld [vmem:[%s3956 + $0x20] sm:$0xf]
        %v3966 = vld [vmem:[%s3956 + $0x24] sm:$0xf]
        %v3967 = vld [vmem:[%s3956 + $0x28] sm:$0xf]
        %v3968 = vld [vmem:[%s3956 + $0x2c] sm:$0xf]
        %v3969 = vld [vmem:[%s3956 + $0x30] sm:$0xf]
        %v3970 = vld [vmem:[%s3956 + $0x34] sm:$0xf]
        %v3971 = vld [vmem:[%s3956 + $0x38] sm:$0xf]
        %v3972 = vld [vmem:[%s3956 + $0x3c] sm:$0xf]
        %s3973 = scalar_lea.vmem %s9, 4
        %v3974 = vld [vmem:[%s3973] sm:$0x1]
        %v3975 = vld [vmem:[%s3973 + $0x1] sm:$0x1]
        %v3976 = vld [vmem:[%s3973 + $0x2] sm:$0x1]
        %v3977 = vld [vmem:[%s3973 + $0x3] sm:$0x1]
        %s3978 = scalar_lea.vmem %s10, 16
        %v3979 = vld [vmem:[%s3978] sm:$0xf]
        %v3980 = vld [vmem:[%s3978 + $0x4] sm:$0xf]
        %v3981 = vld [vmem:[%s3978 + $0x8] sm:$0xf]
        %v3982 = vld [vmem:[%s3978 + $0xc] sm:$0xf]
        %s3983 = scalar_lea.vmem %s11, 1
        %v3984 = vld [vmem:[%s3983] sm:$0x1]
        %v3989 = vlaneseq
        %v3990 = vshrl.u32 %v3989, 7
        %v3991 = vsub.s32 0, %v3990
        %v3992 = vrot.slane %v3930, %v3991
        %v3993 = vlaneseq
        %v3994 = vshrl.u32 %v3993, 7
        %v3995 = vsub.s32 0, %v3994
        %v3996 = vrot.slane %v3931, %v3995
        %v3997 = vlaneseq
        %v3998 = vshrl.u32 %v3997, 7
        %v3999 = vsub.s32 0, %v3998
        %v4000 = vrot.slane %v3932, %v3999
        %v4001 = vlaneseq
        %v4002 = vshrl.u32 %v4001, 7
        %v4003 = vsub.s32 0, %v4002
        %v4004 = vrot.slane %v3933, %v4003
        %v4013 = vunpack.c.l.b16 %v3913
        %v4014 = vunpack.c.l.b16 %v3914
        %v4015 = vunpack.c.l.b16 %v3915
        %v4016 = vunpack.c.l.b16 %v3916
        %v4017 = vpack.c.b16 %v4014, %v4013
        %v4018 = vpack.c.b16 %v4016, %v4015
        %v4022 = vsel %vm954, %v3911, 0
        %4024 = vmatprep.subr.bf16.mxu0 0
        %4025 = vmatpush1.bf16.msra.mxu0 %v4017
        %4026 = vmatprep.subr.bf16.mxu0 0
        %4027 = vmatpush1.bf16.msra.mxu0 %v4018
        %4028 = vmatprep.subr.bf16.mxu0 0
        %4029 = vmatpush1.bf16.msra.mxu0 0
        %4030 = vmatprep.subr.bf16.mxu0 0
        %4031 = vmatpush1.bf16.msra.mxu0 0
        %4032 = vmatprep.subr.bf16.mxu0 0
        %4033 = vmatpush1.bf16.msra.mxu0 0
        %4034 = vmatprep.subr.bf16.mxu0 0
        %4035 = vmatpush1.bf16.msra.mxu0 0
        %4036 = vmatprep.subr.bf16.mxu0 0
        %4037 = vmatpush1.bf16.msra.mxu0 0
        %4038 = vmatprep.subr.bf16.mxu0 0
        %4039 = vmatpush1.bf16.msra.mxu0 0
        %4040 = vmatprep.subr.bf16.mxu0 0
        %4041 = vmatpush1.bf16.msra.mxu0 0
        %4042 = vmatprep.subr.bf16.mxu0 0
        %4043 = vmatpush1.bf16.msra.mxu0 0
        %4044 = vmatprep.subr.bf16.mxu0 0
        %4045 = vmatpush1.bf16.msra.mxu0 0
        %4046 = vmatprep.subr.bf16.mxu0 0
        %4047 = vmatpush1.bf16.msra.mxu0 0
        %4048 = vmatprep.subr.bf16.mxu0 0
        %4049 = vmatpush1.bf16.msra.mxu0 0
        %4050 = vmatprep.subr.bf16.mxu0 0
        %4051 = vmatpush1.bf16.msra.mxu0 0
        %4052 = vmatprep.subr.bf16.mxu0 0
        %4053 = vmatpush1.bf16.msra.mxu0 0
        %4054 = vmatprep.subr.bf16.mxu0 0
        %4055 = vmatpush1.bf16.msra.mxu0 0
        %4056 = vmatprep.mubr.bf16.mxu0 0
        %4057 = vmatmul.mubr.bf16.gmra.mrb[0].mxu0 %v4022
        %v4058 = vpop.f32.mrb[0].mxu0
        %v4059 = vadd.f32 %v3992, %v4058
        %v4060 = vpop.f32.mrb[0].mxu0
        %v4061 = vpop.f32.mrb[0].mxu0
        %v4062 = vpop.f32.mrb[0].mxu0
        %4063 = vdwg.mxu0
        %v4068 = vunpack.c.l.b16 %v3917
        %v4069 = vunpack.c.l.b16 %v3918
        %v4070 = vunpack.c.l.b16 %v3919
        %v4071 = vunpack.c.l.b16 %v3920
        %v4072 = vpack.c.b16 %v4069, %v4068
        %v4073 = vpack.c.b16 %v4071, %v4070
        %4076 = vmatprep.subr.bf16.mxu0 0
        %4077 = vmatpush1.bf16.msra.mxu0 %v4072
        %4078 = vmatprep.subr.bf16.mxu0 0
        %4079 = vmatpush1.bf16.msra.mxu0 %v4073
        %4080 = vmatprep.subr.bf16.mxu0 0
        %4081 = vmatpush1.bf16.msra.mxu0 0
        %4082 = vmatprep.subr.bf16.mxu0 0
        %4083 = vmatpush1.bf16.msra.mxu0 0
        %4084 = vmatprep.subr.bf16.mxu0 0
        %4085 = vmatpush1.bf16.msra.mxu0 0
        %4086 = vmatprep.subr.bf16.mxu0 0
        %4087 = vmatpush1.bf16.msra.mxu0 0
        %4088 = vmatprep.subr.bf16.mxu0 0
        %4089 = vmatpush1.bf16.msra.mxu0 0
        %4090 = vmatprep.subr.bf16.mxu0 0
        %4091 = vmatpush1.bf16.msra.mxu0 0
        %4092 = vmatprep.subr.bf16.mxu0 0
        %4093 = vmatpush1.bf16.msra.mxu0 0
        %4094 = vmatprep.subr.bf16.mxu0 0
        %4095 = vmatpush1.bf16.msra.mxu0 0
        %4096 = vmatprep.subr.bf16.mxu0 0
        %4097 = vmatpush1.bf16.msra.mxu0 0
        %4098 = vmatprep.subr.bf16.mxu0 0
        %4099 = vmatpush1.bf16.msra.mxu0 0
        %4100 = vmatprep.subr.bf16.mxu0 0
        %4101 = vmatpush1.bf16.msra.mxu0 0
        %4102 = vmatprep.subr.bf16.mxu0 0
        %4103 = vmatpush1.bf16.msra.mxu0 0
        %4104 = vmatprep.subr.bf16.mxu0 0
        %4105 = vmatpush1.bf16.msra.mxu0 0
        %4106 = vmatprep.subr.bf16.mxu0 0
        %4107 = vmatpush1.bf16.msra.mxu0 0
        %4108 = vmatprep.mubr.bf16.mxu0 0
        %4109 = vmatmul.mubr.bf16.gmra.mrb[0].mxu0 %v4022
        %v4110 = vpop.f32.mrb[0].mxu0
        %v4111 = vadd.f32 %v3996, %v4110
        %v4112 = vpop.f32.mrb[0].mxu0
        %v4113 = vpop.f32.mrb[0].mxu0
        %v4114 = vpop.f32.mrb[0].mxu0
        %4115 = vdwg.mxu0
        %v4120 = vunpack.c.l.b16 %v3921
        %v4121 = vunpack.c.l.b16 %v3922
        %v4122 = vunpack.c.l.b16 %v3923
        %v4123 = vunpack.c.l.b16 %v3924
        %v4124 = vpack.c.b16 %v4121, %v4120
        %v4125 = vpack.c.b16 %v4123, %v4122
        %4128 = vmatprep.subr.bf16.mxu0 0
        %4129 = vmatpush1.bf16.msra.mxu0 %v4124
        %4130 = vmatprep.subr.bf16.mxu0 0
        %4131 = vmatpush1.bf16.msra.mxu0 %v4125
        %4132 = vmatprep.subr.bf16.mxu0 0
        %4133 = vmatpush1.bf16.msra.mxu0 0
        %4134 = vmatprep.subr.bf16.mxu0 0
        %4135 = vmatpush1.bf16.msra.mxu0 0
        %4136 = vmatprep.subr.bf16.mxu0 0
        %4137 = vmatpush1.bf16.msra.mxu0 0
        %4138 = vmatprep.subr.bf16.mxu0 0
        %4139 = vmatpush1.bf16.msra.mxu0 0
        %4140 = vmatprep.subr.bf16.mxu0 0
        %4141 = vmatpush1.bf16.msra.mxu0 0
        %4142 = vmatprep.subr.bf16.mxu0 0
        %4143 = vmatpush1.bf16.msra.mxu0 0
        %4144 = vmatprep.subr.bf16.mxu0 0
        %4145 = vmatpush1.bf16.msra.mxu0 0
        %4146 = vmatprep.subr.bf16.mxu0 0
        %4147 = vmatpush1.bf16.msra.mxu0 0
        %4148 = vmatprep.subr.bf16.mxu0 0
        %4149 = vmatpush1.bf16.msra.mxu0 0
        %4150 = vmatprep.subr.bf16.mxu0 0
        %4151 = vmatpush1.bf16.msra.mxu0 0
        %4152 = vmatprep.subr.bf16.mxu0 0
        %4153 = vmatpush1.bf16.msra.mxu0 0
        %4154 = vmatprep.subr.bf16.mxu0 0
        %4155 = vmatpush1.bf16.msra.mxu0 0
        %4156 = vmatprep.subr.bf16.mxu0 0
        %4157 = vmatpush1.bf16.msra.mxu0 0
        %4158 = vmatprep.subr.bf16.mxu0 0
        %4159 = vmatpush1.bf16.msra.mxu0 0
        %4160 = vmatprep.mubr.bf16.mxu0 0
        %4161 = vmatmul.mubr.bf16.gmra.mrb[0].mxu0 %v4022
        %v4162 = vpop.f32.mrb[0].mxu0
        %v4163 = vadd.f32 %v4000, %v4162
        %v4164 = vpop.f32.mrb[0].mxu0
        %v4165 = vpop.f32.mrb[0].mxu0
        %v4166 = vpop.f32.mrb[0].mxu0
        %4167 = vdwg.mxu0
        %v4172 = vunpack.c.l.b16 %v3925
        %v4173 = vunpack.c.l.b16 %v3926
        %v4174 = vunpack.c.l.b16 %v3927
        %v4175 = vunpack.c.l.b16 %v3928
        %v4176 = vpack.c.b16 %v4173, %v4172
        %v4177 = vpack.c.b16 %v4175, %v4174
        %4180 = vmatprep.subr.bf16.mxu0 0
        %4181 = vmatpush1.bf16.msra.mxu0 %v4176
        %4182 = vmatprep.subr.bf16.mxu0 0
        %4183 = vmatpush1.bf16.msra.mxu0 %v4177
        %4184 = vmatprep.subr.bf16.mxu0 0
        %4185 = vmatpush1.bf16.msra.mxu0 0
        %4186 = vmatprep.subr.bf16.mxu0 0
        %4187 = vmatpush1.bf16.msra.mxu0 0
        %4188 = vmatprep.subr.bf16.mxu0 0
        %4189 = vmatpush1.bf16.msra.mxu0 0
        %4190 = vmatprep.subr.bf16.mxu0 0
        %4191 = vmatpush1.bf16.msra.mxu0 0
        %4192 = vmatprep.subr.bf16.mxu0 0
        %4193 = vmatpush1.bf16.msra.mxu0 0
        %4194 = vmatprep.subr.bf16.mxu0 0
        %4195 = vmatpush1.bf16.msra.mxu0 0
        %4196 = vmatprep.subr.bf16.mxu0 0
        %4197 = vmatpush1.bf16.msra.mxu0 0
        %4198 = vmatprep.subr.bf16.mxu0 0
        %4199 = vmatpush1.bf16.msra.mxu0 0
        %4200 = vmatprep.subr.bf16.mxu0 0
        %4201 = vmatpush1.bf16.msra.mxu0 0
        %4202 = vmatprep.subr.bf16.mxu0 0
        %4203 = vmatpush1.bf16.msra.mxu0 0
        %4204 = vmatprep.subr.bf16.mxu0 0
        %4205 = vmatpush1.bf16.msra.mxu0 0
        %4206 = vmatprep.subr.bf16.mxu0 0
        %4207 = vmatpush1.bf16.msra.mxu0 0
        %4208 = vmatprep.subr.bf16.mxu0 0
        %4209 = vmatpush1.bf16.msra.mxu0 0
        %4210 = vmatprep.subr.bf16.mxu0 0
        %4211 = vmatpush1.bf16.msra.mxu0 0
        %4212 = vmatprep.mubr.bf16.mxu0 0
        %4213 = vmatmul.mubr.bf16.gmra.mrb[0].mxu0 %v4022
        %v4214 = vpop.f32.mrb[0].mxu0
        %v4215 = vadd.f32 %v4004, %v4214
        %v4216 = vpop.f32.mrb[0].mxu0
        %v4217 = vpop.f32.mrb[0].mxu0
        %v4218 = vpop.f32.mrb[0].mxu0
        %4219 = vdwg.mxu0
        %v4224 = vlaneseq
        %v4225 = vshrl.u32 %v4224, 7
        %v4226 = vsub.s32 0, %v4225
        %v4227 = vrot.slane %v3952, %v4226
        %v4228 = vlaneseq
        %v4229 = vshrl.u32 %v4228, 7
        %v4230 = vsub.s32 0, %v4229
        %v4231 = vrot.slane %v3953, %v4230
        %v4232 = vlaneseq
        %v4233 = vshrl.u32 %v4232, 7
        %v4234 = vsub.s32 0, %v4233
        %v4235 = vrot.slane %v3954, %v4234
        %v4236 = vlaneseq
        %v4237 = vshrl.u32 %v4236, 7
        %v4238 = vsub.s32 0, %v4237
        %v4239 = vrot.slane %v3955, %v4238
        %v4248 = vunpack.c.l.b16 %v3935
        %v4249 = vunpack.c.l.b16 %v3936
        %v4250 = vunpack.c.l.b16 %v3937
        %v4251 = vunpack.c.l.b16 %v3938
        %v4252 = vpack.c.b16 %v4249, %v4248
        %v4253 = vpack.c.b16 %v4251, %v4250
        %4256 = vmatprep.subr.bf16.mxu0 0
        %4257 = vmatpush1.bf16.msra.mxu0 %v4252
        %4258 = vmatprep.subr.bf16.mxu0 0
        %4259 = vmatpush1.bf16.msra.mxu0 %v4253
        %4260 = vmatprep.subr.bf16.mxu0 0
        %4261 = vmatpush1.bf16.msra.mxu0 0
        %4262 = vmatprep.subr.bf16.mxu0 0
        %4263 = vmatpush1.bf16.msra.mxu0 0
        %4264 = vmatprep.subr.bf16.mxu0 0
        %4265 = vmatpush1.bf16.msra.mxu0 0
        %4266 = vmatprep.subr.bf16.mxu0 0
        %4267 = vmatpush1.bf16.msra.mxu0 0
        %4268 = vmatprep.subr.bf16.mxu0 0
        %4269 = vmatpush1.bf16.msra.mxu0 0
        %4270 = vmatprep.subr.bf16.mxu0 0
        %4271 = vmatpush1.bf16.msra.mxu0 0
        %4272 = vmatprep.subr.bf16.mxu0 0
        %4273 = vmatpush1.bf16.msra.mxu0 0
        %4274 = vmatprep.subr.bf16.mxu0 0
        %4275 = vmatpush1.bf16.msra.mxu0 0
        %4276 = vmatprep.subr.bf16.mxu0 0
        %4277 = vmatpush1.bf16.msra.mxu0 0
        %4278 = vmatprep.subr.bf16.mxu0 0
        %4279 = vmatpush1.bf16.msra.mxu0 0
        %4280 = vmatprep.subr.bf16.mxu0 0
        %4281 = vmatpush1.bf16.msra.mxu0 0
        %4282 = vmatprep.subr.bf16.mxu0 0
        %4283 = vmatpush1.bf16.msra.mxu0 0
        %4284 = vmatprep.subr.bf16.mxu0 0
        %4285 = vmatpush1.bf16.msra.mxu0 0
        %4286 = vmatprep.subr.bf16.mxu0 0
        %4287 = vmatpush1.bf16.msra.mxu0 0
        %4288 = vmatprep.mubr.bf16.mxu0 0
        %4289 = vmatmul.mubr.bf16.gmra.mrb[0].mxu0 %v4022
        %v4290 = vpop.f32.mrb[0].mxu0
        %v4291 = vadd.f32 %v4227, %v4290
        %v4292 = vpop.f32.mrb[0].mxu0
        %v4293 = vpop.f32.mrb[0].mxu0
        %v4294 = vpop.f32.mrb[0].mxu0
        %4295 = vdwg.mxu0
        %v4300 = vunpack.c.l.b16 %v3939
        %v4301 = vunpack.c.l.b16 %v3940
        %v4302 = vunpack.c.l.b16 %v3941
        %v4303 = vunpack.c.l.b16 %v3942
        %v4304 = vpack.c.b16 %v4301, %v4300
        %v4305 = vpack.c.b16 %v4303, %v4302
        %4308 = vmatprep.subr.bf16.mxu0 0
        %4309 = vmatpush1.bf16.msra.mxu0 %v4304
        %4310 = vmatprep.subr.bf16.mxu0 0
        %4311 = vmatpush1.bf16.msra.mxu0 %v4305
        %4312 = vmatprep.subr.bf16.mxu0 0
        %4313 = vmatpush1.bf16.msra.mxu0 0
        %4314 = vmatprep.subr.bf16.mxu0 0
        %4315 = vmatpush1.bf16.msra.mxu0 0
        %4316 = vmatprep.subr.bf16.mxu0 0
        %4317 = vmatpush1.bf16.msra.mxu0 0
        %4318 = vmatprep.subr.bf16.mxu0 0
        %4319 = vmatpush1.bf16.msra.mxu0 0
        %4320 = vmatprep.subr.bf16.mxu0 0
        %4321 = vmatpush1.bf16.msra.mxu0 0
        %4322 = vmatprep.subr.bf16.mxu0 0
        %4323 = vmatpush1.bf16.msra.mxu0 0
        %4324 = vmatprep.subr.bf16.mxu0 0
        %4325 = vmatpush1.bf16.msra.mxu0 0
        %4326 = vmatprep.subr.bf16.mxu0 0
        %4327 = vmatpush1.bf16.msra.mxu0 0
        %4328 = vmatprep.subr.bf16.mxu0 0
        %4329 = vmatpush1.bf16.msra.mxu0 0
        %4330 = vmatprep.subr.bf16.mxu0 0
        %4331 = vmatpush1.bf16.msra.mxu0 0
        %4332 = vmatprep.subr.bf16.mxu0 0
        %4333 = vmatpush1.bf16.msra.mxu0 0
        %4334 = vmatprep.subr.bf16.mxu0 0
        %4335 = vmatpush1.bf16.msra.mxu0 0
        %4336 = vmatprep.subr.bf16.mxu0 0
        %4337 = vmatpush1.bf16.msra.mxu0 0
        %4338 = vmatprep.subr.bf16.mxu0 0
        %4339 = vmatpush1.bf16.msra.mxu0 0
        %4340 = vmatprep.mubr.bf16.mxu0 0
        %4341 = vmatmul.mubr.bf16.gmra.mrb[0].mxu0 %v4022
        %v4342 = vpop.f32.mrb[0].mxu0
        %v4343 = vadd.f32 %v4231, %v4342
        %v4344 = vpop.f32.mrb[0].mxu0
        %v4345 = vpop.f32.mrb[0].mxu0
        %v4346 = vpop.f32.mrb[0].mxu0
        %4347 = vdwg.mxu0
        %v4352 = vunpack.c.l.b16 %v3943
        %v4353 = vunpack.c.l.b16 %v3944
        %v4354 = vunpack.c.l.b16 %v3945
        %v4355 = vunpack.c.l.b16 %v3946
        %v4356 = vpack.c.b16 %v4353, %v4352
        %v4357 = vpack.c.b16 %v4355, %v4354
        %4360 = vmatprep.subr.bf16.mxu0 0
        %4361 = vmatpush1.bf16.msra.mxu0 %v4356
        %4362 = vmatprep.subr.bf16.mxu0 0
        %4363 = vmatpush1.bf16.msra.mxu0 %v4357
        %4364 = vmatprep.subr.bf16.mxu0 0
        %4365 = vmatpush1.bf16.msra.mxu0 0
        %4366 = vmatprep.subr.bf16.mxu0 0
        %4367 = vmatpush1.bf16.msra.mxu0 0
        %4368 = vmatprep.subr.bf16.mxu0 0
        %4369 = vmatpush1.bf16.msra.mxu0 0
        %4370 = vmatprep.subr.bf16.mxu0 0
        %4371 = vmatpush1.bf16.msra.mxu0 0
        %4372 = vmatprep.subr.bf16.mxu0 0
        %4373 = vmatpush1.bf16.msra.mxu0 0
        %4374 = vmatprep.subr.bf16.mxu0 0
        %4375 = vmatpush1.bf16.msra.mxu0 0
        %4376 = vmatprep.subr.bf16.mxu0 0
        %4377 = vmatpush1.bf16.msra.mxu0 0
        %4378 = vmatprep.subr.bf16.mxu0 0
        %4379 = vmatpush1.bf16.msra.mxu0 0
        %4380 = vmatprep.subr.bf16.mxu0 0
        %4381 = vmatpush1.bf16.msra.mxu0 0
        %4382 = vmatprep.subr.bf16.mxu0 0
        %4383 = vmatpush1.bf16.msra.mxu0 0
        %4384 = vmatprep.subr.bf16.mxu0 0
        %4385 = vmatpush1.bf16.msra.mxu0 0
        %4386 = vmatprep.subr.bf16.mxu0 0
        %4387 = vmatpush1.bf16.msra.mxu0 0
        %4388 = vmatprep.subr.bf16.mxu0 0
        %4389 = vmatpush1.bf16.msra.mxu0 0
        %4390 = vmatprep.subr.bf16.mxu0 0
        %4391 = vmatpush1.bf16.msra.mxu0 0
        %4392 = vmatprep.mubr.bf16.mxu0 0
        %4393 = vmatmul.mubr.bf16.gmra.mrb[0].mxu0 %v4022
        %v4394 = vpop.f32.mrb[0].mxu0
        %v4395 = vadd.f32 %v4235, %v4394
        %v4396 = vpop.f32.mrb[0].mxu0
        %v4397 = vpop.f32.mrb[0].mxu0
        %v4398 = vpop.f32.mrb[0].mxu0
        %4399 = vdwg.mxu0
        %v4404 = vunpack.c.l.b16 %v3947
        %v4405 = vunpack.c.l.b16 %v3948
        %v4406 = vunpack.c.l.b16 %v3949
        %v4407 = vunpack.c.l.b16 %v3950
        %v4408 = vpack.c.b16 %v4405, %v4404
        %v4409 = vpack.c.b16 %v4407, %v4406
        %4412 = vmatprep.subr.bf16.mxu0 0
        %4413 = vmatpush1.bf16.msra.mxu0 %v4408
        %4414 = vmatprep.subr.bf16.mxu0 0
        %4415 = vmatpush1.bf16.msra.mxu0 %v4409
        %4416 = vmatprep.subr.bf16.mxu0 0
        %4417 = vmatpush1.bf16.msra.mxu0 0
        %4418 = vmatprep.subr.bf16.mxu0 0
        %4419 = vmatpush1.bf16.msra.mxu0 0
        %4420 = vmatprep.subr.bf16.mxu0 0
        %4421 = vmatpush1.bf16.msra.mxu0 0
        %4422 = vmatprep.subr.bf16.mxu0 0
        %4423 = vmatpush1.bf16.msra.mxu0 0
        %4424 = vmatprep.subr.bf16.mxu0 0
        %4425 = vmatpush1.bf16.msra.mxu0 0
        %4426 = vmatprep.subr.bf16.mxu0 0
        %4427 = vmatpush1.bf16.msra.mxu0 0
        %4428 = vmatprep.subr.bf16.mxu0 0
        %4429 = vmatpush1.bf16.msra.mxu0 0
        %4430 = vmatprep.subr.bf16.mxu0 0
        %4431 = vmatpush1.bf16.msra.mxu0 0
        %4432 = vmatprep.subr.bf16.mxu0 0
        %4433 = vmatpush1.bf16.msra.mxu0 0
        %4434 = vmatprep.subr.bf16.mxu0 0
        %4435 = vmatpush1.bf16.msra.mxu0 0
        %4436 = vmatprep.subr.bf16.mxu0 0
        %4437 = vmatpush1.bf16.msra.mxu0 0
        %4438 = vmatprep.subr.bf16.mxu0 0
        %4439 = vmatpush1.bf16.msra.mxu0 0
        %4440 = vmatprep.subr.bf16.mxu0 0
        %4441 = vmatpush1.bf16.msra.mxu0 0
        %4442 = vmatprep.subr.bf16.mxu0 0
        %4443 = vmatpush1.bf16.msra.mxu0 0
        %4444 = vmatprep.mubr.bf16.mxu0 0
        %4445 = vmatmul.mubr.bf16.gmra.mrb[0].mxu0 %v4022
        %v4446 = vpop.f32.mrb[0].mxu0
        %v4447 = vadd.f32 %v4239, %v4446
        %v4448 = vpop.f32.mrb[0].mxu0
        %v4449 = vpop.f32.mrb[0].mxu0
        %v4450 = vpop.f32.mrb[0].mxu0
        %4451 = vdwg.mxu0
        %v4456 = vlaneseq
        %v4457 = vshrl.u32 %v4456, 7
        %v4458 = vsub.s32 0, %v4457
        %v4459 = vrot.slane %v3974, %v4458
        %v4460 = vlaneseq
        %v4461 = vshrl.u32 %v4460, 7
        %v4462 = vsub.s32 0, %v4461
        %v4463 = vrot.slane %v3975, %v4462
        %v4464 = vlaneseq
        %v4465 = vshrl.u32 %v4464, 7
        %v4466 = vsub.s32 0, %v4465
        %v4467 = vrot.slane %v3976, %v4466
        %v4468 = vlaneseq
        %v4469 = vshrl.u32 %v4468, 7
        %v4470 = vsub.s32 0, %v4469
        %v4471 = vrot.slane %v3977, %v4470
        %v4480 = vunpack.c.l.b16 %v3957
        %v4481 = vunpack.c.l.b16 %v3958
        %v4482 = vunpack.c.l.b16 %v3959
        %v4483 = vunpack.c.l.b16 %v3960
        %v4484 = vpack.c.b16 %v4481, %v4480
        %v4485 = vpack.c.b16 %v4483, %v4482
        %4488 = vmatprep.subr.bf16.mxu0 0
        %4489 = vmatpush1.bf16.msra.mxu0 %v4484
        %4490 = vmatprep.subr.bf16.mxu0 0
        %4491 = vmatpush1.bf16.msra.mxu0 %v4485
        %4492 = vmatprep.subr.bf16.mxu0 0
        %4493 = vmatpush1.bf16.msra.mxu0 0
        %4494 = vmatprep.subr.bf16.mxu0 0
        %4495 = vmatpush1.bf16.msra.mxu0 0
        %4496 = vmatprep.subr.bf16.mxu0 0
        %4497 = vmatpush1.bf16.msra.mxu0 0
        %4498 = vmatprep.subr.bf16.mxu0 0
        %4499 = vmatpush1.bf16.msra.mxu0 0
        %4500 = vmatprep.subr.bf16.mxu0 0
        %4501 = vmatpush1.bf16.msra.mxu0 0
        %4502 = vmatprep.subr.bf16.mxu0 0
        %4503 = vmatpush1.bf16.msra.mxu0 0
        %4504 = vmatprep.subr.bf16.mxu0 0
        %4505 = vmatpush1.bf16.msra.mxu0 0
        %4506 = vmatprep.subr.bf16.mxu0 0
        %4507 = vmatpush1.bf16.msra.mxu0 0
        %4508 = vmatprep.subr.bf16.mxu0 0
        %4509 = vmatpush1.bf16.msra.mxu0 0
        %4510 = vmatprep.subr.bf16.mxu0 0
        %4511 = vmatpush1.bf16.msra.mxu0 0
        %4512 = vmatprep.subr.bf16.mxu0 0
        %4513 = vmatpush1.bf16.msra.mxu0 0
        %4514 = vmatprep.subr.bf16.mxu0 0
        %4515 = vmatpush1.bf16.msra.mxu0 0
        %4516 = vmatprep.subr.bf16.mxu0 0
        %4517 = vmatpush1.bf16.msra.mxu0 0
        %4518 = vmatprep.subr.bf16.mxu0 0
        %4519 = vmatpush1.bf16.msra.mxu0 0
        %4520 = vmatprep.mubr.bf16.mxu0 0
        %4521 = vmatmul.mubr.bf16.gmra.mrb[0].mxu0 %v4022
        %v4522 = vpop.f32.mrb[0].mxu0
        %v4523 = vadd.f32 %v4459, %v4522
        %v4524 = vpop.f32.mrb[0].mxu0
        %v4525 = vpop.f32.mrb[0].mxu0
        %v4526 = vpop.f32.mrb[0].mxu0
        %4527 = vdwg.mxu0
        %v4532 = vunpack.c.l.b16 %v3961
        %v4533 = vunpack.c.l.b16 %v3962
        %v4534 = vunpack.c.l.b16 %v3963
        %v4535 = vunpack.c.l.b16 %v3964
        %v4536 = vpack.c.b16 %v4533, %v4532
        %v4537 = vpack.c.b16 %v4535, %v4534
        %4540 = vmatprep.subr.bf16.mxu0 0
        %4541 = vmatpush1.bf16.msra.mxu0 %v4536
        %4542 = vmatprep.subr.bf16.mxu0 0
        %4543 = vmatpush1.bf16.msra.mxu0 %v4537
        %4544 = vmatprep.subr.bf16.mxu0 0
        %4545 = vmatpush1.bf16.msra.mxu0 0
        %4546 = vmatprep.subr.bf16.mxu0 0
        %4547 = vmatpush1.bf16.msra.mxu0 0
        %4548 = vmatprep.subr.bf16.mxu0 0
        %4549 = vmatpush1.bf16.msra.mxu0 0
        %4550 = vmatprep.subr.bf16.mxu0 0
        %4551 = vmatpush1.bf16.msra.mxu0 0
        %4552 = vmatprep.subr.bf16.mxu0 0
        %4553 = vmatpush1.bf16.msra.mxu0 0
        %4554 = vmatprep.subr.bf16.mxu0 0
        %4555 = vmatpush1.bf16.msra.mxu0 0
        %4556 = vmatprep.subr.bf16.mxu0 0
        %4557 = vmatpush1.bf16.msra.mxu0 0
        %4558 = vmatprep.subr.bf16.mxu0 0
        %4559 = vmatpush1.bf16.msra.mxu0 0
        %4560 = vmatprep.subr.bf16.mxu0 0
        %4561 = vmatpush1.bf16.msra.mxu0 0
        %4562 = vmatprep.subr.bf16.mxu0 0
        %4563 = vmatpush1.bf16.msra.mxu0 0
        %4564 = vmatprep.subr.bf16.mxu0 0
        %4565 = vmatpush1.bf16.msra.mxu0 0
        %4566 = vmatprep.subr.bf16.mxu0 0
        %4567 = vmatpush1.bf16.msra.mxu0 0
        %4568 = vmatprep.subr.bf16.mxu0 0
        %4569 = vmatpush1.bf16.msra.mxu0 0
        %4570 = vmatprep.subr.bf16.mxu0 0
        %4571 = vmatpush1.bf16.msra.mxu0 0
        %4572 = vmatprep.mubr.bf16.mxu0 0
        %4573 = vmatmul.mubr.bf16.gmra.mrb[0].mxu0 %v4022
        %v4574 = vpop.f32.mrb[0].mxu0
        %v4575 = vadd.f32 %v4463, %v4574
        %v4576 = vpop.f32.mrb[0].mxu0
        %v4577 = vpop.f32.mrb[0].mxu0
        %v4578 = vpop.f32.mrb[0].mxu0
        %4579 = vdwg.mxu0
        %v4584 = vunpack.c.l.b16 %v3965
        %v4585 = vunpack.c.l.b16 %v3966
        %v4586 = vunpack.c.l.b16 %v3967
        %v4587 = vunpack.c.l.b16 %v3968
        %v4588 = vpack.c.b16 %v4585, %v4584
        %v4589 = vpack.c.b16 %v4587, %v4586
        %4592 = vmatprep.subr.bf16.mxu0 0
        %4593 = vmatpush1.bf16.msra.mxu0 %v4588
        %4594 = vmatprep.subr.bf16.mxu0 0
        %4595 = vmatpush1.bf16.msra.mxu0 %v4589
        %4596 = vmatprep.subr.bf16.mxu0 0
        %4597 = vmatpush1.bf16.msra.mxu0 0
        %4598 = vmatprep.subr.bf16.mxu0 0
        %4599 = vmatpush1.bf16.msra.mxu0 0
        %4600 = vmatprep.subr.bf16.mxu0 0
        %4601 = vmatpush1.bf16.msra.mxu0 0
        %4602 = vmatprep.subr.bf16.mxu0 0
        %4603 = vmatpush1.bf16.msra.mxu0 0
        %4604 = vmatprep.subr.bf16.mxu0 0
        %4605 = vmatpush1.bf16.msra.mxu0 0
        %4606 = vmatprep.subr.bf16.mxu0 0
        %4607 = vmatpush1.bf16.msra.mxu0 0
        %4608 = vmatprep.subr.bf16.mxu0 0
        %4609 = vmatpush1.bf16.msra.mxu0 0
        %4610 = vmatprep.subr.bf16.mxu0 0
        %4611 = vmatpush1.bf16.msra.mxu0 0
        %4612 = vmatprep.subr.bf16.mxu0 0
        %4613 = vmatpush1.bf16.msra.mxu0 0
        %4614 = vmatprep.subr.bf16.mxu0 0
        %4615 = vmatpush1.bf16.msra.mxu0 0
        %4616 = vmatprep.subr.bf16.mxu0 0
        %4617 = vmatpush1.bf16.msra.mxu0 0
        %4618 = vmatprep.subr.bf16.mxu0 0
        %4619 = vmatpush1.bf16.msra.mxu0 0
        %4620 = vmatprep.subr.bf16.mxu0 0
        %4621 = vmatpush1.bf16.msra.mxu0 0
        %4622 = vmatprep.subr.bf16.mxu0 0
        %4623 = vmatpush1.bf16.msra.mxu0 0
        %4624 = vmatprep.mubr.bf16.mxu0 0
        %4625 = vmatmul.mubr.bf16.gmra.mrb[0].mxu0 %v4022
        %v4626 = vpop.f32.mrb[0].mxu0
        %v4627 = vadd.f32 %v4467, %v4626
        %v4628 = vpop.f32.mrb[0].mxu0
        %v4629 = vpop.f32.mrb[0].mxu0
        %v4630 = vpop.f32.mrb[0].mxu0
        %4631 = vdwg.mxu0
        %v4636 = vunpack.c.l.b16 %v3969
        %v4637 = vunpack.c.l.b16 %v3970
        %v4638 = vunpack.c.l.b16 %v3971
        %v4639 = vunpack.c.l.b16 %v3972
        %v4640 = vpack.c.b16 %v4637, %v4636
        %v4641 = vpack.c.b16 %v4639, %v4638
        %4644 = vmatprep.subr.bf16.mxu0 0
        %4645 = vmatpush1.bf16.msra.mxu0 %v4640
        %4646 = vmatprep.subr.bf16.mxu0 0
        %4647 = vmatpush1.bf16.msra.mxu0 %v4641
        %4648 = vmatprep.subr.bf16.mxu0 0
        %4649 = vmatpush1.bf16.msra.mxu0 0
        %4650 = vmatprep.subr.bf16.mxu0 0
        %4651 = vmatpush1.bf16.msra.mxu0 0
        %4652 = vmatprep.subr.bf16.mxu0 0
        %4653 = vmatpush1.bf16.msra.mxu0 0
        %4654 = vmatprep.subr.bf16.mxu0 0
        %4655 = vmatpush1.bf16.msra.mxu0 0
        %4656 = vmatprep.subr.bf16.mxu0 0
        %4657 = vmatpush1.bf16.msra.mxu0 0
        %4658 = vmatprep.subr.bf16.mxu0 0
        %4659 = vmatpush1.bf16.msra.mxu0 0
        %4660 = vmatprep.subr.bf16.mxu0 0
        %4661 = vmatpush1.bf16.msra.mxu0 0
        %4662 = vmatprep.subr.bf16.mxu0 0
        %4663 = vmatpush1.bf16.msra.mxu0 0
        %4664 = vmatprep.subr.bf16.mxu0 0
        %4665 = vmatpush1.bf16.msra.mxu0 0
        %4666 = vmatprep.subr.bf16.mxu0 0
        %4667 = vmatpush1.bf16.msra.mxu0 0
        %4668 = vmatprep.subr.bf16.mxu0 0
        %4669 = vmatpush1.bf16.msra.mxu0 0
        %4670 = vmatprep.subr.bf16.mxu0 0
        %4671 = vmatpush1.bf16.msra.mxu0 0
        %4672 = vmatprep.subr.bf16.mxu0 0
        %4673 = vmatpush1.bf16.msra.mxu0 0
        %4674 = vmatprep.subr.bf16.mxu0 0
        %4675 = vmatpush1.bf16.msra.mxu0 0
        %4676 = vmatprep.mubr.bf16.mxu0 0
        %4677 = vmatmul.mubr.bf16.gmra.mrb[0].mxu0 %v4022
        %v4678 = vpop.f32.mrb[0].mxu0
        %v4679 = vadd.f32 %v4471, %v4678
        %v4680 = vpop.f32.mrb[0].mxu0
        %v4681 = vpop.f32.mrb[0].mxu0
        %v4682 = vpop.f32.mrb[0].mxu0
        %4683 = vdwg.mxu0
        %v4684 = vpack.c.bf16 %v4059, %v4059
        %v4685 = vpack.c.bf16 %v4111, %v4111
        %v4686 = vpack.c.bf16 %v4163, %v4163
        %v4687 = vpack.c.bf16 %v4215, %v4215
        %v4688 = vpack.c.bf16 %v4291, %v4291
        %v4689 = vpack.c.bf16 %v4343, %v4343
        %v4690 = vpack.c.bf16 %v4395, %v4395
        %v4691 = vpack.c.bf16 %v4447, %v4447
        %v4693 = vsel %vm1626, %v4684, 0
        %v4696 = vsel %vm1626, %v4688, 0
        %4698 = vmatprep.subr.bf16.mxu0 0
        %4699 = vmatpush1.bf16.xpose.msra.mxu0 %v4696
        %4700 = vmatprep.subr.bf16.mxu0 0
        %4701 = vmatpush1.bf16.xpose.msra.mxu0 0
        %4702 = vmatprep.subr.bf16.mxu0 0
        %4703 = vmatpush1.bf16.xpose.msra.mxu0 0
        %4704 = vmatprep.subr.bf16.mxu0 0
        %4705 = vmatpush1.bf16.xpose.msra.mxu0 0
        %4706 = vmatprep.subr.bf16.mxu0 0
        %4707 = vmatpush1.bf16.xpose.msra.mxu0 0
        %4708 = vmatprep.subr.bf16.mxu0 0
        %4709 = vmatpush1.bf16.xpose.msra.mxu0 0
        %4710 = vmatprep.subr.bf16.mxu0 0
        %4711 = vmatpush1.bf16.xpose.msra.mxu0 0
        %4712 = vmatprep.subr.bf16.mxu0 0
        %4713 = vmatpush1.bf16.xpose.msra.mxu0 0
        %4714 = vmatprep.subr.bf16.mxu0 0
        %4715 = vmatpush1.bf16.xpose.msra.mxu0 0
        %4716 = vmatprep.subr.bf16.mxu0 0
        %4717 = vmatpush1.bf16.xpose.msra.mxu0 0
        %4718 = vmatprep.subr.bf16.mxu0 0
        %4719 = vmatpush1.bf16.xpose.msra.mxu0 0
        %4720 = vmatprep.subr.bf16.mxu0 0
        %4721 = vmatpush1.bf16.xpose.msra.mxu0 0
        %4722 = vmatprep.subr.bf16.mxu0 0
        %4723 = vmatpush1.bf16.xpose.msra.mxu0 0
        %4724 = vmatprep.subr.bf16.mxu0 0
        %4725 = vmatpush1.bf16.xpose.msra.mxu0 0
        %4726 = vmatprep.subr.bf16.mxu0 0
        %4727 = vmatpush1.bf16.xpose.msra.mxu0 0
        %4728 = vmatprep.subr.bf16.mxu0 0
        %4729 = vmatpush1.bf16.xpose.msra.mxu0 0
        %4730 = vmatprep.mubr.bf16.mxu0 0
        %4731 = vmatmul.mubr.bf16.gmra.mrb[0].mxu0 %v4693
        %v4732 = vpop.f32.mrb[0].mxu0
        %v4733 = vadd.f32 0.0, %v4732
        %v4734 = vpop.f32.mrb[0].mxu0
        %v4735 = vpop.f32.mrb[0].mxu0
        %v4736 = vpop.f32.mrb[0].mxu0
        %4737 = vdwg.mxu0
        %v4739 = vsel %vm1626, %v4685, 0
        %v4742 = vsel %vm1626, %v4689, 0
        %4744 = vmatprep.subr.bf16.mxu0 0
        %4745 = vmatpush1.bf16.xpose.msra.mxu0 %v4742
        %4746 = vmatprep.subr.bf16.mxu0 0
        %4747 = vmatpush1.bf16.xpose.msra.mxu0 0
        %4748 = vmatprep.subr.bf16.mxu0 0
        %4749 = vmatpush1.bf16.xpose.msra.mxu0 0
        %4750 = vmatprep.subr.bf16.mxu0 0
        %4751 = vmatpush1.bf16.xpose.msra.mxu0 0
        %4752 = vmatprep.subr.bf16.mxu0 0
        %4753 = vmatpush1.bf16.xpose.msra.mxu0 0
        %4754 = vmatprep.subr.bf16.mxu0 0
        %4755 = vmatpush1.bf16.xpose.msra.mxu0 0
        %4756 = vmatprep.subr.bf16.mxu0 0
        %4757 = vmatpush1.bf16.xpose.msra.mxu0 0
        %4758 = vmatprep.subr.bf16.mxu0 0
        %4759 = vmatpush1.bf16.xpose.msra.mxu0 0
        %4760 = vmatprep.subr.bf16.mxu0 0
        %4761 = vmatpush1.bf16.xpose.msra.mxu0 0
        %4762 = vmatprep.subr.bf16.mxu0 0
        %4763 = vmatpush1.bf16.xpose.msra.mxu0 0
        %4764 = vmatprep.subr.bf16.mxu0 0
        %4765 = vmatpush1.bf16.xpose.msra.mxu0 0
        %4766 = vmatprep.subr.bf16.mxu0 0
        %4767 = vmatpush1.bf16.xpose.msra.mxu0 0
        %4768 = vmatprep.subr.bf16.mxu0 0
        %4769 = vmatpush1.bf16.xpose.msra.mxu0 0
        %4770 = vmatprep.subr.bf16.mxu0 0
        %4771 = vmatpush1.bf16.xpose.msra.mxu0 0
        %4772 = vmatprep.subr.bf16.mxu0 0
        %4773 = vmatpush1.bf16.xpose.msra.mxu0 0
        %4774 = vmatprep.subr.bf16.mxu0 0
        %4775 = vmatpush1.bf16.xpose.msra.mxu0 0
        %4776 = vmatprep.mubr.bf16.mxu0 0
        %4777 = vmatmul.mubr.bf16.gmra.mrb[0].mxu0 %v4739
        %v4778 = vpop.f32.mrb[0].mxu0
        %v4779 = vadd.f32 0.0, %v4778
        %v4780 = vpop.f32.mrb[0].mxu0
        %v4781 = vpop.f32.mrb[0].mxu0
        %v4782 = vpop.f32.mrb[0].mxu0
        %4783 = vdwg.mxu0
        %v4785 = vsel %vm1626, %v4686, 0
        %v4788 = vsel %vm1626, %v4690, 0
        %4790 = vmatprep.subr.bf16.mxu0 0
        %4791 = vmatpush1.bf16.xpose.msra.mxu0 %v4788
        %4792 = vmatprep.subr.bf16.mxu0 0
        %4793 = vmatpush1.bf16.xpose.msra.mxu0 0
        %4794 = vmatprep.subr.bf16.mxu0 0
        %4795 = vmatpush1.bf16.xpose.msra.mxu0 0
        %4796 = vmatprep.subr.bf16.mxu0 0
        %4797 = vmatpush1.bf16.xpose.msra.mxu0 0
        %4798 = vmatprep.subr.bf16.mxu0 0
        %4799 = vmatpush1.bf16.xpose.msra.mxu0 0
        %4800 = vmatprep.subr.bf16.mxu0 0
        %4801 = vmatpush1.bf16.xpose.msra.mxu0 0
        %4802 = vmatprep.subr.bf16.mxu0 0
        %4803 = vmatpush1.bf16.xpose.msra.mxu0 0
        %4804 = vmatprep.subr.bf16.mxu0 0
        %4805 = vmatpush1.bf16.xpose.msra.mxu0 0
        %4806 = vmatprep.subr.bf16.mxu0 0
        %4807 = vmatpush1.bf16.xpose.msra.mxu0 0
        %4808 = vmatprep.subr.bf16.mxu0 0
        %4809 = vmatpush1.bf16.xpose.msra.mxu0 0
        %4810 = vmatprep.subr.bf16.mxu0 0
        %4811 = vmatpush1.bf16.xpose.msra.mxu0 0
        %4812 = vmatprep.subr.bf16.mxu0 0
        %4813 = vmatpush1.bf16.xpose.msra.mxu0 0
        %4814 = vmatprep.subr.bf16.mxu0 0
        %4815 = vmatpush1.bf16.xpose.msra.mxu0 0
        %4816 = vmatprep.subr.bf16.mxu0 0
        %4817 = vmatpush1.bf16.xpose.msra.mxu0 0
        %4818 = vmatprep.subr.bf16.mxu0 0
        %4819 = vmatpush1.bf16.xpose.msra.mxu0 0
        %4820 = vmatprep.subr.bf16.mxu0 0
        %4821 = vmatpush1.bf16.xpose.msra.mxu0 0
        %4822 = vmatprep.mubr.bf16.mxu0 0
        %4823 = vmatmul.mubr.bf16.gmra.mrb[0].mxu0 %v4785
        %v4824 = vpop.f32.mrb[0].mxu0
        %v4825 = vadd.f32 0.0, %v4824
        %v4826 = vpop.f32.mrb[0].mxu0
        %v4827 = vpop.f32.mrb[0].mxu0
        %v4828 = vpop.f32.mrb[0].mxu0
        %4829 = vdwg.mxu0
        %v4831 = vsel %vm1626, %v4687, 0
        %v4834 = vsel %vm1626, %v4691, 0
        %4836 = vmatprep.subr.bf16.mxu0 0
        %4837 = vmatpush1.bf16.xpose.msra.mxu0 %v4834
        %4838 = vmatprep.subr.bf16.mxu0 0
        %4839 = vmatpush1.bf16.xpose.msra.mxu0 0
        %4840 = vmatprep.subr.bf16.mxu0 0
        %4841 = vmatpush1.bf16.xpose.msra.mxu0 0
        %4842 = vmatprep.subr.bf16.mxu0 0
        %4843 = vmatpush1.bf16.xpose.msra.mxu0 0
        %4844 = vmatprep.subr.bf16.mxu0 0
        %4845 = vmatpush1.bf16.xpose.msra.mxu0 0
        %4846 = vmatprep.subr.bf16.mxu0 0
        %4847 = vmatpush1.bf16.xpose.msra.mxu0 0
        %4848 = vmatprep.subr.bf16.mxu0 0
        %4849 = vmatpush1.bf16.xpose.msra.mxu0 0
        %4850 = vmatprep.subr.bf16.mxu0 0
        %4851 = vmatpush1.bf16.xpose.msra.mxu0 0
        %4852 = vmatprep.subr.bf16.mxu0 0
        %4853 = vmatpush1.bf16.xpose.msra.mxu0 0
        %4854 = vmatprep.subr.bf16.mxu0 0
        %4855 = vmatpush1.bf16.xpose.msra.mxu0 0
        %4856 = vmatprep.subr.bf16.mxu0 0
        %4857 = vmatpush1.bf16.xpose.msra.mxu0 0
        %4858 = vmatprep.subr.bf16.mxu0 0
        %4859 = vmatpush1.bf16.xpose.msra.mxu0 0
        %4860 = vmatprep.subr.bf16.mxu0 0
        %4861 = vmatpush1.bf16.xpose.msra.mxu0 0
        %4862 = vmatprep.subr.bf16.mxu0 0
        %4863 = vmatpush1.bf16.xpose.msra.mxu0 0
        %4864 = vmatprep.subr.bf16.mxu0 0
        %4865 = vmatpush1.bf16.xpose.msra.mxu0 0
        %4866 = vmatprep.subr.bf16.mxu0 0
        %4867 = vmatpush1.bf16.xpose.msra.mxu0 0
        %4868 = vmatprep.mubr.bf16.mxu0 0
        %4869 = vmatmul.mubr.bf16.gmra.mrb[0].mxu0 %v4831
        %v4870 = vpop.f32.mrb[0].mxu0
        %v4871 = vadd.f32 0.0, %v4870
        %v4872 = vpop.f32.mrb[0].mxu0
        %v4873 = vpop.f32.mrb[0].mxu0
        %v4874 = vpop.f32.mrb[0].mxu0
        %4875 = vdwg.mxu0
        %v4876 = vsel %vm1812, %v4733, -1e+09
        %v4877 = vsel %vm1812, %v4779, -1e+09
        %v4878 = vsel %vm1812, %v4825, -1e+09
        %v4879 = vsel %vm1812, %v4871, -1e+09
        %v4880 = vsel %vm1626, %v4876, -inf
        %4881 = vmax.xlane.f32.xlu0 %v4880
        %v4882 = vpop.xlane.xlu0 %4881
        %v4883 = vsel %vm1626, %v4877, -inf
        %4884 = vmax.xlane.f32.xlu0 %v4883
        %v4885 = vpop.xlane.xlu0 %4884
        %v4886 = vsel %vm1626, %v4878, -inf
        %4887 = vmax.xlane.f32.xlu0 %v4886
        %v4888 = vpop.xlane.xlu0 %4887
        %v4889 = vsel %vm1626, %v4879, -inf
        %4890 = vmax.xlane.f32.xlu0 %v4889
        %v4891 = vpop.xlane.xlu0 %4890
        %v4892 = vsub.f32 %v4876, %v4882
        %v4893 = vsub.f32 %v4877, %v4885
        %v4894 = vsub.f32 %v4878, %v4888
        %v4895 = vsub.f32 %v4879, %v4891
        %v4896 = vmul.f32 %v4892, 1.442695
        %v4897 = vpow.pop %v4896
        %v4898 = vmul.f32 %v4893, 1.442695
        %v4899 = vpow.pop %v4898
        %v4900 = vmul.f32 %v4894, 1.442695
        %v4901 = vpow.pop %v4900
        %v4902 = vmul.f32 %v4895, 1.442695
        %v4903 = vpow.pop %v4902
        %v4904 = vsel %vm1626, %v4897, 0.0
        %4905 = vadd.xlane.f32.xlu0 %v4904
        %v4906 = vpop.xlane.xlu0 %4905
        %v4907 = vsel %vm1626, %v4899, 0.0
        %4908 = vadd.xlane.f32.xlu0 %v4907
        %v4909 = vpop.xlane.xlu0 %4908
        %v4910 = vsel %vm1626, %v4901, 0.0
        %4911 = vadd.xlane.f32.xlu0 %v4910
        %v4912 = vpop.xlane.xlu0 %4911
        %v4913 = vsel %vm1626, %v4903, 0.0
        %4914 = vadd.xlane.f32.xlu0 %v4913
        %v4915 = vpop.xlane.xlu0 %4914
        %v4916 = vrcp.pop %v4906
        %v4917 = vrcp.pop %v4909
        %v4918 = vrcp.pop %v4912
        %v4919 = vrcp.pop %v4915
        %v4920 = vmul.f32 %v4897, %v4916
        %v4921 = vmul.f32 %v4899, %v4917
        %v4922 = vmul.f32 %v4901, %v4918
        %v4923 = vmul.f32 %v4903, %v4919
        %v4924 = vpack.c.bf16 %v4920, %v4920
        %v4925 = vpack.c.bf16 %v4921, %v4921
        %v4926 = vpack.c.bf16 %v4922, %v4922
        %v4927 = vpack.c.bf16 %v4923, %v4923
        %v4928 = vpack.c.bf16 %v4523, %v4523
        %v4929 = vpack.c.bf16 %v4575, %v4575
        %v4930 = vpack.c.bf16 %v4627, %v4627
        %v4931 = vpack.c.bf16 %v4679, %v4679
        %v4933 = vsel %vm1626, %v4924, 0
        %v4936 = vsel %vm1872, %v4928, 0
        %4938 = vmatprep.subr.bf16.mxu0 0
        %4939 = vmatpush1.bf16.msra.mxu0 %v4936
        %4940 = vmatprep.subr.bf16.mxu0 0
        %4941 = vmatpush1.bf16.msra.mxu0 0
        %4942 = vmatprep.subr.bf16.mxu0 0
        %4943 = vmatpush1.bf16.msra.mxu0 0
        %4944 = vmatprep.subr.bf16.mxu0 0
        %4945 = vmatpush1.bf16.msra.mxu0 0
        %4946 = vmatprep.subr.bf16.mxu0 0
        %4947 = vmatpush1.bf16.msra.mxu0 0
        %4948 = vmatprep.subr.bf16.mxu0 0
        %4949 = vmatpush1.bf16.msra.mxu0 0
        %4950 = vmatprep.subr.bf16.mxu0 0
        %4951 = vmatpush1.bf16.msra.mxu0 0
        %4952 = vmatprep.subr.bf16.mxu0 0
        %4953 = vmatpush1.bf16.msra.mxu0 0
        %4954 = vmatprep.subr.bf16.mxu0 0
        %4955 = vmatpush1.bf16.msra.mxu0 0
        %4956 = vmatprep.subr.bf16.mxu0 0
        %4957 = vmatpush1.bf16.msra.mxu0 0
        %4958 = vmatprep.subr.bf16.mxu0 0
        %4959 = vmatpush1.bf16.msra.mxu0 0
        %4960 = vmatprep.subr.bf16.mxu0 0
        %4961 = vmatpush1.bf16.msra.mxu0 0
        %4962 = vmatprep.subr.bf16.mxu0 0
        %4963 = vmatpush1.bf16.msra.mxu0 0
        %4964 = vmatprep.subr.bf16.mxu0 0
        %4965 = vmatpush1.bf16.msra.mxu0 0
        %4966 = vmatprep.subr.bf16.mxu0 0
        %4967 = vmatpush1.bf16.msra.mxu0 0
        %4968 = vmatprep.subr.bf16.mxu0 0
        %4969 = vmatpush1.bf16.msra.mxu0 0
        %4970 = vmatprep.mubr.bf16.mxu0 0
        %4971 = vmatmul.mubr.bf16.gmra.mrb[0].mxu0 %v4933
        %v4972 = vpop.f32.mrb[0].mxu0
        %v4973 = vadd.f32 0.0, %v4972
        %v4974 = vpop.f32.mrb[0].mxu0
        %v4975 = vpop.f32.mrb[0].mxu0
        %v4976 = vpop.f32.mrb[0].mxu0
        %4977 = vdwg.mxu0
        %v4979 = vsel %vm1626, %v4925, 0
        %v4982 = vsel %vm1872, %v4929, 0
        %4984 = vmatprep.subr.bf16.mxu0 0
        %4985 = vmatpush1.bf16.msra.mxu0 %v4982
        %4986 = vmatprep.subr.bf16.mxu0 0
        %4987 = vmatpush1.bf16.msra.mxu0 0
        %4988 = vmatprep.subr.bf16.mxu0 0
        %4989 = vmatpush1.bf16.msra.mxu0 0
        %4990 = vmatprep.subr.bf16.mxu0 0
        %4991 = vmatpush1.bf16.msra.mxu0 0
        %4992 = vmatprep.subr.bf16.mxu0 0
        %4993 = vmatpush1.bf16.msra.mxu0 0
        %4994 = vmatprep.subr.bf16.mxu0 0
        %4995 = vmatpush1.bf16.msra.mxu0 0
        %4996 = vmatprep.subr.bf16.mxu0 0
        %4997 = vmatpush1.bf16.msra.mxu0 0
        %4998 = vmatprep.subr.bf16.mxu0 0
        %4999 = vmatpush1.bf16.msra.mxu0 0
        %5000 = vmatprep.subr.bf16.mxu0 0
        %5001 = vmatpush1.bf16.msra.mxu0 0
        %5002 = vmatprep.subr.bf16.mxu0 0
        %5003 = vmatpush1.bf16.msra.mxu0 0
        %5004 = vmatprep.subr.bf16.mxu0 0
        %5005 = vmatpush1.bf16.msra.mxu0 0
        %5006 = vmatprep.subr.bf16.mxu0 0
        %5007 = vmatpush1.bf16.msra.mxu0 0
        %5008 = vmatprep.subr.bf16.mxu0 0
        %5009 = vmatpush1.bf16.msra.mxu0 0
        %5010 = vmatprep.subr.bf16.mxu0 0
        %5011 = vmatpush1.bf16.msra.mxu0 0
        %5012 = vmatprep.subr.bf16.mxu0 0
        %5013 = vmatpush1.bf16.msra.mxu0 0
        %5014 = vmatprep.subr.bf16.mxu0 0
        %5015 = vmatpush1.bf16.msra.mxu0 0
        %5016 = vmatprep.mubr.bf16.mxu0 0
        %5017 = vmatmul.mubr.bf16.gmra.mrb[0].mxu0 %v4979
        %v5018 = vpop.f32.mrb[0].mxu0
        %v5019 = vadd.f32 0.0, %v5018
        %v5020 = vpop.f32.mrb[0].mxu0
        %v5021 = vpop.f32.mrb[0].mxu0
        %v5022 = vpop.f32.mrb[0].mxu0
        %5023 = vdwg.mxu0
        %v5025 = vsel %vm1626, %v4926, 0
        %v5028 = vsel %vm1872, %v4930, 0
        %5030 = vmatprep.subr.bf16.mxu0 0
        %5031 = vmatpush1.bf16.msra.mxu0 %v5028
        %5032 = vmatprep.subr.bf16.mxu0 0
        %5033 = vmatpush1.bf16.msra.mxu0 0
        %5034 = vmatprep.subr.bf16.mxu0 0
        %5035 = vmatpush1.bf16.msra.mxu0 0
        %5036 = vmatprep.subr.bf16.mxu0 0
        %5037 = vmatpush1.bf16.msra.mxu0 0
        %5038 = vmatprep.subr.bf16.mxu0 0
        %5039 = vmatpush1.bf16.msra.mxu0 0
        %5040 = vmatprep.subr.bf16.mxu0 0
        %5041 = vmatpush1.bf16.msra.mxu0 0
        %5042 = vmatprep.subr.bf16.mxu0 0
        %5043 = vmatpush1.bf16.msra.mxu0 0
        %5044 = vmatprep.subr.bf16.mxu0 0
        %5045 = vmatpush1.bf16.msra.mxu0 0
        %5046 = vmatprep.subr.bf16.mxu0 0
        %5047 = vmatpush1.bf16.msra.mxu0 0
        %5048 = vmatprep.subr.bf16.mxu0 0
        %5049 = vmatpush1.bf16.msra.mxu0 0
        %5050 = vmatprep.subr.bf16.mxu0 0
        %5051 = vmatpush1.bf16.msra.mxu0 0
        %5052 = vmatprep.subr.bf16.mxu0 0
        %5053 = vmatpush1.bf16.msra.mxu0 0
        %5054 = vmatprep.subr.bf16.mxu0 0
        %5055 = vmatpush1.bf16.msra.mxu0 0
        %5056 = vmatprep.subr.bf16.mxu0 0
        %5057 = vmatpush1.bf16.msra.mxu0 0
        %5058 = vmatprep.subr.bf16.mxu0 0
        %5059 = vmatpush1.bf16.msra.mxu0 0
        %5060 = vmatprep.subr.bf16.mxu0 0
        %5061 = vmatpush1.bf16.msra.mxu0 0
        %5062 = vmatprep.mubr.bf16.mxu0 0
        %5063 = vmatmul.mubr.bf16.gmra.mrb[0].mxu0 %v5025
        %v5064 = vpop.f32.mrb[0].mxu0
        %v5065 = vadd.f32 0.0, %v5064
        %v5066 = vpop.f32.mrb[0].mxu0
        %v5067 = vpop.f32.mrb[0].mxu0
        %v5068 = vpop.f32.mrb[0].mxu0
        %5069 = vdwg.mxu0
        %v5071 = vsel %vm1626, %v4927, 0
        %v5074 = vsel %vm1872, %v4931, 0
        %5076 = vmatprep.subr.bf16.mxu0 0
        %5077 = vmatpush1.bf16.msra.mxu0 %v5074
        %5078 = vmatprep.subr.bf16.mxu0 0
        %5079 = vmatpush1.bf16.msra.mxu0 0
        %5080 = vmatprep.subr.bf16.mxu0 0
        %5081 = vmatpush1.bf16.msra.mxu0 0
        %5082 = vmatprep.subr.bf16.mxu0 0
        %5083 = vmatpush1.bf16.msra.mxu0 0
        %5084 = vmatprep.subr.bf16.mxu0 0
        %5085 = vmatpush1.bf16.msra.mxu0 0
        %5086 = vmatprep.subr.bf16.mxu0 0
        %5087 = vmatpush1.bf16.msra.mxu0 0
        %5088 = vmatprep.subr.bf16.mxu0 0
        %5089 = vmatpush1.bf16.msra.mxu0 0
        %5090 = vmatprep.subr.bf16.mxu0 0
        %5091 = vmatpush1.bf16.msra.mxu0 0
        %5092 = vmatprep.subr.bf16.mxu0 0
        %5093 = vmatpush1.bf16.msra.mxu0 0
        %5094 = vmatprep.subr.bf16.mxu0 0
        %5095 = vmatpush1.bf16.msra.mxu0 0
        %5096 = vmatprep.subr.bf16.mxu0 0
        %5097 = vmatpush1.bf16.msra.mxu0 0
        %5098 = vmatprep.subr.bf16.mxu0 0
        %5099 = vmatpush1.bf16.msra.mxu0 0
        %5100 = vmatprep.subr.bf16.mxu0 0
        %5101 = vmatpush1.bf16.msra.mxu0 0
        %5102 = vmatprep.subr.bf16.mxu0 0
        %5103 = vmatpush1.bf16.msra.mxu0 0
        %5104 = vmatprep.subr.bf16.mxu0 0
        %5105 = vmatpush1.bf16.msra.mxu0 0
        %5106 = vmatprep.subr.bf16.mxu0 0
        %5107 = vmatpush1.bf16.msra.mxu0 0
        %5108 = vmatprep.mubr.bf16.mxu0 0
        %5109 = vmatmul.mubr.bf16.gmra.mrb[0].mxu0 %v5071
        %v5110 = vpop.f32.mrb[0].mxu0
        %v5111 = vadd.f32 0.0, %v5110
        %v5112 = vpop.f32.mrb[0].mxu0
        %v5113 = vpop.f32.mrb[0].mxu0
        %v5114 = vpop.f32.mrb[0].mxu0
        %5115 = vdwg.mxu0
        %v5116 = vpack.c.bf16 %v4973, %v4973
        %v5117 = vpack.c.bf16 %v5019, %v5019
        %v5118 = vpack.c.bf16 %v5065, %v5065
        %v5119 = vpack.c.bf16 %v5111, %v5111
        %v5121 = vsel %vm1626, %v5116, 0
        %v5124 = vsel %vm1872, %v3979, 0
        %5126 = vmatprep.subr.bf16.mxu0 0
        %5127 = vmatpush1.bf16.msra.mxu0 %v5124
        %5128 = vmatprep.subr.bf16.mxu0 0
        %5129 = vmatpush1.bf16.msra.mxu0 0
        %5130 = vmatprep.subr.bf16.mxu0 0
        %5131 = vmatpush1.bf16.msra.mxu0 0
        %5132 = vmatprep.subr.bf16.mxu0 0
        %5133 = vmatpush1.bf16.msra.mxu0 0
        %5134 = vmatprep.subr.bf16.mxu0 0
        %5135 = vmatpush1.bf16.msra.mxu0 0
        %5136 = vmatprep.subr.bf16.mxu0 0
        %5137 = vmatpush1.bf16.msra.mxu0 0
        %5138 = vmatprep.subr.bf16.mxu0 0
        %5139 = vmatpush1.bf16.msra.mxu0 0
        %5140 = vmatprep.subr.bf16.mxu0 0
        %5141 = vmatpush1.bf16.msra.mxu0 0
        %5142 = vmatprep.subr.bf16.mxu0 0
        %5143 = vmatpush1.bf16.msra.mxu0 0
        %5144 = vmatprep.subr.bf16.mxu0 0
        %5145 = vmatpush1.bf16.msra.mxu0 0
        %5146 = vmatprep.subr.bf16.mxu0 0
        %5147 = vmatpush1.bf16.msra.mxu0 0
        %5148 = vmatprep.subr.bf16.mxu0 0
        %5149 = vmatpush1.bf16.msra.mxu0 0
        %5150 = vmatprep.subr.bf16.mxu0 0
        %5151 = vmatpush1.bf16.msra.mxu0 0
        %5152 = vmatprep.subr.bf16.mxu0 0
        %5153 = vmatpush1.bf16.msra.mxu0 0
        %5154 = vmatprep.subr.bf16.mxu0 0
        %5155 = vmatpush1.bf16.msra.mxu0 0
        %5156 = vmatprep.subr.bf16.mxu0 0
        %5157 = vmatpush1.bf16.msra.mxu0 0
        %5158 = vmatprep.mubr.bf16.mxu0 0
        %5159 = vmatmul.mubr.bf16.gmra.mrb[0].mxu0 %v5121
        %v5160 = vpop.f32.mrb[0].mxu0
        %v5161 = vadd.f32 0.0, %v5160
        %v5162 = vpop.f32.mrb[0].mxu0
        %v5163 = vpop.f32.mrb[0].mxu0
        %v5164 = vpop.f32.mrb[0].mxu0
        %5165 = vdwg.mxu0
        %v5167 = vsel %vm1626, %v5117, 0
        %v5170 = vsel %vm1872, %v3980, 0
        %5172 = vmatprep.subr.bf16.mxu0 0
        %5173 = vmatpush1.bf16.msra.mxu0 %v5170
        %5174 = vmatprep.subr.bf16.mxu0 0
        %5175 = vmatpush1.bf16.msra.mxu0 0
        %5176 = vmatprep.subr.bf16.mxu0 0
        %5177 = vmatpush1.bf16.msra.mxu0 0
        %5178 = vmatprep.subr.bf16.mxu0 0
        %5179 = vmatpush1.bf16.msra.mxu0 0
        %5180 = vmatprep.subr.bf16.mxu0 0
        %5181 = vmatpush1.bf16.msra.mxu0 0
        %5182 = vmatprep.subr.bf16.mxu0 0
        %5183 = vmatpush1.bf16.msra.mxu0 0
        %5184 = vmatprep.subr.bf16.mxu0 0
        %5185 = vmatpush1.bf16.msra.mxu0 0
        %5186 = vmatprep.subr.bf16.mxu0 0
        %5187 = vmatpush1.bf16.msra.mxu0 0
        %5188 = vmatprep.subr.bf16.mxu0 0
        %5189 = vmatpush1.bf16.msra.mxu0 0
        %5190 = vmatprep.subr.bf16.mxu0 0
        %5191 = vmatpush1.bf16.msra.mxu0 0
        %5192 = vmatprep.subr.bf16.mxu0 0
        %5193 = vmatpush1.bf16.msra.mxu0 0
        %5194 = vmatprep.subr.bf16.mxu0 0
        %5195 = vmatpush1.bf16.msra.mxu0 0
        %5196 = vmatprep.subr.bf16.mxu0 0
        %5197 = vmatpush1.bf16.msra.mxu0 0
        %5198 = vmatprep.subr.bf16.mxu0 0
        %5199 = vmatpush1.bf16.msra.mxu0 0
        %5200 = vmatprep.subr.bf16.mxu0 0
        %5201 = vmatpush1.bf16.msra.mxu0 0
        %5202 = vmatprep.subr.bf16.mxu0 0
        %5203 = vmatpush1.bf16.msra.mxu0 0
        %5204 = vmatprep.mubr.bf16.mxu0 0
        %5205 = vmatmul.mubr.bf16.gmra.mrb[0].mxu0 %v5167
        %v5206 = vpop.f32.mrb[0].mxu0
        %v5207 = vadd.f32 0.0, %v5206
        %v5208 = vpop.f32.mrb[0].mxu0
        %v5209 = vpop.f32.mrb[0].mxu0
        %v5210 = vpop.f32.mrb[0].mxu0
        %5211 = vdwg.mxu0
        %v5213 = vsel %vm1626, %v5118, 0
        %v5216 = vsel %vm1872, %v3981, 0
        %5218 = vmatprep.subr.bf16.mxu0 0
        %5219 = vmatpush1.bf16.msra.mxu0 %v5216
        %5220 = vmatprep.subr.bf16.mxu0 0
        %5221 = vmatpush1.bf16.msra.mxu0 0
        %5222 = vmatprep.subr.bf16.mxu0 0
        %5223 = vmatpush1.bf16.msra.mxu0 0
        %5224 = vmatprep.subr.bf16.mxu0 0
        %5225 = vmatpush1.bf16.msra.mxu0 0
        %5226 = vmatprep.subr.bf16.mxu0 0
        %5227 = vmatpush1.bf16.msra.mxu0 0
        %5228 = vmatprep.subr.bf16.mxu0 0
        %5229 = vmatpush1.bf16.msra.mxu0 0
        %5230 = vmatprep.subr.bf16.mxu0 0
        %5231 = vmatpush1.bf16.msra.mxu0 0
        %5232 = vmatprep.subr.bf16.mxu0 0
        %5233 = vmatpush1.bf16.msra.mxu0 0
        %5234 = vmatprep.subr.bf16.mxu0 0
        %5235 = vmatpush1.bf16.msra.mxu0 0
        %5236 = vmatprep.subr.bf16.mxu0 0
        %5237 = vmatpush1.bf16.msra.mxu0 0
        %5238 = vmatprep.subr.bf16.mxu0 0
        %5239 = vmatpush1.bf16.msra.mxu0 0
        %5240 = vmatprep.subr.bf16.mxu0 0
        %5241 = vmatpush1.bf16.msra.mxu0 0
        %5242 = vmatprep.subr.bf16.mxu0 0
        %5243 = vmatpush1.bf16.msra.mxu0 0
        %5244 = vmatprep.subr.bf16.mxu0 0
        %5245 = vmatpush1.bf16.msra.mxu0 0
        %5246 = vmatprep.subr.bf16.mxu0 0
        %5247 = vmatpush1.bf16.msra.mxu0 0
        %5248 = vmatprep.subr.bf16.mxu0 0
        %5249 = vmatpush1.bf16.msra.mxu0 0
        %5250 = vmatprep.mubr.bf16.mxu0 0
        %5251 = vmatmul.mubr.bf16.gmra.mrb[0].mxu0 %v5213
        %v5252 = vpop.f32.mrb[0].mxu0
        %v5253 = vadd.f32 0.0, %v5252
        %v5254 = vpop.f32.mrb[0].mxu0
        %v5255 = vpop.f32.mrb[0].mxu0
        %v5256 = vpop.f32.mrb[0].mxu0
        %5257 = vdwg.mxu0
        %v5259 = vsel %vm1626, %v5119, 0
        %v5262 = vsel %vm1872, %v3982, 0
        %5264 = vmatprep.subr.bf16.mxu0 0
        %5265 = vmatpush1.bf16.msra.mxu0 %v5262
        %5266 = vmatprep.subr.bf16.mxu0 0
        %5267 = vmatpush1.bf16.msra.mxu0 0
        %5268 = vmatprep.subr.bf16.mxu0 0
        %5269 = vmatpush1.bf16.msra.mxu0 0
        %5270 = vmatprep.subr.bf16.mxu0 0
        %5271 = vmatpush1.bf16.msra.mxu0 0
        %5272 = vmatprep.subr.bf16.mxu0 0
        %5273 = vmatpush1.bf16.msra.mxu0 0
        %5274 = vmatprep.subr.bf16.mxu0 0
        %5275 = vmatpush1.bf16.msra.mxu0 0
        %5276 = vmatprep.subr.bf16.mxu0 0
        %5277 = vmatpush1.bf16.msra.mxu0 0
        %5278 = vmatprep.subr.bf16.mxu0 0
        %5279 = vmatpush1.bf16.msra.mxu0 0
        %5280 = vmatprep.subr.bf16.mxu0 0
        %5281 = vmatpush1.bf16.msra.mxu0 0
        %5282 = vmatprep.subr.bf16.mxu0 0
        %5283 = vmatpush1.bf16.msra.mxu0 0
        %5284 = vmatprep.subr.bf16.mxu0 0
        %5285 = vmatpush1.bf16.msra.mxu0 0
        %5286 = vmatprep.subr.bf16.mxu0 0
        %5287 = vmatpush1.bf16.msra.mxu0 0
        %5288 = vmatprep.subr.bf16.mxu0 0
        %5289 = vmatpush1.bf16.msra.mxu0 0
        %5290 = vmatprep.subr.bf16.mxu0 0
        %5291 = vmatpush1.bf16.msra.mxu0 0
        %5292 = vmatprep.subr.bf16.mxu0 0
        %5293 = vmatpush1.bf16.msra.mxu0 0
        %5294 = vmatprep.subr.bf16.mxu0 0
        %5295 = vmatpush1.bf16.msra.mxu0 0
        %5296 = vmatprep.mubr.bf16.mxu0 0
        %5297 = vmatmul.mubr.bf16.gmra.mrb[0].mxu0 %v5259
        %v5298 = vpop.f32.mrb[0].mxu0
        %v5299 = vadd.f32 0.0, %v5298
        %v5300 = vpop.f32.mrb[0].mxu0
        %v5301 = vpop.f32.mrb[0].mxu0
        %v5302 = vpop.f32.mrb[0].mxu0
        %5303 = vdwg.mxu0
        %v5304 = vsel %vm954, %v5161, 0.0
        %v5305 = vsel %vm954, %v5207, 0.0
        %v5306 = vadd.f32 %v5304, %v5305
        %v5307 = vsel %vm954, %v5253, 0.0
        %v5308 = vadd.f32 %v5306, %v5307
        %v5309 = vsel %vm954, %v5299, 0.0
        %v5310 = vadd.f32 %v5308, %v5309
        %v5312 = vlaneseq
        %v5313 = vshrl.u32 %v5312, 7
        %v5314 = vsub.s32 0, %v5313
        %v5315 = vrot.slane %v3984, %v5314
        %v5317 = vadd.f32 %v5310, %v5315
        %v5318 = vadd.f32 %v5317, %v3902
        %v5319 = vsel %vm954, %v5318, 0.0
        %5320 = vadd.xlane.f32.xlu0 %v5319
        %v5321 = vpop.xlane.xlu0 %5320
        %v5322 = vmul.f32 %v5321, %v2260
        %v5323 = vmul.f32 %v5318, %v5318
        %v5324 = vsel %vm954, %v5323, 0.0
        %5325 = vadd.xlane.f32.xlu0 %v5324
        %v5326 = vpop.xlane.xlu0 %5325
        %v5327 = vmul.f32 %v5326, %v2260
        %v5328 = vmul.f32 %v5322, %v5322
        %v5329 = vsub.f32 %v5327, %v5328
        %v5330 = vsub.f32 %v5318, %v5322
        %v5331 = vadd.f32 %v5329, 1e-05
        %v5332 = vrsqrt.pop %v5331
        %v5333 = vmul.f32 %v5330, %v5332
        %v5335 = vlaneseq
        %v5336 = vshrl.u32 %v5335, 7
        %v5337 = vsub.s32 0, %v5336
        %v5338 = vrot.slane %v3904, %v5337
        %v5340 = vmul.f32 %v5333, %v5338
        %v5342 = vlaneseq
        %v5343 = vshrl.u32 %v5342, 7
        %v5344 = vsub.s32 0, %v5343
        %v5345 = vrot.slane %v3908, %v5344
        %v5347 = vadd.f32 %v5340, %v5345
        %v5348 = vpack.c.bf16 %v5347, %v5347
        %s5349 = scalar_lea.vmem %s12, 64
        %v5350 = vld [vmem:[%s5349] sm:$0xf]
        %v5351 = vld [vmem:[%s5349 + $0x4] sm:$0xf]
        %v5352 = vld [vmem:[%s5349 + $0x8] sm:$0xf]
        %v5353 = vld [vmem:[%s5349 + $0xc] sm:$0xf]
        %v5354 = vld [vmem:[%s5349 + $0x10] sm:$0xf]
        %v5355 = vld [vmem:[%s5349 + $0x14] sm:$0xf]
        %v5356 = vld [vmem:[%s5349 + $0x18] sm:$0xf]
        %v5357 = vld [vmem:[%s5349 + $0x1c] sm:$0xf]
        %v5358 = vld [vmem:[%s5349 + $0x20] sm:$0xf]
        %v5359 = vld [vmem:[%s5349 + $0x24] sm:$0xf]
        %v5360 = vld [vmem:[%s5349 + $0x28] sm:$0xf]
        %v5361 = vld [vmem:[%s5349 + $0x2c] sm:$0xf]
        %v5362 = vld [vmem:[%s5349 + $0x30] sm:$0xf]
        %v5363 = vld [vmem:[%s5349 + $0x34] sm:$0xf]
        %v5364 = vld [vmem:[%s5349 + $0x38] sm:$0xf]
        %v5365 = vld [vmem:[%s5349 + $0x3c] sm:$0xf]
        %s5366 = scalar_lea.vmem %s13, 4
        %v5367 = vld [vmem:[%s5366] sm:$0x1]
        %v5368 = vld [vmem:[%s5366 + $0x1] sm:$0x1]
        %v5369 = vld [vmem:[%s5366 + $0x2] sm:$0x1]
        %v5370 = vld [vmem:[%s5366 + $0x3] sm:$0x1]
        %s5371 = scalar_lea.vmem %s14, 64
        %v5372 = vld [vmem:[%s5371] sm:$0xf]
        %v5373 = vld [vmem:[%s5371 + $0x4] sm:$0xf]
        %v5374 = vld [vmem:[%s5371 + $0x8] sm:$0xf]
        %v5375 = vld [vmem:[%s5371 + $0xc] sm:$0xf]
        %v5376 = vld [vmem:[%s5371 + $0x10] sm:$0xf]
        %v5377 = vld [vmem:[%s5371 + $0x14] sm:$0xf]
        %v5378 = vld [vmem:[%s5371 + $0x18] sm:$0xf]
        %v5379 = vld [vmem:[%s5371 + $0x1c] sm:$0xf]
        %v5380 = vld [vmem:[%s5371 + $0x20] sm:$0xf]
        %v5381 = vld [vmem:[%s5371 + $0x24] sm:$0xf]
        %v5382 = vld [vmem:[%s5371 + $0x28] sm:$0xf]
        %v5383 = vld [vmem:[%s5371 + $0x2c] sm:$0xf]
        %v5384 = vld [vmem:[%s5371 + $0x30] sm:$0xf]
        %v5385 = vld [vmem:[%s5371 + $0x34] sm:$0xf]
        %v5386 = vld [vmem:[%s5371 + $0x38] sm:$0xf]
        %v5387 = vld [vmem:[%s5371 + $0x3c] sm:$0xf]
        %s5388 = scalar_lea.vmem %s15, 4
        %v5389 = vld [vmem:[%s5388] sm:$0x1]
        %v5390 = vld [vmem:[%s5388 + $0x1] sm:$0x1]
        %v5391 = vld [vmem:[%s5388 + $0x2] sm:$0x1]
        %v5392 = vld [vmem:[%s5388 + $0x3] sm:$0x1]
        %s5393 = scalar_lea.vmem %s16, 64
        %v5394 = vld [vmem:[%s5393] sm:$0xf]
        %v5395 = vld [vmem:[%s5393 + $0x4] sm:$0xf]
        %v5396 = vld [vmem:[%s5393 + $0x8] sm:$0xf]
        %v5397 = vld [vmem:[%s5393 + $0xc] sm:$0xf]
        %v5398 = vld [vmem:[%s5393 + $0x10] sm:$0xf]
        %v5399 = vld [vmem:[%s5393 + $0x14] sm:$0xf]
        %v5400 = vld [vmem:[%s5393 + $0x18] sm:$0xf]
        %v5401 = vld [vmem:[%s5393 + $0x1c] sm:$0xf]
        %v5402 = vld [vmem:[%s5393 + $0x20] sm:$0xf]
        %v5403 = vld [vmem:[%s5393 + $0x24] sm:$0xf]
        %v5404 = vld [vmem:[%s5393 + $0x28] sm:$0xf]
        %v5405 = vld [vmem:[%s5393 + $0x2c] sm:$0xf]
        %v5406 = vld [vmem:[%s5393 + $0x30] sm:$0xf]
        %v5407 = vld [vmem:[%s5393 + $0x34] sm:$0xf]
        %v5408 = vld [vmem:[%s5393 + $0x38] sm:$0xf]
        %v5409 = vld [vmem:[%s5393 + $0x3c] sm:$0xf]
        %s5410 = scalar_lea.vmem %s17, 4
        %v5411 = vld [vmem:[%s5410] sm:$0x1]
        %v5412 = vld [vmem:[%s5410 + $0x1] sm:$0x1]
        %v5413 = vld [vmem:[%s5410 + $0x2] sm:$0x1]
        %v5414 = vld [vmem:[%s5410 + $0x3] sm:$0x1]
        %s5415 = scalar_lea.vmem %s18, 16
        %v5416 = vld [vmem:[%s5415] sm:$0xf]
        %v5417 = vld [vmem:[%s5415 + $0x4] sm:$0xf]
        %v5418 = vld [vmem:[%s5415 + $0x8] sm:$0xf]
        %v5419 = vld [vmem:[%s5415 + $0xc] sm:$0xf]
        %s5420 = scalar_lea.vmem %s19, 1
        %v5421 = vld [vmem:[%s5420] sm:$0x1]
        %v5426 = vlaneseq
        %v5427 = vshrl.u32 %v5426, 7
        %v5428 = vsub.s32 0, %v5427
        %v5429 = vrot.slane %v5367, %v5428
        %v5430 = vlaneseq
        %v5431 = vshrl.u32 %v5430, 7
        %v5432 = vsub.s32 0, %v5431
        %v5433 = vrot.slane %v5368, %v5432
        %v5434 = vlaneseq
        %v5435 = vshrl.u32 %v5434, 7
        %v5436 = vsub.s32 0, %v5435
        %v5437 = vrot.slane %v5369, %v5436
        %v5438 = vlaneseq
        %v5439 = vshrl.u32 %v5438, 7
        %v5440 = vsub.s32 0, %v5439
        %v5441 = vrot.slane %v5370, %v5440
        %v5450 = vunpack.c.l.b16 %v5350
        %v5451 = vunpack.c.l.b16 %v5351
        %v5452 = vunpack.c.l.b16 %v5352
        %v5453 = vunpack.c.l.b16 %v5353
        %v5454 = vpack.c.b16 %v5451, %v5450
        %v5455 = vpack.c.b16 %v5453, %v5452
        %v5459 = vsel %vm954, %v5348, 0
        %5461 = vmatprep.subr.bf16.mxu0 0
        %5462 = vmatpush1.bf16.msra.mxu0 %v5454
        %5463 = vmatprep.subr.bf16.mxu0 0
        %5464 = vmatpush1.bf16.msra.mxu0 %v5455
        %5465 = vmatprep.subr.bf16.mxu0 0
        %5466 = vmatpush1.bf16.msra.mxu0 0
        %5467 = vmatprep.subr.bf16.mxu0 0
        %5468 = vmatpush1.bf16.msra.mxu0 0
        %5469 = vmatprep.subr.bf16.mxu0 0
        %5470 = vmatpush1.bf16.msra.mxu0 0
        %5471 = vmatprep.subr.bf16.mxu0 0
        %5472 = vmatpush1.bf16.msra.mxu0 0
        %5473 = vmatprep.subr.bf16.mxu0 0
        %5474 = vmatpush1.bf16.msra.mxu0 0
        %5475 = vmatprep.subr.bf16.mxu0 0
        %5476 = vmatpush1.bf16.msra.mxu0 0
        %5477 = vmatprep.subr.bf16.mxu0 0
        %5478 = vmatpush1.bf16.msra.mxu0 0
        %5479 = vmatprep.subr.bf16.mxu0 0
        %5480 = vmatpush1.bf16.msra.mxu0 0
        %5481 = vmatprep.subr.bf16.mxu0 0
        %5482 = vmatpush1.bf16.msra.mxu0 0
        %5483 = vmatprep.subr.bf16.mxu0 0
        %5484 = vmatpush1.bf16.msra.mxu0 0
        %5485 = vmatprep.subr.bf16.mxu0 0
        %5486 = vmatpush1.bf16.msra.mxu0 0
        %5487 = vmatprep.subr.bf16.mxu0 0
        %5488 = vmatpush1.bf16.msra.mxu0 0
        %5489 = vmatprep.subr.bf16.mxu0 0
        %5490 = vmatpush1.bf16.msra.mxu0 0
        %5491 = vmatprep.subr.bf16.mxu0 0
        %5492 = vmatpush1.bf16.msra.mxu0 0
        %5493 = vmatprep.mubr.bf16.mxu0 0
        %5494 = vmatmul.mubr.bf16.gmra.mrb[0].mxu0 %v5459
        %v5495 = vpop.f32.mrb[0].mxu0
        %v5496 = vadd.f32 %v5429, %v5495
        %v5497 = vpop.f32.mrb[0].mxu0
        %v5498 = vpop.f32.mrb[0].mxu0
        %v5499 = vpop.f32.mrb[0].mxu0
        %5500 = vdwg.mxu0
        %v5505 = vunpack.c.l.b16 %v5354
        %v5506 = vunpack.c.l.b16 %v5355
        %v5507 = vunpack.c.l.b16 %v5356
        %v5508 = vunpack.c.l.b16 %v5357
        %v5509 = vpack.c.b16 %v5506, %v5505
        %v5510 = vpack.c.b16 %v5508, %v5507
        %5513 = vmatprep.subr.bf16.mxu0 0
        %5514 = vmatpush1.bf16.msra.mxu0 %v5509
        %5515 = vmatprep.subr.bf16.mxu0 0
        %5516 = vmatpush1.bf16.msra.mxu0 %v5510
        %5517 = vmatprep.subr.bf16.mxu0 0
        %5518 = vmatpush1.bf16.msra.mxu0 0
        %5519 = vmatprep.subr.bf16.mxu0 0
        %5520 = vmatpush1.bf16.msra.mxu0 0
        %5521 = vmatprep.subr.bf16.mxu0 0
        %5522 = vmatpush1.bf16.msra.mxu0 0
        %5523 = vmatprep.subr.bf16.mxu0 0
        %5524 = vmatpush1.bf16.msra.mxu0 0
        %5525 = vmatprep.subr.bf16.mxu0 0
        %5526 = vmatpush1.bf16.msra.mxu0 0
        %5527 = vmatprep.subr.bf16.mxu0 0
        %5528 = vmatpush1.bf16.msra.mxu0 0
        %5529 = vmatprep.subr.bf16.mxu0 0
        %5530 = vmatpush1.bf16.msra.mxu0 0
        %5531 = vmatprep.subr.bf16.mxu0 0
        %5532 = vmatpush1.bf16.msra.mxu0 0
        %5533 = vmatprep.subr.bf16.mxu0 0
        %5534 = vmatpush1.bf16.msra.mxu0 0
        %5535 = vmatprep.subr.bf16.mxu0 0
        %5536 = vmatpush1.bf16.msra.mxu0 0
        %5537 = vmatprep.subr.bf16.mxu0 0
        %5538 = vmatpush1.bf16.msra.mxu0 0
        %5539 = vmatprep.subr.bf16.mxu0 0
        %5540 = vmatpush1.bf16.msra.mxu0 0
        %5541 = vmatprep.subr.bf16.mxu0 0
        %5542 = vmatpush1.bf16.msra.mxu0 0
        %5543 = vmatprep.subr.bf16.mxu0 0
        %5544 = vmatpush1.bf16.msra.mxu0 0
        %5545 = vmatprep.mubr.bf16.mxu0 0
        %5546 = vmatmul.mubr.bf16.gmra.mrb[0].mxu0 %v5459
        %v5547 = vpop.f32.mrb[0].mxu0
        %v5548 = vadd.f32 %v5433, %v5547
        %v5549 = vpop.f32.mrb[0].mxu0
        %v5550 = vpop.f32.mrb[0].mxu0
        %v5551 = vpop.f32.mrb[0].mxu0
        %5552 = vdwg.mxu0
        %v5557 = vunpack.c.l.b16 %v5358
        %v5558 = vunpack.c.l.b16 %v5359
        %v5559 = vunpack.c.l.b16 %v5360
        %v5560 = vunpack.c.l.b16 %v5361
        %v5561 = vpack.c.b16 %v5558, %v5557
        %v5562 = vpack.c.b16 %v5560, %v5559
        %5565 = vmatprep.subr.bf16.mxu0 0
        %5566 = vmatpush1.bf16.msra.mxu0 %v5561
        %5567 = vmatprep.subr.bf16.mxu0 0
        %5568 = vmatpush1.bf16.msra.mxu0 %v5562
        %5569 = vmatprep.subr.bf16.mxu0 0
        %5570 = vmatpush1.bf16.msra.mxu0 0
        %5571 = vmatprep.subr.bf16.mxu0 0
        %5572 = vmatpush1.bf16.msra.mxu0 0
        %5573 = vmatprep.subr.bf16.mxu0 0
        %5574 = vmatpush1.bf16.msra.mxu0 0
        %5575 = vmatprep.subr.bf16.mxu0 0
        %5576 = vmatpush1.bf16.msra.mxu0 0
        %5577 = vmatprep.subr.bf16.mxu0 0
        %5578 = vmatpush1.bf16.msra.mxu0 0
        %5579 = vmatprep.subr.bf16.mxu0 0
        %5580 = vmatpush1.bf16.msra.mxu0 0
        %5581 = vmatprep.subr.bf16.mxu0 0
        %5582 = vmatpush1.bf16.msra.mxu0 0
        %5583 = vmatprep.subr.bf16.mxu0 0
        %5584 = vmatpush1.bf16.msra.mxu0 0
        %5585 = vmatprep.subr.bf16.mxu0 0
        %5586 = vmatpush1.bf16.msra.mxu0 0
        %5587 = vmatprep.subr.bf16.mxu0 0
        %5588 = vmatpush1.bf16.msra.mxu0 0
        %5589 = vmatprep.subr.bf16.mxu0 0
        %5590 = vmatpush1.bf16.msra.mxu0 0
        %5591 = vmatprep.subr.bf16.mxu0 0
        %5592 = vmatpush1.bf16.msra.mxu0 0
        %5593 = vmatprep.subr.bf16.mxu0 0
        %5594 = vmatpush1.bf16.msra.mxu0 0
        %5595 = vmatprep.subr.bf16.mxu0 0
        %5596 = vmatpush1.bf16.msra.mxu0 0
        %5597 = vmatprep.mubr.bf16.mxu0 0
        %5598 = vmatmul.mubr.bf16.gmra.mrb[0].mxu0 %v5459
        %v5599 = vpop.f32.mrb[0].mxu0
        %v5600 = vadd.f32 %v5437, %v5599
        %v5601 = vpop.f32.mrb[0].mxu0
        %v5602 = vpop.f32.mrb[0].mxu0
        %v5603 = vpop.f32.mrb[0].mxu0
        %5604 = vdwg.mxu0
        %v5609 = vunpack.c.l.b16 %v5362
        %v5610 = vunpack.c.l.b16 %v5363
        %v5611 = vunpack.c.l.b16 %v5364
        %v5612 = vunpack.c.l.b16 %v5365
        %v5613 = vpack.c.b16 %v5610, %v5609
        %v5614 = vpack.c.b16 %v5612, %v5611
        %5617 = vmatprep.subr.bf16.mxu0 0
        %5618 = vmatpush1.bf16.msra.mxu0 %v5613
        %5619 = vmatprep.subr.bf16.mxu0 0
        %5620 = vmatpush1.bf16.msra.mxu0 %v5614
        %5621 = vmatprep.subr.bf16.mxu0 0
        %5622 = vmatpush1.bf16.msra.mxu0 0
        %5623 = vmatprep.subr.bf16.mxu0 0
        %5624 = vmatpush1.bf16.msra.mxu0 0
        %5625 = vmatprep.subr.bf16.mxu0 0
        %5626 = vmatpush1.bf16.msra.mxu0 0
        %5627 = vmatprep.subr.bf16.mxu0 0
        %5628 = vmatpush1.bf16.msra.mxu0 0
        %5629 = vmatprep.subr.bf16.mxu0 0
        %5630 = vmatpush1.bf16.msra.mxu0 0
        %5631 = vmatprep.subr.bf16.mxu0 0
        %5632 = vmatpush1.bf16.msra.mxu0 0
        %5633 = vmatprep.subr.bf16.mxu0 0
        %5634 = vmatpush1.bf16.msra.mxu0 0
        %5635 = vmatprep.subr.bf16.mxu0 0
        %5636 = vmatpush1.bf16.msra.mxu0 0
        %5637 = vmatprep.subr.bf16.mxu0 0
        %5638 = vmatpush1.bf16.msra.mxu0 0
        %5639 = vmatprep.subr.bf16.mxu0 0
        %5640 = vmatpush1.bf16.msra.mxu0 0
        %5641 = vmatprep.subr.bf16.mxu0 0
        %5642 = vmatpush1.bf16.msra.mxu0 0
        %5643 = vmatprep.subr.bf16.mxu0 0
        %5644 = vmatpush1.bf16.msra.mxu0 0
        %5645 = vmatprep.subr.bf16.mxu0 0
        %5646 = vmatpush1.bf16.msra.mxu0 0
        %5647 = vmatprep.subr.bf16.mxu0 0
        %5648 = vmatpush1.bf16.msra.mxu0 0
        %5649 = vmatprep.mubr.bf16.mxu0 0
        %5650 = vmatmul.mubr.bf16.gmra.mrb[0].mxu0 %v5459
        %v5651 = vpop.f32.mrb[0].mxu0
        %v5652 = vadd.f32 %v5441, %v5651
        %v5653 = vpop.f32.mrb[0].mxu0
        %v5654 = vpop.f32.mrb[0].mxu0
        %v5655 = vpop.f32.mrb[0].mxu0
        %5656 = vdwg.mxu0
        %v5661 = vlaneseq
        %v5662 = vshrl.u32 %v5661, 7
        %v5663 = vsub.s32 0, %v5662
        %v5664 = vrot.slane %v5389, %v5663
        %v5665 = vlaneseq
        %v5666 = vshrl.u32 %v5665, 7
        %v5667 = vsub.s32 0, %v5666
        %v5668 = vrot.slane %v5390, %v5667
        %v5669 = vlaneseq
        %v5670 = vshrl.u32 %v5669, 7
        %v5671 = vsub.s32 0, %v5670
        %v5672 = vrot.slane %v5391, %v5671
        %v5673 = vlaneseq
        %v5674 = vshrl.u32 %v5673, 7
        %v5675 = vsub.s32 0, %v5674
        %v5676 = vrot.slane %v5392, %v5675
        %v5685 = vunpack.c.l.b16 %v5372
        %v5686 = vunpack.c.l.b16 %v5373
        %v5687 = vunpack.c.l.b16 %v5374
        %v5688 = vunpack.c.l.b16 %v5375
        %v5689 = vpack.c.b16 %v5686, %v5685
        %v5690 = vpack.c.b16 %v5688, %v5687
        %5693 = vmatprep.subr.bf16.mxu0 0
        %5694 = vmatpush1.bf16.msra.mxu0 %v5689
        %5695 = vmatprep.subr.bf16.mxu0 0
        %5696 = vmatpush1.bf16.msra.mxu0 %v5690
        %5697 = vmatprep.subr.bf16.mxu0 0
        %5698 = vmatpush1.bf16.msra.mxu0 0
        %5699 = vmatprep.subr.bf16.mxu0 0
        %5700 = vmatpush1.bf16.msra.mxu0 0
        %5701 = vmatprep.subr.bf16.mxu0 0
        %5702 = vmatpush1.bf16.msra.mxu0 0
        %5703 = vmatprep.subr.bf16.mxu0 0
        %5704 = vmatpush1.bf16.msra.mxu0 0
        %5705 = vmatprep.subr.bf16.mxu0 0
        %5706 = vmatpush1.bf16.msra.mxu0 0
        %5707 = vmatprep.subr.bf16.mxu0 0
        %5708 = vmatpush1.bf16.msra.mxu0 0
        %5709 = vmatprep.subr.bf16.mxu0 0
        %5710 = vmatpush1.bf16.msra.mxu0 0
        %5711 = vmatprep.subr.bf16.mxu0 0
        %5712 = vmatpush1.bf16.msra.mxu0 0
        %5713 = vmatprep.subr.bf16.mxu0 0
        %5714 = vmatpush1.bf16.msra.mxu0 0
        %5715 = vmatprep.subr.bf16.mxu0 0
        %5716 = vmatpush1.bf16.msra.mxu0 0
        %5717 = vmatprep.subr.bf16.mxu0 0
        %5718 = vmatpush1.bf16.msra.mxu0 0
        %5719 = vmatprep.subr.bf16.mxu0 0
        %5720 = vmatpush1.bf16.msra.mxu0 0
        %5721 = vmatprep.subr.bf16.mxu0 0
        %5722 = vmatpush1.bf16.msra.mxu0 0
        %5723 = vmatprep.subr.bf16.mxu0 0
        %5724 = vmatpush1.bf16.msra.mxu0 0
        %5725 = vmatprep.mubr.bf16.mxu0 0
        %5726 = vmatmul.mubr.bf16.gmra.mrb[0].mxu0 %v2625
        %v5727 = vpop.f32.mrb[0].mxu0
        %v5728 = vadd.f32 %v5664, %v5727
        %v5729 = vpop.f32.mrb[0].mxu0
        %v5730 = vpop.f32.mrb[0].mxu0
        %v5731 = vpop.f32.mrb[0].mxu0
        %5732 = vdwg.mxu0
        %v5737 = vunpack.c.l.b16 %v5376
        %v5738 = vunpack.c.l.b16 %v5377
        %v5739 = vunpack.c.l.b16 %v5378
        %v5740 = vunpack.c.l.b16 %v5379
        %v5741 = vpack.c.b16 %v5738, %v5737
        %v5742 = vpack.c.b16 %v5740, %v5739
        %5745 = vmatprep.subr.bf16.mxu0 0
        %5746 = vmatpush1.bf16.msra.mxu0 %v5741
        %5747 = vmatprep.subr.bf16.mxu0 0
        %5748 = vmatpush1.bf16.msra.mxu0 %v5742
        %5749 = vmatprep.subr.bf16.mxu0 0
        %5750 = vmatpush1.bf16.msra.mxu0 0
        %5751 = vmatprep.subr.bf16.mxu0 0
        %5752 = vmatpush1.bf16.msra.mxu0 0
        %5753 = vmatprep.subr.bf16.mxu0 0
        %5754 = vmatpush1.bf16.msra.mxu0 0
        %5755 = vmatprep.subr.bf16.mxu0 0
        %5756 = vmatpush1.bf16.msra.mxu0 0
        %5757 = vmatprep.subr.bf16.mxu0 0
        %5758 = vmatpush1.bf16.msra.mxu0 0
        %5759 = vmatprep.subr.bf16.mxu0 0
        %5760 = vmatpush1.bf16.msra.mxu0 0
        %5761 = vmatprep.subr.bf16.mxu0 0
        %5762 = vmatpush1.bf16.msra.mxu0 0
        %5763 = vmatprep.subr.bf16.mxu0 0
        %5764 = vmatpush1.bf16.msra.mxu0 0
        %5765 = vmatprep.subr.bf16.mxu0 0
        %5766 = vmatpush1.bf16.msra.mxu0 0
        %5767 = vmatprep.subr.bf16.mxu0 0
        %5768 = vmatpush1.bf16.msra.mxu0 0
        %5769 = vmatprep.subr.bf16.mxu0 0
        %5770 = vmatpush1.bf16.msra.mxu0 0
        %5771 = vmatprep.subr.bf16.mxu0 0
        %5772 = vmatpush1.bf16.msra.mxu0 0
        %5773 = vmatprep.subr.bf16.mxu0 0
        %5774 = vmatpush1.bf16.msra.mxu0 0
        %5775 = vmatprep.subr.bf16.mxu0 0
        %5776 = vmatpush1.bf16.msra.mxu0 0
        %5777 = vmatprep.mubr.bf16.mxu0 0
        %5778 = vmatmul.mubr.bf16.gmra.mrb[0].mxu0 %v2625
        %v5779 = vpop.f32.mrb[0].mxu0
        %v5780 = vadd.f32 %v5668, %v5779
        %v5781 = vpop.f32.mrb[0].mxu0
        %v5782 = vpop.f32.mrb[0].mxu0
        %v5783 = vpop.f32.mrb[0].mxu0
        %5784 = vdwg.mxu0
        %v5789 = vunpack.c.l.b16 %v5380
        %v5790 = vunpack.c.l.b16 %v5381
        %v5791 = vunpack.c.l.b16 %v5382
        %v5792 = vunpack.c.l.b16 %v5383
        %v5793 = vpack.c.b16 %v5790, %v5789
        %v5794 = vpack.c.b16 %v5792, %v5791
        %5797 = vmatprep.subr.bf16.mxu0 0
        %5798 = vmatpush1.bf16.msra.mxu0 %v5793
        %5799 = vmatprep.subr.bf16.mxu0 0
        %5800 = vmatpush1.bf16.msra.mxu0 %v5794
        %5801 = vmatprep.subr.bf16.mxu0 0
        %5802 = vmatpush1.bf16.msra.mxu0 0
        %5803 = vmatprep.subr.bf16.mxu0 0
        %5804 = vmatpush1.bf16.msra.mxu0 0
        %5805 = vmatprep.subr.bf16.mxu0 0
        %5806 = vmatpush1.bf16.msra.mxu0 0
        %5807 = vmatprep.subr.bf16.mxu0 0
        %5808 = vmatpush1.bf16.msra.mxu0 0
        %5809 = vmatprep.subr.bf16.mxu0 0
        %5810 = vmatpush1.bf16.msra.mxu0 0
        %5811 = vmatprep.subr.bf16.mxu0 0
        %5812 = vmatpush1.bf16.msra.mxu0 0
        %5813 = vmatprep.subr.bf16.mxu0 0
        %5814 = vmatpush1.bf16.msra.mxu0 0
        %5815 = vmatprep.subr.bf16.mxu0 0
        %5816 = vmatpush1.bf16.msra.mxu0 0
        %5817 = vmatprep.subr.bf16.mxu0 0
        %5818 = vmatpush1.bf16.msra.mxu0 0
        %5819 = vmatprep.subr.bf16.mxu0 0
        %5820 = vmatpush1.bf16.msra.mxu0 0
        %5821 = vmatprep.subr.bf16.mxu0 0
        %5822 = vmatpush1.bf16.msra.mxu0 0
        %5823 = vmatprep.subr.bf16.mxu0 0
        %5824 = vmatpush1.bf16.msra.mxu0 0
        %5825 = vmatprep.subr.bf16.mxu0 0
        %5826 = vmatpush1.bf16.msra.mxu0 0
        %5827 = vmatprep.subr.bf16.mxu0 0
        %5828 = vmatpush1.bf16.msra.mxu0 0
        %5829 = vmatprep.mubr.bf16.mxu0 0
        %5830 = vmatmul.mubr.bf16.gmra.mrb[0].mxu0 %v2625
        %v5831 = vpop.f32.mrb[0].mxu0
        %v5832 = vadd.f32 %v5672, %v5831
        %v5833 = vpop.f32.mrb[0].mxu0
        %v5834 = vpop.f32.mrb[0].mxu0
        %v5835 = vpop.f32.mrb[0].mxu0
        %5836 = vdwg.mxu0
        %v5841 = vunpack.c.l.b16 %v5384
        %v5842 = vunpack.c.l.b16 %v5385
        %v5843 = vunpack.c.l.b16 %v5386
        %v5844 = vunpack.c.l.b16 %v5387
        %v5845 = vpack.c.b16 %v5842, %v5841
        %v5846 = vpack.c.b16 %v5844, %v5843
        %5849 = vmatprep.subr.bf16.mxu0 0
        %5850 = vmatpush1.bf16.msra.mxu0 %v5845
        %5851 = vmatprep.subr.bf16.mxu0 0
        %5852 = vmatpush1.bf16.msra.mxu0 %v5846
        %5853 = vmatprep.subr.bf16.mxu0 0
        %5854 = vmatpush1.bf16.msra.mxu0 0
        %5855 = vmatprep.subr.bf16.mxu0 0
        %5856 = vmatpush1.bf16.msra.mxu0 0
        %5857 = vmatprep.subr.bf16.mxu0 0
        %5858 = vmatpush1.bf16.msra.mxu0 0
        %5859 = vmatprep.subr.bf16.mxu0 0
        %5860 = vmatpush1.bf16.msra.mxu0 0
        %5861 = vmatprep.subr.bf16.mxu0 0
        %5862 = vmatpush1.bf16.msra.mxu0 0
        %5863 = vmatprep.subr.bf16.mxu0 0
        %5864 = vmatpush1.bf16.msra.mxu0 0
        %5865 = vmatprep.subr.bf16.mxu0 0
        %5866 = vmatpush1.bf16.msra.mxu0 0
        %5867 = vmatprep.subr.bf16.mxu0 0
        %5868 = vmatpush1.bf16.msra.mxu0 0
        %5869 = vmatprep.subr.bf16.mxu0 0
        %5870 = vmatpush1.bf16.msra.mxu0 0
        %5871 = vmatprep.subr.bf16.mxu0 0
        %5872 = vmatpush1.bf16.msra.mxu0 0
        %5873 = vmatprep.subr.bf16.mxu0 0
        %5874 = vmatpush1.bf16.msra.mxu0 0
        %5875 = vmatprep.subr.bf16.mxu0 0
        %5876 = vmatpush1.bf16.msra.mxu0 0
        %5877 = vmatprep.subr.bf16.mxu0 0
        %5878 = vmatpush1.bf16.msra.mxu0 0
        %5879 = vmatprep.subr.bf16.mxu0 0
        %5880 = vmatpush1.bf16.msra.mxu0 0
        %5881 = vmatprep.mubr.bf16.mxu0 0
        %5882 = vmatmul.mubr.bf16.gmra.mrb[0].mxu0 %v2625
        %v5883 = vpop.f32.mrb[0].mxu0
        %v5884 = vadd.f32 %v5676, %v5883
        %v5885 = vpop.f32.mrb[0].mxu0
        %v5886 = vpop.f32.mrb[0].mxu0
        %v5887 = vpop.f32.mrb[0].mxu0
        %5888 = vdwg.mxu0
        %v5893 = vlaneseq
        %v5894 = vshrl.u32 %v5893, 7
        %v5895 = vsub.s32 0, %v5894
        %v5896 = vrot.slane %v5411, %v5895
        %v5897 = vlaneseq
        %v5898 = vshrl.u32 %v5897, 7
        %v5899 = vsub.s32 0, %v5898
        %v5900 = vrot.slane %v5412, %v5899
        %v5901 = vlaneseq
        %v5902 = vshrl.u32 %v5901, 7
        %v5903 = vsub.s32 0, %v5902
        %v5904 = vrot.slane %v5413, %v5903
        %v5905 = vlaneseq
        %v5906 = vshrl.u32 %v5905, 7
        %v5907 = vsub.s32 0, %v5906
        %v5908 = vrot.slane %v5414, %v5907
        %v5917 = vunpack.c.l.b16 %v5394
        %v5918 = vunpack.c.l.b16 %v5395
        %v5919 = vunpack.c.l.b16 %v5396
        %v5920 = vunpack.c.l.b16 %v5397
        %v5921 = vpack.c.b16 %v5918, %v5917
        %v5922 = vpack.c.b16 %v5920, %v5919
        %5925 = vmatprep.subr.bf16.mxu0 0
        %5926 = vmatpush1.bf16.msra.mxu0 %v5921
        %5927 = vmatprep.subr.bf16.mxu0 0
        %5928 = vmatpush1.bf16.msra.mxu0 %v5922
        %5929 = vmatprep.subr.bf16.mxu0 0
        %5930 = vmatpush1.bf16.msra.mxu0 0
        %5931 = vmatprep.subr.bf16.mxu0 0
        %5932 = vmatpush1.bf16.msra.mxu0 0
        %5933 = vmatprep.subr.bf16.mxu0 0
        %5934 = vmatpush1.bf16.msra.mxu0 0
        %5935 = vmatprep.subr.bf16.mxu0 0
        %5936 = vmatpush1.bf16.msra.mxu0 0
        %5937 = vmatprep.subr.bf16.mxu0 0
        %5938 = vmatpush1.bf16.msra.mxu0 0
        %5939 = vmatprep.subr.bf16.mxu0 0
        %5940 = vmatpush1.bf16.msra.mxu0 0
        %5941 = vmatprep.subr.bf16.mxu0 0
        %5942 = vmatpush1.bf16.msra.mxu0 0
        %5943 = vmatprep.subr.bf16.mxu0 0
        %5944 = vmatpush1.bf16.msra.mxu0 0
        %5945 = vmatprep.subr.bf16.mxu0 0
        %5946 = vmatpush1.bf16.msra.mxu0 0
        %5947 = vmatprep.subr.bf16.mxu0 0
        %5948 = vmatpush1.bf16.msra.mxu0 0
        %5949 = vmatprep.subr.bf16.mxu0 0
        %5950 = vmatpush1.bf16.msra.mxu0 0
        %5951 = vmatprep.subr.bf16.mxu0 0
        %5952 = vmatpush1.bf16.msra.mxu0 0
        %5953 = vmatprep.subr.bf16.mxu0 0
        %5954 = vmatpush1.bf16.msra.mxu0 0
        %5955 = vmatprep.subr.bf16.mxu0 0
        %5956 = vmatpush1.bf16.msra.mxu0 0
        %5957 = vmatprep.mubr.bf16.mxu0 0
        %5958 = vmatmul.mubr.bf16.gmra.mrb[0].mxu0 %v2625
        %v5959 = vpop.f32.mrb[0].mxu0
        %v5960 = vadd.f32 %v5896, %v5959
        %v5961 = vpop.f32.mrb[0].mxu0
        %v5962 = vpop.f32.mrb[0].mxu0
        %v5963 = vpop.f32.mrb[0].mxu0
        %5964 = vdwg.mxu0
        %v5969 = vunpack.c.l.b16 %v5398
        %v5970 = vunpack.c.l.b16 %v5399
        %v5971 = vunpack.c.l.b16 %v5400
        %v5972 = vunpack.c.l.b16 %v5401
        %v5973 = vpack.c.b16 %v5970, %v5969
        %v5974 = vpack.c.b16 %v5972, %v5971
        %5977 = vmatprep.subr.bf16.mxu0 0
        %5978 = vmatpush1.bf16.msra.mxu0 %v5973
        %5979 = vmatprep.subr.bf16.mxu0 0
        %5980 = vmatpush1.bf16.msra.mxu0 %v5974
        %5981 = vmatprep.subr.bf16.mxu0 0
        %5982 = vmatpush1.bf16.msra.mxu0 0
        %5983 = vmatprep.subr.bf16.mxu0 0
        %5984 = vmatpush1.bf16.msra.mxu0 0
        %5985 = vmatprep.subr.bf16.mxu0 0
        %5986 = vmatpush1.bf16.msra.mxu0 0
        %5987 = vmatprep.subr.bf16.mxu0 0
        %5988 = vmatpush1.bf16.msra.mxu0 0
        %5989 = vmatprep.subr.bf16.mxu0 0
        %5990 = vmatpush1.bf16.msra.mxu0 0
        %5991 = vmatprep.subr.bf16.mxu0 0
        %5992 = vmatpush1.bf16.msra.mxu0 0
        %5993 = vmatprep.subr.bf16.mxu0 0
        %5994 = vmatpush1.bf16.msra.mxu0 0
        %5995 = vmatprep.subr.bf16.mxu0 0
        %5996 = vmatpush1.bf16.msra.mxu0 0
        %5997 = vmatprep.subr.bf16.mxu0 0
        %5998 = vmatpush1.bf16.msra.mxu0 0
        %5999 = vmatprep.subr.bf16.mxu0 0
        %6000 = vmatpush1.bf16.msra.mxu0 0
        %6001 = vmatprep.subr.bf16.mxu0 0
        %6002 = vmatpush1.bf16.msra.mxu0 0
        %6003 = vmatprep.subr.bf16.mxu0 0
        %6004 = vmatpush1.bf16.msra.mxu0 0
        %6005 = vmatprep.subr.bf16.mxu0 0
        %6006 = vmatpush1.bf16.msra.mxu0 0
        %6007 = vmatprep.subr.bf16.mxu0 0
        %6008 = vmatpush1.bf16.msra.mxu0 0
        %6009 = vmatprep.mubr.bf16.mxu0 0
        %6010 = vmatmul.mubr.bf16.gmra.mrb[0].mxu0 %v2625
        %v6011 = vpop.f32.mrb[0].mxu0
        %v6012 = vadd.f32 %v5900, %v6011
        %v6013 = vpop.f32.mrb[0].mxu0
        %v6014 = vpop.f32.mrb[0].mxu0
        %v6015 = vpop.f32.mrb[0].mxu0
        %6016 = vdwg.mxu0
        %v6021 = vunpack.c.l.b16 %v5402
        %v6022 = vunpack.c.l.b16 %v5403
        %v6023 = vunpack.c.l.b16 %v5404
        %v6024 = vunpack.c.l.b16 %v5405
        %v6025 = vpack.c.b16 %v6022, %v6021
        %v6026 = vpack.c.b16 %v6024, %v6023
        %6029 = vmatprep.subr.bf16.mxu0 0
        %6030 = vmatpush1.bf16.msra.mxu0 %v6025
        %6031 = vmatprep.subr.bf16.mxu0 0
        %6032 = vmatpush1.bf16.msra.mxu0 %v6026
        %6033 = vmatprep.subr.bf16.mxu0 0
        %6034 = vmatpush1.bf16.msra.mxu0 0
        %6035 = vmatprep.subr.bf16.mxu0 0
        %6036 = vmatpush1.bf16.msra.mxu0 0
        %6037 = vmatprep.subr.bf16.mxu0 0
        %6038 = vmatpush1.bf16.msra.mxu0 0
        %6039 = vmatprep.subr.bf16.mxu0 0
        %6040 = vmatpush1.bf16.msra.mxu0 0
        %6041 = vmatprep.subr.bf16.mxu0 0
        %6042 = vmatpush1.bf16.msra.mxu0 0
        %6043 = vmatprep.subr.bf16.mxu0 0
        %6044 = vmatpush1.bf16.msra.mxu0 0
        %6045 = vmatprep.subr.bf16.mxu0 0
        %6046 = vmatpush1.bf16.msra.mxu0 0
        %6047 = vmatprep.subr.bf16.mxu0 0
        %6048 = vmatpush1.bf16.msra.mxu0 0
        %6049 = vmatprep.subr.bf16.mxu0 0
        %6050 = vmatpush1.bf16.msra.mxu0 0
        %6051 = vmatprep.subr.bf16.mxu0 0
        %6052 = vmatpush1.bf16.msra.mxu0 0
        %6053 = vmatprep.subr.bf16.mxu0 0
        %6054 = vmatpush1.bf16.msra.mxu0 0
        %6055 = vmatprep.subr.bf16.mxu0 0
        %6056 = vmatpush1.bf16.msra.mxu0 0
        %6057 = vmatprep.subr.bf16.mxu0 0
        %6058 = vmatpush1.bf16.msra.mxu0 0
        %6059 = vmatprep.subr.bf16.mxu0 0
        %6060 = vmatpush1.bf16.msra.mxu0 0
        %6061 = vmatprep.mubr.bf16.mxu0 0
        %6062 = vmatmul.mubr.bf16.gmra.mrb[0].mxu0 %v2625
        %v6063 = vpop.f32.mrb[0].mxu0
        %v6064 = vadd.f32 %v5904, %v6063
        %v6065 = vpop.f32.mrb[0].mxu0
        %v6066 = vpop.f32.mrb[0].mxu0
        %v6067 = vpop.f32.mrb[0].mxu0
        %6068 = vdwg.mxu0
        %v6073 = vunpack.c.l.b16 %v5406
        %v6074 = vunpack.c.l.b16 %v5407
        %v6075 = vunpack.c.l.b16 %v5408
        %v6076 = vunpack.c.l.b16 %v5409
        %v6077 = vpack.c.b16 %v6074, %v6073
        %v6078 = vpack.c.b16 %v6076, %v6075
        %6081 = vmatprep.subr.bf16.mxu0 0
        %6082 = vmatpush1.bf16.msra.mxu0 %v6077
        %6083 = vmatprep.subr.bf16.mxu0 0
        %6084 = vmatpush1.bf16.msra.mxu0 %v6078
        %6085 = vmatprep.subr.bf16.mxu0 0
        %6086 = vmatpush1.bf16.msra.mxu0 0
        %6087 = vmatprep.subr.bf16.mxu0 0
        %6088 = vmatpush1.bf16.msra.mxu0 0
        %6089 = vmatprep.subr.bf16.mxu0 0
        %6090 = vmatpush1.bf16.msra.mxu0 0
        %6091 = vmatprep.subr.bf16.mxu0 0
        %6092 = vmatpush1.bf16.msra.mxu0 0
        %6093 = vmatprep.subr.bf16.mxu0 0
        %6094 = vmatpush1.bf16.msra.mxu0 0
        %6095 = vmatprep.subr.bf16.mxu0 0
        %6096 = vmatpush1.bf16.msra.mxu0 0
        %6097 = vmatprep.subr.bf16.mxu0 0
        %6098 = vmatpush1.bf16.msra.mxu0 0
        %6099 = vmatprep.subr.bf16.mxu0 0
        %6100 = vmatpush1.bf16.msra.mxu0 0
        %6101 = vmatprep.subr.bf16.mxu0 0
        %6102 = vmatpush1.bf16.msra.mxu0 0
        %6103 = vmatprep.subr.bf16.mxu0 0
        %6104 = vmatpush1.bf16.msra.mxu0 0
        %6105 = vmatprep.subr.bf16.mxu0 0
        %6106 = vmatpush1.bf16.msra.mxu0 0
        %6107 = vmatprep.subr.bf16.mxu0 0
        %6108 = vmatpush1.bf16.msra.mxu0 0
        %6109 = vmatprep.subr.bf16.mxu0 0
        %6110 = vmatpush1.bf16.msra.mxu0 0
        %6111 = vmatprep.subr.bf16.mxu0 0
        %6112 = vmatpush1.bf16.msra.mxu0 0
        %6113 = vmatprep.mubr.bf16.mxu0 0
        %6114 = vmatmul.mubr.bf16.gmra.mrb[0].mxu0 %v2625
        %v6115 = vpop.f32.mrb[0].mxu0
        %v6116 = vadd.f32 %v5908, %v6115
        %v6117 = vpop.f32.mrb[0].mxu0
        %v6118 = vpop.f32.mrb[0].mxu0
        %v6119 = vpop.f32.mrb[0].mxu0
        %6120 = vdwg.mxu0
        %v6121 = vpack.c.bf16 %v5496, %v5496
        %v6122 = vpack.c.bf16 %v5548, %v5548
        %v6123 = vpack.c.bf16 %v5600, %v5600
        %v6124 = vpack.c.bf16 %v5652, %v5652
        %v6125 = vpack.c.bf16 %v5728, %v5728
        %v6126 = vpack.c.bf16 %v5780, %v5780
        %v6127 = vpack.c.bf16 %v5832, %v5832
        %v6128 = vpack.c.bf16 %v5884, %v5884
        %v6130 = vsel %vm1626, %v6121, 0
        %v6133 = vsel %vm1626, %v6125, 0
        %6135 = vmatprep.subr.bf16.mxu0 0
        %6136 = vmatpush1.bf16.xpose.msra.mxu0 %v6133
        %6137 = vmatprep.subr.bf16.mxu0 0
        %6138 = vmatpush1.bf16.xpose.msra.mxu0 0
        %6139 = vmatprep.subr.bf16.mxu0 0
        %6140 = vmatpush1.bf16.xpose.msra.mxu0 0
        %6141 = vmatprep.subr.bf16.mxu0 0
        %6142 = vmatpush1.bf16.xpose.msra.mxu0 0
        %6143 = vmatprep.subr.bf16.mxu0 0
        %6144 = vmatpush1.bf16.xpose.msra.mxu0 0
        %6145 = vmatprep.subr.bf16.mxu0 0
        %6146 = vmatpush1.bf16.xpose.msra.mxu0 0
        %6147 = vmatprep.subr.bf16.mxu0 0
        %6148 = vmatpush1.bf16.xpose.msra.mxu0 0
        %6149 = vmatprep.subr.bf16.mxu0 0
        %6150 = vmatpush1.bf16.xpose.msra.mxu0 0
        %6151 = vmatprep.subr.bf16.mxu0 0
        %6152 = vmatpush1.bf16.xpose.msra.mxu0 0
        %6153 = vmatprep.subr.bf16.mxu0 0
        %6154 = vmatpush1.bf16.xpose.msra.mxu0 0
        %6155 = vmatprep.subr.bf16.mxu0 0
        %6156 = vmatpush1.bf16.xpose.msra.mxu0 0
        %6157 = vmatprep.subr.bf16.mxu0 0
        %6158 = vmatpush1.bf16.xpose.msra.mxu0 0
        %6159 = vmatprep.subr.bf16.mxu0 0
        %6160 = vmatpush1.bf16.xpose.msra.mxu0 0
        %6161 = vmatprep.subr.bf16.mxu0 0
        %6162 = vmatpush1.bf16.xpose.msra.mxu0 0
        %6163 = vmatprep.subr.bf16.mxu0 0
        %6164 = vmatpush1.bf16.xpose.msra.mxu0 0
        %6165 = vmatprep.subr.bf16.mxu0 0
        %6166 = vmatpush1.bf16.xpose.msra.mxu0 0
        %6167 = vmatprep.mubr.bf16.mxu0 0
        %6168 = vmatmul.mubr.bf16.gmra.mrb[0].mxu0 %v6130
        %v6169 = vpop.f32.mrb[0].mxu0
        %v6170 = vadd.f32 0.0, %v6169
        %v6171 = vpop.f32.mrb[0].mxu0
        %v6172 = vpop.f32.mrb[0].mxu0
        %v6173 = vpop.f32.mrb[0].mxu0
        %6174 = vdwg.mxu0
        %v6176 = vsel %vm1626, %v6122, 0
        %v6179 = vsel %vm1626, %v6126, 0
        %6181 = vmatprep.subr.bf16.mxu0 0
        %6182 = vmatpush1.bf16.xpose.msra.mxu0 %v6179
        %6183 = vmatprep.subr.bf16.mxu0 0
        %6184 = vmatpush1.bf16.xpose.msra.mxu0 0
        %6185 = vmatprep.subr.bf16.mxu0 0
        %6186 = vmatpush1.bf16.xpose.msra.mxu0 0
        %6187 = vmatprep.subr.bf16.mxu0 0
        %6188 = vmatpush1.bf16.xpose.msra.mxu0 0
        %6189 = vmatprep.subr.bf16.mxu0 0
        %6190 = vmatpush1.bf16.xpose.msra.mxu0 0
        %6191 = vmatprep.subr.bf16.mxu0 0
        %6192 = vmatpush1.bf16.xpose.msra.mxu0 0
        %6193 = vmatprep.subr.bf16.mxu0 0
        %6194 = vmatpush1.bf16.xpose.msra.mxu0 0
        %6195 = vmatprep.subr.bf16.mxu0 0
        %6196 = vmatpush1.bf16.xpose.msra.mxu0 0
        %6197 = vmatprep.subr.bf16.mxu0 0
        %6198 = vmatpush1.bf16.xpose.msra.mxu0 0
        %6199 = vmatprep.subr.bf16.mxu0 0
        %6200 = vmatpush1.bf16.xpose.msra.mxu0 0
        %6201 = vmatprep.subr.bf16.mxu0 0
        %6202 = vmatpush1.bf16.xpose.msra.mxu0 0
        %6203 = vmatprep.subr.bf16.mxu0 0
        %6204 = vmatpush1.bf16.xpose.msra.mxu0 0
        %6205 = vmatprep.subr.bf16.mxu0 0
        %6206 = vmatpush1.bf16.xpose.msra.mxu0 0
        %6207 = vmatprep.subr.bf16.mxu0 0
        %6208 = vmatpush1.bf16.xpose.msra.mxu0 0
        %6209 = vmatprep.subr.bf16.mxu0 0
        %6210 = vmatpush1.bf16.xpose.msra.mxu0 0
        %6211 = vmatprep.subr.bf16.mxu0 0
        %6212 = vmatpush1.bf16.xpose.msra.mxu0 0
        %6213 = vmatprep.mubr.bf16.mxu0 0
        %6214 = vmatmul.mubr.bf16.gmra.mrb[0].mxu0 %v6176
        %v6215 = vpop.f32.mrb[0].mxu0
        %v6216 = vadd.f32 0.0, %v6215
        %v6217 = vpop.f32.mrb[0].mxu0
        %v6218 = vpop.f32.mrb[0].mxu0
        %v6219 = vpop.f32.mrb[0].mxu0
        %6220 = vdwg.mxu0
        %v6222 = vsel %vm1626, %v6123, 0
        %v6225 = vsel %vm1626, %v6127, 0
        %6227 = vmatprep.subr.bf16.mxu0 0
        %6228 = vmatpush1.bf16.xpose.msra.mxu0 %v6225
        %6229 = vmatprep.subr.bf16.mxu0 0
        %6230 = vmatpush1.bf16.xpose.msra.mxu0 0
        %6231 = vmatprep.subr.bf16.mxu0 0
        %6232 = vmatpush1.bf16.xpose.msra.mxu0 0
        %6233 = vmatprep.subr.bf16.mxu0 0
        %6234 = vmatpush1.bf16.xpose.msra.mxu0 0
        %6235 = vmatprep.subr.bf16.mxu0 0
        %6236 = vmatpush1.bf16.xpose.msra.mxu0 0
        %6237 = vmatprep.subr.bf16.mxu0 0
        %6238 = vmatpush1.bf16.xpose.msra.mxu0 0
        %6239 = vmatprep.subr.bf16.mxu0 0
        %6240 = vmatpush1.bf16.xpose.msra.mxu0 0
        %6241 = vmatprep.subr.bf16.mxu0 0
        %6242 = vmatpush1.bf16.xpose.msra.mxu0 0
        %6243 = vmatprep.subr.bf16.mxu0 0
        %6244 = vmatpush1.bf16.xpose.msra.mxu0 0
        %6245 = vmatprep.subr.bf16.mxu0 0
        %6246 = vmatpush1.bf16.xpose.msra.mxu0 0
        %6247 = vmatprep.subr.bf16.mxu0 0
        %6248 = vmatpush1.bf16.xpose.msra.mxu0 0
        %6249 = vmatprep.subr.bf16.mxu0 0
        %6250 = vmatpush1.bf16.xpose.msra.mxu0 0
        %6251 = vmatprep.subr.bf16.mxu0 0
        %6252 = vmatpush1.bf16.xpose.msra.mxu0 0
        %6253 = vmatprep.subr.bf16.mxu0 0
        %6254 = vmatpush1.bf16.xpose.msra.mxu0 0
        %6255 = vmatprep.subr.bf16.mxu0 0
        %6256 = vmatpush1.bf16.xpose.msra.mxu0 0
        %6257 = vmatprep.subr.bf16.mxu0 0
        %6258 = vmatpush1.bf16.xpose.msra.mxu0 0
        %6259 = vmatprep.mubr.bf16.mxu0 0
        %6260 = vmatmul.mubr.bf16.gmra.mrb[0].mxu0 %v6222
        %v6261 = vpop.f32.mrb[0].mxu0
        %v6262 = vadd.f32 0.0, %v6261
        %v6263 = vpop.f32.mrb[0].mxu0
        %v6264 = vpop.f32.mrb[0].mxu0
        %v6265 = vpop.f32.mrb[0].mxu0
        %6266 = vdwg.mxu0
        %v6268 = vsel %vm1626, %v6124, 0
        %v6271 = vsel %vm1626, %v6128, 0
        %6273 = vmatprep.subr.bf16.mxu0 0
        %6274 = vmatpush1.bf16.xpose.msra.mxu0 %v6271
        %6275 = vmatprep.subr.bf16.mxu0 0
        %6276 = vmatpush1.bf16.xpose.msra.mxu0 0
        %6277 = vmatprep.subr.bf16.mxu0 0
        %6278 = vmatpush1.bf16.xpose.msra.mxu0 0
        %6279 = vmatprep.subr.bf16.mxu0 0
        %6280 = vmatpush1.bf16.xpose.msra.mxu0 0
        %6281 = vmatprep.subr.bf16.mxu0 0
        %6282 = vmatpush1.bf16.xpose.msra.mxu0 0
        %6283 = vmatprep.subr.bf16.mxu0 0
        %6284 = vmatpush1.bf16.xpose.msra.mxu0 0
        %6285 = vmatprep.subr.bf16.mxu0 0
        %6286 = vmatpush1.bf16.xpose.msra.mxu0 0
        %6287 = vmatprep.subr.bf16.mxu0 0
        %6288 = vmatpush1.bf16.xpose.msra.mxu0 0
        %6289 = vmatprep.subr.bf16.mxu0 0
        %6290 = vmatpush1.bf16.xpose.msra.mxu0 0
        %6291 = vmatprep.subr.bf16.mxu0 0
        %6292 = vmatpush1.bf16.xpose.msra.mxu0 0
        %6293 = vmatprep.subr.bf16.mxu0 0
        %6294 = vmatpush1.bf16.xpose.msra.mxu0 0
        %6295 = vmatprep.subr.bf16.mxu0 0
        %6296 = vmatpush1.bf16.xpose.msra.mxu0 0
        %6297 = vmatprep.subr.bf16.mxu0 0
        %6298 = vmatpush1.bf16.xpose.msra.mxu0 0
        %6299 = vmatprep.subr.bf16.mxu0 0
        %6300 = vmatpush1.bf16.xpose.msra.mxu0 0
        %6301 = vmatprep.subr.bf16.mxu0 0
        %6302 = vmatpush1.bf16.xpose.msra.mxu0 0
        %6303 = vmatprep.subr.bf16.mxu0 0
        %6304 = vmatpush1.bf16.xpose.msra.mxu0 0
        %6305 = vmatprep.mubr.bf16.mxu0 0
        %6306 = vmatmul.mubr.bf16.gmra.mrb[0].mxu0 %v6268
        %v6307 = vpop.f32.mrb[0].mxu0
        %v6308 = vadd.f32 0.0, %v6307
        %v6309 = vpop.f32.mrb[0].mxu0
        %v6310 = vpop.f32.mrb[0].mxu0
        %v6311 = vpop.f32.mrb[0].mxu0
        %6312 = vdwg.mxu0
        %v6313 = vsel %vm3248, %v6170, -1e+09
        %v6314 = vsel %vm3248, %v6216, -1e+09
        %v6315 = vsel %vm3248, %v6262, -1e+09
        %v6316 = vsel %vm3248, %v6308, -1e+09
        %v6317 = vsel %vm1626, %v6313, -inf
        %6318 = vmax.xlane.f32.xlu0 %v6317
        %v6319 = vpop.xlane.xlu0 %6318
        %v6320 = vsel %vm1626, %v6314, -inf
        %6321 = vmax.xlane.f32.xlu0 %v6320
        %v6322 = vpop.xlane.xlu0 %6321
        %v6323 = vsel %vm1626, %v6315, -inf
        %6324 = vmax.xlane.f32.xlu0 %v6323
        %v6325 = vpop.xlane.xlu0 %6324
        %v6326 = vsel %vm1626, %v6316, -inf
        %6327 = vmax.xlane.f32.xlu0 %v6326
        %v6328 = vpop.xlane.xlu0 %6327
        %v6329 = vsub.f32 %v6313, %v6319
        %v6330 = vsub.f32 %v6314, %v6322
        %v6331 = vsub.f32 %v6315, %v6325
        %v6332 = vsub.f32 %v6316, %v6328
        %v6333 = vmul.f32 %v6329, 1.442695
        %v6334 = vpow.pop %v6333
        %v6335 = vmul.f32 %v6330, 1.442695
        %v6336 = vpow.pop %v6335
        %v6337 = vmul.f32 %v6331, 1.442695
        %v6338 = vpow.pop %v6337
        %v6339 = vmul.f32 %v6332, 1.442695
        %v6340 = vpow.pop %v6339
        %v6341 = vsel %vm1626, %v6334, 0.0
        %6342 = vadd.xlane.f32.xlu0 %v6341
        %v6343 = vpop.xlane.xlu0 %6342
        %v6344 = vsel %vm1626, %v6336, 0.0
        %6345 = vadd.xlane.f32.xlu0 %v6344
        %v6346 = vpop.xlane.xlu0 %6345
        %v6347 = vsel %vm1626, %v6338, 0.0
        %6348 = vadd.xlane.f32.xlu0 %v6347
        %v6349 = vpop.xlane.xlu0 %6348
        %v6350 = vsel %vm1626, %v6340, 0.0
        %6351 = vadd.xlane.f32.xlu0 %v6350
        %v6352 = vpop.xlane.xlu0 %6351
        %v6353 = vrcp.pop %v6343
        %v6354 = vrcp.pop %v6346
        %v6355 = vrcp.pop %v6349
        %v6356 = vrcp.pop %v6352
        %v6357 = vmul.f32 %v6334, %v6353
        %v6358 = vmul.f32 %v6336, %v6354
        %v6359 = vmul.f32 %v6338, %v6355
        %v6360 = vmul.f32 %v6340, %v6356
        %v6361 = vpack.c.bf16 %v6357, %v6357
        %v6362 = vpack.c.bf16 %v6358, %v6358
        %v6363 = vpack.c.bf16 %v6359, %v6359
        %v6364 = vpack.c.bf16 %v6360, %v6360
        %v6365 = vpack.c.bf16 %v5960, %v5960
        %v6366 = vpack.c.bf16 %v6012, %v6012
        %v6367 = vpack.c.bf16 %v6064, %v6064
        %v6368 = vpack.c.bf16 %v6116, %v6116
        %v6370 = vsel %vm1626, %v6361, 0
        %v6373 = vsel %vm1872, %v6365, 0
        %6375 = vmatprep.subr.bf16.mxu0 0
        %6376 = vmatpush1.bf16.msra.mxu0 %v6373
        %6377 = vmatprep.subr.bf16.mxu0 0
        %6378 = vmatpush1.bf16.msra.mxu0 0
        %6379 = vmatprep.subr.bf16.mxu0 0
        %6380 = vmatpush1.bf16.msra.mxu0 0
        %6381 = vmatprep.subr.bf16.mxu0 0
        %6382 = vmatpush1.bf16.msra.mxu0 0
        %6383 = vmatprep.subr.bf16.mxu0 0
        %6384 = vmatpush1.bf16.msra.mxu0 0
        %6385 = vmatprep.subr.bf16.mxu0 0
        %6386 = vmatpush1.bf16.msra.mxu0 0
        %6387 = vmatprep.subr.bf16.mxu0 0
        %6388 = vmatpush1.bf16.msra.mxu0 0
        %6389 = vmatprep.subr.bf16.mxu0 0
        %6390 = vmatpush1.bf16.msra.mxu0 0
        %6391 = vmatprep.subr.bf16.mxu0 0
        %6392 = vmatpush1.bf16.msra.mxu0 0
        %6393 = vmatprep.subr.bf16.mxu0 0
        %6394 = vmatpush1.bf16.msra.mxu0 0
        %6395 = vmatprep.subr.bf16.mxu0 0
        %6396 = vmatpush1.bf16.msra.mxu0 0
        %6397 = vmatprep.subr.bf16.mxu0 0
        %6398 = vmatpush1.bf16.msra.mxu0 0
        %6399 = vmatprep.subr.bf16.mxu0 0
        %6400 = vmatpush1.bf16.msra.mxu0 0
        %6401 = vmatprep.subr.bf16.mxu0 0
        %6402 = vmatpush1.bf16.msra.mxu0 0
        %6403 = vmatprep.subr.bf16.mxu0 0
        %6404 = vmatpush1.bf16.msra.mxu0 0
        %6405 = vmatprep.subr.bf16.mxu0 0
        %6406 = vmatpush1.bf16.msra.mxu0 0
        %6407 = vmatprep.mubr.bf16.mxu0 0
        %6408 = vmatmul.mubr.bf16.gmra.mrb[0].mxu0 %v6370
        %v6409 = vpop.f32.mrb[0].mxu0
        %v6410 = vadd.f32 0.0, %v6409
        %v6411 = vpop.f32.mrb[0].mxu0
        %v6412 = vpop.f32.mrb[0].mxu0
        %v6413 = vpop.f32.mrb[0].mxu0
        %6414 = vdwg.mxu0
        %v6416 = vsel %vm1626, %v6362, 0
        %v6419 = vsel %vm1872, %v6366, 0
        %6421 = vmatprep.subr.bf16.mxu0 0
        %6422 = vmatpush1.bf16.msra.mxu0 %v6419
        %6423 = vmatprep.subr.bf16.mxu0 0
        %6424 = vmatpush1.bf16.msra.mxu0 0
        %6425 = vmatprep.subr.bf16.mxu0 0
        %6426 = vmatpush1.bf16.msra.mxu0 0
        %6427 = vmatprep.subr.bf16.mxu0 0
        %6428 = vmatpush1.bf16.msra.mxu0 0
        %6429 = vmatprep.subr.bf16.mxu0 0
        %6430 = vmatpush1.bf16.msra.mxu0 0
        %6431 = vmatprep.subr.bf16.mxu0 0
        %6432 = vmatpush1.bf16.msra.mxu0 0
        %6433 = vmatprep.subr.bf16.mxu0 0
        %6434 = vmatpush1.bf16.msra.mxu0 0
        %6435 = vmatprep.subr.bf16.mxu0 0
        %6436 = vmatpush1.bf16.msra.mxu0 0
        %6437 = vmatprep.subr.bf16.mxu0 0
        %6438 = vmatpush1.bf16.msra.mxu0 0
        %6439 = vmatprep.subr.bf16.mxu0 0
        %6440 = vmatpush1.bf16.msra.mxu0 0
        %6441 = vmatprep.subr.bf16.mxu0 0
        %6442 = vmatpush1.bf16.msra.mxu0 0
        %6443 = vmatprep.subr.bf16.mxu0 0
        %6444 = vmatpush1.bf16.msra.mxu0 0
        %6445 = vmatprep.subr.bf16.mxu0 0
        %6446 = vmatpush1.bf16.msra.mxu0 0
        %6447 = vmatprep.subr.bf16.mxu0 0
        %6448 = vmatpush1.bf16.msra.mxu0 0
        %6449 = vmatprep.subr.bf16.mxu0 0
        %6450 = vmatpush1.bf16.msra.mxu0 0
        %6451 = vmatprep.subr.bf16.mxu0 0
        %6452 = vmatpush1.bf16.msra.mxu0 0
        %6453 = vmatprep.mubr.bf16.mxu0 0
        %6454 = vmatmul.mubr.bf16.gmra.mrb[0].mxu0 %v6416
        %v6455 = vpop.f32.mrb[0].mxu0
        %v6456 = vadd.f32 0.0, %v6455
        %v6457 = vpop.f32.mrb[0].mxu0
        %v6458 = vpop.f32.mrb[0].mxu0
        %v6459 = vpop.f32.mrb[0].mxu0
        %6460 = vdwg.mxu0
        %v6462 = vsel %vm1626, %v6363, 0
        %v6465 = vsel %vm1872, %v6367, 0
        %6467 = vmatprep.subr.bf16.mxu0 0
        %6468 = vmatpush1.bf16.msra.mxu0 %v6465
        %6469 = vmatprep.subr.bf16.mxu0 0
        %6470 = vmatpush1.bf16.msra.mxu0 0
        %6471 = vmatprep.subr.bf16.mxu0 0
        %6472 = vmatpush1.bf16.msra.mxu0 0
        %6473 = vmatprep.subr.bf16.mxu0 0
        %6474 = vmatpush1.bf16.msra.mxu0 0
        %6475 = vmatprep.subr.bf16.mxu0 0
        %6476 = vmatpush1.bf16.msra.mxu0 0
        %6477 = vmatprep.subr.bf16.mxu0 0
        %6478 = vmatpush1.bf16.msra.mxu0 0
        %6479 = vmatprep.subr.bf16.mxu0 0
        %6480 = vmatpush1.bf16.msra.mxu0 0
        %6481 = vmatprep.subr.bf16.mxu0 0
        %6482 = vmatpush1.bf16.msra.mxu0 0
        %6483 = vmatprep.subr.bf16.mxu0 0
        %6484 = vmatpush1.bf16.msra.mxu0 0
        %6485 = vmatprep.subr.bf16.mxu0 0
        %6486 = vmatpush1.bf16.msra.mxu0 0
        %6487 = vmatprep.subr.bf16.mxu0 0
        %6488 = vmatpush1.bf16.msra.mxu0 0
        %6489 = vmatprep.subr.bf16.mxu0 0
        %6490 = vmatpush1.bf16.msra.mxu0 0
        %6491 = vmatprep.subr.bf16.mxu0 0
        %6492 = vmatpush1.bf16.msra.mxu0 0
        %6493 = vmatprep.subr.bf16.mxu0 0
        %6494 = vmatpush1.bf16.msra.mxu0 0
        %6495 = vmatprep.subr.bf16.mxu0 0
        %6496 = vmatpush1.bf16.msra.mxu0 0
        %6497 = vmatprep.subr.bf16.mxu0 0
        %6498 = vmatpush1.bf16.msra.mxu0 0
        %6499 = vmatprep.mubr.bf16.mxu0 0
        %6500 = vmatmul.mubr.bf16.gmra.mrb[0].mxu0 %v6462
        %v6501 = vpop.f32.mrb[0].mxu0
        %v6502 = vadd.f32 0.0, %v6501
        %v6503 = vpop.f32.mrb[0].mxu0
        %v6504 = vpop.f32.mrb[0].mxu0
        %v6505 = vpop.f32.mrb[0].mxu0
        %6506 = vdwg.mxu0
        %v6508 = vsel %vm1626, %v6364, 0
        %v6511 = vsel %vm1872, %v6368, 0
        %6513 = vmatprep.subr.bf16.mxu0 0
        %6514 = vmatpush1.bf16.msra.mxu0 %v6511
        %6515 = vmatprep.subr.bf16.mxu0 0
        %6516 = vmatpush1.bf16.msra.mxu0 0
        %6517 = vmatprep.subr.bf16.mxu0 0
        %6518 = vmatpush1.bf16.msra.mxu0 0
        %6519 = vmatprep.subr.bf16.mxu0 0
        %6520 = vmatpush1.bf16.msra.mxu0 0
        %6521 = vmatprep.subr.bf16.mxu0 0
        %6522 = vmatpush1.bf16.msra.mxu0 0
        %6523 = vmatprep.subr.bf16.mxu0 0
        %6524 = vmatpush1.bf16.msra.mxu0 0
        %6525 = vmatprep.subr.bf16.mxu0 0
        %6526 = vmatpush1.bf16.msra.mxu0 0
        %6527 = vmatprep.subr.bf16.mxu0 0
        %6528 = vmatpush1.bf16.msra.mxu0 0
        %6529 = vmatprep.subr.bf16.mxu0 0
        %6530 = vmatpush1.bf16.msra.mxu0 0
        %6531 = vmatprep.subr.bf16.mxu0 0
        %6532 = vmatpush1.bf16.msra.mxu0 0
        %6533 = vmatprep.subr.bf16.mxu0 0
        %6534 = vmatpush1.bf16.msra.mxu0 0
        %6535 = vmatprep.subr.bf16.mxu0 0
        %6536 = vmatpush1.bf16.msra.mxu0 0
        %6537 = vmatprep.subr.bf16.mxu0 0
        %6538 = vmatpush1.bf16.msra.mxu0 0
        %6539 = vmatprep.subr.bf16.mxu0 0
        %6540 = vmatpush1.bf16.msra.mxu0 0
        %6541 = vmatprep.subr.bf16.mxu0 0
        %6542 = vmatpush1.bf16.msra.mxu0 0
        %6543 = vmatprep.subr.bf16.mxu0 0
        %6544 = vmatpush1.bf16.msra.mxu0 0
        %6545 = vmatprep.mubr.bf16.mxu0 0
        %6546 = vmatmul.mubr.bf16.gmra.mrb[0].mxu0 %v6508
        %v6547 = vpop.f32.mrb[0].mxu0
        %v6548 = vadd.f32 0.0, %v6547
        %v6549 = vpop.f32.mrb[0].mxu0
        %v6550 = vpop.f32.mrb[0].mxu0
        %v6551 = vpop.f32.mrb[0].mxu0
        %6552 = vdwg.mxu0
        %v6553 = vpack.c.bf16 %v6410, %v6410
        %v6554 = vpack.c.bf16 %v6456, %v6456
        %v6555 = vpack.c.bf16 %v6502, %v6502
        %v6556 = vpack.c.bf16 %v6548, %v6548
        %v6558 = vsel %vm1626, %v6553, 0
        %v6561 = vsel %vm1872, %v5416, 0
        %6563 = vmatprep.subr.bf16.mxu0 0
        %6564 = vmatpush1.bf16.msra.mxu0 %v6561
        %6565 = vmatprep.subr.bf16.mxu0 0
        %6566 = vmatpush1.bf16.msra.mxu0 0
        %6567 = vmatprep.subr.bf16.mxu0 0
        %6568 = vmatpush1.bf16.msra.mxu0 0
        %6569 = vmatprep.subr.bf16.mxu0 0
        %6570 = vmatpush1.bf16.msra.mxu0 0
        %6571 = vmatprep.subr.bf16.mxu0 0
        %6572 = vmatpush1.bf16.msra.mxu0 0
        %6573 = vmatprep.subr.bf16.mxu0 0
        %6574 = vmatpush1.bf16.msra.mxu0 0
        %6575 = vmatprep.subr.bf16.mxu0 0
        %6576 = vmatpush1.bf16.msra.mxu0 0
        %6577 = vmatprep.subr.bf16.mxu0 0
        %6578 = vmatpush1.bf16.msra.mxu0 0
        %6579 = vmatprep.subr.bf16.mxu0 0
        %6580 = vmatpush1.bf16.msra.mxu0 0
        %6581 = vmatprep.subr.bf16.mxu0 0
        %6582 = vmatpush1.bf16.msra.mxu0 0
        %6583 = vmatprep.subr.bf16.mxu0 0
        %6584 = vmatpush1.bf16.msra.mxu0 0
        %6585 = vmatprep.subr.bf16.mxu0 0
        %6586 = vmatpush1.bf16.msra.mxu0 0
        %6587 = vmatprep.subr.bf16.mxu0 0
        %6588 = vmatpush1.bf16.msra.mxu0 0
        %6589 = vmatprep.subr.bf16.mxu0 0
        %6590 = vmatpush1.bf16.msra.mxu0 0
        %6591 = vmatprep.subr.bf16.mxu0 0
        %6592 = vmatpush1.bf16.msra.mxu0 0
        %6593 = vmatprep.subr.bf16.mxu0 0
        %6594 = vmatpush1.bf16.msra.mxu0 0
        %6595 = vmatprep.mubr.bf16.mxu0 0
        %6596 = vmatmul.mubr.bf16.gmra.mrb[0].mxu0 %v6558
        %v6597 = vpop.f32.mrb[0].mxu0
        %v6598 = vadd.f32 0.0, %v6597
        %v6599 = vpop.f32.mrb[0].mxu0
        %v6600 = vpop.f32.mrb[0].mxu0
        %v6601 = vpop.f32.mrb[0].mxu0
        %6602 = vdwg.mxu0
        %v6604 = vsel %vm1626, %v6554, 0
        %v6607 = vsel %vm1872, %v5417, 0
        %6609 = vmatprep.subr.bf16.mxu0 0
        %6610 = vmatpush1.bf16.msra.mxu0 %v6607
        %6611 = vmatprep.subr.bf16.mxu0 0
        %6612 = vmatpush1.bf16.msra.mxu0 0
        %6613 = vmatprep.subr.bf16.mxu0 0
        %6614 = vmatpush1.bf16.msra.mxu0 0
        %6615 = vmatprep.subr.bf16.mxu0 0
        %6616 = vmatpush1.bf16.msra.mxu0 0
        %6617 = vmatprep.subr.bf16.mxu0 0
        %6618 = vmatpush1.bf16.msra.mxu0 0
        %6619 = vmatprep.subr.bf16.mxu0 0
        %6620 = vmatpush1.bf16.msra.mxu0 0
        %6621 = vmatprep.subr.bf16.mxu0 0
        %6622 = vmatpush1.bf16.msra.mxu0 0
        %6623 = vmatprep.subr.bf16.mxu0 0
        %6624 = vmatpush1.bf16.msra.mxu0 0
        %6625 = vmatprep.subr.bf16.mxu0 0
        %6626 = vmatpush1.bf16.msra.mxu0 0
        %6627 = vmatprep.subr.bf16.mxu0 0
        %6628 = vmatpush1.bf16.msra.mxu0 0
        %6629 = vmatprep.subr.bf16.mxu0 0
        %6630 = vmatpush1.bf16.msra.mxu0 0
        %6631 = vmatprep.subr.bf16.mxu0 0
        %6632 = vmatpush1.bf16.msra.mxu0 0
        %6633 = vmatprep.subr.bf16.mxu0 0
        %6634 = vmatpush1.bf16.msra.mxu0 0
        %6635 = vmatprep.subr.bf16.mxu0 0
        %6636 = vmatpush1.bf16.msra.mxu0 0
        %6637 = vmatprep.subr.bf16.mxu0 0
        %6638 = vmatpush1.bf16.msra.mxu0 0
        %6639 = vmatprep.subr.bf16.mxu0 0
        %6640 = vmatpush1.bf16.msra.mxu0 0
        %6641 = vmatprep.mubr.bf16.mxu0 0
        %6642 = vmatmul.mubr.bf16.gmra.mrb[0].mxu0 %v6604
        %v6643 = vpop.f32.mrb[0].mxu0
        %v6644 = vadd.f32 0.0, %v6643
        %v6645 = vpop.f32.mrb[0].mxu0
        %v6646 = vpop.f32.mrb[0].mxu0
        %v6647 = vpop.f32.mrb[0].mxu0
        %6648 = vdwg.mxu0
        %v6650 = vsel %vm1626, %v6555, 0
        %v6653 = vsel %vm1872, %v5418, 0
        %6655 = vmatprep.subr.bf16.mxu0 0
        %6656 = vmatpush1.bf16.msra.mxu0 %v6653
        %6657 = vmatprep.subr.bf16.mxu0 0
        %6658 = vmatpush1.bf16.msra.mxu0 0
        %6659 = vmatprep.subr.bf16.mxu0 0
        %6660 = vmatpush1.bf16.msra.mxu0 0
        %6661 = vmatprep.subr.bf16.mxu0 0
        %6662 = vmatpush1.bf16.msra.mxu0 0
        %6663 = vmatprep.subr.bf16.mxu0 0
        %6664 = vmatpush1.bf16.msra.mxu0 0
        %6665 = vmatprep.subr.bf16.mxu0 0
        %6666 = vmatpush1.bf16.msra.mxu0 0
        %6667 = vmatprep.subr.bf16.mxu0 0
        %6668 = vmatpush1.bf16.msra.mxu0 0
        %6669 = vmatprep.subr.bf16.mxu0 0
        %6670 = vmatpush1.bf16.msra.mxu0 0
        %6671 = vmatprep.subr.bf16.mxu0 0
        %6672 = vmatpush1.bf16.msra.mxu0 0
        %6673 = vmatprep.subr.bf16.mxu0 0
        %6674 = vmatpush1.bf16.msra.mxu0 0
        %6675 = vmatprep.subr.bf16.mxu0 0
        %6676 = vmatpush1.bf16.msra.mxu0 0
        %6677 = vmatprep.subr.bf16.mxu0 0
        %6678 = vmatpush1.bf16.msra.mxu0 0
        %6679 = vmatprep.subr.bf16.mxu0 0
        %6680 = vmatpush1.bf16.msra.mxu0 0
        %6681 = vmatprep.subr.bf16.mxu0 0
        %6682 = vmatpush1.bf16.msra.mxu0 0
        %6683 = vmatprep.subr.bf16.mxu0 0
        %6684 = vmatpush1.bf16.msra.mxu0 0
        %6685 = vmatprep.subr.bf16.mxu0 0
        %6686 = vmatpush1.bf16.msra.mxu0 0
        %6687 = vmatprep.mubr.bf16.mxu0 0
        %6688 = vmatmul.mubr.bf16.gmra.mrb[0].mxu0 %v6650
        %v6689 = vpop.f32.mrb[0].mxu0
        %v6690 = vadd.f32 0.0, %v6689
        %v6691 = vpop.f32.mrb[0].mxu0
        %v6692 = vpop.f32.mrb[0].mxu0
        %v6693 = vpop.f32.mrb[0].mxu0
        %6694 = vdwg.mxu0
        %v6696 = vsel %vm1626, %v6556, 0
        %v6699 = vsel %vm1872, %v5419, 0
        %6701 = vmatprep.subr.bf16.mxu0 0
        %6702 = vmatpush1.bf16.msra.mxu0 %v6699
        %6703 = vmatprep.subr.bf16.mxu0 0
        %6704 = vmatpush1.bf16.msra.mxu0 0
        %6705 = vmatprep.subr.bf16.mxu0 0
        %6706 = vmatpush1.bf16.msra.mxu0 0
        %6707 = vmatprep.subr.bf16.mxu0 0
        %6708 = vmatpush1.bf16.msra.mxu0 0
        %6709 = vmatprep.subr.bf16.mxu0 0
        %6710 = vmatpush1.bf16.msra.mxu0 0
        %6711 = vmatprep.subr.bf16.mxu0 0
        %6712 = vmatpush1.bf16.msra.mxu0 0
        %6713 = vmatprep.subr.bf16.mxu0 0
        %6714 = vmatpush1.bf16.msra.mxu0 0
        %6715 = vmatprep.subr.bf16.mxu0 0
        %6716 = vmatpush1.bf16.msra.mxu0 0
        %6717 = vmatprep.subr.bf16.mxu0 0
        %6718 = vmatpush1.bf16.msra.mxu0 0
        %6719 = vmatprep.subr.bf16.mxu0 0
        %6720 = vmatpush1.bf16.msra.mxu0 0
        %6721 = vmatprep.subr.bf16.mxu0 0
        %6722 = vmatpush1.bf16.msra.mxu0 0
        %6723 = vmatprep.subr.bf16.mxu0 0
        %6724 = vmatpush1.bf16.msra.mxu0 0
        %6725 = vmatprep.subr.bf16.mxu0 0
        %6726 = vmatpush1.bf16.msra.mxu0 0
        %6727 = vmatprep.subr.bf16.mxu0 0
        %6728 = vmatpush1.bf16.msra.mxu0 0
        %6729 = vmatprep.subr.bf16.mxu0 0
        %6730 = vmatpush1.bf16.msra.mxu0 0
        %6731 = vmatprep.subr.bf16.mxu0 0
        %6732 = vmatpush1.bf16.msra.mxu0 0
        %6733 = vmatprep.mubr.bf16.mxu0 0
        %6734 = vmatmul.mubr.bf16.gmra.mrb[0].mxu0 %v6696
        %v6735 = vpop.f32.mrb[0].mxu0
        %v6736 = vadd.f32 0.0, %v6735
        %v6737 = vpop.f32.mrb[0].mxu0
        %v6738 = vpop.f32.mrb[0].mxu0
        %v6739 = vpop.f32.mrb[0].mxu0
        %6740 = vdwg.mxu0
        %v6741 = vsel %vm954, %v6598, 0.0
        %v6742 = vsel %vm954, %v6644, 0.0
        %v6743 = vadd.f32 %v6741, %v6742
        %v6744 = vsel %vm954, %v6690, 0.0
        %v6745 = vadd.f32 %v6743, %v6744
        %v6746 = vsel %vm954, %v6736, 0.0
        %v6747 = vadd.f32 %v6745, %v6746
        %v6749 = vlaneseq
        %v6750 = vshrl.u32 %v6749, 7
        %v6751 = vsub.s32 0, %v6750
        %v6752 = vrot.slane %v5421, %v6751
        %v6754 = vadd.f32 %v6747, %v6752
        %v6755 = vadd.f32 %v6754, %v5347
        %v6756 = vsel %vm954, %v6755, 0.0
        %6757 = vadd.xlane.f32.xlu0 %v6756
        %v6758 = vpop.xlane.xlu0 %6757
        %v6759 = vmul.f32 %v6758, %v2260
        %v6760 = vmul.f32 %v6755, %v6755
        %v6761 = vsel %vm954, %v6760, 0.0
        %6762 = vadd.xlane.f32.xlu0 %v6761
        %v6763 = vpop.xlane.xlu0 %6762
        %v6764 = vmul.f32 %v6763, %v2260
        %v6765 = vmul.f32 %v6759, %v6759
        %v6766 = vsub.f32 %v6764, %v6765
        %v6767 = vsub.f32 %v6755, %v6759
        %v6768 = vadd.f32 %v6766, 1e-05
        %v6769 = vrsqrt.pop %v6768
        %v6770 = vmul.f32 %v6767, %v6769
        %v6772 = vlaneseq
        %v6773 = vshrl.u32 %v6772, 7
        %v6774 = vsub.s32 0, %v6773
        %v6775 = vrot.slane %v3905, %v6774
        %v6777 = vmul.f32 %v6770, %v6775
        %v6779 = vlaneseq
        %v6780 = vshrl.u32 %v6779, 7
        %v6781 = vsub.s32 0, %v6780
        %v6782 = vrot.slane %v3909, %v6781
        %v6784 = vadd.f32 %v6777, %v6782
        %v6785 = vpack.c.bf16 %v6784, %v6784
        %s6786 = scalar_lea.vmem %s20, 16
        %v6787 = vld [vmem:[%s6786] sm:$0xf]
        %v6788 = vld [vmem:[%s6786 + $0x4] sm:$0xf]
        %v6789 = vld [vmem:[%s6786 + $0x8] sm:$0xf]
        %v6790 = vld [vmem:[%s6786 + $0xc] sm:$0xf]
        %s6791 = scalar_lea.vmem %s21, 1
        %v6792 = vld [vmem:[%s6791] sm:$0x1]
        %v6794 = vlaneseq
        %v6795 = vshrl.u32 %v6794, 7
        %v6796 = vsub.s32 0, %v6795
        %v6797 = vrot.slane %v6792, %v6796
        %v6803 = vunpack.c.l.b16 %v6787
        %v6804 = vunpack.c.l.b16 %v6788
        %v6805 = vunpack.c.l.b16 %v6789
        %v6806 = vunpack.c.l.b16 %v6790
        %v6807 = vpack.c.b16 %v6804, %v6803
        %v6808 = vpack.c.b16 %v6806, %v6805
        %v6812 = vsel %vm954, %v6785, 0
        %6814 = vmatprep.subr.bf16.mxu0 0
        %6815 = vmatpush1.bf16.msra.mxu0 %v6807
        %6816 = vmatprep.subr.bf16.mxu0 0
        %6817 = vmatpush1.bf16.msra.mxu0 %v6808
        %6818 = vmatprep.subr.bf16.mxu0 0
        %6819 = vmatpush1.bf16.msra.mxu0 0
        %6820 = vmatprep.subr.bf16.mxu0 0
        %6821 = vmatpush1.bf16.msra.mxu0 0
        %6822 = vmatprep.subr.bf16.mxu0 0
        %6823 = vmatpush1.bf16.msra.mxu0 0
        %6824 = vmatprep.subr.bf16.mxu0 0
        %6825 = vmatpush1.bf16.msra.mxu0 0
        %6826 = vmatprep.subr.bf16.mxu0 0
        %6827 = vmatpush1.bf16.msra.mxu0 0
        %6828 = vmatprep.subr.bf16.mxu0 0
        %6829 = vmatpush1.bf16.msra.mxu0 0
        %6830 = vmatprep.subr.bf16.mxu0 0
        %6831 = vmatpush1.bf16.msra.mxu0 0
        %6832 = vmatprep.subr.bf16.mxu0 0
        %6833 = vmatpush1.bf16.msra.mxu0 0
        %6834 = vmatprep.subr.bf16.mxu0 0
        %6835 = vmatpush1.bf16.msra.mxu0 0
        %6836 = vmatprep.subr.bf16.mxu0 0
        %6837 = vmatpush1.bf16.msra.mxu0 0
        %6838 = vmatprep.subr.bf16.mxu0 0
        %6839 = vmatpush1.bf16.msra.mxu0 0
        %6840 = vmatprep.subr.bf16.mxu0 0
        %6841 = vmatpush1.bf16.msra.mxu0 0
        %6842 = vmatprep.subr.bf16.mxu0 0
        %6843 = vmatpush1.bf16.msra.mxu0 0
        %6844 = vmatprep.subr.bf16.mxu0 0
        %6845 = vmatpush1.bf16.msra.mxu0 0
        %6846 = vmatprep.mubr.bf16.mxu0 0
        %6847 = vmatmul.mubr.bf16.gmra.mrb[0].mxu0 %v6812
        %v6848 = vpop.f32.mrb[0].mxu0
        %v6849 = vadd.f32 %v6797, %v6848
        %v6850 = vpop.f32.mrb[0].mxu0
        %v6851 = vpop.f32.mrb[0].mxu0
        %v6852 = vpop.f32.mrb[0].mxu0
        %6853 = vdwg.mxu0
        %v6854 = vmax.f32 %v6849, 0.0
        %v6855 = vpack.c.bf16 %v6854, %v6854
        %s6856 = scalar_lea.vmem %s22, 32
        %v6857 = vld [vmem:[%s6856] sm:$0xf]
        %v6858 = vld [vmem:[%s6856 + $0x4] sm:$0xf]
        %v6859 = vld [vmem:[%s6856 + $0x8] sm:$0xf]
        %v6860 = vld [vmem:[%s6856 + $0xc] sm:$0xf]
        %v6861 = vld [vmem:[%s6856 + $0x10] sm:$0xf]
        %v6862 = vld [vmem:[%s6856 + $0x14] sm:$0xf]
        %v6863 = vld [vmem:[%s6856 + $0x18] sm:$0xf]
        %v6864 = vld [vmem:[%s6856 + $0x1c] sm:$0xf]
        %s6865 = scalar_lea.vmem %s23, 1
        %v6866 = vld [vmem:[%s6865] sm:$0x1]
        %v6868 = vlaneseq
        %v6869 = vshrl.u32 %v6868, 7
        %v6870 = vsub.s32 0, %v6869
        %v6871 = vrot.slane %v6866, %v6870
        %v6881 = vunpack.c.l.b16 %v6857
        %v6882 = vunpack.c.l.b16 %v6858
        %v6883 = vunpack.c.l.b16 %v6859
        %v6884 = vunpack.c.l.b16 %v6860
        %v6885 = vunpack.c.l.b16 %v6861
        %v6886 = vunpack.c.l.b16 %v6862
        %v6887 = vunpack.c.l.b16 %v6863
        %v6888 = vunpack.c.l.b16 %v6864
        %v6889 = vpack.c.b16 %v6882, %v6881
        %v6890 = vpack.c.b16 %v6884, %v6883
        %v6891 = vpack.c.b16 %v6886, %v6885
        %v6892 = vpack.c.b16 %v6888, %v6887
        %v6898 = vsel %vm3829, %v6855, 0
        %6900 = vmatprep.subr.bf16.mxu0 0
        %6901 = vmatpush1.bf16.msra.mxu0 %v6889
        %6902 = vmatprep.subr.bf16.mxu0 0
        %6903 = vmatpush1.bf16.msra.mxu0 %v6890
        %6904 = vmatprep.subr.bf16.mxu0 0
        %6905 = vmatpush1.bf16.msra.mxu0 %v6891
        %6906 = vmatprep.subr.bf16.mxu0 0
        %6907 = vmatpush1.bf16.msra.mxu0 %v6892
        %6908 = vmatprep.subr.bf16.mxu0 0
        %6909 = vmatpush1.bf16.msra.mxu0 0
        %6910 = vmatprep.subr.bf16.mxu0 0
        %6911 = vmatpush1.bf16.msra.mxu0 0
        %6912 = vmatprep.subr.bf16.mxu0 0
        %6913 = vmatpush1.bf16.msra.mxu0 0
        %6914 = vmatprep.subr.bf16.mxu0 0
        %6915 = vmatpush1.bf16.msra.mxu0 0
        %6916 = vmatprep.subr.bf16.mxu0 0
        %6917 = vmatpush1.bf16.msra.mxu0 0
        %6918 = vmatprep.subr.bf16.mxu0 0
        %6919 = vmatpush1.bf16.msra.mxu0 0
        %6920 = vmatprep.subr.bf16.mxu0 0
        %6921 = vmatpush1.bf16.msra.mxu0 0
        %6922 = vmatprep.subr.bf16.mxu0 0
        %6923 = vmatpush1.bf16.msra.mxu0 0
        %6924 = vmatprep.subr.bf16.mxu0 0
        %6925 = vmatpush1.bf16.msra.mxu0 0
        %6926 = vmatprep.subr.bf16.mxu0 0
        %6927 = vmatpush1.bf16.msra.mxu0 0
        %6928 = vmatprep.subr.bf16.mxu0 0
        %6929 = vmatpush1.bf16.msra.mxu0 0
        %6930 = vmatprep.subr.bf16.mxu0 0
        %6931 = vmatpush1.bf16.msra.mxu0 0
        %6932 = vmatprep.mubr.bf16.mxu0 0
        %6933 = vmatmul.mubr.bf16.gmra.mrb[0].mxu0 %v6898
        %v6934 = vpop.f32.mrb[0].mxu0
        %v6935 = vadd.f32 %v6871, %v6934
        %v6936 = vpop.f32.mrb[0].mxu0
        %v6937 = vpop.f32.mrb[0].mxu0
        %v6938 = vpop.f32.mrb[0].mxu0
        %6939 = vdwg.mxu0
        %v6940 = vadd.f32 %v6935, %v6784
        %v6941 = vsel %vm954, %v6940, 0.0
        %6942 = vadd.xlane.f32.xlu0 %v6941
        %v6943 = vpop.xlane.xlu0 %6942
        %v6944 = vmul.f32 %v6943, %v2260
        %v6945 = vmul.f32 %v6940, %v6940
        %v6946 = vsel %vm954, %v6945, 0.0
        %6947 = vadd.xlane.f32.xlu0 %v6946
        %v6948 = vpop.xlane.xlu0 %6947
        %v6949 = vmul.f32 %v6948, %v2260
        %v6950 = vmul.f32 %v6944, %v6944
        %v6951 = vsub.f32 %v6949, %v6950
        %v6952 = vsub.f32 %v6940, %v6944
        %v6953 = vadd.f32 %v6951, 1e-05
        %v6954 = vrsqrt.pop %v6953
        %v6955 = vmul.f32 %v6952, %v6954
        %v6957 = vlaneseq
        %v6958 = vshrl.u32 %v6957, 7
        %v6959 = vsub.s32 0, %v6958
        %v6960 = vrot.slane %v3906, %v6959
        %v6962 = vmul.f32 %v6955, %v6960
        %v6964 = vlaneseq
        %v6965 = vshrl.u32 %v6964, 7
        %v6966 = vsub.s32 0, %v6965
        %v6967 = vrot.slane %v3910, %v6966
        %v6969 = vadd.f32 %v6962, %v6967
        %6970 = vst.msk [vmem:[%s821] sm:$0xff] %vm954, %v6969
        %s6971 = sand.u32 %s614, 1
        %s6972 = scalar_lea.sflag [#allocation3], %s6971
        %s6973 = sand.u32 %s614, 1
        %s6974 = smul.addr %s6973, 8
        %s6975 = scalar_lea.vmem [#allocation2], %s6974
        // Predicated region
        $region125: #{decoder_forward.1} parent=123 // pred_check
          %p6976 = pneg %p624
        $region126: #{decoder_forward.1} parent=123 // pred_check_branch
          %6978 = sbr.rel (%p6976) target = $region128
        $region127: #{decoder_forward.1} parent=123 // pred_region
          %s6980 = ssub.s32 128, 128
          %6981 = vsyncadd %s6972, %s6980
          %s6982 = smul.addr %s40, 128
          %s6983 = scalar_lea.hbm %s26, %s6982
          %s6985 = sshll.u32 %s6975, 4
          %s6986 = int_to_ptr.vmem [resolvable:$true] %s6985
          %6988 = dma.vmem_to_hbm [thread:$0]  %s6986, 128, %s6983, %s6972
        $region128: #{decoder_forward.1} parent=123 // pred_fallthru
          _
      $region124: #{decoder_forward.1} parent=5 // pred_fallthru
        _
      %p6989 = scmp.le.s32.totalorder 2, %s35
      // Predicated region
      $region129: #{decoder_forward.1} parent=5 // pred_check
        %p6990 = pneg %p6989
      $region130: #{decoder_forward.1} parent=5 // pred_check_branch
        %6992 = sbr.rel (%p6990) target = $region132
      $region131: #{decoder_forward.1} parent=5 // pred_region
        %s6993 = ssub.s32 %s35, 2
        // Predicated region
        $region133: #{decoder_forward.1} parent=131 // pred_check
          %p6994 = pneg %p630
        $region134: #{decoder_forward.1} parent=131 // pred_check_branch
          %6996 = sbr.rel (%p6994) target = $region136
        $region135: #{decoder_forward.1} parent=131 // pred_region
          %s6997 = sand.u32 %s615, 1
          %s6998 = scalar_lea.sflag [#allocation3], %s6997
          %s6999 = sand.u32 %s615, 1
          %s7000 = smul.addr %s6999, 8
          %s7001 = scalar_lea.vmem [#allocation2], %s7000
          %7002 = dma.done %s6998, 128
        $region136: #{decoder_forward.1} parent=131 // pred_fallthru
          _
      $region132: #{decoder_forward.1} parent=5 // pred_fallthru
        _
    $region6: #{decoder_forward.1} parent=1 // loop_footer
      %s39 = sadd.s32 1, %s35
    $region7: #{decoder_forward.1} parent=1 // loop_footer_branch
      %34 = sbr.rel target = $region3
    $region8: #{decoder_forward.1} parent=1 // loop_exit
      _
    %7003 = vsyncpa [#allocation3], 1
    %s7004 = scalar_lea.sflag [#allocation3], 1
    %7005 = vsyncpa %s7004, 1

</llo_original>
